<compile_context>
chip_gen: v7x
topology: tpu7x:2x2x1
jax: 0.10.0
libtpu: 0.0.40
codegen_flags: <defaults>
</compile_context>

<pallas_src>
import functools

import jax
import jax.numpy as jnp
from jax import lax
from jax.experimental import pallas as pl
from jax.experimental.pallas import tpu as pltpu

NEG_INF = -1e30   # Python float literal (a jnp scalar would be a captured constant)


def _ccattn_kernel(x_ref, wq_ref, bq_ref, wk_ref, bk_ref, wv_ref, bv_ref,
                   gamma_ref, o_ref, *, H, W, Cp, C):
    """One grid step == one full batch element (all H*W queries)."""
    x = x_ref[0]                                               # (P, C) f32
    xb = x.astype(jnp.bfloat16)

    # 1x1-conv projections: three bf16 MXU matmuls with f32 accumulation.
    q = jnp.dot(xb, wq_ref[...], preferred_element_type=jnp.float32) + bq_ref[...]
    k = jnp.dot(xb, wk_ref[...], preferred_element_type=jnp.float32) + bk_ref[...]
    v = jnp.dot(xb, wv_ref[...], preferred_element_type=jnp.float32) + bv_ref[...]

    q_hwc = q.reshape(H, W, Cp)                                # row-major layouts
    k_hwc = k.reshape(H, W, Cp)
    v_hwc = v.reshape(H, W, C)
    q_whc = jnp.transpose(q_hwc, (1, 0, 2))                    # column-major layouts
    k_whc = jnp.transpose(k_hwc, (1, 0, 2))
    v_whc = jnp.transpose(v_hwc, (1, 0, 2))

    qb_r, kb_r, vb_r = (a.astype(jnp.bfloat16) for a in (q_hwc, k_hwc, v_hwc))
    qb_c, kb_c, vb_c = (a.astype(jnp.bfloat16) for a in (q_whc, k_whc, v_whc))

    # Row branch logits: e_row[h, w, w'] = q[h,w] . k[h,w']   (batch = row h)
    e_row = jnp.einsum('hwc,hvc->hwv', qb_r, kb_r,
                       preferred_element_type=jnp.float32)     # (H, W, W) f32

    # Column branch logits: e_col[w, h, g] = q[h,w] . k[g,w]   (batch = col w)
    e_col = jnp.einsum('whc,wgc->whg', qb_c, kb_c,
                       preferred_element_type=jnp.float32)     # (W, H, H) f32
    # -inf on the self position g == h (the INF() diagonal of the reference).
    diag = (lax.broadcasted_iota(jnp.int32, (H, H), 0) ==
            lax.broadcasted_iota(jnp.int32, (H, H), 1))
    e_col = jnp.where(diag[None, :, :], NEG_INF, e_col)

    # Joint softmax over the H+W logits of each query, decomposed (max / sum).
    m = jnp.maximum(jnp.max(e_row, axis=-1),
                    jnp.max(e_col, axis=-1).T)                 # (H, W)
    p_row = jnp.exp(e_row - m[:, :, None])                     # (H, W, W)
    p_col = jnp.exp(e_col - m.T[:, :, None])                   # (W, H, H)
    z = jnp.sum(p_row, axis=-1) + jnp.sum(p_col, axis=-1).T    # (H, W)

    # Weighted value sums — both batched MXU matmuls, bf16 operands, f32 acc.
    out_row = jnp.einsum('hwv,hvc->hwc', p_row.astype(jnp.bfloat16), vb_r,
                         preferred_element_type=jnp.float32)   # (H, W, C)
    out_col = jnp.einsum('whg,wgc->whc', p_col.astype(jnp.bfloat16), vb_c,
                         preferred_element_type=jnp.float32)   # (W, H, C)
    out = out_row + jnp.transpose(out_col, (1, 0, 2))          # (H, W, C)

    inv_z = pl.reciprocal(z, approx=True)                      # EUP slot, ~free
    out = out * inv_z[:, :, None]

    o_ref[0] = (gamma_ref[0] * out.reshape(H * W, C) + x).astype(o_ref.dtype)


def criss_cross_attention_pallas(x_nchw, wq, bq, wk, bk, wv, bv, gamma):
    """x_nchw: (B, C, H, W) float32 -> (B, C, H, W) float32."""
    B, C, H, W = x_nchw.shape
    Cp = wq.shape[1]
    P = H * W

    # Host glue: NCHW -> (B, P, C) channels-last pixels; weights to bf16 once.
    x_flat = jnp.transpose(x_nchw, (0, 2, 3, 1)).reshape(B, P, C)
    wq_b, wk_b, wv_b = (w.astype(jnp.bfloat16) for w in (wq, wk, wv))

    kernel = functools.partial(_ccattn_kernel, H=H, W=W, Cp=Cp, C=C)
    const = lambda b: (0, 0)

    out_flat = pl.pallas_call(
        kernel,
        out_shape=jax.ShapeDtypeStruct((B, P, C), jnp.float32),
        grid=(B,),
        in_specs=[
            pl.BlockSpec((1, P, C), lambda b: (b, 0, 0)),        # x (one element)
            pl.BlockSpec((C, Cp), const),                        # wq (bf16)
            pl.BlockSpec((1, Cp), const),                        # bq (f32)
            pl.BlockSpec((C, Cp), const),                        # wk (bf16)
            pl.BlockSpec((1, Cp), const),                        # bk (f32)
            pl.BlockSpec((C, C), const),                         # wv (bf16)
            pl.BlockSpec((1, C), const),                         # bv (f32)
            pl.BlockSpec(memory_space=pltpu.MemorySpace.SMEM),   # gamma scalar
        ],
        out_specs=pl.BlockSpec((1, P, C), lambda b: (b, 0, 0)),
        compiler_params=pltpu.CompilerParams(
            dimension_semantics=("parallel",),
            vmem_limit_bytes=48 * 1024 * 1024),
    )(x_flat, wq_b, bq, wk_b, bk, wv_b, bv, gamma)

    return jnp.transpose(out_flat.reshape(B, H, W, C), (0, 3, 1, 2))


def criss_cross_attention_ref(x, wq, bq, wk, bk, wv, bv, gamma):
    """Faithful plain-JAX transcription of the PyTorch forward (NCHW, f32)."""
    B, C, H, W = x.shape
    hp = lax.Precision.HIGHEST

    def conv1x1(inp, w, b):                        # w: (C_in, C_out)
        return (jnp.einsum('bchw,cd->bdhw', inp, w, precision=hp)
                + b.reshape(1, -1, 1, 1))

    q = conv1x1(x, wq, bq); k = conv1x1(x, wk, bk); v = conv1x1(x, wv, bv)
    Cp = q.shape[1]

    q_H = q.transpose(0, 3, 1, 2).reshape(B * W, Cp, H).transpose(0, 2, 1)
    q_W = q.transpose(0, 2, 1, 3).reshape(B * H, Cp, W).transpose(0, 2, 1)
    k_H = k.transpose(0, 3, 1, 2).reshape(B * W, Cp, H)
    k_W = k.transpose(0, 2, 1, 3).reshape(B * H, Cp, W)
    v_H = v.transpose(0, 3, 1, 2).reshape(B * W, C, H)
    v_W = v.transpose(0, 2, 1, 3).reshape(B * H, C, W)

    inf_diag = jnp.where(jnp.eye(H, dtype=bool), -jnp.inf, 0.0)
    energy_H = jnp.einsum('bic,bcj->bij', q_H, k_H, precision=hp) + inf_diag[None]
    energy_H = energy_H.reshape(B, W, H, H).transpose(0, 2, 1, 3)      # (B,H,W,H)
    energy_W = jnp.einsum('bic,bcj->bij', q_W, k_W,
                          precision=hp).reshape(B, H, W, W)
    concate = jax.nn.softmax(jnp.concatenate([energy_H, energy_W], axis=3),
                             axis=3)
    att_H = concate[..., :H].transpose(0, 2, 1, 3).reshape(B * W, H, H)
    att_W = concate[..., H:H + W].reshape(B * H, W, W)
    out_H = jnp.einsum('bch,bih->bci', v_H, att_H, precision=hp)
    out_H = out_H.reshape(B, W, C, H).transpose(0, 2, 3, 1)            # (B,C,H,W)
    out_W = jnp.einsum('bcw,biw->bci', v_W, att_W, precision=hp)
    out_W = out_W.reshape(B, H, C, W).transpose(0, 2, 1, 3)            # (B,C,H,W)
    return gamma[0] * (out_H + out_W) + x


if __name__ == "__main__":
    # Small but layout-friendly shapes: W, H multiples of 8; C = 64 -> Cp = 8.
    B, C, H, W = 2, 64, 16, 16
    Cp = C // 8
    key = jax.random.PRNGKey(0)
    kx, kq, kbq, kk, kbk, kv, kbv = jax.random.split(key, 7)

    x = jax.random.normal(kx, (B, C, H, W), dtype=jnp.float32)
    # 1x1-conv parameters, stored as (C_in, C_out) (= conv weight transposed).
    # Modest scales keep the softmax well-conditioned for the bf16 comparison.
    wq = 0.05 * jax.random.normal(kq, (C, Cp), dtype=jnp.float32)
    bq = 0.02 * jax.random.normal(kbq, (1, Cp), dtype=jnp.float32)
    wk = 0.05 * jax.random.normal(kk, (C, Cp), dtype=jnp.float32)
    bk = 0.02 * jax.random.normal(kbk, (1, Cp), dtype=jnp.float32)
    wv = 0.10 * jax.random.normal(kv, (C, C), dtype=jnp.float32)
    bv = 0.05 * jax.random.normal(kbv, (1, C), dtype=jnp.float32)
    # PyTorch initializes gamma to 0 (output == x); use a nonzero value so the
    # attention path is actually exercised.
    gamma = jnp.array([0.5], dtype=jnp.float32)

    y = criss_cross_attention_pallas(x, wq, bq, wk, bk, wv, bv, gamma)
    y = jax.block_until_ready(y)

    y_ref = criss_cross_attention_ref(x, wq, bq, wk, bk, wv, bv, gamma)
    # Tolerance covers bf16 MXU operands (per the perf review) vs the
    # f32 HIGHEST-precision reference; algorithmic bugs (masking / joint
    # softmax / indexing) would show up as O(0.1+) errors.
    if not bool(jnp.allclose(y, y_ref, atol=2e-2, rtol=2e-2)):
        raise SystemExit("mismatch: max abs err = %e"
                         % float(jnp.max(jnp.abs(y - y_ref))))
    print("KERNEL_OK")
</pallas_src>

<mosaic_0001>
module attributes {stable_mosaic.version = 11 : i64} {
  func.func @_ccattn_kernel(%arg0: i32, %arg1: memref<1x256x64xf32, #tpu.memory_space<vmem>>, %arg2: memref<64x8xbf16, #tpu.memory_space<vmem>>, %arg3: memref<1x8xf32, #tpu.memory_space<vmem>>, %arg4: memref<64x8xbf16, #tpu.memory_space<vmem>>, %arg5: memref<1x8xf32, #tpu.memory_space<vmem>>, %arg6: memref<64x64xbf16, #tpu.memory_space<vmem>>, %arg7: memref<1x64xf32, #tpu.memory_space<vmem>>, %arg8: memref<1xf32, #tpu.memory_space<smem>>, %arg9: memref<1x256x64xf32, #tpu.memory_space<vmem>>) attributes {dimension_semantics = [#tpu.dimension_semantics<parallel>], iteration_bounds = array<i64: 2>, scalar_prefetch = 0 : i64, scratch_operands = 0 : i64, tpu.core_type = #tpu.core_type<tc>, window_params = [{transform_indices = @transform_0, window_bounds = array<i64: 1, 256, 64>}, {pipeline_mode = #tpu.pipeline_mode<synchronous>, transform_indices = @transform_1, window_bounds = array<i64: 64, 8>}, {pipeline_mode = #tpu.pipeline_mode<synchronous>, transform_indices = @transform_2, window_bounds = array<i64: 1, 8>}, {pipeline_mode = #tpu.pipeline_mode<synchronous>, transform_indices = @transform_3, window_bounds = array<i64: 64, 8>}, {pipeline_mode = #tpu.pipeline_mode<synchronous>, transform_indices = @transform_4, window_bounds = array<i64: 1, 8>}, {pipeline_mode = #tpu.pipeline_mode<synchronous>, transform_indices = @transform_5, window_bounds = array<i64: 64, 64>}, {pipeline_mode = #tpu.pipeline_mode<synchronous>, transform_indices = @transform_6, window_bounds = array<i64: 1, 64>}, {transform_indices = @transform_7, window_bounds = array<i64: 1>}, {transform_indices = @transform_8, window_bounds = array<i64: 1, 256, 64>}]} {
    %c0 = arith.constant 0 : index
    %c0_0 = arith.constant 0 : index
    %c0_1 = arith.constant 0 : index
    %0 = vector.load %arg1[%c0, %c0_0, %c0_1] : memref<1x256x64xf32, #tpu.memory_space<vmem>>, vector<1x256x64xf32>
    %1 = vector.shape_cast %0 : vector<1x256x64xf32> to vector<256x64xf32>
    %2 = arith.truncf %1 : vector<256x64xf32> to vector<256x64xbf16>
    %c0_2 = arith.constant 0 : index
    %c0_3 = arith.constant 0 : index
    %3 = vector.load %arg2[%c0_2, %c0_3] : memref<64x8xbf16, #tpu.memory_space<vmem>>, vector<64x8xbf16>
    %cst = arith.constant dense<0.000000e+00> : vector<256x8xf32>
    %4 = tpu.matmul %2, %3, %cst {dimension_numbers = #tpu.dot_dimension_numbers<[1], [0], [0], [1], [0, 0, 1, 1], [], []>} : vector<256x64xbf16>, vector<64x8xbf16>, vector<256x8xf32> -> vector<256x8xf32>
    %c0_4 = arith.constant 0 : index
    %c0_5 = arith.constant 0 : index
    %5 = vector.load %arg3[%c0_4, %c0_5] : memref<1x8xf32, #tpu.memory_space<vmem>>, vector<1x8xf32>
    %6 = vector.broadcast %5 : vector<1x8xf32> to vector<256x8xf32>
    %7 = arith.addf %4, %6 : vector<256x8xf32>
    %c0_6 = arith.constant 0 : index
    %c0_7 = arith.constant 0 : index
    %8 = vector.load %arg4[%c0_6, %c0_7] : memref<64x8xbf16, #tpu.memory_space<vmem>>, vector<64x8xbf16>
    %cst_8 = arith.constant dense<0.000000e+00> : vector<256x8xf32>
    %9 = tpu.matmul %2, %8, %cst_8 {dimension_numbers = #tpu.dot_dimension_numbers<[1], [0], [0], [1], [0, 0, 1, 1], [], []>} : vector<256x64xbf16>, vector<64x8xbf16>, vector<256x8xf32> -> vector<256x8xf32>
    %c0_9 = arith.constant 0 : index
    %c0_10 = arith.constant 0 : index
    %10 = vector.load %arg5[%c0_9, %c0_10] : memref<1x8xf32, #tpu.memory_space<vmem>>, vector<1x8xf32>
    %11 = vector.broadcast %10 : vector<1x8xf32> to vector<256x8xf32>
    %12 = arith.addf %9, %11 : vector<256x8xf32>
    %c0_11 = arith.constant 0 : index
    %c0_12 = arith.constant 0 : index
    %13 = vector.load %arg6[%c0_11, %c0_12] : memref<64x64xbf16, #tpu.memory_space<vmem>>, vector<64x64xbf16>
    %cst_13 = arith.constant dense<0.000000e+00> : vector<256x64xf32>
    %14 = tpu.matmul %2, %13, %cst_13 {dimension_numbers = #tpu.dot_dimension_numbers<[1], [0], [0], [1], [0, 0, 1, 1], [], []>} : vector<256x64xbf16>, vector<64x64xbf16>, vector<256x64xf32> -> vector<256x64xf32>
    %c0_14 = arith.constant 0 : index
    %c0_15 = arith.constant 0 : index
    %15 = vector.load %arg7[%c0_14, %c0_15] : memref<1x64xf32, #tpu.memory_space<vmem>>, vector<1x64xf32>
    %16 = vector.broadcast %15 : vector<1x64xf32> to vector<256x64xf32>
    %17 = arith.addf %14, %16 : vector<256x64xf32>
    %18 = vector.shape_cast %7 : vector<256x8xf32> to vector<16x16x8xf32>
    %19 = vector.shape_cast %12 : vector<256x8xf32> to vector<16x16x8xf32>
    %20 = vector.shape_cast %17 : vector<256x64xf32> to vector<16x16x64xf32>
    %21 = tpu.transpose %18, [1, 0, 2] : vector<16x16x8xf32> -> vector<16x16x8xf32>
    %22 = tpu.transpose %19, [1, 0, 2] : vector<16x16x8xf32> -> vector<16x16x8xf32>
    %23 = tpu.transpose %20, [1, 0, 2] : vector<16x16x64xf32> -> vector<16x16x64xf32>
    %24 = arith.truncf %18 : vector<16x16x8xf32> to vector<16x16x8xbf16>
    %25 = arith.truncf %19 : vector<16x16x8xf32> to vector<16x16x8xbf16>
    %26 = arith.truncf %20 : vector<16x16x64xf32> to vector<16x16x64xbf16>
    %27 = arith.truncf %21 : vector<16x16x8xf32> to vector<16x16x8xbf16>
    %28 = arith.truncf %22 : vector<16x16x8xf32> to vector<16x16x8xbf16>
    %29 = arith.truncf %23 : vector<16x16x64xf32> to vector<16x16x64xbf16>
    "tpu.trace_start"() <{level = 10 : i32, message = "hwc,hvc->hwv"}> : () -> ()
    %cst_16 = arith.constant dense<0.000000e+00> : vector<16x16x16xf32>
    %30 = tpu.matmul %24, %25, %cst_16 {dimension_numbers = #tpu.dot_dimension_numbers<[2], [2], [1], [1], [0, 0, 0, 1, 1, 1], [0], [0]>} : vector<16x16x8xbf16>, vector<16x16x8xbf16>, vector<16x16x16xf32> -> vector<16x16x16xf32>
    "tpu.trace_stop"() : () -> ()
    "tpu.trace_start"() <{level = 10 : i32, message = "whc,wgc->whg"}> : () -> ()
    %cst_17 = arith.constant dense<0.000000e+00> : vector<16x16x16xf32>
    %31 = tpu.matmul %27, %28, %cst_17 {dimension_numbers = #tpu.dot_dimension_numbers<[2], [2], [1], [1], [0, 0, 0, 1, 1, 1], [0], [0]>} : vector<16x16x8xbf16>, vector<16x16x8xbf16>, vector<16x16x16xf32> -> vector<16x16x16xf32>
    "tpu.trace_stop"() : () -> ()
    %32 = tpu.iota {dimensions = array<i32: 0>} : vector<16x16xi32>
    %33 = tpu.iota {dimensions = array<i32: 1>} : vector<16x16xi32>
    %34 = arith.cmpi eq, %32, %33 : vector<16x16xi32>
    %35 = vector.shape_cast %34 : vector<16x16xi1> to vector<1x16x16xi1>
    %cst_18 = arith.constant -1.000000e+30 : f32
    %36 = vector.shape_cast %35 : vector<1x16x16xi1> to vector<1x16x16xi1>
    %37 = vector.broadcast %36 : vector<1x16x16xi1> to vector<16x16x16xi1>
    %38 = vector.broadcast %cst_18 : f32 to vector<16x16x16xf32>
    %39 = arith.select %37, %38, %31 : vector<16x16x16xi1>, vector<16x16x16xf32>
    %cst_19 = arith.constant dense<0xFF800000> : vector<16x16xf32>
    %40 = vector.multi_reduction <maximumf>, %30, %cst_19 [2] : vector<16x16x16xf32> to vector<16x16xf32>
    %cst_20 = arith.constant dense<0xFF800000> : vector<16x16xf32>
    %41 = vector.multi_reduction <maximumf>, %39, %cst_20 [2] : vector<16x16x16xf32> to vector<16x16xf32>
    %42 = tpu.transpose %41, [1, 0] : vector<16x16xf32> -> vector<16x16xf32>
    %43 = arith.maximumf %40, %42 : vector<16x16xf32>
    %44 = vector.shape_cast %43 : vector<16x16xf32> to vector<16x16x1xf32>
    %45 = vector.broadcast %44 : vector<16x16x1xf32> to vector<16x16x16xf32>
    %46 = arith.subf %30, %45 : vector<16x16x16xf32>
    %47 = math.exp %46 : vector<16x16x16xf32>
    %48 = tpu.transpose %43, [1, 0] : vector<16x16xf32> -> vector<16x16xf32>
    %49 = vector.shape_cast %48 : vector<16x16xf32> to vector<16x16x1xf32>
    %50 = vector.broadcast %49 : vector<16x16x1xf32> to vector<16x16x16xf32>
    %51 = arith.subf %39, %50 : vector<16x16x16xf32>
    %52 = math.exp %51 : vector<16x16x16xf32>
    %cst_21 = arith.constant dense<0.000000e+00> : vector<16x16xf32>
    %53 = vector.multi_reduction <add>, %47, %cst_21 [2] : vector<16x16x16xf32> to vector<16x16xf32>
    %cst_22 = arith.constant dense<0.000000e+00> : vector<16x16xf32>
    %54 = vector.multi_reduction <add>, %52, %cst_22 [2] : vector<16x16x16xf32> to vector<16x16xf32>
    %55 = tpu.transpose %54, [1, 0] : vector<16x16xf32> -> vector<16x16xf32>
    %56 = arith.addf %53, %55 : vector<16x16xf32>
    %57 = arith.truncf %47 : vector<16x16x16xf32> to vector<16x16x16xbf16>
    "tpu.trace_start"() <{level = 10 : i32, message = "hwv,hvc->hwc"}> : () -> ()
    %cst_23 = arith.constant dense<0.000000e+00> : vector<16x16x64xf32>
    %58 = tpu.matmul %57, %26, %cst_23 {dimension_numbers = #tpu.dot_dimension_numbers<[2], [1], [1], [2], [0, 0, 0, 1, 1, 2], [0], [0]>} : vector<16x16x16xbf16>, vector<16x16x64xbf16>, vector<16x16x64xf32> -> vector<16x16x64xf32>
    "tpu.trace_stop"() : () -> ()
    %59 = arith.truncf %52 : vector<16x16x16xf32> to vector<16x16x16xbf16>
    "tpu.trace_start"() <{level = 10 : i32, message = "whg,wgc->whc"}> : () -> ()
    %cst_24 = arith.constant dense<0.000000e+00> : vector<16x16x64xf32>
    %60 = tpu.matmul %59, %29, %cst_24 {dimension_numbers = #tpu.dot_dimension_numbers<[2], [1], [1], [2], [0, 0, 0, 1, 1, 2], [0], [0]>} : vector<16x16x16xbf16>, vector<16x16x64xbf16>, vector<16x16x64xf32> -> vector<16x16x64xf32>
    "tpu.trace_stop"() : () -> ()
    %61 = tpu.transpose %60, [1, 0, 2] : vector<16x16x64xf32> -> vector<16x16x64xf32>
    %62 = arith.addf %58, %61 : vector<16x16x64xf32>
    %63 = tpu.reciprocal %56 {approx = true} : vector<16x16xf32> -> vector<16x16xf32>
    %64 = vector.shape_cast %63 : vector<16x16xf32> to vector<16x16x1xf32>
    %65 = vector.broadcast %64 : vector<16x16x1xf32> to vector<16x16x64xf32>
    %66 = arith.mulf %62, %65 : vector<16x16x64xf32>
    %c0_25 = arith.constant 0 : index
    %67 = memref.load %arg8[%c0_25] : memref<1xf32, #tpu.memory_space<smem>>
    %68 = vector.shape_cast %66 : vector<16x16x64xf32> to vector<256x64xf32>
    %69 = vector.broadcast %67 : f32 to vector<256x64xf32>
    %70 = arith.mulf %69, %68 : vector<256x64xf32>
    %71 = arith.addf %70, %1 : vector<256x64xf32>
    %c0_26 = arith.constant 0 : index
    %c0_27 = arith.constant 0 : index
    %c0_28 = arith.constant 0 : index
    %72 = vector.load %arg9[%c0_26, %c0_27, %c0_28] : memref<1x256x64xf32, #tpu.memory_space<vmem>>, vector<1x256x64xf32>
    %73 = vector.shape_cast %72 : vector<1x256x64xf32> to vector<256x64xf32>
    %74 = vector.shape_cast %71 : vector<256x64xf32> to vector<1x256x64xf32>
    tpu.vector_store %arg9[%c0_26, %c0_27, %c0_28], %74 {strides = array<i32>} : memref<1x256x64xf32, #tpu.memory_space<vmem>>, vector<1x256x64xf32>,
    return
  }
  func.func @transform_0(%arg0: i32) -> (i32, i32, i32) {
    %c0_i32 = arith.constant 0 : i32
    %c0_i32_0 = arith.constant 0 : i32
    %c0_i32_1 = arith.constant 0 : i32
    return %arg0, %c0_i32, %c0_i32_0 : i32, i32, i32
  }
  func.func @transform_1(%arg0: i32) -> (i32, i32) {
    %c0_i32 = arith.constant 0 : i32
    %c0_i32_0 = arith.constant 0 : i32
    %c0_i32_1 = arith.constant 0 : i32
    return %c0_i32, %c0_i32_0 : i32, i32
  }
  func.func @transform_2(%arg0: i32) -> (i32, i32) {
    %c0_i32 = arith.constant 0 : i32
    %c0_i32_0 = arith.constant 0 : i32
    %c0_i32_1 = arith.constant 0 : i32
    return %c0_i32, %c0_i32_0 : i32, i32
  }
  func.func @transform_3(%arg0: i32) -> (i32, i32) {
    %c0_i32 = arith.constant 0 : i32
    %c0_i32_0 = arith.constant 0 : i32
    %c0_i32_1 = arith.constant 0 : i32
    return %c0_i32, %c0_i32_0 : i32, i32
  }
  func.func @transform_4(%arg0: i32) -> (i32, i32) {
    %c0_i32 = arith.constant 0 : i32
    %c0_i32_0 = arith.constant 0 : i32
    %c0_i32_1 = arith.constant 0 : i32
    return %c0_i32, %c0_i32_0 : i32, i32
  }
  func.func @transform_5(%arg0: i32) -> (i32, i32) {
    %c0_i32 = arith.constant 0 : i32
    %c0_i32_0 = arith.constant 0 : i32
    %c0_i32_1 = arith.constant 0 : i32
    return %c0_i32, %c0_i32_0 : i32, i32
  }
  func.func @transform_6(%arg0: i32) -> (i32, i32) {
    %c0_i32 = arith.constant 0 : i32
    %c0_i32_0 = arith.constant 0 : i32
    %c0_i32_1 = arith.constant 0 : i32
    return %c0_i32, %c0_i32_0 : i32, i32
  }
  func.func @transform_7(%arg0: i32) -> i32 {
    %c0_i32 = arith.constant 0 : i32
    %c0_i32_0 = arith.constant 0 : i32
    return %c0_i32 : i32
  }
  func.func @transform_8(%arg0: i32) -> (i32, i32, i32) {
    %c0_i32 = arith.constant 0 : i32
    %c0_i32_0 = arith.constant 0 : i32
    %c0_i32_1 = arith.constant 0 : i32
    return %arg0, %c0_i32, %c0_i32_0 : i32, i32, i32
  }
}

</mosaic_0001>

<llo_original>
// kernel: tpu_custom_call.1
$region0: #{tpu_custom_call.1}
  #allocation0 [shape = 'u32[]', space=smem, size = 0x4, offset = 0x4, fixed_abs, tag = 'smem constant byte address 0x4 - core index']
  #allocation1 [shape = 'u32[144,128]{1,0:T(1,128)}', space=vmem, size = 0x12000, scoped, tag = 'internal scratch']
  #allocation2 [shape = 'f32[1]{0:T(128)S(6)}', space=smem, size = 0x200, scoped, tag = 'scoped memory for tpu_custom_call.1']
  %s0 = inlined_call_operand.vmem [shape: f32[2,256,64], index: 0, kind: input, shape index: {}]
  %s1 = inlined_call_operand.vmem [shape: bf16[64,8], index: 1, kind: input, shape index: {}]
  %s2 = inlined_call_operand.vmem [shape: f32[1,8], index: 2, kind: input, shape index: {}]
  %s3 = inlined_call_operand.vmem [shape: bf16[64,8], index: 3, kind: input, shape index: {}]
  %s4 = inlined_call_operand.vmem [shape: f32[1,8], index: 4, kind: input, shape index: {}]
  %s5 = inlined_call_operand.vmem [shape: bf16[64,64], index: 5, kind: input, shape index: {}]
  %s6 = inlined_call_operand.vmem [shape: f32[1,64], index: 6, kind: input, shape index: {}]
  %s7 = inlined_call_operand.<no memory space> [shape: f32[1], index: 7, kind: input, shape index: {}]
  %s8 = inlined_call_operand.vmem [shape: f32[2,256,64], index: 8, kind: output, shape index: {}]
  %s9 = sld [smem:[#allocation0]]
  $region65: #{tpu_custom_call.1} parent=0
    _
  %s11 = ssub.s32 1, %s9
  %s12 = scalar_select 0, %s11, %s9
  %13 = sst [smem:[#allocation2]] %s7
  loop: start=0, step=1, limit=4
  $region2: #{tpu_custom_call.1} parent=0 // loop_pre_header
    _
  $region3: #{tpu_custom_call.1} parent=0 // loop_header
    %s15 = sphi 0, %s19
    %p16 = scmp.ge.s32.totalorder %s15, 4
    %s25 = sphi 0, %s27
    %s28 = sphi 0, %s25
    %s29 = sphi 0, %s28
    %s45 = sphi 0, %s29
    %s49 = sphi 0, %s49
    %s51 = sphi 0, %s49
    %s52 = sphi 0, %s51
    %s66 = sphi 0, %s52
    %s70 = sphi 0, %s70
    %s72 = sphi 0, %s70
    %s73 = sphi 0, %s72
    %s87 = sphi 0, %s73
    %s91 = sphi 0, %s91
    %s93 = sphi 0, %s91
    %s94 = sphi 0, %s93
    %s108 = sphi 0, %s94
    %s112 = sphi 0, %s112
    %s114 = sphi 0, %s112
    %s115 = sphi 0, %s114
    %s129 = sphi 0, %s115
    %s133 = sphi 0, %s133
    %s135 = sphi 0, %s133
    %s136 = sphi 0, %s135
    %s150 = sphi 0, %s136
    %s154 = sphi 0, %s154
    %s156 = sphi 0, %s154
    %s157 = sphi 0, %s156
    %s171 = sphi 0, %s157
    %s175 = sphi 0, %s175
    %s177 = sphi 0, %s175
    %s178 = sphi 0, %s177
    %s192 = sphi 0, %s178
    %s198 = sphi 0, %s200
    %s201 = sphi 0, %s198
    %s202 = sphi 0, %s201
    %s218 = sphi 0, %s202
  $region4: #{tpu_custom_call.1} parent=0 // loop_header_branch
    %18 = sbr.rel (%p16) target = $region8
  $region5: #{tpu_custom_call.1} parent=0 // loop_body
    %s20 = ssub.s32 %s15, 1
    %s21 = ssub.s32 %s15, 2
    %s22 = sadd.s32 %s15, 1
    %s23 = ssub.s32 %s15, %s22
    %p24 = scmp.eq.s32.totalorder %s23, 0
    %s26 = sadd.s32 %s25, 1
    %s27 = scalar_select %p24, %s25, %s26
    %p30 = pneg %p24
    %p31 = scmp.eq.s32.totalorder %s15, 1
    %p32 = por %p30, %p31
    %p33 = scmp.ne.s32.totalorder %s25, %s28
    %p34 = scmp.eq.s32.totalorder %s15, 0
    %p35 = por %p33, %p34
    %p36 = scmp.ne.s32.totalorder %s25, %s28
    %p37 = scmp.eq.s32.totalorder %s20, 1
    %p38 = por %p36, %p37
    %p39 = scmp.ne.s32.totalorder %s28, %s29
    %p40 = scmp.eq.s32.totalorder %s20, 0
    %p41 = por %p39, %p40
    %p42 = scmp.ne.s32.totalorder %s28, %s29
    %p43 = scmp.eq.s32.totalorder %s21, 1
    %p44 = por %p42, %p43
    %p46 = scmp.ne.s32.totalorder %s29, %s45
    %p47 = scmp.eq.s32.totalorder %s21, 0
    %p48 = por %p46, %p47
    %s50 = sadd.s32 %s49, 1
    %p53 = scmp.eq.s32.totalorder %s15, 1
    %p54 = scmp.ne.s32.totalorder %s49, %s51
    %p55 = scmp.eq.s32.totalorder %s15, 0
    %p56 = por %p54, %p55
    %p57 = scmp.ne.s32.totalorder %s49, %s51
    %p58 = scmp.eq.s32.totalorder %s20, 1
    %p59 = por %p57, %p58
    %p60 = scmp.ne.s32.totalorder %s51, %s52
    %p61 = scmp.eq.s32.totalorder %s20, 0
    %p62 = por %p60, %p61
    %p63 = scmp.ne.s32.totalorder %s51, %s52
    %p64 = scmp.eq.s32.totalorder %s21, 1
    %p65 = por %p63, %p64
    %p67 = scmp.ne.s32.totalorder %s52, %s66
    %p68 = scmp.eq.s32.totalorder %s21, 0
    %p69 = por %p67, %p68
    %s71 = sadd.s32 %s70, 1
    %p74 = scmp.eq.s32.totalorder %s15, 1
    %p75 = scmp.ne.s32.totalorder %s70, %s72
    %p76 = scmp.eq.s32.totalorder %s15, 0
    %p77 = por %p75, %p76
    %p78 = scmp.ne.s32.totalorder %s70, %s72
    %p79 = scmp.eq.s32.totalorder %s20, 1
    %p80 = por %p78, %p79
    %p81 = scmp.ne.s32.totalorder %s72, %s73
    %p82 = scmp.eq.s32.totalorder %s20, 0
    %p83 = por %p81, %p82
    %p84 = scmp.ne.s32.totalorder %s72, %s73
    %p85 = scmp.eq.s32.totalorder %s21, 1
    %p86 = por %p84, %p85
    %p88 = scmp.ne.s32.totalorder %s73, %s87
    %p89 = scmp.eq.s32.totalorder %s21, 0
    %p90 = por %p88, %p89
    %s92 = sadd.s32 %s91, 1
    %p95 = scmp.eq.s32.totalorder %s15, 1
    %p96 = scmp.ne.s32.totalorder %s91, %s93
    %p97 = scmp.eq.s32.totalorder %s15, 0
    %p98 = por %p96, %p97
    %p99 = scmp.ne.s32.totalorder %s91, %s93
    %p100 = scmp.eq.s32.totalorder %s20, 1
    %p101 = por %p99, %p100
    %p102 = scmp.ne.s32.totalorder %s93, %s94
    %p103 = scmp.eq.s32.totalorder %s20, 0
    %p104 = por %p102, %p103
    %p105 = scmp.ne.s32.totalorder %s93, %s94
    %p106 = scmp.eq.s32.totalorder %s21, 1
    %p107 = por %p105, %p106
    %p109 = scmp.ne.s32.totalorder %s94, %s108
    %p110 = scmp.eq.s32.totalorder %s21, 0
    %p111 = por %p109, %p110
    %s113 = sadd.s32 %s112, 1
    %p116 = scmp.eq.s32.totalorder %s15, 1
    %p117 = scmp.ne.s32.totalorder %s112, %s114
    %p118 = scmp.eq.s32.totalorder %s15, 0
    %p119 = por %p117, %p118
    %p120 = scmp.ne.s32.totalorder %s112, %s114
    %p121 = scmp.eq.s32.totalorder %s20, 1
    %p122 = por %p120, %p121
    %p123 = scmp.ne.s32.totalorder %s114, %s115
    %p124 = scmp.eq.s32.totalorder %s20, 0
    %p125 = por %p123, %p124
    %p126 = scmp.ne.s32.totalorder %s114, %s115
    %p127 = scmp.eq.s32.totalorder %s21, 1
    %p128 = por %p126, %p127
    %p130 = scmp.ne.s32.totalorder %s115, %s129
    %p131 = scmp.eq.s32.totalorder %s21, 0
    %p132 = por %p130, %p131
    %s134 = sadd.s32 %s133, 1
    %p137 = scmp.eq.s32.totalorder %s15, 1
    %p138 = scmp.ne.s32.totalorder %s133, %s135
    %p139 = scmp.eq.s32.totalorder %s15, 0
    %p140 = por %p138, %p139
    %p141 = scmp.ne.s32.totalorder %s133, %s135
    %p142 = scmp.eq.s32.totalorder %s20, 1
    %p143 = por %p141, %p142
    %p144 = scmp.ne.s32.totalorder %s135, %s136
    %p145 = scmp.eq.s32.totalorder %s20, 0
    %p146 = por %p144, %p145
    %p147 = scmp.ne.s32.totalorder %s135, %s136
    %p148 = scmp.eq.s32.totalorder %s21, 1
    %p149 = por %p147, %p148
    %p151 = scmp.ne.s32.totalorder %s136, %s150
    %p152 = scmp.eq.s32.totalorder %s21, 0
    %p153 = por %p151, %p152
    %s155 = sadd.s32 %s154, 1
    %p158 = scmp.eq.s32.totalorder %s15, 1
    %p159 = scmp.ne.s32.totalorder %s154, %s156
    %p160 = scmp.eq.s32.totalorder %s15, 0
    %p161 = por %p159, %p160
    %p162 = scmp.ne.s32.totalorder %s154, %s156
    %p163 = scmp.eq.s32.totalorder %s20, 1
    %p164 = por %p162, %p163
    %p165 = scmp.ne.s32.totalorder %s156, %s157
    %p166 = scmp.eq.s32.totalorder %s20, 0
    %p167 = por %p165, %p166
    %p168 = scmp.ne.s32.totalorder %s156, %s157
    %p169 = scmp.eq.s32.totalorder %s21, 1
    %p170 = por %p168, %p169
    %p172 = scmp.ne.s32.totalorder %s157, %s171
    %p173 = scmp.eq.s32.totalorder %s21, 0
    %p174 = por %p172, %p173
    %s176 = sadd.s32 %s175, 1
    %p179 = scmp.eq.s32.totalorder %s15, 1
    %p180 = scmp.ne.s32.totalorder %s175, %s177
    %p181 = scmp.eq.s32.totalorder %s15, 0
    %p182 = por %p180, %p181
    %p183 = scmp.ne.s32.totalorder %s175, %s177
    %p184 = scmp.eq.s32.totalorder %s20, 1
    %p185 = por %p183, %p184
    %p186 = scmp.ne.s32.totalorder %s177, %s178
    %p187 = scmp.eq.s32.totalorder %s20, 0
    %p188 = por %p186, %p187
    %p189 = scmp.ne.s32.totalorder %s177, %s178
    %p190 = scmp.eq.s32.totalorder %s21, 1
    %p191 = por %p189, %p190
    %p193 = scmp.ne.s32.totalorder %s178, %s192
    %p194 = scmp.eq.s32.totalorder %s21, 0
    %p195 = por %p193, %p194
    %s196 = ssub.s32 %s15, %s22
    %p197 = scmp.eq.s32.totalorder %s196, 0
    %s199 = sadd.s32 %s198, 1
    %s200 = scalar_select %p197, %s198, %s199
    %p203 = pneg %p197
    %p204 = scmp.eq.s32.totalorder %s15, 1
    %p205 = por %p203, %p204
    %p206 = scmp.ne.s32.totalorder %s198, %s201
    %p207 = scmp.eq.s32.totalorder %s15, 0
    %p208 = por %p206, %p207
    %p209 = scmp.ne.s32.totalorder %s198, %s201
    %p210 = scmp.eq.s32.totalorder %s20, 1
    %p211 = por %p209, %p210
    %p212 = scmp.ne.s32.totalorder %s201, %s202
    %p213 = scmp.eq.s32.totalorder %s20, 0
    %p214 = por %p212, %p213
    %p215 = scmp.ne.s32.totalorder %s201, %s202
    %p216 = scmp.eq.s32.totalorder %s21, 1
    %p217 = por %p215, %p216
    %p219 = scmp.ne.s32.totalorder %s202, %s218
    %p220 = scmp.eq.s32.totalorder %s21, 0
    %p221 = por %p219, %p220
    %p222 = scmp.le.s32.totalorder 1, %s15
    %p223 = scmp.lt.s32.totalorder %s15, 3
    %p224 = pnand %p222, %p223
    %p225 = pneg %p224
    // Predicated region
    $region9: #{tpu_custom_call.1} parent=5 // pred_check
      _
    $region10: #{tpu_custom_call.1} parent=5 // pred_check_branch
      %227 = sbr.rel (%p224) target = $region12
    $region11: #{tpu_custom_call.1} parent=5 // pred_region
      %s228 = ssub.s32 %s15, 1
      // Predicated region
      $region13: #{tpu_custom_call.1} parent=11 // pred_check
        %p229 = pneg %p62
      $region14: #{tpu_custom_call.1} parent=11 // pred_check_branch
        %231 = sbr.rel (%p229) target = $region16
      $region15: #{tpu_custom_call.1} parent=11 // pred_region
        _
      $region16: #{tpu_custom_call.1} parent=11 // pred_fallthru
        _
      // Predicated region
      $region17: #{tpu_custom_call.1} parent=11 // pred_check
        %p232 = pneg %p83
      $region18: #{tpu_custom_call.1} parent=11 // pred_check_branch
        %234 = sbr.rel (%p232) target = $region20
      $region19: #{tpu_custom_call.1} parent=11 // pred_region
        _
      $region20: #{tpu_custom_call.1} parent=11 // pred_fallthru
        _
      // Predicated region
      $region21: #{tpu_custom_call.1} parent=11 // pred_check
        %p235 = pneg %p104
      $region22: #{tpu_custom_call.1} parent=11 // pred_check_branch
        %237 = sbr.rel (%p235) target = $region24
      $region23: #{tpu_custom_call.1} parent=11 // pred_region
        _
      $region24: #{tpu_custom_call.1} parent=11 // pred_fallthru
        _
      // Predicated region
      $region25: #{tpu_custom_call.1} parent=11 // pred_check
        %p238 = pneg %p125
      $region26: #{tpu_custom_call.1} parent=11 // pred_check_branch
        %240 = sbr.rel (%p238) target = $region28
      $region27: #{tpu_custom_call.1} parent=11 // pred_region
        _
      $region28: #{tpu_custom_call.1} parent=11 // pred_fallthru
        _
      // Predicated region
      $region29: #{tpu_custom_call.1} parent=11 // pred_check
        %p241 = pneg %p146
      $region30: #{tpu_custom_call.1} parent=11 // pred_check_branch
        %243 = sbr.rel (%p241) target = $region32
      $region31: #{tpu_custom_call.1} parent=11 // pred_region
        _
      $region32: #{tpu_custom_call.1} parent=11 // pred_fallthru
        _
      // Predicated region
      $region33: #{tpu_custom_call.1} parent=11 // pred_check
        %p244 = pneg %p167
      $region34: #{tpu_custom_call.1} parent=11 // pred_check_branch
        %246 = sbr.rel (%p244) target = $region36
      $region35: #{tpu_custom_call.1} parent=11 // pred_region
        _
      $region36: #{tpu_custom_call.1} parent=11 // pred_fallthru
        _
      // Predicated region
      $region37: #{tpu_custom_call.1} parent=11 // pred_check
        %p247 = pneg %p188
      $region38: #{tpu_custom_call.1} parent=11 // pred_check_branch
        %249 = sbr.rel (%p247) target = $region40
      $region39: #{tpu_custom_call.1} parent=11 // pred_region
        _
      $region40: #{tpu_custom_call.1} parent=11 // pred_fallthru
        _
    $region12: #{tpu_custom_call.1} parent=5 // pred_fallthru
      _
    %p250 = scmp.lt.s32.totalorder %s15, 2
    // Predicated region
    $region41: #{tpu_custom_call.1} parent=5 // pred_check
      %p251 = pneg %p250
    $region42: #{tpu_custom_call.1} parent=5 // pred_check_branch
      %253 = sbr.rel (%p251) target = $region44
    $region43: #{tpu_custom_call.1} parent=5 // pred_region
      // Predicated region
      $region45: #{tpu_custom_call.1} parent=43 // pred_check
        %p254 = pneg %p35
      $region46: #{tpu_custom_call.1} parent=43 // pred_check_branch
        %256 = sbr.rel (%p254) target = $region48
      $region47: #{tpu_custom_call.1} parent=43 // pred_region
        %p257 = scmp.lt.s32.totalorder %s15, 1
        %s258 = scalar_select %p257, %s15, 1
        %s259 = smul.addr %s258, 32
        %s260 = smul.addr %s259, 8
        %s261 = scalar_lea.vmem %s0, %s260
      $region48: #{tpu_custom_call.1} parent=43 // pred_fallthru
        _
    $region44: #{tpu_custom_call.1} parent=5 // pred_fallthru
      _
    %p262 = scmp.le.s32.totalorder 1, %s15
    %p263 = scmp.lt.s32.totalorder %s15, 3
    %p264 = pnand %p262, %p263
    %p265 = pneg %p264
    // Predicated region
    $region49: #{tpu_custom_call.1} parent=5 // pred_check
      _
    $region50: #{tpu_custom_call.1} parent=5 // pred_check_branch
      %267 = sbr.rel (%p264) target = $region52
    $region51: #{tpu_custom_call.1} parent=5 // pred_region
      %s268 = ssub.s32 %s15, 1
      %p269 = scmp.lt.s32.totalorder %s20, 1
      %s270 = scalar_select %p269, %s20, 1
      %s271 = smul.addr %s270, 32
      %s272 = smul.addr %s271, 8
      %s273 = scalar_lea.vmem %s0, %s272
      %p274 = pneg %p41
      %p275 = pneg %p38
      %p276 = pneg %p62
      %p277 = pneg %p59
      %p278 = pneg %p83
      %p279 = pneg %p80
      %p280 = pneg %p104
      %p281 = pneg %p101
      %p282 = pneg %p125
      %p283 = pneg %p122
      %p284 = pneg %p146
      %p285 = pneg %p143
      %p286 = pneg %p167
      %p287 = pneg %p164
      %p288 = pneg %p188
      %p289 = pneg %p185
      %p290 = pneg %p214
      %p291 = pneg %p211
      %p292 = scmp.lt.s32.totalorder %s20, 1
      %s293 = scalar_select %p292, %s20, 1
      %s294 = smul.addr %s293, 32
      %s295 = smul.addr %s294, 8
      %s296 = scalar_lea.vmem %s8, %s295
      %p297 = scmp.lt.s32.totalorder %s20, 1
      %s298 = scalar_select %p297, %s20, 1
      %s299 = smul.addr %s298, 32
      %s300 = smul.addr %s299, 8
      %s301 = scalar_lea.vmem %s0, %s300
      %p302 = scmp.lt.s32.totalorder %s20, 1
      %s303 = scalar_select %p302, %s20, 1
      %s304 = smul.addr %s303, 32
      %s305 = smul.addr %s304, 8
      %s306 = scalar_lea.vmem %s8, %s305
      %v308 = vld [vmem:[%s301] sm:$0xff]
      %v309 = vld [vmem:[%s301 + $0x8] sm:$0xff]
      %v310 = vld [vmem:[%s301 + $0x10] sm:$0xff]
      %v311 = vld [vmem:[%s301 + $0x18] sm:$0xff]
      %v312 = vld [vmem:[%s301 + $0x20] sm:$0xff]
      %v313 = vld [vmem:[%s301 + $0x28] sm:$0xff]
      %v314 = vld [vmem:[%s301 + $0x30] sm:$0xff]
      %v315 = vld [vmem:[%s301 + $0x38] sm:$0xff]
      %v316 = vld [vmem:[%s301 + $0x40] sm:$0xff]
      %v317 = vld [vmem:[%s301 + $0x48] sm:$0xff]
      %v318 = vld [vmem:[%s301 + $0x50] sm:$0xff]
      %v319 = vld [vmem:[%s301 + $0x58] sm:$0xff]
      %v320 = vld [vmem:[%s301 + $0x60] sm:$0xff]
      %v321 = vld [vmem:[%s301 + $0x68] sm:$0xff]
      %v322 = vld [vmem:[%s301 + $0x70] sm:$0xff]
      %v323 = vld [vmem:[%s301 + $0x78] sm:$0xff]
      %v324 = vld [vmem:[%s301 + $0x80] sm:$0xff]
      %v325 = vld [vmem:[%s301 + $0x88] sm:$0xff]
      %v326 = vld [vmem:[%s301 + $0x90] sm:$0xff]
      %v327 = vld [vmem:[%s301 + $0x98] sm:$0xff]
      %v328 = vld [vmem:[%s301 + $0xa0] sm:$0xff]
      %v329 = vld [vmem:[%s301 + $0xa8] sm:$0xff]
      %v330 = vld [vmem:[%s301 + $0xb0] sm:$0xff]
      %v331 = vld [vmem:[%s301 + $0xb8] sm:$0xff]
      %v332 = vld [vmem:[%s301 + $0xc0] sm:$0xff]
      %v333 = vld [vmem:[%s301 + $0xc8] sm:$0xff]
      %v334 = vld [vmem:[%s301 + $0xd0] sm:$0xff]
      %v335 = vld [vmem:[%s301 + $0xd8] sm:$0xff]
      %v336 = vld [vmem:[%s301 + $0xe0] sm:$0xff]
      %v337 = vld [vmem:[%s301 + $0xe8] sm:$0xff]
      %v338 = vld [vmem:[%s301 + $0xf0] sm:$0xff]
      %v339 = vld [vmem:[%s301 + $0xf8] sm:$0xff]
      %v340 = vpack.c.bf16 %v309, %v308
      %v341 = vpack.c.bf16 %v311, %v310
      %v342 = vpack.c.bf16 %v313, %v312
      %v343 = vpack.c.bf16 %v315, %v314
      %v344 = vpack.c.bf16 %v317, %v316
      %v345 = vpack.c.bf16 %v319, %v318
      %v346 = vpack.c.bf16 %v321, %v320
      %v347 = vpack.c.bf16 %v323, %v322
      %v348 = vpack.c.bf16 %v325, %v324
      %v349 = vpack.c.bf16 %v327, %v326
      %v350 = vpack.c.bf16 %v329, %v328
      %v351 = vpack.c.bf16 %v331, %v330
      %v352 = vpack.c.bf16 %v333, %v332
      %v353 = vpack.c.bf16 %v335, %v334
      %v354 = vpack.c.bf16 %v337, %v336
      %v355 = vpack.c.bf16 %v339, %v338
      %v356 = vld [vmem:[%s1] sm:$0xf]
      %v357 = vld [vmem:[%s1 + $0x4] sm:$0xf]
      %v358 = vld [vmem:[%s1 + $0x8] sm:$0xf]
      %v359 = vld [vmem:[%s1 + $0xc] sm:$0xf]
      %v360 = vld [vmem:[%s1 + $0x10] sm:$0xf]
      %v361 = vld [vmem:[%s1 + $0x14] sm:$0xf]
      %v362 = vld [vmem:[%s1 + $0x18] sm:$0xf]
      %v363 = vld [vmem:[%s1 + $0x1c] sm:$0xf]
      %v364 = vld [vmem:[%s2] sm:$0x1]
      %v366 = vlaneseq
      %v367 = vshrl.u32 %v366, 7
      %v368 = vsub.s32 0, %v367
      %v369 = vrot.slane %v364, %v368
      %v379 = vunpack.c.l.b16 %v356
      %v380 = vunpack.c.l.b16 %v357
      %v381 = vunpack.c.l.b16 %v358
      %v382 = vunpack.c.l.b16 %v359
      %v383 = vunpack.c.l.b16 %v360
      %v384 = vunpack.c.l.b16 %v361
      %v385 = vunpack.c.l.b16 %v362
      %v386 = vunpack.c.l.b16 %v363
      %v387 = vpack.c.b16 %v380, %v379
      %v388 = vpack.c.b16 %v382, %v381
      %v389 = vpack.c.b16 %v384, %v383
      %v390 = vpack.c.b16 %v386, %v385
      %vm395 = vcmask 523264
      %v397 = vsel %vm395, %v340, 0
      %v400 = vsel %vm395, %v341, 0
      %v403 = vsel %vm395, %v342, 0
      %v406 = vsel %vm395, %v343, 0
      %v409 = vsel %vm395, %v344, 0
      %v412 = vsel %vm395, %v345, 0
      %v415 = vsel %vm395, %v346, 0
      %v418 = vsel %vm395, %v347, 0
      %v421 = vsel %vm395, %v348, 0
      %v424 = vsel %vm395, %v349, 0
      %v427 = vsel %vm395, %v350, 0
      %v430 = vsel %vm395, %v351, 0
      %v433 = vsel %vm395, %v352, 0
      %v436 = vsel %vm395, %v353, 0
      %v439 = vsel %vm395, %v354, 0
      %v442 = vsel %vm395, %v355, 0
      %444 = vmatprep.subr.bf16.mxu0 0
      %445 = vmatpush1.bf16.msra.mxu0 %v387
      %446 = vmatprep.subr.bf16.mxu0 0
      %447 = vmatpush1.bf16.msra.mxu0 %v388
      %448 = vmatprep.subr.bf16.mxu0 0
      %449 = vmatpush1.bf16.msra.mxu0 %v389
      %450 = vmatprep.subr.bf16.mxu0 0
      %451 = vmatpush1.bf16.msra.mxu0 %v390
      %452 = vmatprep.subr.bf16.mxu0 0
      %453 = vmatpush1.bf16.msra.mxu0 0
      %454 = vmatprep.subr.bf16.mxu0 0
      %455 = vmatpush1.bf16.msra.mxu0 0
      %456 = vmatprep.subr.bf16.mxu0 0
      %457 = vmatpush1.bf16.msra.mxu0 0
      %458 = vmatprep.subr.bf16.mxu0 0
      %459 = vmatpush1.bf16.msra.mxu0 0
      %460 = vmatprep.subr.bf16.mxu0 0
      %461 = vmatpush1.bf16.msra.mxu0 0
      %462 = vmatprep.subr.bf16.mxu0 0
      %463 = vmatpush1.bf16.msra.mxu0 0
      %464 = vmatprep.subr.bf16.mxu0 0
      %465 = vmatpush1.bf16.msra.mxu0 0
      %466 = vmatprep.subr.bf16.mxu0 0
      %467 = vmatpush1.bf16.msra.mxu0 0
      %468 = vmatprep.subr.bf16.mxu0 0
      %469 = vmatpush1.bf16.msra.mxu0 0
      %470 = vmatprep.subr.bf16.mxu0 0
      %471 = vmatpush1.bf16.msra.mxu0 0
      %472 = vmatprep.subr.bf16.mxu0 0
      %473 = vmatpush1.bf16.msra.mxu0 0
      %474 = vmatprep.subr.bf16.mxu0 0
      %475 = vmatpush1.bf16.msra.mxu0 0
      %476 = vmatprep.mubr.bf16.mxu0 0
      %477 = vmatmul.mubr.bf16.gmra.mrb[0].mxu0 %v397
      %v478 = vpop.f32.mrb[0].mxu0
      %v479 = vadd.f32 %v369, %v478
      %v480 = vpop.f32.mrb[0].mxu0
      %v481 = vpop.f32.mrb[0].mxu0
      %v482 = vadd.f32 %v369, %v481
      %v483 = vpop.f32.mrb[0].mxu0
      %484 = vmatprep.mubr.bf16.mxu0 0
      %485 = vmatmul.mubr.bf16.gmra.mrb[0].mxu0 %v400
      %v486 = vpop.f32.mrb[0].mxu0
      %v487 = vadd.f32 %v369, %v486
      %v488 = vpop.f32.mrb[0].mxu0
      %v489 = vpop.f32.mrb[0].mxu0
      %v490 = vadd.f32 %v369, %v489
      %v491 = vpop.f32.mrb[0].mxu0
      %492 = vmatprep.mubr.bf16.mxu0 0
      %493 = vmatmul.mubr.bf16.gmra.mrb[0].mxu0 %v403
      %v494 = vpop.f32.mrb[0].mxu0
      %v495 = vadd.f32 %v369, %v494
      %v496 = vpop.f32.mrb[0].mxu0
      %v497 = vpop.f32.mrb[0].mxu0
      %v498 = vadd.f32 %v369, %v497
      %v499 = vpop.f32.mrb[0].mxu0
      %500 = vmatprep.mubr.bf16.mxu0 0
      %501 = vmatmul.mubr.bf16.gmra.mrb[0].mxu0 %v406
      %v502 = vpop.f32.mrb[0].mxu0
      %v503 = vadd.f32 %v369, %v502
      %v504 = vpop.f32.mrb[0].mxu0
      %v505 = vpop.f32.mrb[0].mxu0
      %v506 = vadd.f32 %v369, %v505
      %v507 = vpop.f32.mrb[0].mxu0
      %508 = vmatprep.mubr.bf16.mxu0 0
      %509 = vmatmul.mubr.bf16.gmra.mrb[0].mxu0 %v409
      %v510 = vpop.f32.mrb[0].mxu0
      %v511 = vadd.f32 %v369, %v510
      %v512 = vpop.f32.mrb[0].mxu0
      %v513 = vpop.f32.mrb[0].mxu0
      %v514 = vadd.f32 %v369, %v513
      %v515 = vpop.f32.mrb[0].mxu0
      %516 = vmatprep.mubr.bf16.mxu0 0
      %517 = vmatmul.mubr.bf16.gmra.mrb[0].mxu0 %v412
      %v518 = vpop.f32.mrb[0].mxu0
      %v519 = vadd.f32 %v369, %v518
      %v520 = vpop.f32.mrb[0].mxu0
      %v521 = vpop.f32.mrb[0].mxu0
      %v522 = vadd.f32 %v369, %v521
      %v523 = vpop.f32.mrb[0].mxu0
      %524 = vmatprep.mubr.bf16.mxu0 0
      %525 = vmatmul.mubr.bf16.gmra.mrb[0].mxu0 %v415
      %v526 = vpop.f32.mrb[0].mxu0
      %v527 = vadd.f32 %v369, %v526
      %v528 = vpop.f32.mrb[0].mxu0
      %v529 = vpop.f32.mrb[0].mxu0
      %v530 = vadd.f32 %v369, %v529
      %v531 = vpop.f32.mrb[0].mxu0
      %532 = vmatprep.mubr.bf16.mxu0 0
      %533 = vmatmul.mubr.bf16.gmra.mrb[0].mxu0 %v418
      %v534 = vpop.f32.mrb[0].mxu0
      %v535 = vadd.f32 %v369, %v534
      %v536 = vpop.f32.mrb[0].mxu0
      %v537 = vpop.f32.mrb[0].mxu0
      %v538 = vadd.f32 %v369, %v537
      %v539 = vpop.f32.mrb[0].mxu0
      %540 = vmatprep.mubr.bf16.mxu0 0
      %541 = vmatmul.mubr.bf16.gmra.mrb[0].mxu0 %v421
      %v542 = vpop.f32.mrb[0].mxu0
      %v543 = vadd.f32 %v369, %v542
      %v544 = vpop.f32.mrb[0].mxu0
      %v545 = vpop.f32.mrb[0].mxu0
      %v546 = vadd.f32 %v369, %v545
      %v547 = vpop.f32.mrb[0].mxu0
      %548 = vmatprep.mubr.bf16.mxu0 0
      %549 = vmatmul.mubr.bf16.gmra.mrb[0].mxu0 %v424
      %v550 = vpop.f32.mrb[0].mxu0
      %v551 = vadd.f32 %v369, %v550
      %v552 = vpop.f32.mrb[0].mxu0
      %v553 = vpop.f32.mrb[0].mxu0
      %v554 = vadd.f32 %v369, %v553
      %v555 = vpop.f32.mrb[0].mxu0
      %556 = vmatprep.mubr.bf16.mxu0 0
      %557 = vmatmul.mubr.bf16.gmra.mrb[0].mxu0 %v427
      %v558 = vpop.f32.mrb[0].mxu0
      %v559 = vadd.f32 %v369, %v558
      %v560 = vpop.f32.mrb[0].mxu0
      %v561 = vpop.f32.mrb[0].mxu0
      %v562 = vadd.f32 %v369, %v561
      %v563 = vpop.f32.mrb[0].mxu0
      %564 = vmatprep.mubr.bf16.mxu0 0
      %565 = vmatmul.mubr.bf16.gmra.mrb[0].mxu0 %v430
      %v566 = vpop.f32.mrb[0].mxu0
      %v567 = vadd.f32 %v369, %v566
      %v568 = vpop.f32.mrb[0].mxu0
      %v569 = vpop.f32.mrb[0].mxu0
      %v570 = vadd.f32 %v369, %v569
      %v571 = vpop.f32.mrb[0].mxu0
      %572 = vmatprep.mubr.bf16.mxu0 0
      %573 = vmatmul.mubr.bf16.gmra.mrb[0].mxu0 %v433
      %v574 = vpop.f32.mrb[0].mxu0
      %v575 = vadd.f32 %v369, %v574
      %v576 = vpop.f32.mrb[0].mxu0
      %v577 = vpop.f32.mrb[0].mxu0
      %v578 = vadd.f32 %v369, %v577
      %v579 = vpop.f32.mrb[0].mxu0
      %580 = vmatprep.mubr.bf16.mxu0 0
      %581 = vmatmul.mubr.bf16.gmra.mrb[0].mxu0 %v436
      %v582 = vpop.f32.mrb[0].mxu0
      %v583 = vadd.f32 %v369, %v582
      %v584 = vpop.f32.mrb[0].mxu0
      %v585 = vpop.f32.mrb[0].mxu0
      %v586 = vadd.f32 %v369, %v585
      %v587 = vpop.f32.mrb[0].mxu0
      %588 = vmatprep.mubr.bf16.mxu0 0
      %589 = vmatmul.mubr.bf16.gmra.mrb[0].mxu0 %v439
      %v590 = vpop.f32.mrb[0].mxu0
      %v591 = vadd.f32 %v369, %v590
      %v592 = vpop.f32.mrb[0].mxu0
      %v593 = vpop.f32.mrb[0].mxu0
      %v594 = vadd.f32 %v369, %v593
      %v595 = vpop.f32.mrb[0].mxu0
      %596 = vmatprep.mubr.bf16.mxu0 0
      %597 = vmatmul.mubr.bf16.gmra.mrb[0].mxu0 %v442
      %v598 = vpop.f32.mrb[0].mxu0
      %v599 = vadd.f32 %v369, %v598
      %v600 = vpop.f32.mrb[0].mxu0
      %v601 = vpop.f32.mrb[0].mxu0
      %v602 = vadd.f32 %v369, %v601
      %v603 = vpop.f32.mrb[0].mxu0
      %604 = vdwg.mxu0
      %v605 = vld [vmem:[%s3] sm:$0xf]
      %v606 = vld [vmem:[%s3 + $0x4] sm:$0xf]
      %v607 = vld [vmem:[%s3 + $0x8] sm:$0xf]
      %v608 = vld [vmem:[%s3 + $0xc] sm:$0xf]
      %v609 = vld [vmem:[%s3 + $0x10] sm:$0xf]
      %v610 = vld [vmem:[%s3 + $0x14] sm:$0xf]
      %v611 = vld [vmem:[%s3 + $0x18] sm:$0xf]
      %v612 = vld [vmem:[%s3 + $0x1c] sm:$0xf]
      %v613 = vld [vmem:[%s4] sm:$0x1]
      %v615 = vlaneseq
      %v616 = vshrl.u32 %v615, 7
      %v617 = vsub.s32 0, %v616
      %v618 = vrot.slane %v613, %v617
      %v628 = vunpack.c.l.b16 %v605
      %v629 = vunpack.c.l.b16 %v606
      %v630 = vunpack.c.l.b16 %v607
      %v631 = vunpack.c.l.b16 %v608
      %v632 = vunpack.c.l.b16 %v609
      %v633 = vunpack.c.l.b16 %v610
      %v634 = vunpack.c.l.b16 %v611
      %v635 = vunpack.c.l.b16 %v612
      %v636 = vpack.c.b16 %v629, %v628
      %v637 = vpack.c.b16 %v631, %v630
      %v638 = vpack.c.b16 %v633, %v632
      %v639 = vpack.c.b16 %v635, %v634
      %644 = vmatprep.subr.bf16.mxu0 0
      %645 = vmatpush1.bf16.msra.mxu0 %v636
      %646 = vmatprep.subr.bf16.mxu0 0
      %647 = vmatpush1.bf16.msra.mxu0 %v637
      %648 = vmatprep.subr.bf16.mxu0 0
      %649 = vmatpush1.bf16.msra.mxu0 %v638
      %650 = vmatprep.subr.bf16.mxu0 0
      %651 = vmatpush1.bf16.msra.mxu0 %v639
      %652 = vmatprep.subr.bf16.mxu0 0
      %653 = vmatpush1.bf16.msra.mxu0 0
      %654 = vmatprep.subr.bf16.mxu0 0
      %655 = vmatpush1.bf16.msra.mxu0 0
      %656 = vmatprep.subr.bf16.mxu0 0
      %657 = vmatpush1.bf16.msra.mxu0 0
      %658 = vmatprep.subr.bf16.mxu0 0
      %659 = vmatpush1.bf16.msra.mxu0 0
      %660 = vmatprep.subr.bf16.mxu0 0
      %661 = vmatpush1.bf16.msra.mxu0 0
      %662 = vmatprep.subr.bf16.mxu0 0
      %663 = vmatpush1.bf16.msra.mxu0 0
      %664 = vmatprep.subr.bf16.mxu0 0
      %665 = vmatpush1.bf16.msra.mxu0 0
      %666 = vmatprep.subr.bf16.mxu0 0
      %667 = vmatpush1.bf16.msra.mxu0 0
      %668 = vmatprep.subr.bf16.mxu0 0
      %669 = vmatpush1.bf16.msra.mxu0 0
      %670 = vmatprep.subr.bf16.mxu0 0
      %671 = vmatpush1.bf16.msra.mxu0 0
      %672 = vmatprep.subr.bf16.mxu0 0
      %673 = vmatpush1.bf16.msra.mxu0 0
      %674 = vmatprep.subr.bf16.mxu0 0
      %675 = vmatpush1.bf16.msra.mxu0 0
      %676 = vmatprep.mubr.bf16.mxu0 0
      %677 = vmatmul.mubr.bf16.gmra.mrb[0].mxu0 %v397
      %v678 = vpop.f32.mrb[0].mxu0
      %v679 = vadd.f32 %v618, %v678
      %v680 = vpop.f32.mrb[0].mxu0
      %v681 = vpop.f32.mrb[0].mxu0
      %v682 = vadd.f32 %v618, %v681
      %v683 = vpop.f32.mrb[0].mxu0
      %684 = vmatprep.mubr.bf16.mxu0 0
      %685 = vmatmul.mubr.bf16.gmra.mrb[0].mxu0 %v400
      %v686 = vpop.f32.mrb[0].mxu0
      %v687 = vadd.f32 %v618, %v686
      %v688 = vpop.f32.mrb[0].mxu0
      %v689 = vpop.f32.mrb[0].mxu0
      %v690 = vadd.f32 %v618, %v689
      %v691 = vpop.f32.mrb[0].mxu0
      %692 = vmatprep.mubr.bf16.mxu0 0
      %693 = vmatmul.mubr.bf16.gmra.mrb[0].mxu0 %v403
      %v694 = vpop.f32.mrb[0].mxu0
      %v695 = vadd.f32 %v618, %v694
      %v696 = vpop.f32.mrb[0].mxu0
      %v697 = vpop.f32.mrb[0].mxu0
      %v698 = vadd.f32 %v618, %v697
      %v699 = vpop.f32.mrb[0].mxu0
      %700 = vmatprep.mubr.bf16.mxu0 0
      %701 = vmatmul.mubr.bf16.gmra.mrb[0].mxu0 %v406
      %v702 = vpop.f32.mrb[0].mxu0
      %v703 = vadd.f32 %v618, %v702
      %v704 = vpop.f32.mrb[0].mxu0
      %v705 = vpop.f32.mrb[0].mxu0
      %v706 = vadd.f32 %v618, %v705
      %v707 = vpop.f32.mrb[0].mxu0
      %708 = vmatprep.mubr.bf16.mxu0 0
      %709 = vmatmul.mubr.bf16.gmra.mrb[0].mxu0 %v409
      %v710 = vpop.f32.mrb[0].mxu0
      %v711 = vadd.f32 %v618, %v710
      %v712 = vpop.f32.mrb[0].mxu0
      %v713 = vpop.f32.mrb[0].mxu0
      %v714 = vadd.f32 %v618, %v713
      %v715 = vpop.f32.mrb[0].mxu0
      %716 = vmatprep.mubr.bf16.mxu0 0
      %717 = vmatmul.mubr.bf16.gmra.mrb[0].mxu0 %v412
      %v718 = vpop.f32.mrb[0].mxu0
      %v719 = vadd.f32 %v618, %v718
      %v720 = vpop.f32.mrb[0].mxu0
      %v721 = vpop.f32.mrb[0].mxu0
      %v722 = vadd.f32 %v618, %v721
      %v723 = vpop.f32.mrb[0].mxu0
      %724 = vmatprep.mubr.bf16.mxu0 0
      %725 = vmatmul.mubr.bf16.gmra.mrb[0].mxu0 %v415
      %v726 = vpop.f32.mrb[0].mxu0
      %v727 = vadd.f32 %v618, %v726
      %v728 = vpop.f32.mrb[0].mxu0
      %v729 = vpop.f32.mrb[0].mxu0
      %v730 = vadd.f32 %v618, %v729
      %v731 = vpop.f32.mrb[0].mxu0
      %732 = vmatprep.mubr.bf16.mxu0 0
      %733 = vmatmul.mubr.bf16.gmra.mrb[0].mxu0 %v418
      %v734 = vpop.f32.mrb[0].mxu0
      %v735 = vadd.f32 %v618, %v734
      %v736 = vpop.f32.mrb[0].mxu0
      %v737 = vpop.f32.mrb[0].mxu0
      %v738 = vadd.f32 %v618, %v737
      %v739 = vpop.f32.mrb[0].mxu0
      %740 = vmatprep.mubr.bf16.mxu0 0
      %741 = vmatmul.mubr.bf16.gmra.mrb[0].mxu0 %v421
      %v742 = vpop.f32.mrb[0].mxu0
      %v743 = vadd.f32 %v618, %v742
      %v744 = vpop.f32.mrb[0].mxu0
      %v745 = vpop.f32.mrb[0].mxu0
      %v746 = vadd.f32 %v618, %v745
      %v747 = vpop.f32.mrb[0].mxu0
      %748 = vmatprep.mubr.bf16.mxu0 0
      %749 = vmatmul.mubr.bf16.gmra.mrb[0].mxu0 %v424
      %v750 = vpop.f32.mrb[0].mxu0
      %v751 = vadd.f32 %v618, %v750
      %v752 = vpop.f32.mrb[0].mxu0
      %v753 = vpop.f32.mrb[0].mxu0
      %v754 = vadd.f32 %v618, %v753
      %v755 = vpop.f32.mrb[0].mxu0
      %756 = vmatprep.mubr.bf16.mxu0 0
      %757 = vmatmul.mubr.bf16.gmra.mrb[0].mxu0 %v427
      %v758 = vpop.f32.mrb[0].mxu0
      %v759 = vadd.f32 %v618, %v758
      %v760 = vpop.f32.mrb[0].mxu0
      %v761 = vpop.f32.mrb[0].mxu0
      %v762 = vadd.f32 %v618, %v761
      %v763 = vpop.f32.mrb[0].mxu0
      %764 = vmatprep.mubr.bf16.mxu0 0
      %765 = vmatmul.mubr.bf16.gmra.mrb[0].mxu0 %v430
      %v766 = vpop.f32.mrb[0].mxu0
      %v767 = vadd.f32 %v618, %v766
      %v768 = vpop.f32.mrb[0].mxu0
      %v769 = vpop.f32.mrb[0].mxu0
      %v770 = vadd.f32 %v618, %v769
      %v771 = vpop.f32.mrb[0].mxu0
      %772 = vmatprep.mubr.bf16.mxu0 0
      %773 = vmatmul.mubr.bf16.gmra.mrb[0].mxu0 %v433
      %v774 = vpop.f32.mrb[0].mxu0
      %v775 = vadd.f32 %v618, %v774
      %v776 = vpop.f32.mrb[0].mxu0
      %v777 = vpop.f32.mrb[0].mxu0
      %v778 = vadd.f32 %v618, %v777
      %v779 = vpop.f32.mrb[0].mxu0
      %780 = vmatprep.mubr.bf16.mxu0 0
      %781 = vmatmul.mubr.bf16.gmra.mrb[0].mxu0 %v436
      %v782 = vpop.f32.mrb[0].mxu0
      %v783 = vadd.f32 %v618, %v782
      %v784 = vpop.f32.mrb[0].mxu0
      %v785 = vpop.f32.mrb[0].mxu0
      %v786 = vadd.f32 %v618, %v785
      %v787 = vpop.f32.mrb[0].mxu0
      %788 = vmatprep.mubr.bf16.mxu0 0
      %789 = vmatmul.mubr.bf16.gmra.mrb[0].mxu0 %v439
      %v790 = vpop.f32.mrb[0].mxu0
      %v791 = vadd.f32 %v618, %v790
      %v792 = vpop.f32.mrb[0].mxu0
      %v793 = vpop.f32.mrb[0].mxu0
      %v794 = vadd.f32 %v618, %v793
      %v795 = vpop.f32.mrb[0].mxu0
      %796 = vmatprep.mubr.bf16.mxu0 0
      %797 = vmatmul.mubr.bf16.gmra.mrb[0].mxu0 %v442
      %v798 = vpop.f32.mrb[0].mxu0
      %v799 = vadd.f32 %v618, %v798
      %v800 = vpop.f32.mrb[0].mxu0
      %v801 = vpop.f32.mrb[0].mxu0
      %v802 = vadd.f32 %v618, %v801
      %v803 = vpop.f32.mrb[0].mxu0
      %804 = vdwg.mxu0
      %v805 = vld [vmem:[%s5] sm:$0xf]
      %v806 = vld [vmem:[%s5 + $0x4] sm:$0xf]
      %v807 = vld [vmem:[%s5 + $0x8] sm:$0xf]
      %v808 = vld [vmem:[%s5 + $0xc] sm:$0xf]
      %v809 = vld [vmem:[%s5 + $0x10] sm:$0xf]
      %v810 = vld [vmem:[%s5 + $0x14] sm:$0xf]
      %v811 = vld [vmem:[%s5 + $0x18] sm:$0xf]
      %v812 = vld [vmem:[%s5 + $0x1c] sm:$0xf]
      %v813 = vld [vmem:[%s6] sm:$0x1]
      %v815 = vlaneseq
      %v816 = vshrl.u32 %v815, 7
      %v817 = vsub.s32 0, %v816
      %v818 = vrot.slane %v813, %v817
      %v828 = vunpack.c.l.b16 %v805
      %v829 = vunpack.c.l.b16 %v806
      %v830 = vunpack.c.l.b16 %v807
      %v831 = vunpack.c.l.b16 %v808
      %v832 = vunpack.c.l.b16 %v809
      %v833 = vunpack.c.l.b16 %v810
      %v834 = vunpack.c.l.b16 %v811
      %v835 = vunpack.c.l.b16 %v812
      %v836 = vpack.c.b16 %v829, %v828
      %v837 = vpack.c.b16 %v831, %v830
      %v838 = vpack.c.b16 %v833, %v832
      %v839 = vpack.c.b16 %v835, %v834
      %844 = vmatprep.subr.bf16.mxu0 0
      %845 = vmatpush1.bf16.msra.mxu0 %v836
      %846 = vmatprep.subr.bf16.mxu0 0
      %847 = vmatpush1.bf16.msra.mxu0 %v837
      %848 = vmatprep.subr.bf16.mxu0 0
      %849 = vmatpush1.bf16.msra.mxu0 %v838
      %850 = vmatprep.subr.bf16.mxu0 0
      %851 = vmatpush1.bf16.msra.mxu0 %v839
      %852 = vmatprep.subr.bf16.mxu0 0
      %853 = vmatpush1.bf16.msra.mxu0 0
      %854 = vmatprep.subr.bf16.mxu0 0
      %855 = vmatpush1.bf16.msra.mxu0 0
      %856 = vmatprep.subr.bf16.mxu0 0
      %857 = vmatpush1.bf16.msra.mxu0 0
      %858 = vmatprep.subr.bf16.mxu0 0
      %859 = vmatpush1.bf16.msra.mxu0 0
      %860 = vmatprep.subr.bf16.mxu0 0
      %861 = vmatpush1.bf16.msra.mxu0 0
      %862 = vmatprep.subr.bf16.mxu0 0
      %863 = vmatpush1.bf16.msra.mxu0 0
      %864 = vmatprep.subr.bf16.mxu0 0
      %865 = vmatpush1.bf16.msra.mxu0 0
      %866 = vmatprep.subr.bf16.mxu0 0
      %867 = vmatpush1.bf16.msra.mxu0 0
      %868 = vmatprep.subr.bf16.mxu0 0
      %869 = vmatpush1.bf16.msra.mxu0 0
      %870 = vmatprep.subr.bf16.mxu0 0
      %871 = vmatpush1.bf16.msra.mxu0 0
      %872 = vmatprep.subr.bf16.mxu0 0
      %873 = vmatpush1.bf16.msra.mxu0 0
      %874 = vmatprep.subr.bf16.mxu0 0
      %875 = vmatpush1.bf16.msra.mxu0 0
      %876 = vmatprep.mubr.bf16.mxu0 0
      %877 = vmatmul.mubr.bf16.gmra.mrb[0].mxu0 %v397
      %v878 = vpop.f32.mrb[0].mxu0
      %v879 = vadd.f32 %v818, %v878
      %v880 = vpop.f32.mrb[0].mxu0
      %v881 = vpop.f32.mrb[0].mxu0
      %v882 = vadd.f32 %v818, %v881
      %v883 = vpop.f32.mrb[0].mxu0
      %884 = vmatprep.mubr.bf16.mxu0 0
      %885 = vmatmul.mubr.bf16.gmra.mrb[0].mxu0 %v400
      %v886 = vpop.f32.mrb[0].mxu0
      %v887 = vadd.f32 %v818, %v886
      %v888 = vpop.f32.mrb[0].mxu0
      %v889 = vpop.f32.mrb[0].mxu0
      %v890 = vadd.f32 %v818, %v889
      %v891 = vpop.f32.mrb[0].mxu0
      %892 = vmatprep.mubr.bf16.mxu0 0
      %893 = vmatmul.mubr.bf16.gmra.mrb[0].mxu0 %v403
      %v894 = vpop.f32.mrb[0].mxu0
      %v895 = vadd.f32 %v818, %v894
      %v896 = vpop.f32.mrb[0].mxu0
      %v897 = vpop.f32.mrb[0].mxu0
      %v898 = vadd.f32 %v818, %v897
      %v899 = vpop.f32.mrb[0].mxu0
      %900 = vmatprep.mubr.bf16.mxu0 0
      %901 = vmatmul.mubr.bf16.gmra.mrb[0].mxu0 %v406
      %v902 = vpop.f32.mrb[0].mxu0
      %v903 = vadd.f32 %v818, %v902
      %v904 = vpop.f32.mrb[0].mxu0
      %v905 = vpop.f32.mrb[0].mxu0
      %v906 = vadd.f32 %v818, %v905
      %v907 = vpop.f32.mrb[0].mxu0
      %908 = vmatprep.mubr.bf16.mxu0 0
      %909 = vmatmul.mubr.bf16.gmra.mrb[0].mxu0 %v409
      %v910 = vpop.f32.mrb[0].mxu0
      %v911 = vadd.f32 %v818, %v910
      %v912 = vpop.f32.mrb[0].mxu0
      %v913 = vpop.f32.mrb[0].mxu0
      %v914 = vadd.f32 %v818, %v913
      %v915 = vpop.f32.mrb[0].mxu0
      %916 = vmatprep.mubr.bf16.mxu0 0
      %917 = vmatmul.mubr.bf16.gmra.mrb[0].mxu0 %v412
      %v918 = vpop.f32.mrb[0].mxu0
      %v919 = vadd.f32 %v818, %v918
      %v920 = vpop.f32.mrb[0].mxu0
      %v921 = vpop.f32.mrb[0].mxu0
      %v922 = vadd.f32 %v818, %v921
      %v923 = vpop.f32.mrb[0].mxu0
      %924 = vmatprep.mubr.bf16.mxu0 0
      %925 = vmatmul.mubr.bf16.gmra.mrb[0].mxu0 %v415
      %v926 = vpop.f32.mrb[0].mxu0
      %v927 = vadd.f32 %v818, %v926
      %v928 = vpop.f32.mrb[0].mxu0
      %v929 = vpop.f32.mrb[0].mxu0
      %v930 = vadd.f32 %v818, %v929
      %v931 = vpop.f32.mrb[0].mxu0
      %932 = vmatprep.mubr.bf16.mxu0 0
      %933 = vmatmul.mubr.bf16.gmra.mrb[0].mxu0 %v418
      %v934 = vpop.f32.mrb[0].mxu0
      %v935 = vadd.f32 %v818, %v934
      %v936 = vpop.f32.mrb[0].mxu0
      %v937 = vpop.f32.mrb[0].mxu0
      %v938 = vadd.f32 %v818, %v937
      %v939 = vpop.f32.mrb[0].mxu0
      %940 = vmatprep.mubr.bf16.mxu0 0
      %941 = vmatmul.mubr.bf16.gmra.mrb[0].mxu0 %v421
      %v942 = vpop.f32.mrb[0].mxu0
      %v943 = vadd.f32 %v818, %v942
      %v944 = vpop.f32.mrb[0].mxu0
      %v945 = vpop.f32.mrb[0].mxu0
      %v946 = vadd.f32 %v818, %v945
      %v947 = vpop.f32.mrb[0].mxu0
      %948 = vmatprep.mubr.bf16.mxu0 0
      %949 = vmatmul.mubr.bf16.gmra.mrb[0].mxu0 %v424
      %v950 = vpop.f32.mrb[0].mxu0
      %v951 = vadd.f32 %v818, %v950
      %v952 = vpop.f32.mrb[0].mxu0
      %v953 = vpop.f32.mrb[0].mxu0
      %v954 = vadd.f32 %v818, %v953
      %v955 = vpop.f32.mrb[0].mxu0
      %956 = vmatprep.mubr.bf16.mxu0 0
      %957 = vmatmul.mubr.bf16.gmra.mrb[0].mxu0 %v427
      %v958 = vpop.f32.mrb[0].mxu0
      %v959 = vadd.f32 %v818, %v958
      %v960 = vpop.f32.mrb[0].mxu0
      %v961 = vpop.f32.mrb[0].mxu0
      %v962 = vadd.f32 %v818, %v961
      %v963 = vpop.f32.mrb[0].mxu0
      %964 = vmatprep.mubr.bf16.mxu0 0
      %965 = vmatmul.mubr.bf16.gmra.mrb[0].mxu0 %v430
      %v966 = vpop.f32.mrb[0].mxu0
      %v967 = vadd.f32 %v818, %v966
      %v968 = vpop.f32.mrb[0].mxu0
      %v969 = vpop.f32.mrb[0].mxu0
      %v970 = vadd.f32 %v818, %v969
      %v971 = vpop.f32.mrb[0].mxu0
      %972 = vmatprep.mubr.bf16.mxu0 0
      %973 = vmatmul.mubr.bf16.gmra.mrb[0].mxu0 %v433
      %v974 = vpop.f32.mrb[0].mxu0
      %v975 = vadd.f32 %v818, %v974
      %v976 = vpop.f32.mrb[0].mxu0
      %v977 = vpop.f32.mrb[0].mxu0
      %v978 = vadd.f32 %v818, %v977
      %v979 = vpop.f32.mrb[0].mxu0
      %980 = vmatprep.mubr.bf16.mxu0 0
      %981 = vmatmul.mubr.bf16.gmra.mrb[0].mxu0 %v436
      %v982 = vpop.f32.mrb[0].mxu0
      %v983 = vadd.f32 %v818, %v982
      %v984 = vpop.f32.mrb[0].mxu0
      %v985 = vpop.f32.mrb[0].mxu0
      %v986 = vadd.f32 %v818, %v985
      %v987 = vpop.f32.mrb[0].mxu0
      %988 = vmatprep.mubr.bf16.mxu0 0
      %989 = vmatmul.mubr.bf16.gmra.mrb[0].mxu0 %v439
      %v990 = vpop.f32.mrb[0].mxu0
      %v991 = vadd.f32 %v818, %v990
      %v992 = vpop.f32.mrb[0].mxu0
      %v993 = vpop.f32.mrb[0].mxu0
      %v994 = vadd.f32 %v818, %v993
      %v995 = vpop.f32.mrb[0].mxu0
      %996 = vmatprep.mubr.bf16.mxu0 0
      %997 = vmatmul.mubr.bf16.gmra.mrb[0].mxu0 %v442
      %v998 = vpop.f32.mrb[0].mxu0
      %v999 = vadd.f32 %v818, %v998
      %v1000 = vpop.f32.mrb[0].mxu0
      %v1001 = vpop.f32.mrb[0].mxu0
      %v1002 = vadd.f32 %v818, %v1001
      %v1003 = vpop.f32.mrb[0].mxu0
      %1004 = vdwg.mxu0
      %v1005 = vcombine.low %v479, %v495
      %v1006 = vcombine.high %v479, %v495
      %v1008 = vunpack.c.l.s4 1983009808
      %v1009 = vunpack.c.0.s8 %v1008
      %v1010 = vlaneseq
      %v1011 = vshrl.u32 %v1010, 7
      %v1012 = vsub.s32 %v1009, %v1011
      %v1013 = vrot.slane %v1005, %v1012
      %v1015 = vunpack.c.l.s4 1983009808
      %v1016 = vunpack.c.0.s8 %v1015
      %v1017 = vlaneseq
      %v1018 = vshrl.u32 %v1017, 7
      %v1019 = vsub.s32 %v1016, %v1018
      %v1020 = vrot.slane %v1006, %v1019
      %v1021 = vcombine.low %v487, %v503
      %v1022 = vcombine.high %v487, %v503
      %v1024 = vunpack.c.l.s4 1983009808
      %v1025 = vunpack.c.0.s8 %v1024
      %v1026 = vlaneseq
      %v1027 = vshrl.u32 %v1026, 7
      %v1028 = vsub.s32 %v1025, %v1027
      %v1029 = vrot.slane %v1021, %v1028
      %v1031 = vunpack.c.l.s4 1983009808
      %v1032 = vunpack.c.0.s8 %v1031
      %v1033 = vlaneseq
      %v1034 = vshrl.u32 %v1033, 7
      %v1035 = vsub.s32 %v1032, %v1034
      %v1036 = vrot.slane %v1022, %v1035
      %v1037 = vcombine.low %v511, %v527
      %v1038 = vcombine.high %v511, %v527
      %v1040 = vunpack.c.l.s4 1983009808
      %v1041 = vunpack.c.0.s8 %v1040
      %v1042 = vlaneseq
      %v1043 = vshrl.u32 %v1042, 7
      %v1044 = vsub.s32 %v1041, %v1043
      %v1045 = vrot.slane %v1037, %v1044
      %v1047 = vunpack.c.l.s4 1983009808
      %v1048 = vunpack.c.0.s8 %v1047
      %v1049 = vlaneseq
      %v1050 = vshrl.u32 %v1049, 7
      %v1051 = vsub.s32 %v1048, %v1050
      %v1052 = vrot.slane %v1038, %v1051
      %v1053 = vcombine.low %v519, %v535
      %v1054 = vcombine.high %v519, %v535
      %v1056 = vunpack.c.l.s4 1983009808
      %v1057 = vunpack.c.0.s8 %v1056
      %v1058 = vlaneseq
      %v1059 = vshrl.u32 %v1058, 7
      %v1060 = vsub.s32 %v1057, %v1059
      %v1061 = vrot.slane %v1053, %v1060
      %v1063 = vunpack.c.l.s4 1983009808
      %v1064 = vunpack.c.0.s8 %v1063
      %v1065 = vlaneseq
      %v1066 = vshrl.u32 %v1065, 7
      %v1067 = vsub.s32 %v1064, %v1066
      %v1068 = vrot.slane %v1054, %v1067
      %v1069 = vcombine.low %v1013, %v1029
      %v1070 = vcombine.high %v1013, %v1029
      %v1072 = vunpack.c.l.s4 1934713408
      %v1073 = vunpack.c.0.s8 %v1072
      %v1074 = vlaneseq
      %v1075 = vshrl.u32 %v1074, 7
      %v1076 = vsub.s32 %v1073, %v1075
      %v1077 = vrot.slane %v1069, %v1076
      %v1079 = vunpack.c.l.s4 1934713408
      %v1080 = vunpack.c.0.s8 %v1079
      %v1081 = vlaneseq
      %v1082 = vshrl.u32 %v1081, 7
      %v1083 = vsub.s32 %v1080, %v1082
      %v1084 = vrot.slane %v1070, %v1083
      %v1085 = vcombine.low %v1020, %v1036
      %v1086 = vcombine.high %v1020, %v1036
      %v1088 = vunpack.c.l.s4 1934713408
      %v1089 = vunpack.c.0.s8 %v1088
      %v1090 = vlaneseq
      %v1091 = vshrl.u32 %v1090, 7
      %v1092 = vsub.s32 %v1089, %v1091
      %v1093 = vrot.slane %v1085, %v1092
      %v1095 = vunpack.c.l.s4 1934713408
      %v1096 = vunpack.c.0.s8 %v1095
      %v1097 = vlaneseq
      %v1098 = vshrl.u32 %v1097, 7
      %v1099 = vsub.s32 %v1096, %v1098
      %v1100 = vrot.slane %v1086, %v1099
      %v1101 = vcombine.low %v1045, %v1061
      %v1102 = vcombine.high %v1045, %v1061
      %v1104 = vunpack.c.l.s4 1934713408
      %v1105 = vunpack.c.0.s8 %v1104
      %v1106 = vlaneseq
      %v1107 = vshrl.u32 %v1106, 7
      %v1108 = vsub.s32 %v1105, %v1107
      %v1109 = vrot.slane %v1101, %v1108
      %v1111 = vunpack.c.l.s4 1934713408
      %v1112 = vunpack.c.0.s8 %v1111
      %v1113 = vlaneseq
      %v1114 = vshrl.u32 %v1113, 7
      %v1115 = vsub.s32 %v1112, %v1114
      %v1116 = vrot.slane %v1102, %v1115
      %v1117 = vcombine.low %v1052, %v1068
      %v1118 = vcombine.high %v1052, %v1068
      %v1120 = vunpack.c.l.s4 1934713408
      %v1121 = vunpack.c.0.s8 %v1120
      %v1122 = vlaneseq
      %v1123 = vshrl.u32 %v1122, 7
      %v1124 = vsub.s32 %v1121, %v1123
      %v1125 = vrot.slane %v1117, %v1124
      %v1127 = vunpack.c.l.s4 1934713408
      %v1128 = vunpack.c.0.s8 %v1127
      %v1129 = vlaneseq
      %v1130 = vshrl.u32 %v1129, 7
      %v1131 = vsub.s32 %v1128, %v1130
      %v1132 = vrot.slane %v1118, %v1131
      %v1133 = vcombine.low %v1077, %v1109
      %v1134 = vcombine.high %v1077, %v1109
      %v1135 = vcombine.low %v1084, %v1116
      %v1136 = vcombine.high %v1084, %v1116
      %v1137 = vcombine.low %v1093, %v1125
      %v1138 = vcombine.high %v1093, %v1125
      %v1139 = vcombine.low %v1100, %v1132
      %v1140 = vcombine.high %v1100, %v1132
      %v1141 = vcombine.low %v543, %v559
      %v1142 = vcombine.high %v543, %v559
      %v1144 = vunpack.c.l.s4 1983009808
      %v1145 = vunpack.c.0.s8 %v1144
      %v1146 = vlaneseq
      %v1147 = vshrl.u32 %v1146, 7
      %v1148 = vsub.s32 %v1145, %v1147
      %v1149 = vrot.slane %v1141, %v1148
      %v1151 = vunpack.c.l.s4 1983009808
      %v1152 = vunpack.c.0.s8 %v1151
      %v1153 = vlaneseq
      %v1154 = vshrl.u32 %v1153, 7
      %v1155 = vsub.s32 %v1152, %v1154
      %v1156 = vrot.slane %v1142, %v1155
      %v1157 = vcombine.low %v551, %v567
      %v1158 = vcombine.high %v551, %v567
      %v1160 = vunpack.c.l.s4 1983009808
      %v1161 = vunpack.c.0.s8 %v1160
      %v1162 = vlaneseq
      %v1163 = vshrl.u32 %v1162, 7
      %v1164 = vsub.s32 %v1161, %v1163
      %v1165 = vrot.slane %v1157, %v1164
      %v1167 = vunpack.c.l.s4 1983009808
      %v1168 = vunpack.c.0.s8 %v1167
      %v1169 = vlaneseq
      %v1170 = vshrl.u32 %v1169, 7
      %v1171 = vsub.s32 %v1168, %v1170
      %v1172 = vrot.slane %v1158, %v1171
      %v1173 = vcombine.low %v575, %v591
      %v1174 = vcombine.high %v575, %v591
      %v1176 = vunpack.c.l.s4 1983009808
      %v1177 = vunpack.c.0.s8 %v1176
      %v1178 = vlaneseq
      %v1179 = vshrl.u32 %v1178, 7
      %v1180 = vsub.s32 %v1177, %v1179
      %v1181 = vrot.slane %v1173, %v1180
      %v1183 = vunpack.c.l.s4 1983009808
      %v1184 = vunpack.c.0.s8 %v1183
      %v1185 = vlaneseq
      %v1186 = vshrl.u32 %v1185, 7
      %v1187 = vsub.s32 %v1184, %v1186
      %v1188 = vrot.slane %v1174, %v1187
      %v1189 = vcombine.low %v583, %v599
      %v1190 = vcombine.high %v583, %v599
      %v1192 = vunpack.c.l.s4 1983009808
      %v1193 = vunpack.c.0.s8 %v1192
      %v1194 = vlaneseq
      %v1195 = vshrl.u32 %v1194, 7
      %v1196 = vsub.s32 %v1193, %v1195
      %v1197 = vrot.slane %v1189, %v1196
      %v1199 = vunpack.c.l.s4 1983009808
      %v1200 = vunpack.c.0.s8 %v1199
      %v1201 = vlaneseq
      %v1202 = vshrl.u32 %v1201, 7
      %v1203 = vsub.s32 %v1200, %v1202
      %v1204 = vrot.slane %v1190, %v1203
      %v1205 = vcombine.low %v1149, %v1165
      %v1206 = vcombine.high %v1149, %v1165
      %v1208 = vunpack.c.l.s4 1934713408
      %v1209 = vunpack.c.0.s8 %v1208
      %v1210 = vlaneseq
      %v1211 = vshrl.u32 %v1210, 7
      %v1212 = vsub.s32 %v1209, %v1211
      %v1213 = vrot.slane %v1205, %v1212
      %v1215 = vunpack.c.l.s4 1934713408
      %v1216 = vunpack.c.0.s8 %v1215
      %v1217 = vlaneseq
      %v1218 = vshrl.u32 %v1217, 7
      %v1219 = vsub.s32 %v1216, %v1218
      %v1220 = vrot.slane %v1206, %v1219
      %v1221 = vcombine.low %v1156, %v1172
      %v1222 = vcombine.high %v1156, %v1172
      %v1224 = vunpack.c.l.s4 1934713408
      %v1225 = vunpack.c.0.s8 %v1224
      %v1226 = vlaneseq
      %v1227 = vshrl.u32 %v1226, 7
      %v1228 = vsub.s32 %v1225, %v1227
      %v1229 = vrot.slane %v1221, %v1228
      %v1231 = vunpack.c.l.s4 1934713408
      %v1232 = vunpack.c.0.s8 %v1231
      %v1233 = vlaneseq
      %v1234 = vshrl.u32 %v1233, 7
      %v1235 = vsub.s32 %v1232, %v1234
      %v1236 = vrot.slane %v1222, %v1235
      %v1237 = vcombine.low %v1181, %v1197
      %v1238 = vcombine.high %v1181, %v1197
      %v1240 = vunpack.c.l.s4 1934713408
      %v1241 = vunpack.c.0.s8 %v1240
      %v1242 = vlaneseq
      %v1243 = vshrl.u32 %v1242, 7
      %v1244 = vsub.s32 %v1241, %v1243
      %v1245 = vrot.slane %v1237, %v1244
      %v1247 = vunpack.c.l.s4 1934713408
      %v1248 = vunpack.c.0.s8 %v1247
      %v1249 = vlaneseq
      %v1250 = vshrl.u32 %v1249, 7
      %v1251 = vsub.s32 %v1248, %v1250
      %v1252 = vrot.slane %v1238, %v1251
      %v1253 = vcombine.low %v1188, %v1204
      %v1254 = vcombine.high %v1188, %v1204
      %v1256 = vunpack.c.l.s4 1934713408
      %v1257 = vunpack.c.0.s8 %v1256
      %v1258 = vlaneseq
      %v1259 = vshrl.u32 %v1258, 7
      %v1260 = vsub.s32 %v1257, %v1259
      %v1261 = vrot.slane %v1253, %v1260
      %v1263 = vunpack.c.l.s4 1934713408
      %v1264 = vunpack.c.0.s8 %v1263
      %v1265 = vlaneseq
      %v1266 = vshrl.u32 %v1265, 7
      %v1267 = vsub.s32 %v1264, %v1266
      %v1268 = vrot.slane %v1254, %v1267
      %v1269 = vcombine.low %v1213, %v1245
      %v1270 = vcombine.high %v1213, %v1245
      %v1271 = vcombine.low %v1220, %v1252
      %v1272 = vcombine.high %v1220, %v1252
      %v1273 = vcombine.low %v1229, %v1261
      %v1274 = vcombine.high %v1229, %v1261
      %v1275 = vcombine.low %v1236, %v1268
      %v1276 = vcombine.high %v1236, %v1268
      %v1277 = vcombine.low %v482, %v498
      %v1278 = vcombine.high %v482, %v498
      %v1280 = vunpack.c.l.s4 1983009808
      %v1281 = vunpack.c.0.s8 %v1280
      %v1282 = vlaneseq
      %v1283 = vshrl.u32 %v1282, 7
      %v1284 = vsub.s32 %v1281, %v1283
      %v1285 = vrot.slane %v1277, %v1284
      %v1287 = vunpack.c.l.s4 1983009808
      %v1288 = vunpack.c.0.s8 %v1287
      %v1289 = vlaneseq
      %v1290 = vshrl.u32 %v1289, 7
      %v1291 = vsub.s32 %v1288, %v1290
      %v1292 = vrot.slane %v1278, %v1291
      %v1293 = vcombine.low %v490, %v506
      %v1294 = vcombine.high %v490, %v506
      %v1296 = vunpack.c.l.s4 1983009808
      %v1297 = vunpack.c.0.s8 %v1296
      %v1298 = vlaneseq
      %v1299 = vshrl.u32 %v1298, 7
      %v1300 = vsub.s32 %v1297, %v1299
      %v1301 = vrot.slane %v1293, %v1300
      %v1303 = vunpack.c.l.s4 1983009808
      %v1304 = vunpack.c.0.s8 %v1303
      %v1305 = vlaneseq
      %v1306 = vshrl.u32 %v1305, 7
      %v1307 = vsub.s32 %v1304, %v1306
      %v1308 = vrot.slane %v1294, %v1307
      %v1309 = vcombine.low %v514, %v530
      %v1310 = vcombine.high %v514, %v530
      %v1312 = vunpack.c.l.s4 1983009808
      %v1313 = vunpack.c.0.s8 %v1312
      %v1314 = vlaneseq
      %v1315 = vshrl.u32 %v1314, 7
      %v1316 = vsub.s32 %v1313, %v1315
      %v1317 = vrot.slane %v1309, %v1316
      %v1319 = vunpack.c.l.s4 1983009808
      %v1320 = vunpack.c.0.s8 %v1319
      %v1321 = vlaneseq
      %v1322 = vshrl.u32 %v1321, 7
      %v1323 = vsub.s32 %v1320, %v1322
      %v1324 = vrot.slane %v1310, %v1323
      %v1325 = vcombine.low %v522, %v538
      %v1326 = vcombine.high %v522, %v538
      %v1328 = vunpack.c.l.s4 1983009808
      %v1329 = vunpack.c.0.s8 %v1328
      %v1330 = vlaneseq
      %v1331 = vshrl.u32 %v1330, 7
      %v1332 = vsub.s32 %v1329, %v1331
      %v1333 = vrot.slane %v1325, %v1332
      %v1335 = vunpack.c.l.s4 1983009808
      %v1336 = vunpack.c.0.s8 %v1335
      %v1337 = vlaneseq
      %v1338 = vshrl.u32 %v1337, 7
      %v1339 = vsub.s32 %v1336, %v1338
      %v1340 = vrot.slane %v1326, %v1339
      %v1341 = vcombine.low %v1285, %v1301
      %v1342 = vcombine.high %v1285, %v1301
      %v1344 = vunpack.c.l.s4 1934713408
      %v1345 = vunpack.c.0.s8 %v1344
      %v1346 = vlaneseq
      %v1347 = vshrl.u32 %v1346, 7
      %v1348 = vsub.s32 %v1345, %v1347
      %v1349 = vrot.slane %v1341, %v1348
      %v1351 = vunpack.c.l.s4 1934713408
      %v1352 = vunpack.c.0.s8 %v1351
      %v1353 = vlaneseq
      %v1354 = vshrl.u32 %v1353, 7
      %v1355 = vsub.s32 %v1352, %v1354
      %v1356 = vrot.slane %v1342, %v1355
      %v1357 = vcombine.low %v1292, %v1308
      %v1358 = vcombine.high %v1292, %v1308
      %v1360 = vunpack.c.l.s4 1934713408
      %v1361 = vunpack.c.0.s8 %v1360
      %v1362 = vlaneseq
      %v1363 = vshrl.u32 %v1362, 7
      %v1364 = vsub.s32 %v1361, %v1363
      %v1365 = vrot.slane %v1357, %v1364
      %v1367 = vunpack.c.l.s4 1934713408
      %v1368 = vunpack.c.0.s8 %v1367
      %v1369 = vlaneseq
      %v1370 = vshrl.u32 %v1369, 7
      %v1371 = vsub.s32 %v1368, %v1370
      %v1372 = vrot.slane %v1358, %v1371
      %v1373 = vcombine.low %v1317, %v1333
      %v1374 = vcombine.high %v1317, %v1333
      %v1376 = vunpack.c.l.s4 1934713408
      %v1377 = vunpack.c.0.s8 %v1376
      %v1378 = vlaneseq
      %v1379 = vshrl.u32 %v1378, 7
      %v1380 = vsub.s32 %v1377, %v1379
      %v1381 = vrot.slane %v1373, %v1380
      %v1383 = vunpack.c.l.s4 1934713408
      %v1384 = vunpack.c.0.s8 %v1383
      %v1385 = vlaneseq
      %v1386 = vshrl.u32 %v1385, 7
      %v1387 = vsub.s32 %v1384, %v1386
      %v1388 = vrot.slane %v1374, %v1387
      %v1389 = vcombine.low %v1324, %v1340
      %v1390 = vcombine.high %v1324, %v1340
      %v1392 = vunpack.c.l.s4 1934713408
      %v1393 = vunpack.c.0.s8 %v1392
      %v1394 = vlaneseq
      %v1395 = vshrl.u32 %v1394, 7
      %v1396 = vsub.s32 %v1393, %v1395
      %v1397 = vrot.slane %v1389, %v1396
      %v1399 = vunpack.c.l.s4 1934713408
      %v1400 = vunpack.c.0.s8 %v1399
      %v1401 = vlaneseq
      %v1402 = vshrl.u32 %v1401, 7
      %v1403 = vsub.s32 %v1400, %v1402
      %v1404 = vrot.slane %v1390, %v1403
      %v1405 = vcombine.low %v1349, %v1381
      %v1406 = vcombine.high %v1349, %v1381
      %v1407 = vcombine.low %v1356, %v1388
      %v1408 = vcombine.high %v1356, %v1388
      %v1409 = vcombine.low %v1365, %v1397
      %v1410 = vcombine.high %v1365, %v1397
      %v1411 = vcombine.low %v1372, %v1404
      %v1412 = vcombine.high %v1372, %v1404
      %v1413 = vcombine.low %v546, %v562
      %v1414 = vcombine.high %v546, %v562
      %v1416 = vunpack.c.l.s4 1983009808
      %v1417 = vunpack.c.0.s8 %v1416
      %v1418 = vlaneseq
      %v1419 = vshrl.u32 %v1418, 7
      %v1420 = vsub.s32 %v1417, %v1419
      %v1421 = vrot.slane %v1413, %v1420
      %v1423 = vunpack.c.l.s4 1983009808
      %v1424 = vunpack.c.0.s8 %v1423
      %v1425 = vlaneseq
      %v1426 = vshrl.u32 %v1425, 7
      %v1427 = vsub.s32 %v1424, %v1426
      %v1428 = vrot.slane %v1414, %v1427
      %v1429 = vcombine.low %v554, %v570
      %v1430 = vcombine.high %v554, %v570
      %v1432 = vunpack.c.l.s4 1983009808
      %v1433 = vunpack.c.0.s8 %v1432
      %v1434 = vlaneseq
      %v1435 = vshrl.u32 %v1434, 7
      %v1436 = vsub.s32 %v1433, %v1435
      %v1437 = vrot.slane %v1429, %v1436
      %v1439 = vunpack.c.l.s4 1983009808
      %v1440 = vunpack.c.0.s8 %v1439
      %v1441 = vlaneseq
      %v1442 = vshrl.u32 %v1441, 7
      %v1443 = vsub.s32 %v1440, %v1442
      %v1444 = vrot.slane %v1430, %v1443
      %v1445 = vcombine.low %v578, %v594
      %v1446 = vcombine.high %v578, %v594
      %v1448 = vunpack.c.l.s4 1983009808
      %v1449 = vunpack.c.0.s8 %v1448
      %v1450 = vlaneseq
      %v1451 = vshrl.u32 %v1450, 7
      %v1452 = vsub.s32 %v1449, %v1451
      %v1453 = vrot.slane %v1445, %v1452
      %v1455 = vunpack.c.l.s4 1983009808
      %v1456 = vunpack.c.0.s8 %v1455
      %v1457 = vlaneseq
      %v1458 = vshrl.u32 %v1457, 7
      %v1459 = vsub.s32 %v1456, %v1458
      %v1460 = vrot.slane %v1446, %v1459
      %v1461 = vcombine.low %v586, %v602
      %v1462 = vcombine.high %v586, %v602
      %v1464 = vunpack.c.l.s4 1983009808
      %v1465 = vunpack.c.0.s8 %v1464
      %v1466 = vlaneseq
      %v1467 = vshrl.u32 %v1466, 7
      %v1468 = vsub.s32 %v1465, %v1467
      %v1469 = vrot.slane %v1461, %v1468
      %v1471 = vunpack.c.l.s4 1983009808
      %v1472 = vunpack.c.0.s8 %v1471
      %v1473 = vlaneseq
      %v1474 = vshrl.u32 %v1473, 7
      %v1475 = vsub.s32 %v1472, %v1474
      %v1476 = vrot.slane %v1462, %v1475
      %v1477 = vcombine.low %v1421, %v1437
      %v1478 = vcombine.high %v1421, %v1437
      %v1480 = vunpack.c.l.s4 1934713408
      %v1481 = vunpack.c.0.s8 %v1480
      %v1482 = vlaneseq
      %v1483 = vshrl.u32 %v1482, 7
      %v1484 = vsub.s32 %v1481, %v1483
      %v1485 = vrot.slane %v1477, %v1484
      %v1487 = vunpack.c.l.s4 1934713408
      %v1488 = vunpack.c.0.s8 %v1487
      %v1489 = vlaneseq
      %v1490 = vshrl.u32 %v1489, 7
      %v1491 = vsub.s32 %v1488, %v1490
      %v1492 = vrot.slane %v1478, %v1491
      %v1493 = vcombine.low %v1428, %v1444
      %v1494 = vcombine.high %v1428, %v1444
      %v1496 = vunpack.c.l.s4 1934713408
      %v1497 = vunpack.c.0.s8 %v1496
      %v1498 = vlaneseq
      %v1499 = vshrl.u32 %v1498, 7
      %v1500 = vsub.s32 %v1497, %v1499
      %v1501 = vrot.slane %v1493, %v1500
      %v1503 = vunpack.c.l.s4 1934713408
      %v1504 = vunpack.c.0.s8 %v1503
      %v1505 = vlaneseq
      %v1506 = vshrl.u32 %v1505, 7
      %v1507 = vsub.s32 %v1504, %v1506
      %v1508 = vrot.slane %v1494, %v1507
      %v1509 = vcombine.low %v1453, %v1469
      %v1510 = vcombine.high %v1453, %v1469
      %v1512 = vunpack.c.l.s4 1934713408
      %v1513 = vunpack.c.0.s8 %v1512
      %v1514 = vlaneseq
      %v1515 = vshrl.u32 %v1514, 7
      %v1516 = vsub.s32 %v1513, %v1515
      %v1517 = vrot.slane %v1509, %v1516
      %v1519 = vunpack.c.l.s4 1934713408
      %v1520 = vunpack.c.0.s8 %v1519
      %v1521 = vlaneseq
      %v1522 = vshrl.u32 %v1521, 7
      %v1523 = vsub.s32 %v1520, %v1522
      %v1524 = vrot.slane %v1510, %v1523
      %v1525 = vcombine.low %v1460, %v1476
      %v1526 = vcombine.high %v1460, %v1476
      %v1528 = vunpack.c.l.s4 1934713408
      %v1529 = vunpack.c.0.s8 %v1528
      %v1530 = vlaneseq
      %v1531 = vshrl.u32 %v1530, 7
      %v1532 = vsub.s32 %v1529, %v1531
      %v1533 = vrot.slane %v1525, %v1532
      %v1535 = vunpack.c.l.s4 1934713408
      %v1536 = vunpack.c.0.s8 %v1535
      %v1537 = vlaneseq
      %v1538 = vshrl.u32 %v1537, 7
      %v1539 = vsub.s32 %v1536, %v1538
      %v1540 = vrot.slane %v1526, %v1539
      %v1541 = vcombine.low %v1485, %v1517
      %v1542 = vcombine.high %v1485, %v1517
      %v1543 = vcombine.low %v1492, %v1524
      %v1544 = vcombine.high %v1492, %v1524
      %v1545 = vcombine.low %v1501, %v1533
      %v1546 = vcombine.high %v1501, %v1533
      %v1547 = vcombine.low %v1508, %v1540
      %v1548 = vcombine.high %v1508, %v1540
      %v1549 = vcombine.low %v679, %v695
      %v1550 = vcombine.high %v679, %v695
      %v1552 = vunpack.c.l.s4 1983009808
      %v1553 = vunpack.c.0.s8 %v1552
      %v1554 = vlaneseq
      %v1555 = vshrl.u32 %v1554, 7
      %v1556 = vsub.s32 %v1553, %v1555
      %v1557 = vrot.slane %v1549, %v1556
      %v1559 = vunpack.c.l.s4 1983009808
      %v1560 = vunpack.c.0.s8 %v1559
      %v1561 = vlaneseq
      %v1562 = vshrl.u32 %v1561, 7
      %v1563 = vsub.s32 %v1560, %v1562
      %v1564 = vrot.slane %v1550, %v1563
      %v1565 = vcombine.low %v687, %v703
      %v1566 = vcombine.high %v687, %v703
      %v1568 = vunpack.c.l.s4 1983009808
      %v1569 = vunpack.c.0.s8 %v1568
      %v1570 = vlaneseq
      %v1571 = vshrl.u32 %v1570, 7
      %v1572 = vsub.s32 %v1569, %v1571
      %v1573 = vrot.slane %v1565, %v1572
      %v1575 = vunpack.c.l.s4 1983009808
      %v1576 = vunpack.c.0.s8 %v1575
      %v1577 = vlaneseq
      %v1578 = vshrl.u32 %v1577, 7
      %v1579 = vsub.s32 %v1576, %v1578
      %v1580 = vrot.slane %v1566, %v1579
      %v1581 = vcombine.low %v711, %v727
      %v1582 = vcombine.high %v711, %v727
      %v1584 = vunpack.c.l.s4 1983009808
      %v1585 = vunpack.c.0.s8 %v1584
      %v1586 = vlaneseq
      %v1587 = vshrl.u32 %v1586, 7
      %v1588 = vsub.s32 %v1585, %v1587
      %v1589 = vrot.slane %v1581, %v1588
      %v1591 = vunpack.c.l.s4 1983009808
      %v1592 = vunpack.c.0.s8 %v1591
      %v1593 = vlaneseq
      %v1594 = vshrl.u32 %v1593, 7
      %v1595 = vsub.s32 %v1592, %v1594
      %v1596 = vrot.slane %v1582, %v1595
      %v1597 = vcombine.low %v719, %v735
      %v1598 = vcombine.high %v719, %v735
      %v1600 = vunpack.c.l.s4 1983009808
      %v1601 = vunpack.c.0.s8 %v1600
      %v1602 = vlaneseq
      %v1603 = vshrl.u32 %v1602, 7
      %v1604 = vsub.s32 %v1601, %v1603
      %v1605 = vrot.slane %v1597, %v1604
      %v1607 = vunpack.c.l.s4 1983009808
      %v1608 = vunpack.c.0.s8 %v1607
      %v1609 = vlaneseq
      %v1610 = vshrl.u32 %v1609, 7
      %v1611 = vsub.s32 %v1608, %v1610
      %v1612 = vrot.slane %v1598, %v1611
      %v1613 = vcombine.low %v1557, %v1573
      %v1614 = vcombine.high %v1557, %v1573
      %v1616 = vunpack.c.l.s4 1934713408
      %v1617 = vunpack.c.0.s8 %v1616
      %v1618 = vlaneseq
      %v1619 = vshrl.u32 %v1618, 7
      %v1620 = vsub.s32 %v1617, %v1619
      %v1621 = vrot.slane %v1613, %v1620
      %v1623 = vunpack.c.l.s4 1934713408
      %v1624 = vunpack.c.0.s8 %v1623
      %v1625 = vlaneseq
      %v1626 = vshrl.u32 %v1625, 7
      %v1627 = vsub.s32 %v1624, %v1626
      %v1628 = vrot.slane %v1614, %v1627
      %v1629 = vcombine.low %v1564, %v1580
      %v1630 = vcombine.high %v1564, %v1580
      %v1632 = vunpack.c.l.s4 1934713408
      %v1633 = vunpack.c.0.s8 %v1632
      %v1634 = vlaneseq
      %v1635 = vshrl.u32 %v1634, 7
      %v1636 = vsub.s32 %v1633, %v1635
      %v1637 = vrot.slane %v1629, %v1636
      %v1639 = vunpack.c.l.s4 1934713408
      %v1640 = vunpack.c.0.s8 %v1639
      %v1641 = vlaneseq
      %v1642 = vshrl.u32 %v1641, 7
      %v1643 = vsub.s32 %v1640, %v1642
      %v1644 = vrot.slane %v1630, %v1643
      %v1645 = vcombine.low %v1589, %v1605
      %v1646 = vcombine.high %v1589, %v1605
      %v1648 = vunpack.c.l.s4 1934713408
      %v1649 = vunpack.c.0.s8 %v1648
      %v1650 = vlaneseq
      %v1651 = vshrl.u32 %v1650, 7
      %v1652 = vsub.s32 %v1649, %v1651
      %v1653 = vrot.slane %v1645, %v1652
      %v1655 = vunpack.c.l.s4 1934713408
      %v1656 = vunpack.c.0.s8 %v1655
      %v1657 = vlaneseq
      %v1658 = vshrl.u32 %v1657, 7
      %v1659 = vsub.s32 %v1656, %v1658
      %v1660 = vrot.slane %v1646, %v1659
      %v1661 = vcombine.low %v1596, %v1612
      %v1662 = vcombine.high %v1596, %v1612
      %v1664 = vunpack.c.l.s4 1934713408
      %v1665 = vunpack.c.0.s8 %v1664
      %v1666 = vlaneseq
      %v1667 = vshrl.u32 %v1666, 7
      %v1668 = vsub.s32 %v1665, %v1667
      %v1669 = vrot.slane %v1661, %v1668
      %v1671 = vunpack.c.l.s4 1934713408
      %v1672 = vunpack.c.0.s8 %v1671
      %v1673 = vlaneseq
      %v1674 = vshrl.u32 %v1673, 7
      %v1675 = vsub.s32 %v1672, %v1674
      %v1676 = vrot.slane %v1662, %v1675
      %v1677 = vcombine.low %v1621, %v1653
      %v1678 = vcombine.high %v1621, %v1653
      %v1679 = vcombine.low %v1628, %v1660
      %v1680 = vcombine.high %v1628, %v1660
      %v1681 = vcombine.low %v1637, %v1669
      %v1682 = vcombine.high %v1637, %v1669
      %v1683 = vcombine.low %v1644, %v1676
      %v1684 = vcombine.high %v1644, %v1676
      %v1685 = vcombine.low %v743, %v759
      %v1686 = vcombine.high %v743, %v759
      %v1688 = vunpack.c.l.s4 1983009808
      %v1689 = vunpack.c.0.s8 %v1688
      %v1690 = vlaneseq
      %v1691 = vshrl.u32 %v1690, 7
      %v1692 = vsub.s32 %v1689, %v1691
      %v1693 = vrot.slane %v1685, %v1692
      %v1695 = vunpack.c.l.s4 1983009808
      %v1696 = vunpack.c.0.s8 %v1695
      %v1697 = vlaneseq
      %v1698 = vshrl.u32 %v1697, 7
      %v1699 = vsub.s32 %v1696, %v1698
      %v1700 = vrot.slane %v1686, %v1699
      %v1701 = vcombine.low %v751, %v767
      %v1702 = vcombine.high %v751, %v767
      %v1704 = vunpack.c.l.s4 1983009808
      %v1705 = vunpack.c.0.s8 %v1704
      %v1706 = vlaneseq
      %v1707 = vshrl.u32 %v1706, 7
      %v1708 = vsub.s32 %v1705, %v1707
      %v1709 = vrot.slane %v1701, %v1708
      %v1711 = vunpack.c.l.s4 1983009808
      %v1712 = vunpack.c.0.s8 %v1711
      %v1713 = vlaneseq
      %v1714 = vshrl.u32 %v1713, 7
      %v1715 = vsub.s32 %v1712, %v1714
      %v1716 = vrot.slane %v1702, %v1715
      %v1717 = vcombine.low %v775, %v791
      %v1718 = vcombine.high %v775, %v791
      %v1720 = vunpack.c.l.s4 1983009808
      %v1721 = vunpack.c.0.s8 %v1720
      %v1722 = vlaneseq
      %v1723 = vshrl.u32 %v1722, 7
      %v1724 = vsub.s32 %v1721, %v1723
      %v1725 = vrot.slane %v1717, %v1724
      %v1727 = vunpack.c.l.s4 1983009808
      %v1728 = vunpack.c.0.s8 %v1727
      %v1729 = vlaneseq
      %v1730 = vshrl.u32 %v1729, 7
      %v1731 = vsub.s32 %v1728, %v1730
      %v1732 = vrot.slane %v1718, %v1731
      %v1733 = vcombine.low %v783, %v799
      %v1734 = vcombine.high %v783, %v799
      %v1736 = vunpack.c.l.s4 1983009808
      %v1737 = vunpack.c.0.s8 %v1736
      %v1738 = vlaneseq
      %v1739 = vshrl.u32 %v1738, 7
      %v1740 = vsub.s32 %v1737, %v1739
      %v1741 = vrot.slane %v1733, %v1740
      %v1743 = vunpack.c.l.s4 1983009808
      %v1744 = vunpack.c.0.s8 %v1743
      %v1745 = vlaneseq
      %v1746 = vshrl.u32 %v1745, 7
      %v1747 = vsub.s32 %v1744, %v1746
      %v1748 = vrot.slane %v1734, %v1747
      %v1749 = vcombine.low %v1693, %v1709
      %v1750 = vcombine.high %v1693, %v1709
      %v1752 = vunpack.c.l.s4 1934713408
      %v1753 = vunpack.c.0.s8 %v1752
      %v1754 = vlaneseq
      %v1755 = vshrl.u32 %v1754, 7
      %v1756 = vsub.s32 %v1753, %v1755
      %v1757 = vrot.slane %v1749, %v1756
      %v1759 = vunpack.c.l.s4 1934713408
      %v1760 = vunpack.c.0.s8 %v1759
      %v1761 = vlaneseq
      %v1762 = vshrl.u32 %v1761, 7
      %v1763 = vsub.s32 %v1760, %v1762
      %v1764 = vrot.slane %v1750, %v1763
      %v1765 = vcombine.low %v1700, %v1716
      %v1766 = vcombine.high %v1700, %v1716
      %v1768 = vunpack.c.l.s4 1934713408
      %v1769 = vunpack.c.0.s8 %v1768
      %v1770 = vlaneseq
      %v1771 = vshrl.u32 %v1770, 7
      %v1772 = vsub.s32 %v1769, %v1771
      %v1773 = vrot.slane %v1765, %v1772
      %v1775 = vunpack.c.l.s4 1934713408
      %v1776 = vunpack.c.0.s8 %v1775
      %v1777 = vlaneseq
      %v1778 = vshrl.u32 %v1777, 7
      %v1779 = vsub.s32 %v1776, %v1778
      %v1780 = vrot.slane %v1766, %v1779
      %v1781 = vcombine.low %v1725, %v1741
      %v1782 = vcombine.high %v1725, %v1741
      %v1784 = vunpack.c.l.s4 1934713408
      %v1785 = vunpack.c.0.s8 %v1784
      %v1786 = vlaneseq
      %v1787 = vshrl.u32 %v1786, 7
      %v1788 = vsub.s32 %v1785, %v1787
      %v1789 = vrot.slane %v1781, %v1788
      %v1791 = vunpack.c.l.s4 1934713408
      %v1792 = vunpack.c.0.s8 %v1791
      %v1793 = vlaneseq
      %v1794 = vshrl.u32 %v1793, 7
      %v1795 = vsub.s32 %v1792, %v1794
      %v1796 = vrot.slane %v1782, %v1795
      %v1797 = vcombine.low %v1732, %v1748
      %v1798 = vcombine.high %v1732, %v1748
      %v1800 = vunpack.c.l.s4 1934713408
      %v1801 = vunpack.c.0.s8 %v1800
      %v1802 = vlaneseq
      %v1803 = vshrl.u32 %v1802, 7
      %v1804 = vsub.s32 %v1801, %v1803
      %v1805 = vrot.slane %v1797, %v1804
      %v1807 = vunpack.c.l.s4 1934713408
      %v1808 = vunpack.c.0.s8 %v1807
      %v1809 = vlaneseq
      %v1810 = vshrl.u32 %v1809, 7
      %v1811 = vsub.s32 %v1808, %v1810
      %v1812 = vrot.slane %v1798, %v1811
      %v1813 = vcombine.low %v1757, %v1789
      %v1814 = vcombine.high %v1757, %v1789
      %v1815 = vcombine.low %v1764, %v1796
      %v1816 = vcombine.high %v1764, %v1796
      %v1817 = vcombine.low %v1773, %v1805
      %v1818 = vcombine.high %v1773, %v1805
      %v1819 = vcombine.low %v1780, %v1812
      %v1820 = vcombine.high %v1780, %v1812
      %v1821 = vcombine.low %v682, %v698
      %v1822 = vcombine.high %v682, %v698
      %v1824 = vunpack.c.l.s4 1983009808
      %v1825 = vunpack.c.0.s8 %v1824
      %v1826 = vlaneseq
      %v1827 = vshrl.u32 %v1826, 7
      %v1828 = vsub.s32 %v1825, %v1827
      %v1829 = vrot.slane %v1821, %v1828
      %v1831 = vunpack.c.l.s4 1983009808
      %v1832 = vunpack.c.0.s8 %v1831
      %v1833 = vlaneseq
      %v1834 = vshrl.u32 %v1833, 7
      %v1835 = vsub.s32 %v1832, %v1834
      %v1836 = vrot.slane %v1822, %v1835
      %v1837 = vcombine.low %v690, %v706
      %v1838 = vcombine.high %v690, %v706
      %v1840 = vunpack.c.l.s4 1983009808
      %v1841 = vunpack.c.0.s8 %v1840
      %v1842 = vlaneseq
      %v1843 = vshrl.u32 %v1842, 7
      %v1844 = vsub.s32 %v1841, %v1843
      %v1845 = vrot.slane %v1837, %v1844
      %v1847 = vunpack.c.l.s4 1983009808
      %v1848 = vunpack.c.0.s8 %v1847
      %v1849 = vlaneseq
      %v1850 = vshrl.u32 %v1849, 7
      %v1851 = vsub.s32 %v1848, %v1850
      %v1852 = vrot.slane %v1838, %v1851
      %v1853 = vcombine.low %v714, %v730
      %v1854 = vcombine.high %v714, %v730
      %v1856 = vunpack.c.l.s4 1983009808
      %v1857 = vunpack.c.0.s8 %v1856
      %v1858 = vlaneseq
      %v1859 = vshrl.u32 %v1858, 7
      %v1860 = vsub.s32 %v1857, %v1859
      %v1861 = vrot.slane %v1853, %v1860
      %v1863 = vunpack.c.l.s4 1983009808
      %v1864 = vunpack.c.0.s8 %v1863
      %v1865 = vlaneseq
      %v1866 = vshrl.u32 %v1865, 7
      %v1867 = vsub.s32 %v1864, %v1866
      %v1868 = vrot.slane %v1854, %v1867
      %v1869 = vcombine.low %v722, %v738
      %v1870 = vcombine.high %v722, %v738
      %v1872 = vunpack.c.l.s4 1983009808
      %v1873 = vunpack.c.0.s8 %v1872
      %v1874 = vlaneseq
      %v1875 = vshrl.u32 %v1874, 7
      %v1876 = vsub.s32 %v1873, %v1875
      %v1877 = vrot.slane %v1869, %v1876
      %v1879 = vunpack.c.l.s4 1983009808
      %v1880 = vunpack.c.0.s8 %v1879
      %v1881 = vlaneseq
      %v1882 = vshrl.u32 %v1881, 7
      %v1883 = vsub.s32 %v1880, %v1882
      %v1884 = vrot.slane %v1870, %v1883
      %v1885 = vcombine.low %v1829, %v1845
      %v1886 = vcombine.high %v1829, %v1845
      %v1888 = vunpack.c.l.s4 1934713408
      %v1889 = vunpack.c.0.s8 %v1888
      %v1890 = vlaneseq
      %v1891 = vshrl.u32 %v1890, 7
      %v1892 = vsub.s32 %v1889, %v1891
      %v1893 = vrot.slane %v1885, %v1892
      %v1895 = vunpack.c.l.s4 1934713408
      %v1896 = vunpack.c.0.s8 %v1895
      %v1897 = vlaneseq
      %v1898 = vshrl.u32 %v1897, 7
      %v1899 = vsub.s32 %v1896, %v1898
      %v1900 = vrot.slane %v1886, %v1899
      %v1901 = vcombine.low %v1836, %v1852
      %v1902 = vcombine.high %v1836, %v1852
      %v1904 = vunpack.c.l.s4 1934713408
      %v1905 = vunpack.c.0.s8 %v1904
      %v1906 = vlaneseq
      %v1907 = vshrl.u32 %v1906, 7
      %v1908 = vsub.s32 %v1905, %v1907
      %v1909 = vrot.slane %v1901, %v1908
      %v1911 = vunpack.c.l.s4 1934713408
      %v1912 = vunpack.c.0.s8 %v1911
      %v1913 = vlaneseq
      %v1914 = vshrl.u32 %v1913, 7
      %v1915 = vsub.s32 %v1912, %v1914
      %v1916 = vrot.slane %v1902, %v1915
      %v1917 = vcombine.low %v1861, %v1877
      %v1918 = vcombine.high %v1861, %v1877
      %v1920 = vunpack.c.l.s4 1934713408
      %v1921 = vunpack.c.0.s8 %v1920
      %v1922 = vlaneseq
      %v1923 = vshrl.u32 %v1922, 7
      %v1924 = vsub.s32 %v1921, %v1923
      %v1925 = vrot.slane %v1917, %v1924
      %v1927 = vunpack.c.l.s4 1934713408
      %v1928 = vunpack.c.0.s8 %v1927
      %v1929 = vlaneseq
      %v1930 = vshrl.u32 %v1929, 7
      %v1931 = vsub.s32 %v1928, %v1930
      %v1932 = vrot.slane %v1918, %v1931
      %v1933 = vcombine.low %v1868, %v1884
      %v1934 = vcombine.high %v1868, %v1884
      %v1936 = vunpack.c.l.s4 1934713408
      %v1937 = vunpack.c.0.s8 %v1936
      %v1938 = vlaneseq
      %v1939 = vshrl.u32 %v1938, 7
      %v1940 = vsub.s32 %v1937, %v1939
      %v1941 = vrot.slane %v1933, %v1940
      %v1943 = vunpack.c.l.s4 1934713408
      %v1944 = vunpack.c.0.s8 %v1943
      %v1945 = vlaneseq
      %v1946 = vshrl.u32 %v1945, 7
      %v1947 = vsub.s32 %v1944, %v1946
      %v1948 = vrot.slane %v1934, %v1947
      %v1949 = vcombine.low %v1893, %v1925
      %v1950 = vcombine.high %v1893, %v1925
      %v1951 = vcombine.low %v1900, %v1932
      %v1952 = vcombine.high %v1900, %v1932
      %v1953 = vcombine.low %v1909, %v1941
      %v1954 = vcombine.high %v1909, %v1941
      %v1955 = vcombine.low %v1916, %v1948
      %v1956 = vcombine.high %v1916, %v1948
      %v1957 = vcombine.low %v746, %v762
      %v1958 = vcombine.high %v746, %v762
      %v1960 = vunpack.c.l.s4 1983009808
      %v1961 = vunpack.c.0.s8 %v1960
      %v1962 = vlaneseq
      %v1963 = vshrl.u32 %v1962, 7
      %v1964 = vsub.s32 %v1961, %v1963
      %v1965 = vrot.slane %v1957, %v1964
      %v1967 = vunpack.c.l.s4 1983009808
      %v1968 = vunpack.c.0.s8 %v1967
      %v1969 = vlaneseq
      %v1970 = vshrl.u32 %v1969, 7
      %v1971 = vsub.s32 %v1968, %v1970
      %v1972 = vrot.slane %v1958, %v1971
      %v1973 = vcombine.low %v754, %v770
      %v1974 = vcombine.high %v754, %v770
      %v1976 = vunpack.c.l.s4 1983009808
      %v1977 = vunpack.c.0.s8 %v1976
      %v1978 = vlaneseq
      %v1979 = vshrl.u32 %v1978, 7
      %v1980 = vsub.s32 %v1977, %v1979
      %v1981 = vrot.slane %v1973, %v1980
      %v1983 = vunpack.c.l.s4 1983009808
      %v1984 = vunpack.c.0.s8 %v1983
      %v1985 = vlaneseq
      %v1986 = vshrl.u32 %v1985, 7
      %v1987 = vsub.s32 %v1984, %v1986
      %v1988 = vrot.slane %v1974, %v1987
      %v1989 = vcombine.low %v778, %v794
      %v1990 = vcombine.high %v778, %v794
      %v1992 = vunpack.c.l.s4 1983009808
      %v1993 = vunpack.c.0.s8 %v1992
      %v1994 = vlaneseq
      %v1995 = vshrl.u32 %v1994, 7
      %v1996 = vsub.s32 %v1993, %v1995
      %v1997 = vrot.slane %v1989, %v1996
      %v1999 = vunpack.c.l.s4 1983009808
      %v2000 = vunpack.c.0.s8 %v1999
      %v2001 = vlaneseq
      %v2002 = vshrl.u32 %v2001, 7
      %v2003 = vsub.s32 %v2000, %v2002
      %v2004 = vrot.slane %v1990, %v2003
      %v2005 = vcombine.low %v786, %v802
      %v2006 = vcombine.high %v786, %v802
      %v2008 = vunpack.c.l.s4 1983009808
      %v2009 = vunpack.c.0.s8 %v2008
      %v2010 = vlaneseq
      %v2011 = vshrl.u32 %v2010, 7
      %v2012 = vsub.s32 %v2009, %v2011
      %v2013 = vrot.slane %v2005, %v2012
      %v2015 = vunpack.c.l.s4 1983009808
      %v2016 = vunpack.c.0.s8 %v2015
      %v2017 = vlaneseq
      %v2018 = vshrl.u32 %v2017, 7
      %v2019 = vsub.s32 %v2016, %v2018
      %v2020 = vrot.slane %v2006, %v2019
      %v2021 = vcombine.low %v1965, %v1981
      %v2022 = vcombine.high %v1965, %v1981
      %v2024 = vunpack.c.l.s4 1934713408
      %v2025 = vunpack.c.0.s8 %v2024
      %v2026 = vlaneseq
      %v2027 = vshrl.u32 %v2026, 7
      %v2028 = vsub.s32 %v2025, %v2027
      %v2029 = vrot.slane %v2021, %v2028
      %v2031 = vunpack.c.l.s4 1934713408
      %v2032 = vunpack.c.0.s8 %v2031
      %v2033 = vlaneseq
      %v2034 = vshrl.u32 %v2033, 7
      %v2035 = vsub.s32 %v2032, %v2034
      %v2036 = vrot.slane %v2022, %v2035
      %v2037 = vcombine.low %v1972, %v1988
      %v2038 = vcombine.high %v1972, %v1988
      %v2040 = vunpack.c.l.s4 1934713408
      %v2041 = vunpack.c.0.s8 %v2040
      %v2042 = vlaneseq
      %v2043 = vshrl.u32 %v2042, 7
      %v2044 = vsub.s32 %v2041, %v2043
      %v2045 = vrot.slane %v2037, %v2044
      %v2047 = vunpack.c.l.s4 1934713408
      %v2048 = vunpack.c.0.s8 %v2047
      %v2049 = vlaneseq
      %v2050 = vshrl.u32 %v2049, 7
      %v2051 = vsub.s32 %v2048, %v2050
      %v2052 = vrot.slane %v2038, %v2051
      %v2053 = vcombine.low %v1997, %v2013
      %v2054 = vcombine.high %v1997, %v2013
      %v2056 = vunpack.c.l.s4 1934713408
      %v2057 = vunpack.c.0.s8 %v2056
      %v2058 = vlaneseq
      %v2059 = vshrl.u32 %v2058, 7
      %v2060 = vsub.s32 %v2057, %v2059
      %v2061 = vrot.slane %v2053, %v2060
      %v2063 = vunpack.c.l.s4 1934713408
      %v2064 = vunpack.c.0.s8 %v2063
      %v2065 = vlaneseq
      %v2066 = vshrl.u32 %v2065, 7
      %v2067 = vsub.s32 %v2064, %v2066
      %v2068 = vrot.slane %v2054, %v2067
      %v2069 = vcombine.low %v2004, %v2020
      %v2070 = vcombine.high %v2004, %v2020
      %v2072 = vunpack.c.l.s4 1934713408
      %v2073 = vunpack.c.0.s8 %v2072
      %v2074 = vlaneseq
      %v2075 = vshrl.u32 %v2074, 7
      %v2076 = vsub.s32 %v2073, %v2075
      %v2077 = vrot.slane %v2069, %v2076
      %v2079 = vunpack.c.l.s4 1934713408
      %v2080 = vunpack.c.0.s8 %v2079
      %v2081 = vlaneseq
      %v2082 = vshrl.u32 %v2081, 7
      %v2083 = vsub.s32 %v2080, %v2082
      %v2084 = vrot.slane %v2070, %v2083
      %v2085 = vcombine.low %v2029, %v2061
      %v2086 = vcombine.high %v2029, %v2061
      %v2087 = vcombine.low %v2036, %v2068
      %v2088 = vcombine.high %v2036, %v2068
      %v2089 = vcombine.low %v2045, %v2077
      %v2090 = vcombine.high %v2045, %v2077
      %v2091 = vcombine.low %v2052, %v2084
      %v2092 = vcombine.high %v2052, %v2084
      %v2093 = vcombine.low %v879, %v895
      %v2094 = vcombine.high %v879, %v895
      %v2096 = vunpack.c.l.s4 1983009808
      %v2097 = vunpack.c.0.s8 %v2096
      %v2098 = vlaneseq
      %v2099 = vshrl.u32 %v2098, 7
      %v2100 = vsub.s32 %v2097, %v2099
      %v2101 = vrot.slane %v2093, %v2100
      %v2103 = vunpack.c.l.s4 1983009808
      %v2104 = vunpack.c.0.s8 %v2103
      %v2105 = vlaneseq
      %v2106 = vshrl.u32 %v2105, 7
      %v2107 = vsub.s32 %v2104, %v2106
      %v2108 = vrot.slane %v2094, %v2107
      %v2109 = vcombine.low %v887, %v903
      %v2110 = vcombine.high %v887, %v903
      %v2112 = vunpack.c.l.s4 1983009808
      %v2113 = vunpack.c.0.s8 %v2112
      %v2114 = vlaneseq
      %v2115 = vshrl.u32 %v2114, 7
      %v2116 = vsub.s32 %v2113, %v2115
      %v2117 = vrot.slane %v2109, %v2116
      %v2119 = vunpack.c.l.s4 1983009808
      %v2120 = vunpack.c.0.s8 %v2119
      %v2121 = vlaneseq
      %v2122 = vshrl.u32 %v2121, 7
      %v2123 = vsub.s32 %v2120, %v2122
      %v2124 = vrot.slane %v2110, %v2123
      %v2125 = vcombine.low %v911, %v927
      %v2126 = vcombine.high %v911, %v927
      %v2128 = vunpack.c.l.s4 1983009808
      %v2129 = vunpack.c.0.s8 %v2128
      %v2130 = vlaneseq
      %v2131 = vshrl.u32 %v2130, 7
      %v2132 = vsub.s32 %v2129, %v2131
      %v2133 = vrot.slane %v2125, %v2132
      %v2135 = vunpack.c.l.s4 1983009808
      %v2136 = vunpack.c.0.s8 %v2135
      %v2137 = vlaneseq
      %v2138 = vshrl.u32 %v2137, 7
      %v2139 = vsub.s32 %v2136, %v2138
      %v2140 = vrot.slane %v2126, %v2139
      %v2141 = vcombine.low %v919, %v935
      %v2142 = vcombine.high %v919, %v935
      %v2144 = vunpack.c.l.s4 1983009808
      %v2145 = vunpack.c.0.s8 %v2144
      %v2146 = vlaneseq
      %v2147 = vshrl.u32 %v2146, 7
      %v2148 = vsub.s32 %v2145, %v2147
      %v2149 = vrot.slane %v2141, %v2148
      %v2151 = vunpack.c.l.s4 1983009808
      %v2152 = vunpack.c.0.s8 %v2151
      %v2153 = vlaneseq
      %v2154 = vshrl.u32 %v2153, 7
      %v2155 = vsub.s32 %v2152, %v2154
      %v2156 = vrot.slane %v2142, %v2155
      %v2157 = vcombine.low %v2101, %v2117
      %v2158 = vcombine.high %v2101, %v2117
      %v2160 = vunpack.c.l.s4 1934713408
      %v2161 = vunpack.c.0.s8 %v2160
      %v2162 = vlaneseq
      %v2163 = vshrl.u32 %v2162, 7
      %v2164 = vsub.s32 %v2161, %v2163
      %v2165 = vrot.slane %v2157, %v2164
      %v2167 = vunpack.c.l.s4 1934713408
      %v2168 = vunpack.c.0.s8 %v2167
      %v2169 = vlaneseq
      %v2170 = vshrl.u32 %v2169, 7
      %v2171 = vsub.s32 %v2168, %v2170
      %v2172 = vrot.slane %v2158, %v2171
      %v2173 = vcombine.low %v2108, %v2124
      %v2174 = vcombine.high %v2108, %v2124
      %v2176 = vunpack.c.l.s4 1934713408
      %v2177 = vunpack.c.0.s8 %v2176
      %v2178 = vlaneseq
      %v2179 = vshrl.u32 %v2178, 7
      %v2180 = vsub.s32 %v2177, %v2179
      %v2181 = vrot.slane %v2173, %v2180
      %v2183 = vunpack.c.l.s4 1934713408
      %v2184 = vunpack.c.0.s8 %v2183
      %v2185 = vlaneseq
      %v2186 = vshrl.u32 %v2185, 7
      %v2187 = vsub.s32 %v2184, %v2186
      %v2188 = vrot.slane %v2174, %v2187
      %v2189 = vcombine.low %v2133, %v2149
      %v2190 = vcombine.high %v2133, %v2149
      %v2192 = vunpack.c.l.s4 1934713408
      %v2193 = vunpack.c.0.s8 %v2192
      %v2194 = vlaneseq
      %v2195 = vshrl.u32 %v2194, 7
      %v2196 = vsub.s32 %v2193, %v2195
      %v2197 = vrot.slane %v2189, %v2196
      %v2199 = vunpack.c.l.s4 1934713408
      %v2200 = vunpack.c.0.s8 %v2199
      %v2201 = vlaneseq
      %v2202 = vshrl.u32 %v2201, 7
      %v2203 = vsub.s32 %v2200, %v2202
      %v2204 = vrot.slane %v2190, %v2203
      %v2205 = vcombine.low %v2140, %v2156
      %v2206 = vcombine.high %v2140, %v2156
      %v2208 = vunpack.c.l.s4 1934713408
      %v2209 = vunpack.c.0.s8 %v2208
      %v2210 = vlaneseq
      %v2211 = vshrl.u32 %v2210, 7
      %v2212 = vsub.s32 %v2209, %v2211
      %v2213 = vrot.slane %v2205, %v2212
      %v2215 = vunpack.c.l.s4 1934713408
      %v2216 = vunpack.c.0.s8 %v2215
      %v2217 = vlaneseq
      %v2218 = vshrl.u32 %v2217, 7
      %v2219 = vsub.s32 %v2216, %v2218
      %v2220 = vrot.slane %v2206, %v2219
      %v2221 = vcombine.low %v2165, %v2197
      %v2222 = vcombine.high %v2165, %v2197
      %v2223 = vcombine.low %v2172, %v2204
      %v2224 = vcombine.high %v2172, %v2204
      %v2225 = vcombine.low %v2181, %v2213
      %v2226 = vcombine.high %v2181, %v2213
      %v2227 = vcombine.low %v2188, %v2220
      %v2228 = vcombine.high %v2188, %v2220
      %v2229 = vcombine.low %v943, %v959
      %v2230 = vcombine.high %v943, %v959
      %v2232 = vunpack.c.l.s4 1983009808
      %v2233 = vunpack.c.0.s8 %v2232
      %v2234 = vlaneseq
      %v2235 = vshrl.u32 %v2234, 7
      %v2236 = vsub.s32 %v2233, %v2235
      %v2237 = vrot.slane %v2229, %v2236
      %v2239 = vunpack.c.l.s4 1983009808
      %v2240 = vunpack.c.0.s8 %v2239
      %v2241 = vlaneseq
      %v2242 = vshrl.u32 %v2241, 7
      %v2243 = vsub.s32 %v2240, %v2242
      %v2244 = vrot.slane %v2230, %v2243
      %v2245 = vcombine.low %v951, %v967
      %v2246 = vcombine.high %v951, %v967
      %v2248 = vunpack.c.l.s4 1983009808
      %v2249 = vunpack.c.0.s8 %v2248
      %v2250 = vlaneseq
      %v2251 = vshrl.u32 %v2250, 7
      %v2252 = vsub.s32 %v2249, %v2251
      %v2253 = vrot.slane %v2245, %v2252
      %v2255 = vunpack.c.l.s4 1983009808
      %v2256 = vunpack.c.0.s8 %v2255
      %v2257 = vlaneseq
      %v2258 = vshrl.u32 %v2257, 7
      %v2259 = vsub.s32 %v2256, %v2258
      %v2260 = vrot.slane %v2246, %v2259
      %v2261 = vcombine.low %v975, %v991
      %v2262 = vcombine.high %v975, %v991
      %v2264 = vunpack.c.l.s4 1983009808
      %v2265 = vunpack.c.0.s8 %v2264
      %v2266 = vlaneseq
      %v2267 = vshrl.u32 %v2266, 7
      %v2268 = vsub.s32 %v2265, %v2267
      %v2269 = vrot.slane %v2261, %v2268
      %v2271 = vunpack.c.l.s4 1983009808
      %v2272 = vunpack.c.0.s8 %v2271
      %v2273 = vlaneseq
      %v2274 = vshrl.u32 %v2273, 7
      %v2275 = vsub.s32 %v2272, %v2274
      %v2276 = vrot.slane %v2262, %v2275
      %v2277 = vcombine.low %v983, %v999
      %v2278 = vcombine.high %v983, %v999
      %v2280 = vunpack.c.l.s4 1983009808
      %v2281 = vunpack.c.0.s8 %v2280
      %v2282 = vlaneseq
      %v2283 = vshrl.u32 %v2282, 7
      %v2284 = vsub.s32 %v2281, %v2283
      %v2285 = vrot.slane %v2277, %v2284
      %v2287 = vunpack.c.l.s4 1983009808
      %v2288 = vunpack.c.0.s8 %v2287
      %v2289 = vlaneseq
      %v2290 = vshrl.u32 %v2289, 7
      %v2291 = vsub.s32 %v2288, %v2290
      %v2292 = vrot.slane %v2278, %v2291
      %v2293 = vcombine.low %v2237, %v2253
      %v2294 = vcombine.high %v2237, %v2253
      %v2296 = vunpack.c.l.s4 1934713408
      %v2297 = vunpack.c.0.s8 %v2296
      %v2298 = vlaneseq
      %v2299 = vshrl.u32 %v2298, 7
      %v2300 = vsub.s32 %v2297, %v2299
      %v2301 = vrot.slane %v2293, %v2300
      %v2303 = vunpack.c.l.s4 1934713408
      %v2304 = vunpack.c.0.s8 %v2303
      %v2305 = vlaneseq
      %v2306 = vshrl.u32 %v2305, 7
      %v2307 = vsub.s32 %v2304, %v2306
      %v2308 = vrot.slane %v2294, %v2307
      %v2309 = vcombine.low %v2244, %v2260
      %v2310 = vcombine.high %v2244, %v2260
      %v2312 = vunpack.c.l.s4 1934713408
      %v2313 = vunpack.c.0.s8 %v2312
      %v2314 = vlaneseq
      %v2315 = vshrl.u32 %v2314, 7
      %v2316 = vsub.s32 %v2313, %v2315
      %v2317 = vrot.slane %v2309, %v2316
      %v2319 = vunpack.c.l.s4 1934713408
      %v2320 = vunpack.c.0.s8 %v2319
      %v2321 = vlaneseq
      %v2322 = vshrl.u32 %v2321, 7
      %v2323 = vsub.s32 %v2320, %v2322
      %v2324 = vrot.slane %v2310, %v2323
      %v2325 = vcombine.low %v2269, %v2285
      %v2326 = vcombine.high %v2269, %v2285
      %v2328 = vunpack.c.l.s4 1934713408
      %v2329 = vunpack.c.0.s8 %v2328
      %v2330 = vlaneseq
      %v2331 = vshrl.u32 %v2330, 7
      %v2332 = vsub.s32 %v2329, %v2331
      %v2333 = vrot.slane %v2325, %v2332
      %v2335 = vunpack.c.l.s4 1934713408
      %v2336 = vunpack.c.0.s8 %v2335
      %v2337 = vlaneseq
      %v2338 = vshrl.u32 %v2337, 7
      %v2339 = vsub.s32 %v2336, %v2338
      %v2340 = vrot.slane %v2326, %v2339
      %v2341 = vcombine.low %v2276, %v2292
      %v2342 = vcombine.high %v2276, %v2292
      %v2344 = vunpack.c.l.s4 1934713408
      %v2345 = vunpack.c.0.s8 %v2344
      %v2346 = vlaneseq
      %v2347 = vshrl.u32 %v2346, 7
      %v2348 = vsub.s32 %v2345, %v2347
      %v2349 = vrot.slane %v2341, %v2348
      %v2351 = vunpack.c.l.s4 1934713408
      %v2352 = vunpack.c.0.s8 %v2351
      %v2353 = vlaneseq
      %v2354 = vshrl.u32 %v2353, 7
      %v2355 = vsub.s32 %v2352, %v2354
      %v2356 = vrot.slane %v2342, %v2355
      %v2357 = vcombine.low %v2301, %v2333
      %v2358 = vcombine.high %v2301, %v2333
      %v2359 = vcombine.low %v2308, %v2340
      %v2360 = vcombine.high %v2308, %v2340
      %v2361 = vcombine.low %v2317, %v2349
      %v2362 = vcombine.high %v2317, %v2349
      %v2363 = vcombine.low %v2324, %v2356
      %v2364 = vcombine.high %v2324, %v2356
      %v2365 = vcombine.low %v882, %v898
      %v2366 = vcombine.high %v882, %v898
      %v2368 = vunpack.c.l.s4 1983009808
      %v2369 = vunpack.c.0.s8 %v2368
      %v2370 = vlaneseq
      %v2371 = vshrl.u32 %v2370, 7
      %v2372 = vsub.s32 %v2369, %v2371
      %v2373 = vrot.slane %v2365, %v2372
      %v2375 = vunpack.c.l.s4 1983009808
      %v2376 = vunpack.c.0.s8 %v2375
      %v2377 = vlaneseq
      %v2378 = vshrl.u32 %v2377, 7
      %v2379 = vsub.s32 %v2376, %v2378
      %v2380 = vrot.slane %v2366, %v2379
      %v2381 = vcombine.low %v890, %v906
      %v2382 = vcombine.high %v890, %v906
      %v2384 = vunpack.c.l.s4 1983009808
      %v2385 = vunpack.c.0.s8 %v2384
      %v2386 = vlaneseq
      %v2387 = vshrl.u32 %v2386, 7
      %v2388 = vsub.s32 %v2385, %v2387
      %v2389 = vrot.slane %v2381, %v2388
      %v2391 = vunpack.c.l.s4 1983009808
      %v2392 = vunpack.c.0.s8 %v2391
      %v2393 = vlaneseq
      %v2394 = vshrl.u32 %v2393, 7
      %v2395 = vsub.s32 %v2392, %v2394
      %v2396 = vrot.slane %v2382, %v2395
      %v2397 = vcombine.low %v914, %v930
      %v2398 = vcombine.high %v914, %v930
      %v2400 = vunpack.c.l.s4 1983009808
      %v2401 = vunpack.c.0.s8 %v2400
      %v2402 = vlaneseq
      %v2403 = vshrl.u32 %v2402, 7
      %v2404 = vsub.s32 %v2401, %v2403
      %v2405 = vrot.slane %v2397, %v2404
      %v2407 = vunpack.c.l.s4 1983009808
      %v2408 = vunpack.c.0.s8 %v2407
      %v2409 = vlaneseq
      %v2410 = vshrl.u32 %v2409, 7
      %v2411 = vsub.s32 %v2408, %v2410
      %v2412 = vrot.slane %v2398, %v2411
      %v2413 = vcombine.low %v922, %v938
      %v2414 = vcombine.high %v922, %v938
      %v2416 = vunpack.c.l.s4 1983009808
      %v2417 = vunpack.c.0.s8 %v2416
      %v2418 = vlaneseq
      %v2419 = vshrl.u32 %v2418, 7
      %v2420 = vsub.s32 %v2417, %v2419
      %v2421 = vrot.slane %v2413, %v2420
      %v2423 = vunpack.c.l.s4 1983009808
      %v2424 = vunpack.c.0.s8 %v2423
      %v2425 = vlaneseq
      %v2426 = vshrl.u32 %v2425, 7
      %v2427 = vsub.s32 %v2424, %v2426
      %v2428 = vrot.slane %v2414, %v2427
      %v2429 = vcombine.low %v2373, %v2389
      %v2430 = vcombine.high %v2373, %v2389
      %v2432 = vunpack.c.l.s4 1934713408
      %v2433 = vunpack.c.0.s8 %v2432
      %v2434 = vlaneseq
      %v2435 = vshrl.u32 %v2434, 7
      %v2436 = vsub.s32 %v2433, %v2435
      %v2437 = vrot.slane %v2429, %v2436
      %v2439 = vunpack.c.l.s4 1934713408
      %v2440 = vunpack.c.0.s8 %v2439
      %v2441 = vlaneseq
      %v2442 = vshrl.u32 %v2441, 7
      %v2443 = vsub.s32 %v2440, %v2442
      %v2444 = vrot.slane %v2430, %v2443
      %v2445 = vcombine.low %v2380, %v2396
      %v2446 = vcombine.high %v2380, %v2396
      %v2448 = vunpack.c.l.s4 1934713408
      %v2449 = vunpack.c.0.s8 %v2448
      %v2450 = vlaneseq
      %v2451 = vshrl.u32 %v2450, 7
      %v2452 = vsub.s32 %v2449, %v2451
      %v2453 = vrot.slane %v2445, %v2452
      %v2455 = vunpack.c.l.s4 1934713408
      %v2456 = vunpack.c.0.s8 %v2455
      %v2457 = vlaneseq
      %v2458 = vshrl.u32 %v2457, 7
      %v2459 = vsub.s32 %v2456, %v2458
      %v2460 = vrot.slane %v2446, %v2459
      %v2461 = vcombine.low %v2405, %v2421
      %v2462 = vcombine.high %v2405, %v2421
      %v2464 = vunpack.c.l.s4 1934713408
      %v2465 = vunpack.c.0.s8 %v2464
      %v2466 = vlaneseq
      %v2467 = vshrl.u32 %v2466, 7
      %v2468 = vsub.s32 %v2465, %v2467
      %v2469 = vrot.slane %v2461, %v2468
      %v2471 = vunpack.c.l.s4 1934713408
      %v2472 = vunpack.c.0.s8 %v2471
      %v2473 = vlaneseq
      %v2474 = vshrl.u32 %v2473, 7
      %v2475 = vsub.s32 %v2472, %v2474
      %v2476 = vrot.slane %v2462, %v2475
      %v2477 = vcombine.low %v2412, %v2428
      %v2478 = vcombine.high %v2412, %v2428
      %v2480 = vunpack.c.l.s4 1934713408
      %v2481 = vunpack.c.0.s8 %v2480
      %v2482 = vlaneseq
      %v2483 = vshrl.u32 %v2482, 7
      %v2484 = vsub.s32 %v2481, %v2483
      %v2485 = vrot.slane %v2477, %v2484
      %v2487 = vunpack.c.l.s4 1934713408
      %v2488 = vunpack.c.0.s8 %v2487
      %v2489 = vlaneseq
      %v2490 = vshrl.u32 %v2489, 7
      %v2491 = vsub.s32 %v2488, %v2490
      %v2492 = vrot.slane %v2478, %v2491
      %v2493 = vcombine.low %v2437, %v2469
      %v2494 = vcombine.high %v2437, %v2469
      %v2495 = vcombine.low %v2444, %v2476
      %v2496 = vcombine.high %v2444, %v2476
      %v2497 = vcombine.low %v2453, %v2485
      %v2498 = vcombine.high %v2453, %v2485
      %v2499 = vcombine.low %v2460, %v2492
      %v2500 = vcombine.high %v2460, %v2492
      %v2501 = vcombine.low %v946, %v962
      %v2502 = vcombine.high %v946, %v962
      %v2504 = vunpack.c.l.s4 1983009808
      %v2505 = vunpack.c.0.s8 %v2504
      %v2506 = vlaneseq
      %v2507 = vshrl.u32 %v2506, 7
      %v2508 = vsub.s32 %v2505, %v2507
      %v2509 = vrot.slane %v2501, %v2508
      %v2511 = vunpack.c.l.s4 1983009808
      %v2512 = vunpack.c.0.s8 %v2511
      %v2513 = vlaneseq
      %v2514 = vshrl.u32 %v2513, 7
      %v2515 = vsub.s32 %v2512, %v2514
      %v2516 = vrot.slane %v2502, %v2515
      %v2517 = vcombine.low %v954, %v970
      %v2518 = vcombine.high %v954, %v970
      %v2520 = vunpack.c.l.s4 1983009808
      %v2521 = vunpack.c.0.s8 %v2520
      %v2522 = vlaneseq
      %v2523 = vshrl.u32 %v2522, 7
      %v2524 = vsub.s32 %v2521, %v2523
      %v2525 = vrot.slane %v2517, %v2524
      %v2527 = vunpack.c.l.s4 1983009808
      %v2528 = vunpack.c.0.s8 %v2527
      %v2529 = vlaneseq
      %v2530 = vshrl.u32 %v2529, 7
      %v2531 = vsub.s32 %v2528, %v2530
      %v2532 = vrot.slane %v2518, %v2531
      %v2533 = vcombine.low %v978, %v994
      %v2534 = vcombine.high %v978, %v994
      %v2536 = vunpack.c.l.s4 1983009808
      %v2537 = vunpack.c.0.s8 %v2536
      %v2538 = vlaneseq
      %v2539 = vshrl.u32 %v2538, 7
      %v2540 = vsub.s32 %v2537, %v2539
      %v2541 = vrot.slane %v2533, %v2540
      %v2543 = vunpack.c.l.s4 1983009808
      %v2544 = vunpack.c.0.s8 %v2543
      %v2545 = vlaneseq
      %v2546 = vshrl.u32 %v2545, 7
      %v2547 = vsub.s32 %v2544, %v2546
      %v2548 = vrot.slane %v2534, %v2547
      %v2549 = vcombine.low %v986, %v1002
      %v2550 = vcombine.high %v986, %v1002
      %v2552 = vunpack.c.l.s4 1983009808
      %v2553 = vunpack.c.0.s8 %v2552
      %v2554 = vlaneseq
      %v2555 = vshrl.u32 %v2554, 7
      %v2556 = vsub.s32 %v2553, %v2555
      %v2557 = vrot.slane %v2549, %v2556
      %v2559 = vunpack.c.l.s4 1983009808
      %v2560 = vunpack.c.0.s8 %v2559
      %v2561 = vlaneseq
      %v2562 = vshrl.u32 %v2561, 7
      %v2563 = vsub.s32 %v2560, %v2562
      %v2564 = vrot.slane %v2550, %v2563
      %v2565 = vcombine.low %v2509, %v2525
      %v2566 = vcombine.high %v2509, %v2525
      %v2568 = vunpack.c.l.s4 1934713408
      %v2569 = vunpack.c.0.s8 %v2568
      %v2570 = vlaneseq
      %v2571 = vshrl.u32 %v2570, 7
      %v2572 = vsub.s32 %v2569, %v2571
      %v2573 = vrot.slane %v2565, %v2572
      %v2575 = vunpack.c.l.s4 1934713408
      %v2576 = vunpack.c.0.s8 %v2575
      %v2577 = vlaneseq
      %v2578 = vshrl.u32 %v2577, 7
      %v2579 = vsub.s32 %v2576, %v2578
      %v2580 = vrot.slane %v2566, %v2579
      %v2581 = vcombine.low %v2516, %v2532
      %v2582 = vcombine.high %v2516, %v2532
      %v2584 = vunpack.c.l.s4 1934713408
      %v2585 = vunpack.c.0.s8 %v2584
      %v2586 = vlaneseq
      %v2587 = vshrl.u32 %v2586, 7
      %v2588 = vsub.s32 %v2585, %v2587
      %v2589 = vrot.slane %v2581, %v2588
      %v2591 = vunpack.c.l.s4 1934713408
      %v2592 = vunpack.c.0.s8 %v2591
      %v2593 = vlaneseq
      %v2594 = vshrl.u32 %v2593, 7
      %v2595 = vsub.s32 %v2592, %v2594
      %v2596 = vrot.slane %v2582, %v2595
      %v2597 = vcombine.low %v2541, %v2557
      %v2598 = vcombine.high %v2541, %v2557
      %v2600 = vunpack.c.l.s4 1934713408
      %v2601 = vunpack.c.0.s8 %v2600
      %v2602 = vlaneseq
      %v2603 = vshrl.u32 %v2602, 7
      %v2604 = vsub.s32 %v2601, %v2603
      %v2605 = vrot.slane %v2597, %v2604
      %v2607 = vunpack.c.l.s4 1934713408
      %v2608 = vunpack.c.0.s8 %v2607
      %v2609 = vlaneseq
      %v2610 = vshrl.u32 %v2609, 7
      %v2611 = vsub.s32 %v2608, %v2610
      %v2612 = vrot.slane %v2598, %v2611
      %v2613 = vcombine.low %v2548, %v2564
      %v2614 = vcombine.high %v2548, %v2564
      %v2616 = vunpack.c.l.s4 1934713408
      %v2617 = vunpack.c.0.s8 %v2616
      %v2618 = vlaneseq
      %v2619 = vshrl.u32 %v2618, 7
      %v2620 = vsub.s32 %v2617, %v2619
      %v2621 = vrot.slane %v2613, %v2620
      %v2623 = vunpack.c.l.s4 1934713408
      %v2624 = vunpack.c.0.s8 %v2623
      %v2625 = vlaneseq
      %v2626 = vshrl.u32 %v2625, 7
      %v2627 = vsub.s32 %v2624, %v2626
      %v2628 = vrot.slane %v2614, %v2627
      %v2629 = vcombine.low %v2573, %v2605
      %v2630 = vcombine.high %v2573, %v2605
      %v2631 = vcombine.low %v2580, %v2612
      %v2632 = vcombine.high %v2580, %v2612
      %v2633 = vcombine.low %v2589, %v2621
      %v2634 = vcombine.high %v2589, %v2621
      %v2635 = vcombine.low %v2596, %v2628
      %v2636 = vcombine.high %v2596, %v2628
      %v2637 = vpack.c.bf16 %v482, %v479
      %v2638 = vpack.c.bf16 %v490, %v487
      %v2639 = vpack.c.bf16 %v498, %v495
      %v2640 = vpack.c.bf16 %v506, %v503
      %v2641 = vpack.c.bf16 %v514, %v511
      %v2642 = vpack.c.bf16 %v522, %v519
      %v2643 = vpack.c.bf16 %v530, %v527
      %v2644 = vpack.c.bf16 %v538, %v535
      %v2645 = vpack.c.bf16 %v546, %v543
      %v2646 = vpack.c.bf16 %v554, %v551
      %v2647 = vpack.c.bf16 %v562, %v559
      %v2648 = vpack.c.bf16 %v570, %v567
      %v2649 = vpack.c.bf16 %v578, %v575
      %v2650 = vpack.c.bf16 %v586, %v583
      %v2651 = vpack.c.bf16 %v594, %v591
      %v2652 = vpack.c.bf16 %v602, %v599
      %v2653 = vpack.c.bf16 %v682, %v679
      %v2654 = vpack.c.bf16 %v690, %v687
      %v2655 = vpack.c.bf16 %v698, %v695
      %v2656 = vpack.c.bf16 %v706, %v703
      %v2657 = vpack.c.bf16 %v714, %v711
      %v2658 = vpack.c.bf16 %v722, %v719
      %v2659 = vpack.c.bf16 %v730, %v727
      %v2660 = vpack.c.bf16 %v738, %v735
      %v2661 = vpack.c.bf16 %v746, %v743
      %v2662 = vpack.c.bf16 %v754, %v751
      %v2663 = vpack.c.bf16 %v762, %v759
      %v2664 = vpack.c.bf16 %v770, %v767
      %v2665 = vpack.c.bf16 %v778, %v775
      %v2666 = vpack.c.bf16 %v786, %v783
      %v2667 = vpack.c.bf16 %v794, %v791
      %v2668 = vpack.c.bf16 %v802, %v799
      %v2669 = vpack.c.bf16 %v882, %v879
      %v2670 = vpack.c.bf16 %v890, %v887
      %v2671 = vpack.c.bf16 %v898, %v895
      %v2672 = vpack.c.bf16 %v906, %v903
      %v2673 = vpack.c.bf16 %v914, %v911
      %v2674 = vpack.c.bf16 %v922, %v919
      %v2675 = vpack.c.bf16 %v930, %v927
      %v2676 = vpack.c.bf16 %v938, %v935
      %v2677 = vpack.c.bf16 %v946, %v943
      %v2678 = vpack.c.bf16 %v954, %v951
      %v2679 = vpack.c.bf16 %v962, %v959
      %v2680 = vpack.c.bf16 %v970, %v967
      %v2681 = vpack.c.bf16 %v978, %v975
      %v2682 = vpack.c.bf16 %v986, %v983
      %v2683 = vpack.c.bf16 %v994, %v991
      %v2684 = vpack.c.bf16 %v1002, %v999
      %v2685 = vpack.c.bf16 %v1269, %v1133
      %v2686 = vpack.c.bf16 %v1270, %v1134
      %v2687 = vpack.c.bf16 %v1271, %v1135
      %v2688 = vpack.c.bf16 %v1272, %v1136
      %v2689 = vpack.c.bf16 %v1273, %v1137
      %v2690 = vpack.c.bf16 %v1274, %v1138
      %v2691 = vpack.c.bf16 %v1275, %v1139
      %v2692 = vpack.c.bf16 %v1276, %v1140
      %v2693 = vpack.c.bf16 %v1541, %v1405
      %v2694 = vpack.c.bf16 %v1542, %v1406
      %v2695 = vpack.c.bf16 %v1543, %v1407
      %v2696 = vpack.c.bf16 %v1544, %v1408
      %v2697 = vpack.c.bf16 %v1545, %v1409
      %v2698 = vpack.c.bf16 %v1546, %v1410
      %v2699 = vpack.c.bf16 %v1547, %v1411
      %v2700 = vpack.c.bf16 %v1548, %v1412
      %v2701 = vpack.c.bf16 %v1813, %v1677
      %v2702 = vpack.c.bf16 %v1814, %v1678
      %v2703 = vpack.c.bf16 %v1815, %v1679
      %v2704 = vpack.c.bf16 %v1816, %v1680
      %v2705 = vpack.c.bf16 %v1817, %v1681
      %v2706 = vpack.c.bf16 %v1818, %v1682
      %v2707 = vpack.c.bf16 %v1819, %v1683
      %v2708 = vpack.c.bf16 %v1820, %v1684
      %v2709 = vpack.c.bf16 %v2085, %v1949
      %v2710 = vpack.c.bf16 %v2086, %v1950
      %v2711 = vpack.c.bf16 %v2087, %v1951
      %v2712 = vpack.c.bf16 %v2088, %v1952
      %v2713 = vpack.c.bf16 %v2089, %v1953
      %v2714 = vpack.c.bf16 %v2090, %v1954
      %v2715 = vpack.c.bf16 %v2091, %v1955
      %v2716 = vpack.c.bf16 %v2092, %v1956
      %v2717 = vpack.c.bf16 %v2357, %v2221
      %v2718 = vpack.c.bf16 %v2358, %v2222
      %v2719 = vpack.c.bf16 %v2359, %v2223
      %v2720 = vpack.c.bf16 %v2360, %v2224
      %v2721 = vpack.c.bf16 %v2361, %v2225
      %v2722 = vpack.c.bf16 %v2362, %v2226
      %v2723 = vpack.c.bf16 %v2363, %v2227
      %v2724 = vpack.c.bf16 %v2364, %v2228
      %v2725 = vpack.c.bf16 %v2629, %v2493
      %v2726 = vpack.c.bf16 %v2630, %v2494
      %v2727 = vpack.c.bf16 %v2631, %v2495
      %v2728 = vpack.c.bf16 %v2632, %v2496
      %v2729 = vpack.c.bf16 %v2633, %v2497
      %v2730 = vpack.c.bf16 %v2634, %v2498
      %v2731 = vpack.c.bf16 %v2635, %v2499
      %v2732 = vpack.c.bf16 %v2636, %v2500
      %vm2733 = vcmask 64512
      %v2735 = vsel %vm2733, %v2637, 0
      %v2738 = vsel %vm2733, %v2653, 0
      %2740 = vmatprep.subr.bf16.mxu0 0
      %2741 = vmatpush1.bf16.xpose.msra.mxu0 %v2738
      %2742 = vmatprep.subr.bf16.mxu0 0
      %2743 = vmatpush1.bf16.xpose.msra.mxu0 0
      %2744 = vmatprep.subr.bf16.mxu0 0
      %2745 = vmatpush1.bf16.xpose.msra.mxu0 0
      %2746 = vmatprep.subr.bf16.mxu0 0
      %2747 = vmatpush1.bf16.xpose.msra.mxu0 0
      %2748 = vmatprep.subr.bf16.mxu0 0
      %2749 = vmatpush1.bf16.xpose.msra.mxu0 0
      %2750 = vmatprep.subr.bf16.mxu0 0
      %2751 = vmatpush1.bf16.xpose.msra.mxu0 0
      %2752 = vmatprep.subr.bf16.mxu0 0
      %2753 = vmatpush1.bf16.xpose.msra.mxu0 0
      %2754 = vmatprep.subr.bf16.mxu0 0
      %2755 = vmatpush1.bf16.xpose.msra.mxu0 0
      %2756 = vmatprep.subr.bf16.mxu0 0
      %2757 = vmatpush1.bf16.xpose.msra.mxu0 0
      %2758 = vmatprep.subr.bf16.mxu0 0
      %2759 = vmatpush1.bf16.xpose.msra.mxu0 0
      %2760 = vmatprep.subr.bf16.mxu0 0
      %2761 = vmatpush1.bf16.xpose.msra.mxu0 0
      %2762 = vmatprep.subr.bf16.mxu0 0
      %2763 = vmatpush1.bf16.xpose.msra.mxu0 0
      %2764 = vmatprep.subr.bf16.mxu0 0
      %2765 = vmatpush1.bf16.xpose.msra.mxu0 0
      %2766 = vmatprep.subr.bf16.mxu0 0
      %2767 = vmatpush1.bf16.xpose.msra.mxu0 0
      %2768 = vmatprep.subr.bf16.mxu0 0
      %2769 = vmatpush1.bf16.xpose.msra.mxu0 0
      %2770 = vmatprep.subr.bf16.mxu0 0
      %2771 = vmatpush1.bf16.xpose.msra.mxu0 0
      %2772 = vmatprep.mubr.bf16.mxu0 0
      %2773 = vmatmul.mubr.bf16.gmra.mrb[0].mxu0 %v2735
      %v2774 = vpop.f32.mrb[0].mxu0
      %v2775 = vadd.f32 0.0, %v2774
      %v2776 = vpop.f32.mrb[0].mxu0
      %v2777 = vpop.f32.mrb[0].mxu0
      %v2778 = vadd.f32 0.0, %v2777
      %v2779 = vpop.f32.mrb[0].mxu0
      %2780 = vdwg.mxu0
      %v2782 = vsel %vm2733, %v2638, 0
      %v2785 = vsel %vm2733, %v2654, 0
      %2787 = vmatprep.subr.bf16.mxu0 0
      %2788 = vmatpush1.bf16.xpose.msra.mxu0 %v2785
      %2789 = vmatprep.subr.bf16.mxu0 0
      %2790 = vmatpush1.bf16.xpose.msra.mxu0 0
      %2791 = vmatprep.subr.bf16.mxu0 0
      %2792 = vmatpush1.bf16.xpose.msra.mxu0 0
      %2793 = vmatprep.subr.bf16.mxu0 0
      %2794 = vmatpush1.bf16.xpose.msra.mxu0 0
      %2795 = vmatprep.subr.bf16.mxu0 0
      %2796 = vmatpush1.bf16.xpose.msra.mxu0 0
      %2797 = vmatprep.subr.bf16.mxu0 0
      %2798 = vmatpush1.bf16.xpose.msra.mxu0 0
      %2799 = vmatprep.subr.bf16.mxu0 0
      %2800 = vmatpush1.bf16.xpose.msra.mxu0 0
      %2801 = vmatprep.subr.bf16.mxu0 0
      %2802 = vmatpush1.bf16.xpose.msra.mxu0 0
      %2803 = vmatprep.subr.bf16.mxu0 0
      %2804 = vmatpush1.bf16.xpose.msra.mxu0 0
      %2805 = vmatprep.subr.bf16.mxu0 0
      %2806 = vmatpush1.bf16.xpose.msra.mxu0 0
      %2807 = vmatprep.subr.bf16.mxu0 0
      %2808 = vmatpush1.bf16.xpose.msra.mxu0 0
      %2809 = vmatprep.subr.bf16.mxu0 0
      %2810 = vmatpush1.bf16.xpose.msra.mxu0 0
      %2811 = vmatprep.subr.bf16.mxu0 0
      %2812 = vmatpush1.bf16.xpose.msra.mxu0 0
      %2813 = vmatprep.subr.bf16.mxu0 0
      %2814 = vmatpush1.bf16.xpose.msra.mxu0 0
      %2815 = vmatprep.subr.bf16.mxu0 0
      %2816 = vmatpush1.bf16.xpose.msra.mxu0 0
      %2817 = vmatprep.subr.bf16.mxu0 0
      %2818 = vmatpush1.bf16.xpose.msra.mxu0 0
      %2819 = vmatprep.mubr.bf16.mxu0 0
      %2820 = vmatmul.mubr.bf16.gmra.mrb[0].mxu0 %v2782
      %v2821 = vpop.f32.mrb[0].mxu0
      %v2822 = vadd.f32 0.0, %v2821
      %v2823 = vpop.f32.mrb[0].mxu0
      %v2824 = vpop.f32.mrb[0].mxu0
      %v2825 = vadd.f32 0.0, %v2824
      %v2826 = vpop.f32.mrb[0].mxu0
      %2827 = vdwg.mxu0
      %v2829 = vsel %vm2733, %v2639, 0
      %v2832 = vsel %vm2733, %v2655, 0
      %2834 = vmatprep.subr.bf16.mxu0 0
      %2835 = vmatpush1.bf16.xpose.msra.mxu0 %v2832
      %2836 = vmatprep.subr.bf16.mxu0 0
      %2837 = vmatpush1.bf16.xpose.msra.mxu0 0
      %2838 = vmatprep.subr.bf16.mxu0 0
      %2839 = vmatpush1.bf16.xpose.msra.mxu0 0
      %2840 = vmatprep.subr.bf16.mxu0 0
      %2841 = vmatpush1.bf16.xpose.msra.mxu0 0
      %2842 = vmatprep.subr.bf16.mxu0 0
      %2843 = vmatpush1.bf16.xpose.msra.mxu0 0
      %2844 = vmatprep.subr.bf16.mxu0 0
      %2845 = vmatpush1.bf16.xpose.msra.mxu0 0
      %2846 = vmatprep.subr.bf16.mxu0 0
      %2847 = vmatpush1.bf16.xpose.msra.mxu0 0
      %2848 = vmatprep.subr.bf16.mxu0 0
      %2849 = vmatpush1.bf16.xpose.msra.mxu0 0
      %2850 = vmatprep.subr.bf16.mxu0 0
      %2851 = vmatpush1.bf16.xpose.msra.mxu0 0
      %2852 = vmatprep.subr.bf16.mxu0 0
      %2853 = vmatpush1.bf16.xpose.msra.mxu0 0
      %2854 = vmatprep.subr.bf16.mxu0 0
      %2855 = vmatpush1.bf16.xpose.msra.mxu0 0
      %2856 = vmatprep.subr.bf16.mxu0 0
      %2857 = vmatpush1.bf16.xpose.msra.mxu0 0
      %2858 = vmatprep.subr.bf16.mxu0 0
      %2859 = vmatpush1.bf16.xpose.msra.mxu0 0
      %2860 = vmatprep.subr.bf16.mxu0 0
      %2861 = vmatpush1.bf16.xpose.msra.mxu0 0
      %2862 = vmatprep.subr.bf16.mxu0 0
      %2863 = vmatpush1.bf16.xpose.msra.mxu0 0
      %2864 = vmatprep.subr.bf16.mxu0 0
      %2865 = vmatpush1.bf16.xpose.msra.mxu0 0
      %2866 = vmatprep.mubr.bf16.mxu0 0
      %2867 = vmatmul.mubr.bf16.gmra.mrb[0].mxu0 %v2829
      %v2868 = vpop.f32.mrb[0].mxu0
      %v2869 = vadd.f32 0.0, %v2868
      %v2870 = vpop.f32.mrb[0].mxu0
      %v2871 = vpop.f32.mrb[0].mxu0
      %v2872 = vadd.f32 0.0, %v2871
      %v2873 = vpop.f32.mrb[0].mxu0
      %2874 = vdwg.mxu0
      %v2876 = vsel %vm2733, %v2640, 0
      %v2879 = vsel %vm2733, %v2656, 0
      %2881 = vmatprep.subr.bf16.mxu0 0
      %2882 = vmatpush1.bf16.xpose.msra.mxu0 %v2879
      %2883 = vmatprep.subr.bf16.mxu0 0
      %2884 = vmatpush1.bf16.xpose.msra.mxu0 0
      %2885 = vmatprep.subr.bf16.mxu0 0
      %2886 = vmatpush1.bf16.xpose.msra.mxu0 0
      %2887 = vmatprep.subr.bf16.mxu0 0
      %2888 = vmatpush1.bf16.xpose.msra.mxu0 0
      %2889 = vmatprep.subr.bf16.mxu0 0
      %2890 = vmatpush1.bf16.xpose.msra.mxu0 0
      %2891 = vmatprep.subr.bf16.mxu0 0
      %2892 = vmatpush1.bf16.xpose.msra.mxu0 0
      %2893 = vmatprep.subr.bf16.mxu0 0
      %2894 = vmatpush1.bf16.xpose.msra.mxu0 0
      %2895 = vmatprep.subr.bf16.mxu0 0
      %2896 = vmatpush1.bf16.xpose.msra.mxu0 0
      %2897 = vmatprep.subr.bf16.mxu0 0
      %2898 = vmatpush1.bf16.xpose.msra.mxu0 0
      %2899 = vmatprep.subr.bf16.mxu0 0
      %2900 = vmatpush1.bf16.xpose.msra.mxu0 0
      %2901 = vmatprep.subr.bf16.mxu0 0
      %2902 = vmatpush1.bf16.xpose.msra.mxu0 0
      %2903 = vmatprep.subr.bf16.mxu0 0
      %2904 = vmatpush1.bf16.xpose.msra.mxu0 0
      %2905 = vmatprep.subr.bf16.mxu0 0
      %2906 = vmatpush1.bf16.xpose.msra.mxu0 0
      %2907 = vmatprep.subr.bf16.mxu0 0
      %2908 = vmatpush1.bf16.xpose.msra.mxu0 0
      %2909 = vmatprep.subr.bf16.mxu0 0
      %2910 = vmatpush1.bf16.xpose.msra.mxu0 0
      %2911 = vmatprep.subr.bf16.mxu0 0
      %2912 = vmatpush1.bf16.xpose.msra.mxu0 0
      %2913 = vmatprep.mubr.bf16.mxu0 0
      %2914 = vmatmul.mubr.bf16.gmra.mrb[0].mxu0 %v2876
      %v2915 = vpop.f32.mrb[0].mxu0
      %v2916 = vadd.f32 0.0, %v2915
      %v2917 = vpop.f32.mrb[0].mxu0
      %v2918 = vpop.f32.mrb[0].mxu0
      %v2919 = vadd.f32 0.0, %v2918
      %v2920 = vpop.f32.mrb[0].mxu0
      %2921 = vdwg.mxu0
      %v2923 = vsel %vm2733, %v2641, 0
      %v2926 = vsel %vm2733, %v2657, 0
      %2928 = vmatprep.subr.bf16.mxu0 0
      %2929 = vmatpush1.bf16.xpose.msra.mxu0 %v2926
      %2930 = vmatprep.subr.bf16.mxu0 0
      %2931 = vmatpush1.bf16.xpose.msra.mxu0 0
      %2932 = vmatprep.subr.bf16.mxu0 0
      %2933 = vmatpush1.bf16.xpose.msra.mxu0 0
      %2934 = vmatprep.subr.bf16.mxu0 0
      %2935 = vmatpush1.bf16.xpose.msra.mxu0 0
      %2936 = vmatprep.subr.bf16.mxu0 0
      %2937 = vmatpush1.bf16.xpose.msra.mxu0 0
      %2938 = vmatprep.subr.bf16.mxu0 0
      %2939 = vmatpush1.bf16.xpose.msra.mxu0 0
      %2940 = vmatprep.subr.bf16.mxu0 0
      %2941 = vmatpush1.bf16.xpose.msra.mxu0 0
      %2942 = vmatprep.subr.bf16.mxu0 0
      %2943 = vmatpush1.bf16.xpose.msra.mxu0 0
      %2944 = vmatprep.subr.bf16.mxu0 0
      %2945 = vmatpush1.bf16.xpose.msra.mxu0 0
      %2946 = vmatprep.subr.bf16.mxu0 0
      %2947 = vmatpush1.bf16.xpose.msra.mxu0 0
      %2948 = vmatprep.subr.bf16.mxu0 0
      %2949 = vmatpush1.bf16.xpose.msra.mxu0 0
      %2950 = vmatprep.subr.bf16.mxu0 0
      %2951 = vmatpush1.bf16.xpose.msra.mxu0 0
      %2952 = vmatprep.subr.bf16.mxu0 0
      %2953 = vmatpush1.bf16.xpose.msra.mxu0 0
      %2954 = vmatprep.subr.bf16.mxu0 0
      %2955 = vmatpush1.bf16.xpose.msra.mxu0 0
      %2956 = vmatprep.subr.bf16.mxu0 0
      %2957 = vmatpush1.bf16.xpose.msra.mxu0 0
      %2958 = vmatprep.subr.bf16.mxu0 0
      %2959 = vmatpush1.bf16.xpose.msra.mxu0 0
      %2960 = vmatprep.mubr.bf16.mxu0 0
      %2961 = vmatmul.mubr.bf16.gmra.mrb[0].mxu0 %v2923
      %v2962 = vpop.f32.mrb[0].mxu0
      %v2963 = vadd.f32 0.0, %v2962
      %v2964 = vpop.f32.mrb[0].mxu0
      %v2965 = vpop.f32.mrb[0].mxu0
      %v2966 = vadd.f32 0.0, %v2965
      %v2967 = vpop.f32.mrb[0].mxu0
      %2968 = vdwg.mxu0
      %v2970 = vsel %vm2733, %v2642, 0
      %v2973 = vsel %vm2733, %v2658, 0
      %2975 = vmatprep.subr.bf16.mxu0 0
      %2976 = vmatpush1.bf16.xpose.msra.mxu0 %v2973
      %2977 = vmatprep.subr.bf16.mxu0 0
      %2978 = vmatpush1.bf16.xpose.msra.mxu0 0
      %2979 = vmatprep.subr.bf16.mxu0 0
      %2980 = vmatpush1.bf16.xpose.msra.mxu0 0
      %2981 = vmatprep.subr.bf16.mxu0 0
      %2982 = vmatpush1.bf16.xpose.msra.mxu0 0
      %2983 = vmatprep.subr.bf16.mxu0 0
      %2984 = vmatpush1.bf16.xpose.msra.mxu0 0
      %2985 = vmatprep.subr.bf16.mxu0 0
      %2986 = vmatpush1.bf16.xpose.msra.mxu0 0
      %2987 = vmatprep.subr.bf16.mxu0 0
      %2988 = vmatpush1.bf16.xpose.msra.mxu0 0
      %2989 = vmatprep.subr.bf16.mxu0 0
      %2990 = vmatpush1.bf16.xpose.msra.mxu0 0
      %2991 = vmatprep.subr.bf16.mxu0 0
      %2992 = vmatpush1.bf16.xpose.msra.mxu0 0
      %2993 = vmatprep.subr.bf16.mxu0 0
      %2994 = vmatpush1.bf16.xpose.msra.mxu0 0
      %2995 = vmatprep.subr.bf16.mxu0 0
      %2996 = vmatpush1.bf16.xpose.msra.mxu0 0
      %2997 = vmatprep.subr.bf16.mxu0 0
      %2998 = vmatpush1.bf16.xpose.msra.mxu0 0
      %2999 = vmatprep.subr.bf16.mxu0 0
      %3000 = vmatpush1.bf16.xpose.msra.mxu0 0
      %3001 = vmatprep.subr.bf16.mxu0 0
      %3002 = vmatpush1.bf16.xpose.msra.mxu0 0
      %3003 = vmatprep.subr.bf16.mxu0 0
      %3004 = vmatpush1.bf16.xpose.msra.mxu0 0
      %3005 = vmatprep.subr.bf16.mxu0 0
      %3006 = vmatpush1.bf16.xpose.msra.mxu0 0
      %3007 = vmatprep.mubr.bf16.mxu0 0
      %3008 = vmatmul.mubr.bf16.gmra.mrb[0].mxu0 %v2970
      %v3009 = vpop.f32.mrb[0].mxu0
      %v3010 = vadd.f32 0.0, %v3009
      %v3011 = vpop.f32.mrb[0].mxu0
      %v3012 = vpop.f32.mrb[0].mxu0
      %v3013 = vadd.f32 0.0, %v3012
      %v3014 = vpop.f32.mrb[0].mxu0
      %3015 = vdwg.mxu0
      %v3017 = vsel %vm2733, %v2643, 0
      %v3020 = vsel %vm2733, %v2659, 0
      %3022 = vmatprep.subr.bf16.mxu0 0
      %3023 = vmatpush1.bf16.xpose.msra.mxu0 %v3020
      %3024 = vmatprep.subr.bf16.mxu0 0
      %3025 = vmatpush1.bf16.xpose.msra.mxu0 0
      %3026 = vmatprep.subr.bf16.mxu0 0
      %3027 = vmatpush1.bf16.xpose.msra.mxu0 0
      %3028 = vmatprep.subr.bf16.mxu0 0
      %3029 = vmatpush1.bf16.xpose.msra.mxu0 0
      %3030 = vmatprep.subr.bf16.mxu0 0
      %3031 = vmatpush1.bf16.xpose.msra.mxu0 0
      %3032 = vmatprep.subr.bf16.mxu0 0
      %3033 = vmatpush1.bf16.xpose.msra.mxu0 0
      %3034 = vmatprep.subr.bf16.mxu0 0
      %3035 = vmatpush1.bf16.xpose.msra.mxu0 0
      %3036 = vmatprep.subr.bf16.mxu0 0
      %3037 = vmatpush1.bf16.xpose.msra.mxu0 0
      %3038 = vmatprep.subr.bf16.mxu0 0
      %3039 = vmatpush1.bf16.xpose.msra.mxu0 0
      %3040 = vmatprep.subr.bf16.mxu0 0
      %3041 = vmatpush1.bf16.xpose.msra.mxu0 0
      %3042 = vmatprep.subr.bf16.mxu0 0
      %3043 = vmatpush1.bf16.xpose.msra.mxu0 0
      %3044 = vmatprep.subr.bf16.mxu0 0
      %3045 = vmatpush1.bf16.xpose.msra.mxu0 0
      %3046 = vmatprep.subr.bf16.mxu0 0
      %3047 = vmatpush1.bf16.xpose.msra.mxu0 0
      %3048 = vmatprep.subr.bf16.mxu0 0
      %3049 = vmatpush1.bf16.xpose.msra.mxu0 0
      %3050 = vmatprep.subr.bf16.mxu0 0
      %3051 = vmatpush1.bf16.xpose.msra.mxu0 0
      %3052 = vmatprep.subr.bf16.mxu0 0
      %3053 = vmatpush1.bf16.xpose.msra.mxu0 0
      %3054 = vmatprep.mubr.bf16.mxu0 0
      %3055 = vmatmul.mubr.bf16.gmra.mrb[0].mxu0 %v3017
      %v3056 = vpop.f32.mrb[0].mxu0
      %v3057 = vadd.f32 0.0, %v3056
      %v3058 = vpop.f32.mrb[0].mxu0
      %v3059 = vpop.f32.mrb[0].mxu0
      %v3060 = vadd.f32 0.0, %v3059
      %v3061 = vpop.f32.mrb[0].mxu0
      %3062 = vdwg.mxu0
      %v3064 = vsel %vm2733, %v2644, 0
      %v3067 = vsel %vm2733, %v2660, 0
      %3069 = vmatprep.subr.bf16.mxu0 0
      %3070 = vmatpush1.bf16.xpose.msra.mxu0 %v3067
      %3071 = vmatprep.subr.bf16.mxu0 0
      %3072 = vmatpush1.bf16.xpose.msra.mxu0 0
      %3073 = vmatprep.subr.bf16.mxu0 0
      %3074 = vmatpush1.bf16.xpose.msra.mxu0 0
      %3075 = vmatprep.subr.bf16.mxu0 0
      %3076 = vmatpush1.bf16.xpose.msra.mxu0 0
      %3077 = vmatprep.subr.bf16.mxu0 0
      %3078 = vmatpush1.bf16.xpose.msra.mxu0 0
      %3079 = vmatprep.subr.bf16.mxu0 0
      %3080 = vmatpush1.bf16.xpose.msra.mxu0 0
      %3081 = vmatprep.subr.bf16.mxu0 0
      %3082 = vmatpush1.bf16.xpose.msra.mxu0 0
      %3083 = vmatprep.subr.bf16.mxu0 0
      %3084 = vmatpush1.bf16.xpose.msra.mxu0 0
      %3085 = vmatprep.subr.bf16.mxu0 0
      %3086 = vmatpush1.bf16.xpose.msra.mxu0 0
      %3087 = vmatprep.subr.bf16.mxu0 0
      %3088 = vmatpush1.bf16.xpose.msra.mxu0 0
      %3089 = vmatprep.subr.bf16.mxu0 0
      %3090 = vmatpush1.bf16.xpose.msra.mxu0 0
      %3091 = vmatprep.subr.bf16.mxu0 0
      %3092 = vmatpush1.bf16.xpose.msra.mxu0 0
      %3093 = vmatprep.subr.bf16.mxu0 0
      %3094 = vmatpush1.bf16.xpose.msra.mxu0 0
      %3095 = vmatprep.subr.bf16.mxu0 0
      %3096 = vmatpush1.bf16.xpose.msra.mxu0 0
      %3097 = vmatprep.subr.bf16.mxu0 0
      %3098 = vmatpush1.bf16.xpose.msra.mxu0 0
      %3099 = vmatprep.subr.bf16.mxu0 0
      %3100 = vmatpush1.bf16.xpose.msra.mxu0 0
      %3101 = vmatprep.mubr.bf16.mxu0 0
      %3102 = vmatmul.mubr.bf16.gmra.mrb[0].mxu0 %v3064
      %v3103 = vpop.f32.mrb[0].mxu0
      %v3104 = vadd.f32 0.0, %v3103
      %v3105 = vpop.f32.mrb[0].mxu0
      %v3106 = vpop.f32.mrb[0].mxu0
      %v3107 = vadd.f32 0.0, %v3106
      %v3108 = vpop.f32.mrb[0].mxu0
      %3109 = vdwg.mxu0
      %v3111 = vsel %vm2733, %v2645, 0
      %v3114 = vsel %vm2733, %v2661, 0
      %3116 = vmatprep.subr.bf16.mxu0 0
      %3117 = vmatpush1.bf16.xpose.msra.mxu0 %v3114
      %3118 = vmatprep.subr.bf16.mxu0 0
      %3119 = vmatpush1.bf16.xpose.msra.mxu0 0
      %3120 = vmatprep.subr.bf16.mxu0 0
      %3121 = vmatpush1.bf16.xpose.msra.mxu0 0
      %3122 = vmatprep.subr.bf16.mxu0 0
      %3123 = vmatpush1.bf16.xpose.msra.mxu0 0
      %3124 = vmatprep.subr.bf16.mxu0 0
      %3125 = vmatpush1.bf16.xpose.msra.mxu0 0
      %3126 = vmatprep.subr.bf16.mxu0 0
      %3127 = vmatpush1.bf16.xpose.msra.mxu0 0
      %3128 = vmatprep.subr.bf16.mxu0 0
      %3129 = vmatpush1.bf16.xpose.msra.mxu0 0
      %3130 = vmatprep.subr.bf16.mxu0 0
      %3131 = vmatpush1.bf16.xpose.msra.mxu0 0
      %3132 = vmatprep.subr.bf16.mxu0 0
      %3133 = vmatpush1.bf16.xpose.msra.mxu0 0
      %3134 = vmatprep.subr.bf16.mxu0 0
      %3135 = vmatpush1.bf16.xpose.msra.mxu0 0
      %3136 = vmatprep.subr.bf16.mxu0 0
      %3137 = vmatpush1.bf16.xpose.msra.mxu0 0
      %3138 = vmatprep.subr.bf16.mxu0 0
      %3139 = vmatpush1.bf16.xpose.msra.mxu0 0
      %3140 = vmatprep.subr.bf16.mxu0 0
      %3141 = vmatpush1.bf16.xpose.msra.mxu0 0
      %3142 = vmatprep.subr.bf16.mxu0 0
      %3143 = vmatpush1.bf16.xpose.msra.mxu0 0
      %3144 = vmatprep.subr.bf16.mxu0 0
      %3145 = vmatpush1.bf16.xpose.msra.mxu0 0
      %3146 = vmatprep.subr.bf16.mxu0 0
      %3147 = vmatpush1.bf16.xpose.msra.mxu0 0
      %3148 = vmatprep.mubr.bf16.mxu0 0
      %3149 = vmatmul.mubr.bf16.gmra.mrb[0].mxu0 %v3111
      %v3150 = vpop.f32.mrb[0].mxu0
      %v3151 = vadd.f32 0.0, %v3150
      %v3152 = vpop.f32.mrb[0].mxu0
      %v3153 = vpop.f32.mrb[0].mxu0
      %v3154 = vadd.f32 0.0, %v3153
      %v3155 = vpop.f32.mrb[0].mxu0
      %3156 = vdwg.mxu0
      %v3158 = vsel %vm2733, %v2646, 0
      %v3161 = vsel %vm2733, %v2662, 0
      %3163 = vmatprep.subr.bf16.mxu0 0
      %3164 = vmatpush1.bf16.xpose.msra.mxu0 %v3161
      %3165 = vmatprep.subr.bf16.mxu0 0
      %3166 = vmatpush1.bf16.xpose.msra.mxu0 0
      %3167 = vmatprep.subr.bf16.mxu0 0
      %3168 = vmatpush1.bf16.xpose.msra.mxu0 0
      %3169 = vmatprep.subr.bf16.mxu0 0
      %3170 = vmatpush1.bf16.xpose.msra.mxu0 0
      %3171 = vmatprep.subr.bf16.mxu0 0
      %3172 = vmatpush1.bf16.xpose.msra.mxu0 0
      %3173 = vmatprep.subr.bf16.mxu0 0
      %3174 = vmatpush1.bf16.xpose.msra.mxu0 0
      %3175 = vmatprep.subr.bf16.mxu0 0
      %3176 = vmatpush1.bf16.xpose.msra.mxu0 0
      %3177 = vmatprep.subr.bf16.mxu0 0
      %3178 = vmatpush1.bf16.xpose.msra.mxu0 0
      %3179 = vmatprep.subr.bf16.mxu0 0
      %3180 = vmatpush1.bf16.xpose.msra.mxu0 0
      %3181 = vmatprep.subr.bf16.mxu0 0
      %3182 = vmatpush1.bf16.xpose.msra.mxu0 0
      %3183 = vmatprep.subr.bf16.mxu0 0
      %3184 = vmatpush1.bf16.xpose.msra.mxu0 0
      %3185 = vmatprep.subr.bf16.mxu0 0
      %3186 = vmatpush1.bf16.xpose.msra.mxu0 0
      %3187 = vmatprep.subr.bf16.mxu0 0
      %3188 = vmatpush1.bf16.xpose.msra.mxu0 0
      %3189 = vmatprep.subr.bf16.mxu0 0
      %3190 = vmatpush1.bf16.xpose.msra.mxu0 0
      %3191 = vmatprep.subr.bf16.mxu0 0
      %3192 = vmatpush1.bf16.xpose.msra.mxu0 0
      %3193 = vmatprep.subr.bf16.mxu0 0
      %3194 = vmatpush1.bf16.xpose.msra.mxu0 0
      %3195 = vmatprep.mubr.bf16.mxu0 0
      %3196 = vmatmul.mubr.bf16.gmra.mrb[0].mxu0 %v3158
      %v3197 = vpop.f32.mrb[0].mxu0
      %v3198 = vadd.f32 0.0, %v3197
      %v3199 = vpop.f32.mrb[0].mxu0
      %v3200 = vpop.f32.mrb[0].mxu0
      %v3201 = vadd.f32 0.0, %v3200
      %v3202 = vpop.f32.mrb[0].mxu0
      %3203 = vdwg.mxu0
      %v3205 = vsel %vm2733, %v2647, 0
      %v3208 = vsel %vm2733, %v2663, 0
      %3210 = vmatprep.subr.bf16.mxu0 0
      %3211 = vmatpush1.bf16.xpose.msra.mxu0 %v3208
      %3212 = vmatprep.subr.bf16.mxu0 0
      %3213 = vmatpush1.bf16.xpose.msra.mxu0 0
      %3214 = vmatprep.subr.bf16.mxu0 0
      %3215 = vmatpush1.bf16.xpose.msra.mxu0 0
      %3216 = vmatprep.subr.bf16.mxu0 0
      %3217 = vmatpush1.bf16.xpose.msra.mxu0 0
      %3218 = vmatprep.subr.bf16.mxu0 0
      %3219 = vmatpush1.bf16.xpose.msra.mxu0 0
      %3220 = vmatprep.subr.bf16.mxu0 0
      %3221 = vmatpush1.bf16.xpose.msra.mxu0 0
      %3222 = vmatprep.subr.bf16.mxu0 0
      %3223 = vmatpush1.bf16.xpose.msra.mxu0 0
      %3224 = vmatprep.subr.bf16.mxu0 0
      %3225 = vmatpush1.bf16.xpose.msra.mxu0 0
      %3226 = vmatprep.subr.bf16.mxu0 0
      %3227 = vmatpush1.bf16.xpose.msra.mxu0 0
      %3228 = vmatprep.subr.bf16.mxu0 0
      %3229 = vmatpush1.bf16.xpose.msra.mxu0 0
      %3230 = vmatprep.subr.bf16.mxu0 0
      %3231 = vmatpush1.bf16.xpose.msra.mxu0 0
      %3232 = vmatprep.subr.bf16.mxu0 0
      %3233 = vmatpush1.bf16.xpose.msra.mxu0 0
      %3234 = vmatprep.subr.bf16.mxu0 0
      %3235 = vmatpush1.bf16.xpose.msra.mxu0 0
      %3236 = vmatprep.subr.bf16.mxu0 0
      %3237 = vmatpush1.bf16.xpose.msra.mxu0 0
      %3238 = vmatprep.subr.bf16.mxu0 0
      %3239 = vmatpush1.bf16.xpose.msra.mxu0 0
      %3240 = vmatprep.subr.bf16.mxu0 0
      %3241 = vmatpush1.bf16.xpose.msra.mxu0 0
      %3242 = vmatprep.mubr.bf16.mxu0 0
      %3243 = vmatmul.mubr.bf16.gmra.mrb[0].mxu0 %v3205
      %v3244 = vpop.f32.mrb[0].mxu0
      %v3245 = vadd.f32 0.0, %v3244
      %v3246 = vpop.f32.mrb[0].mxu0
      %v3247 = vpop.f32.mrb[0].mxu0
      %v3248 = vadd.f32 0.0, %v3247
      %v3249 = vpop.f32.mrb[0].mxu0
      %3250 = vdwg.mxu0
      %v3252 = vsel %vm2733, %v2648, 0
      %v3255 = vsel %vm2733, %v2664, 0
      %3257 = vmatprep.subr.bf16.mxu0 0
      %3258 = vmatpush1.bf16.xpose.msra.mxu0 %v3255
      %3259 = vmatprep.subr.bf16.mxu0 0
      %3260 = vmatpush1.bf16.xpose.msra.mxu0 0
      %3261 = vmatprep.subr.bf16.mxu0 0
      %3262 = vmatpush1.bf16.xpose.msra.mxu0 0
      %3263 = vmatprep.subr.bf16.mxu0 0
      %3264 = vmatpush1.bf16.xpose.msra.mxu0 0
      %3265 = vmatprep.subr.bf16.mxu0 0
      %3266 = vmatpush1.bf16.xpose.msra.mxu0 0
      %3267 = vmatprep.subr.bf16.mxu0 0
      %3268 = vmatpush1.bf16.xpose.msra.mxu0 0
      %3269 = vmatprep.subr.bf16.mxu0 0
      %3270 = vmatpush1.bf16.xpose.msra.mxu0 0
      %3271 = vmatprep.subr.bf16.mxu0 0
      %3272 = vmatpush1.bf16.xpose.msra.mxu0 0
      %3273 = vmatprep.subr.bf16.mxu0 0
      %3274 = vmatpush1.bf16.xpose.msra.mxu0 0
      %3275 = vmatprep.subr.bf16.mxu0 0
      %3276 = vmatpush1.bf16.xpose.msra.mxu0 0
      %3277 = vmatprep.subr.bf16.mxu0 0
      %3278 = vmatpush1.bf16.xpose.msra.mxu0 0
      %3279 = vmatprep.subr.bf16.mxu0 0
      %3280 = vmatpush1.bf16.xpose.msra.mxu0 0
      %3281 = vmatprep.subr.bf16.mxu0 0
      %3282 = vmatpush1.bf16.xpose.msra.mxu0 0
      %3283 = vmatprep.subr.bf16.mxu0 0
      %3284 = vmatpush1.bf16.xpose.msra.mxu0 0
      %3285 = vmatprep.subr.bf16.mxu0 0
      %3286 = vmatpush1.bf16.xpose.msra.mxu0 0
      %3287 = vmatprep.subr.bf16.mxu0 0
      %3288 = vmatpush1.bf16.xpose.msra.mxu0 0
      %3289 = vmatprep.mubr.bf16.mxu0 0
      %3290 = vmatmul.mubr.bf16.gmra.mrb[0].mxu0 %v3252
      %v3291 = vpop.f32.mrb[0].mxu0
      %v3292 = vadd.f32 0.0, %v3291
      %v3293 = vpop.f32.mrb[0].mxu0
      %v3294 = vpop.f32.mrb[0].mxu0
      %v3295 = vadd.f32 0.0, %v3294
      %v3296 = vpop.f32.mrb[0].mxu0
      %3297 = vdwg.mxu0
      %v3299 = vsel %vm2733, %v2649, 0
      %v3302 = vsel %vm2733, %v2665, 0
      %3304 = vmatprep.subr.bf16.mxu0 0
      %3305 = vmatpush1.bf16.xpose.msra.mxu0 %v3302
      %3306 = vmatprep.subr.bf16.mxu0 0
      %3307 = vmatpush1.bf16.xpose.msra.mxu0 0
      %3308 = vmatprep.subr.bf16.mxu0 0
      %3309 = vmatpush1.bf16.xpose.msra.mxu0 0
      %3310 = vmatprep.subr.bf16.mxu0 0
      %3311 = vmatpush1.bf16.xpose.msra.mxu0 0
      %3312 = vmatprep.subr.bf16.mxu0 0
      %3313 = vmatpush1.bf16.xpose.msra.mxu0 0
      %3314 = vmatprep.subr.bf16.mxu0 0
      %3315 = vmatpush1.bf16.xpose.msra.mxu0 0
      %3316 = vmatprep.subr.bf16.mxu0 0
      %3317 = vmatpush1.bf16.xpose.msra.mxu0 0
      %3318 = vmatprep.subr.bf16.mxu0 0
      %3319 = vmatpush1.bf16.xpose.msra.mxu0 0
      %3320 = vmatprep.subr.bf16.mxu0 0
      %3321 = vmatpush1.bf16.xpose.msra.mxu0 0
      %3322 = vmatprep.subr.bf16.mxu0 0
      %3323 = vmatpush1.bf16.xpose.msra.mxu0 0
      %3324 = vmatprep.subr.bf16.mxu0 0
      %3325 = vmatpush1.bf16.xpose.msra.mxu0 0
      %3326 = vmatprep.subr.bf16.mxu0 0
      %3327 = vmatpush1.bf16.xpose.msra.mxu0 0
      %3328 = vmatprep.subr.bf16.mxu0 0
      %3329 = vmatpush1.bf16.xpose.msra.mxu0 0
      %3330 = vmatprep.subr.bf16.mxu0 0
      %3331 = vmatpush1.bf16.xpose.msra.mxu0 0
      %3332 = vmatprep.subr.bf16.mxu0 0
      %3333 = vmatpush1.bf16.xpose.msra.mxu0 0
      %3334 = vmatprep.subr.bf16.mxu0 0
      %3335 = vmatpush1.bf16.xpose.msra.mxu0 0
      %3336 = vmatprep.mubr.bf16.mxu0 0
      %3337 = vmatmul.mubr.bf16.gmra.mrb[0].mxu0 %v3299
      %v3338 = vpop.f32.mrb[0].mxu0
      %v3339 = vadd.f32 0.0, %v3338
      %v3340 = vpop.f32.mrb[0].mxu0
      %v3341 = vpop.f32.mrb[0].mxu0
      %v3342 = vadd.f32 0.0, %v3341
      %v3343 = vpop.f32.mrb[0].mxu0
      %3344 = vdwg.mxu0
      %v3346 = vsel %vm2733, %v2650, 0
      %v3349 = vsel %vm2733, %v2666, 0
      %3351 = vmatprep.subr.bf16.mxu0 0
      %3352 = vmatpush1.bf16.xpose.msra.mxu0 %v3349
      %3353 = vmatprep.subr.bf16.mxu0 0
      %3354 = vmatpush1.bf16.xpose.msra.mxu0 0
      %3355 = vmatprep.subr.bf16.mxu0 0
      %3356 = vmatpush1.bf16.xpose.msra.mxu0 0
      %3357 = vmatprep.subr.bf16.mxu0 0
      %3358 = vmatpush1.bf16.xpose.msra.mxu0 0
      %3359 = vmatprep.subr.bf16.mxu0 0
      %3360 = vmatpush1.bf16.xpose.msra.mxu0 0
      %3361 = vmatprep.subr.bf16.mxu0 0
      %3362 = vmatpush1.bf16.xpose.msra.mxu0 0
      %3363 = vmatprep.subr.bf16.mxu0 0
      %3364 = vmatpush1.bf16.xpose.msra.mxu0 0
      %3365 = vmatprep.subr.bf16.mxu0 0
      %3366 = vmatpush1.bf16.xpose.msra.mxu0 0
      %3367 = vmatprep.subr.bf16.mxu0 0
      %3368 = vmatpush1.bf16.xpose.msra.mxu0 0
      %3369 = vmatprep.subr.bf16.mxu0 0
      %3370 = vmatpush1.bf16.xpose.msra.mxu0 0
      %3371 = vmatprep.subr.bf16.mxu0 0
      %3372 = vmatpush1.bf16.xpose.msra.mxu0 0
      %3373 = vmatprep.subr.bf16.mxu0 0
      %3374 = vmatpush1.bf16.xpose.msra.mxu0 0
      %3375 = vmatprep.subr.bf16.mxu0 0
      %3376 = vmatpush1.bf16.xpose.msra.mxu0 0
      %3377 = vmatprep.subr.bf16.mxu0 0
      %3378 = vmatpush1.bf16.xpose.msra.mxu0 0
      %3379 = vmatprep.subr.bf16.mxu0 0
      %3380 = vmatpush1.bf16.xpose.msra.mxu0 0
      %3381 = vmatprep.subr.bf16.mxu0 0
      %3382 = vmatpush1.bf16.xpose.msra.mxu0 0
      %3383 = vmatprep.mubr.bf16.mxu0 0
      %3384 = vmatmul.mubr.bf16.gmra.mrb[0].mxu0 %v3346
      %v3385 = vpop.f32.mrb[0].mxu0
      %v3386 = vadd.f32 0.0, %v3385
      %v3387 = vpop.f32.mrb[0].mxu0
      %v3388 = vpop.f32.mrb[0].mxu0
      %v3389 = vadd.f32 0.0, %v3388
      %v3390 = vpop.f32.mrb[0].mxu0
      %3391 = vdwg.mxu0
      %v3393 = vsel %vm2733, %v2651, 0
      %v3396 = vsel %vm2733, %v2667, 0
      %3398 = vmatprep.subr.bf16.mxu0 0
      %3399 = vmatpush1.bf16.xpose.msra.mxu0 %v3396
      %3400 = vmatprep.subr.bf16.mxu0 0
      %3401 = vmatpush1.bf16.xpose.msra.mxu0 0
      %3402 = vmatprep.subr.bf16.mxu0 0
      %3403 = vmatpush1.bf16.xpose.msra.mxu0 0
      %3404 = vmatprep.subr.bf16.mxu0 0
      %3405 = vmatpush1.bf16.xpose.msra.mxu0 0
      %3406 = vmatprep.subr.bf16.mxu0 0
      %3407 = vmatpush1.bf16.xpose.msra.mxu0 0
      %3408 = vmatprep.subr.bf16.mxu0 0
      %3409 = vmatpush1.bf16.xpose.msra.mxu0 0
      %3410 = vmatprep.subr.bf16.mxu0 0
      %3411 = vmatpush1.bf16.xpose.msra.mxu0 0
      %3412 = vmatprep.subr.bf16.mxu0 0
      %3413 = vmatpush1.bf16.xpose.msra.mxu0 0
      %3414 = vmatprep.subr.bf16.mxu0 0
      %3415 = vmatpush1.bf16.xpose.msra.mxu0 0
      %3416 = vmatprep.subr.bf16.mxu0 0
      %3417 = vmatpush1.bf16.xpose.msra.mxu0 0
      %3418 = vmatprep.subr.bf16.mxu0 0
      %3419 = vmatpush1.bf16.xpose.msra.mxu0 0
      %3420 = vmatprep.subr.bf16.mxu0 0
      %3421 = vmatpush1.bf16.xpose.msra.mxu0 0
      %3422 = vmatprep.subr.bf16.mxu0 0
      %3423 = vmatpush1.bf16.xpose.msra.mxu0 0
      %3424 = vmatprep.subr.bf16.mxu0 0
      %3425 = vmatpush1.bf16.xpose.msra.mxu0 0
      %3426 = vmatprep.subr.bf16.mxu0 0
      %3427 = vmatpush1.bf16.xpose.msra.mxu0 0
      %3428 = vmatprep.subr.bf16.mxu0 0
      %3429 = vmatpush1.bf16.xpose.msra.mxu0 0
      %3430 = vmatprep.mubr.bf16.mxu0 0
      %3431 = vmatmul.mubr.bf16.gmra.mrb[0].mxu0 %v3393
      %v3432 = vpop.f32.mrb[0].mxu0
      %v3433 = vadd.f32 0.0, %v3432
      %v3434 = vpop.f32.mrb[0].mxu0
      %v3435 = vpop.f32.mrb[0].mxu0
      %v3436 = vadd.f32 0.0, %v3435
      %v3437 = vpop.f32.mrb[0].mxu0
      %3438 = vdwg.mxu0
      %v3440 = vsel %vm2733, %v2652, 0
      %v3443 = vsel %vm2733, %v2668, 0
      %3445 = vmatprep.subr.bf16.mxu0 0
      %3446 = vmatpush1.bf16.xpose.msra.mxu0 %v3443
      %3447 = vmatprep.subr.bf16.mxu0 0
      %3448 = vmatpush1.bf16.xpose.msra.mxu0 0
      %3449 = vmatprep.subr.bf16.mxu0 0
      %3450 = vmatpush1.bf16.xpose.msra.mxu0 0
      %3451 = vmatprep.subr.bf16.mxu0 0
      %3452 = vmatpush1.bf16.xpose.msra.mxu0 0
      %3453 = vmatprep.subr.bf16.mxu0 0
      %3454 = vmatpush1.bf16.xpose.msra.mxu0 0
      %3455 = vmatprep.subr.bf16.mxu0 0
      %3456 = vmatpush1.bf16.xpose.msra.mxu0 0
      %3457 = vmatprep.subr.bf16.mxu0 0
      %3458 = vmatpush1.bf16.xpose.msra.mxu0 0
      %3459 = vmatprep.subr.bf16.mxu0 0
      %3460 = vmatpush1.bf16.xpose.msra.mxu0 0
      %3461 = vmatprep.subr.bf16.mxu0 0
      %3462 = vmatpush1.bf16.xpose.msra.mxu0 0
      %3463 = vmatprep.subr.bf16.mxu0 0
      %3464 = vmatpush1.bf16.xpose.msra.mxu0 0
      %3465 = vmatprep.subr.bf16.mxu0 0
      %3466 = vmatpush1.bf16.xpose.msra.mxu0 0
      %3467 = vmatprep.subr.bf16.mxu0 0
      %3468 = vmatpush1.bf16.xpose.msra.mxu0 0
      %3469 = vmatprep.subr.bf16.mxu0 0
      %3470 = vmatpush1.bf16.xpose.msra.mxu0 0
      %3471 = vmatprep.subr.bf16.mxu0 0
      %3472 = vmatpush1.bf16.xpose.msra.mxu0 0
      %3473 = vmatprep.subr.bf16.mxu0 0
      %3474 = vmatpush1.bf16.xpose.msra.mxu0 0
      %3475 = vmatprep.subr.bf16.mxu0 0
      %3476 = vmatpush1.bf16.xpose.msra.mxu0 0
      %3477 = vmatprep.mubr.bf16.mxu0 0
      %3478 = vmatmul.mubr.bf16.gmra.mrb[0].mxu0 %v3440
      %v3479 = vpop.f32.mrb[0].mxu0
      %v3480 = vadd.f32 0.0, %v3479
      %v3481 = vpop.f32.mrb[0].mxu0
      %v3482 = vpop.f32.mrb[0].mxu0
      %v3483 = vadd.f32 0.0, %v3482
      %v3484 = vpop.f32.mrb[0].mxu0
      %3485 = vdwg.mxu0
      %v3487 = vsel %vm2733, %v2685, 0
      %v3490 = vsel %vm2733, %v2701, 0
      %3492 = vmatprep.subr.bf16.mxu0 0
      %3493 = vmatpush1.bf16.xpose.msra.mxu0 %v3490
      %3494 = vmatprep.subr.bf16.mxu0 0
      %3495 = vmatpush1.bf16.xpose.msra.mxu0 0
      %3496 = vmatprep.subr.bf16.mxu0 0
      %3497 = vmatpush1.bf16.xpose.msra.mxu0 0
      %3498 = vmatprep.subr.bf16.mxu0 0
      %3499 = vmatpush1.bf16.xpose.msra.mxu0 0
      %3500 = vmatprep.subr.bf16.mxu0 0
      %3501 = vmatpush1.bf16.xpose.msra.mxu0 0
      %3502 = vmatprep.subr.bf16.mxu0 0
      %3503 = vmatpush1.bf16.xpose.msra.mxu0 0
      %3504 = vmatprep.subr.bf16.mxu0 0
      %3505 = vmatpush1.bf16.xpose.msra.mxu0 0
      %3506 = vmatprep.subr.bf16.mxu0 0
      %3507 = vmatpush1.bf16.xpose.msra.mxu0 0
      %3508 = vmatprep.subr.bf16.mxu0 0
      %3509 = vmatpush1.bf16.xpose.msra.mxu0 0
      %3510 = vmatprep.subr.bf16.mxu0 0
      %3511 = vmatpush1.bf16.xpose.msra.mxu0 0
      %3512 = vmatprep.subr.bf16.mxu0 0
      %3513 = vmatpush1.bf16.xpose.msra.mxu0 0
      %3514 = vmatprep.subr.bf16.mxu0 0
      %3515 = vmatpush1.bf16.xpose.msra.mxu0 0
      %3516 = vmatprep.subr.bf16.mxu0 0
      %3517 = vmatpush1.bf16.xpose.msra.mxu0 0
      %3518 = vmatprep.subr.bf16.mxu0 0
      %3519 = vmatpush1.bf16.xpose.msra.mxu0 0
      %3520 = vmatprep.subr.bf16.mxu0 0
      %3521 = vmatpush1.bf16.xpose.msra.mxu0 0
      %3522 = vmatprep.subr.bf16.mxu0 0
      %3523 = vmatpush1.bf16.xpose.msra.mxu0 0
      %3524 = vmatprep.mubr.bf16.mxu0 0
      %3525 = vmatmul.mubr.bf16.gmra.mrb[0].mxu0 %v3487
      %v3526 = vpop.f32.mrb[0].mxu0
      %v3527 = vadd.f32 0.0, %v3526
      %v3528 = vpop.f32.mrb[0].mxu0
      %v3529 = vpop.f32.mrb[0].mxu0
      %v3530 = vadd.f32 0.0, %v3529
      %v3531 = vpop.f32.mrb[0].mxu0
      %3532 = vdwg.mxu0
      %v3534 = vsel %vm2733, %v2686, 0
      %v3537 = vsel %vm2733, %v2702, 0
      %3539 = vmatprep.subr.bf16.mxu0 0
      %3540 = vmatpush1.bf16.xpose.msra.mxu0 %v3537
      %3541 = vmatprep.subr.bf16.mxu0 0
      %3542 = vmatpush1.bf16.xpose.msra.mxu0 0
      %3543 = vmatprep.subr.bf16.mxu0 0
      %3544 = vmatpush1.bf16.xpose.msra.mxu0 0
      %3545 = vmatprep.subr.bf16.mxu0 0
      %3546 = vmatpush1.bf16.xpose.msra.mxu0 0
      %3547 = vmatprep.subr.bf16.mxu0 0
      %3548 = vmatpush1.bf16.xpose.msra.mxu0 0
      %3549 = vmatprep.subr.bf16.mxu0 0
      %3550 = vmatpush1.bf16.xpose.msra.mxu0 0
      %3551 = vmatprep.subr.bf16.mxu0 0
      %3552 = vmatpush1.bf16.xpose.msra.mxu0 0
      %3553 = vmatprep.subr.bf16.mxu0 0
      %3554 = vmatpush1.bf16.xpose.msra.mxu0 0
      %3555 = vmatprep.subr.bf16.mxu0 0
      %3556 = vmatpush1.bf16.xpose.msra.mxu0 0
      %3557 = vmatprep.subr.bf16.mxu0 0
      %3558 = vmatpush1.bf16.xpose.msra.mxu0 0
      %3559 = vmatprep.subr.bf16.mxu0 0
      %3560 = vmatpush1.bf16.xpose.msra.mxu0 0
      %3561 = vmatprep.subr.bf16.mxu0 0
      %3562 = vmatpush1.bf16.xpose.msra.mxu0 0
      %3563 = vmatprep.subr.bf16.mxu0 0
      %3564 = vmatpush1.bf16.xpose.msra.mxu0 0
      %3565 = vmatprep.subr.bf16.mxu0 0
      %3566 = vmatpush1.bf16.xpose.msra.mxu0 0
      %3567 = vmatprep.subr.bf16.mxu0 0
      %3568 = vmatpush1.bf16.xpose.msra.mxu0 0
      %3569 = vmatprep.subr.bf16.mxu0 0
      %3570 = vmatpush1.bf16.xpose.msra.mxu0 0
      %3571 = vmatprep.mubr.bf16.mxu0 0
      %3572 = vmatmul.mubr.bf16.gmra.mrb[0].mxu0 %v3534
      %v3573 = vpop.f32.mrb[0].mxu0
      %v3574 = vadd.f32 0.0, %v3573
      %v3575 = vpop.f32.mrb[0].mxu0
      %v3576 = vpop.f32.mrb[0].mxu0
      %v3577 = vadd.f32 0.0, %v3576
      %v3578 = vpop.f32.mrb[0].mxu0
      %3579 = vdwg.mxu0
      %v3581 = vsel %vm2733, %v2687, 0
      %v3584 = vsel %vm2733, %v2703, 0
      %3586 = vmatprep.subr.bf16.mxu0 0
      %3587 = vmatpush1.bf16.xpose.msra.mxu0 %v3584
      %3588 = vmatprep.subr.bf16.mxu0 0
      %3589 = vmatpush1.bf16.xpose.msra.mxu0 0
      %3590 = vmatprep.subr.bf16.mxu0 0
      %3591 = vmatpush1.bf16.xpose.msra.mxu0 0
      %3592 = vmatprep.subr.bf16.mxu0 0
      %3593 = vmatpush1.bf16.xpose.msra.mxu0 0
      %3594 = vmatprep.subr.bf16.mxu0 0
      %3595 = vmatpush1.bf16.xpose.msra.mxu0 0
      %3596 = vmatprep.subr.bf16.mxu0 0
      %3597 = vmatpush1.bf16.xpose.msra.mxu0 0
      %3598 = vmatprep.subr.bf16.mxu0 0
      %3599 = vmatpush1.bf16.xpose.msra.mxu0 0
      %3600 = vmatprep.subr.bf16.mxu0 0
      %3601 = vmatpush1.bf16.xpose.msra.mxu0 0
      %3602 = vmatprep.subr.bf16.mxu0 0
      %3603 = vmatpush1.bf16.xpose.msra.mxu0 0
      %3604 = vmatprep.subr.bf16.mxu0 0
      %3605 = vmatpush1.bf16.xpose.msra.mxu0 0
      %3606 = vmatprep.subr.bf16.mxu0 0
      %3607 = vmatpush1.bf16.xpose.msra.mxu0 0
      %3608 = vmatprep.subr.bf16.mxu0 0
      %3609 = vmatpush1.bf16.xpose.msra.mxu0 0
      %3610 = vmatprep.subr.bf16.mxu0 0
      %3611 = vmatpush1.bf16.xpose.msra.mxu0 0
      %3612 = vmatprep.subr.bf16.mxu0 0
      %3613 = vmatpush1.bf16.xpose.msra.mxu0 0
      %3614 = vmatprep.subr.bf16.mxu0 0
      %3615 = vmatpush1.bf16.xpose.msra.mxu0 0
      %3616 = vmatprep.subr.bf16.mxu0 0
      %3617 = vmatpush1.bf16.xpose.msra.mxu0 0
      %3618 = vmatprep.mubr.bf16.mxu0 0
      %3619 = vmatmul.mubr.bf16.gmra.mrb[0].mxu0 %v3581
      %v3620 = vpop.f32.mrb[0].mxu0
      %v3621 = vadd.f32 0.0, %v3620
      %v3622 = vpop.f32.mrb[0].mxu0
      %v3623 = vpop.f32.mrb[0].mxu0
      %v3624 = vadd.f32 0.0, %v3623
      %v3625 = vpop.f32.mrb[0].mxu0
      %3626 = vdwg.mxu0
      %v3628 = vsel %vm2733, %v2688, 0
      %v3631 = vsel %vm2733, %v2704, 0
      %3633 = vmatprep.subr.bf16.mxu0 0
      %3634 = vmatpush1.bf16.xpose.msra.mxu0 %v3631
      %3635 = vmatprep.subr.bf16.mxu0 0
      %3636 = vmatpush1.bf16.xpose.msra.mxu0 0
      %3637 = vmatprep.subr.bf16.mxu0 0
      %3638 = vmatpush1.bf16.xpose.msra.mxu0 0
      %3639 = vmatprep.subr.bf16.mxu0 0
      %3640 = vmatpush1.bf16.xpose.msra.mxu0 0
      %3641 = vmatprep.subr.bf16.mxu0 0
      %3642 = vmatpush1.bf16.xpose.msra.mxu0 0
      %3643 = vmatprep.subr.bf16.mxu0 0
      %3644 = vmatpush1.bf16.xpose.msra.mxu0 0
      %3645 = vmatprep.subr.bf16.mxu0 0
      %3646 = vmatpush1.bf16.xpose.msra.mxu0 0
      %3647 = vmatprep.subr.bf16.mxu0 0
      %3648 = vmatpush1.bf16.xpose.msra.mxu0 0
      %3649 = vmatprep.subr.bf16.mxu0 0
      %3650 = vmatpush1.bf16.xpose.msra.mxu0 0
      %3651 = vmatprep.subr.bf16.mxu0 0
      %3652 = vmatpush1.bf16.xpose.msra.mxu0 0
      %3653 = vmatprep.subr.bf16.mxu0 0
      %3654 = vmatpush1.bf16.xpose.msra.mxu0 0
      %3655 = vmatprep.subr.bf16.mxu0 0
      %3656 = vmatpush1.bf16.xpose.msra.mxu0 0
      %3657 = vmatprep.subr.bf16.mxu0 0
      %3658 = vmatpush1.bf16.xpose.msra.mxu0 0
      %3659 = vmatprep.subr.bf16.mxu0 0
      %3660 = vmatpush1.bf16.xpose.msra.mxu0 0
      %3661 = vmatprep.subr.bf16.mxu0 0
      %3662 = vmatpush1.bf16.xpose.msra.mxu0 0
      %3663 = vmatprep.subr.bf16.mxu0 0
      %3664 = vmatpush1.bf16.xpose.msra.mxu0 0
      %3665 = vmatprep.mubr.bf16.mxu0 0
      %3666 = vmatmul.mubr.bf16.gmra.mrb[0].mxu0 %v3628
      %v3667 = vpop.f32.mrb[0].mxu0
      %v3668 = vadd.f32 0.0, %v3667
      %v3669 = vpop.f32.mrb[0].mxu0
      %v3670 = vpop.f32.mrb[0].mxu0
      %v3671 = vadd.f32 0.0, %v3670
      %v3672 = vpop.f32.mrb[0].mxu0
      %3673 = vdwg.mxu0
      %v3675 = vsel %vm2733, %v2689, 0
      %v3678 = vsel %vm2733, %v2705, 0
      %3680 = vmatprep.subr.bf16.mxu0 0
      %3681 = vmatpush1.bf16.xpose.msra.mxu0 %v3678
      %3682 = vmatprep.subr.bf16.mxu0 0
      %3683 = vmatpush1.bf16.xpose.msra.mxu0 0
      %3684 = vmatprep.subr.bf16.mxu0 0
      %3685 = vmatpush1.bf16.xpose.msra.mxu0 0
      %3686 = vmatprep.subr.bf16.mxu0 0
      %3687 = vmatpush1.bf16.xpose.msra.mxu0 0
      %3688 = vmatprep.subr.bf16.mxu0 0
      %3689 = vmatpush1.bf16.xpose.msra.mxu0 0
      %3690 = vmatprep.subr.bf16.mxu0 0
      %3691 = vmatpush1.bf16.xpose.msra.mxu0 0
      %3692 = vmatprep.subr.bf16.mxu0 0
      %3693 = vmatpush1.bf16.xpose.msra.mxu0 0
      %3694 = vmatprep.subr.bf16.mxu0 0
      %3695 = vmatpush1.bf16.xpose.msra.mxu0 0
      %3696 = vmatprep.subr.bf16.mxu0 0
      %3697 = vmatpush1.bf16.xpose.msra.mxu0 0
      %3698 = vmatprep.subr.bf16.mxu0 0
      %3699 = vmatpush1.bf16.xpose.msra.mxu0 0
      %3700 = vmatprep.subr.bf16.mxu0 0
      %3701 = vmatpush1.bf16.xpose.msra.mxu0 0
      %3702 = vmatprep.subr.bf16.mxu0 0
      %3703 = vmatpush1.bf16.xpose.msra.mxu0 0
      %3704 = vmatprep.subr.bf16.mxu0 0
      %3705 = vmatpush1.bf16.xpose.msra.mxu0 0
      %3706 = vmatprep.subr.bf16.mxu0 0
      %3707 = vmatpush1.bf16.xpose.msra.mxu0 0
      %3708 = vmatprep.subr.bf16.mxu0 0
      %3709 = vmatpush1.bf16.xpose.msra.mxu0 0
      %3710 = vmatprep.subr.bf16.mxu0 0
      %3711 = vmatpush1.bf16.xpose.msra.mxu0 0
      %3712 = vmatprep.mubr.bf16.mxu0 0
      %3713 = vmatmul.mubr.bf16.gmra.mrb[0].mxu0 %v3675
      %v3714 = vpop.f32.mrb[0].mxu0
      %v3715 = vadd.f32 0.0, %v3714
      %v3716 = vpop.f32.mrb[0].mxu0
      %v3717 = vpop.f32.mrb[0].mxu0
      %v3718 = vadd.f32 0.0, %v3717
      %v3719 = vpop.f32.mrb[0].mxu0
      %3720 = vdwg.mxu0
      %v3722 = vsel %vm2733, %v2690, 0
      %v3725 = vsel %vm2733, %v2706, 0
      %3727 = vmatprep.subr.bf16.mxu0 0
      %3728 = vmatpush1.bf16.xpose.msra.mxu0 %v3725
      %3729 = vmatprep.subr.bf16.mxu0 0
      %3730 = vmatpush1.bf16.xpose.msra.mxu0 0
      %3731 = vmatprep.subr.bf16.mxu0 0
      %3732 = vmatpush1.bf16.xpose.msra.mxu0 0
      %3733 = vmatprep.subr.bf16.mxu0 0
      %3734 = vmatpush1.bf16.xpose.msra.mxu0 0
      %3735 = vmatprep.subr.bf16.mxu0 0
      %3736 = vmatpush1.bf16.xpose.msra.mxu0 0
      %3737 = vmatprep.subr.bf16.mxu0 0
      %3738 = vmatpush1.bf16.xpose.msra.mxu0 0
      %3739 = vmatprep.subr.bf16.mxu0 0
      %3740 = vmatpush1.bf16.xpose.msra.mxu0 0
      %3741 = vmatprep.subr.bf16.mxu0 0
      %3742 = vmatpush1.bf16.xpose.msra.mxu0 0
      %3743 = vmatprep.subr.bf16.mxu0 0
      %3744 = vmatpush1.bf16.xpose.msra.mxu0 0
      %3745 = vmatprep.subr.bf16.mxu0 0
      %3746 = vmatpush1.bf16.xpose.msra.mxu0 0
      %3747 = vmatprep.subr.bf16.mxu0 0
      %3748 = vmatpush1.bf16.xpose.msra.mxu0 0
      %3749 = vmatprep.subr.bf16.mxu0 0
      %3750 = vmatpush1.bf16.xpose.msra.mxu0 0
      %3751 = vmatprep.subr.bf16.mxu0 0
      %3752 = vmatpush1.bf16.xpose.msra.mxu0 0
      %3753 = vmatprep.subr.bf16.mxu0 0
      %3754 = vmatpush1.bf16.xpose.msra.mxu0 0
      %3755 = vmatprep.subr.bf16.mxu0 0
      %3756 = vmatpush1.bf16.xpose.msra.mxu0 0
      %3757 = vmatprep.subr.bf16.mxu0 0
      %3758 = vmatpush1.bf16.xpose.msra.mxu0 0
      %3759 = vmatprep.mubr.bf16.mxu0 0
      %3760 = vmatmul.mubr.bf16.gmra.mrb[0].mxu0 %v3722
      %v3761 = vpop.f32.mrb[0].mxu0
      %v3762 = vadd.f32 0.0, %v3761
      %v3763 = vpop.f32.mrb[0].mxu0
      %v3764 = vpop.f32.mrb[0].mxu0
      %v3765 = vadd.f32 0.0, %v3764
      %v3766 = vpop.f32.mrb[0].mxu0
      %3767 = vdwg.mxu0
      %v3769 = vsel %vm2733, %v2691, 0
      %v3772 = vsel %vm2733, %v2707, 0
      %3774 = vmatprep.subr.bf16.mxu0 0
      %3775 = vmatpush1.bf16.xpose.msra.mxu0 %v3772
      %3776 = vmatprep.subr.bf16.mxu0 0
      %3777 = vmatpush1.bf16.xpose.msra.mxu0 0
      %3778 = vmatprep.subr.bf16.mxu0 0
      %3779 = vmatpush1.bf16.xpose.msra.mxu0 0
      %3780 = vmatprep.subr.bf16.mxu0 0
      %3781 = vmatpush1.bf16.xpose.msra.mxu0 0
      %3782 = vmatprep.subr.bf16.mxu0 0
      %3783 = vmatpush1.bf16.xpose.msra.mxu0 0
      %3784 = vmatprep.subr.bf16.mxu0 0
      %3785 = vmatpush1.bf16.xpose.msra.mxu0 0
      %3786 = vmatprep.subr.bf16.mxu0 0
      %3787 = vmatpush1.bf16.xpose.msra.mxu0 0
      %3788 = vmatprep.subr.bf16.mxu0 0
      %3789 = vmatpush1.bf16.xpose.msra.mxu0 0
      %3790 = vmatprep.subr.bf16.mxu0 0
      %3791 = vmatpush1.bf16.xpose.msra.mxu0 0
      %3792 = vmatprep.subr.bf16.mxu0 0
      %3793 = vmatpush1.bf16.xpose.msra.mxu0 0
      %3794 = vmatprep.subr.bf16.mxu0 0
      %3795 = vmatpush1.bf16.xpose.msra.mxu0 0
      %3796 = vmatprep.subr.bf16.mxu0 0
      %3797 = vmatpush1.bf16.xpose.msra.mxu0 0
      %3798 = vmatprep.subr.bf16.mxu0 0
      %3799 = vmatpush1.bf16.xpose.msra.mxu0 0
      %3800 = vmatprep.subr.bf16.mxu0 0
      %3801 = vmatpush1.bf16.xpose.msra.mxu0 0
      %3802 = vmatprep.subr.bf16.mxu0 0
      %3803 = vmatpush1.bf16.xpose.msra.mxu0 0
      %3804 = vmatprep.subr.bf16.mxu0 0
      %3805 = vmatpush1.bf16.xpose.msra.mxu0 0
      %3806 = vmatprep.mubr.bf16.mxu0 0
      %3807 = vmatmul.mubr.bf16.gmra.mrb[0].mxu0 %v3769
      %v3808 = vpop.f32.mrb[0].mxu0
      %v3809 = vadd.f32 0.0, %v3808
      %v3810 = vpop.f32.mrb[0].mxu0
      %v3811 = vpop.f32.mrb[0].mxu0
      %v3812 = vadd.f32 0.0, %v3811
      %v3813 = vpop.f32.mrb[0].mxu0
      %3814 = vdwg.mxu0
      %v3816 = vsel %vm2733, %v2692, 0
      %v3819 = vsel %vm2733, %v2708, 0
      %3821 = vmatprep.subr.bf16.mxu0 0
      %3822 = vmatpush1.bf16.xpose.msra.mxu0 %v3819
      %3823 = vmatprep.subr.bf16.mxu0 0
      %3824 = vmatpush1.bf16.xpose.msra.mxu0 0
      %3825 = vmatprep.subr.bf16.mxu0 0
      %3826 = vmatpush1.bf16.xpose.msra.mxu0 0
      %3827 = vmatprep.subr.bf16.mxu0 0
      %3828 = vmatpush1.bf16.xpose.msra.mxu0 0
      %3829 = vmatprep.subr.bf16.mxu0 0
      %3830 = vmatpush1.bf16.xpose.msra.mxu0 0
      %3831 = vmatprep.subr.bf16.mxu0 0
      %3832 = vmatpush1.bf16.xpose.msra.mxu0 0
      %3833 = vmatprep.subr.bf16.mxu0 0
      %3834 = vmatpush1.bf16.xpose.msra.mxu0 0
      %3835 = vmatprep.subr.bf16.mxu0 0
      %3836 = vmatpush1.bf16.xpose.msra.mxu0 0
      %3837 = vmatprep.subr.bf16.mxu0 0
      %3838 = vmatpush1.bf16.xpose.msra.mxu0 0
      %3839 = vmatprep.subr.bf16.mxu0 0
      %3840 = vmatpush1.bf16.xpose.msra.mxu0 0
      %3841 = vmatprep.subr.bf16.mxu0 0
      %3842 = vmatpush1.bf16.xpose.msra.mxu0 0
      %3843 = vmatprep.subr.bf16.mxu0 0
      %3844 = vmatpush1.bf16.xpose.msra.mxu0 0
      %3845 = vmatprep.subr.bf16.mxu0 0
      %3846 = vmatpush1.bf16.xpose.msra.mxu0 0
      %3847 = vmatprep.subr.bf16.mxu0 0
      %3848 = vmatpush1.bf16.xpose.msra.mxu0 0
      %3849 = vmatprep.subr.bf16.mxu0 0
      %3850 = vmatpush1.bf16.xpose.msra.mxu0 0
      %3851 = vmatprep.subr.bf16.mxu0 0
      %3852 = vmatpush1.bf16.xpose.msra.mxu0 0
      %3853 = vmatprep.mubr.bf16.mxu0 0
      %3854 = vmatmul.mubr.bf16.gmra.mrb[0].mxu0 %v3816
      %v3855 = vpop.f32.mrb[0].mxu0
      %v3856 = vadd.f32 0.0, %v3855
      %v3857 = vpop.f32.mrb[0].mxu0
      %v3858 = vpop.f32.mrb[0].mxu0
      %v3859 = vadd.f32 0.0, %v3858
      %v3860 = vpop.f32.mrb[0].mxu0
      %3861 = vdwg.mxu0
      %v3863 = vsel %vm2733, %v2693, 0
      %v3866 = vsel %vm2733, %v2709, 0
      %3868 = vmatprep.subr.bf16.mxu0 0
      %3869 = vmatpush1.bf16.xpose.msra.mxu0 %v3866
      %3870 = vmatprep.subr.bf16.mxu0 0
      %3871 = vmatpush1.bf16.xpose.msra.mxu0 0
      %3872 = vmatprep.subr.bf16.mxu0 0
      %3873 = vmatpush1.bf16.xpose.msra.mxu0 0
      %3874 = vmatprep.subr.bf16.mxu0 0
      %3875 = vmatpush1.bf16.xpose.msra.mxu0 0
      %3876 = vmatprep.subr.bf16.mxu0 0
      %3877 = vmatpush1.bf16.xpose.msra.mxu0 0
      %3878 = vmatprep.subr.bf16.mxu0 0
      %3879 = vmatpush1.bf16.xpose.msra.mxu0 0
      %3880 = vmatprep.subr.bf16.mxu0 0
      %3881 = vmatpush1.bf16.xpose.msra.mxu0 0
      %3882 = vmatprep.subr.bf16.mxu0 0
      %3883 = vmatpush1.bf16.xpose.msra.mxu0 0
      %3884 = vmatprep.subr.bf16.mxu0 0
      %3885 = vmatpush1.bf16.xpose.msra.mxu0 0
      %3886 = vmatprep.subr.bf16.mxu0 0
      %3887 = vmatpush1.bf16.xpose.msra.mxu0 0
      %3888 = vmatprep.subr.bf16.mxu0 0
      %3889 = vmatpush1.bf16.xpose.msra.mxu0 0
      %3890 = vmatprep.subr.bf16.mxu0 0
      %3891 = vmatpush1.bf16.xpose.msra.mxu0 0
      %3892 = vmatprep.subr.bf16.mxu0 0
      %3893 = vmatpush1.bf16.xpose.msra.mxu0 0
      %3894 = vmatprep.subr.bf16.mxu0 0
      %3895 = vmatpush1.bf16.xpose.msra.mxu0 0
      %3896 = vmatprep.subr.bf16.mxu0 0
      %3897 = vmatpush1.bf16.xpose.msra.mxu0 0
      %3898 = vmatprep.subr.bf16.mxu0 0
      %3899 = vmatpush1.bf16.xpose.msra.mxu0 0
      %3900 = vmatprep.mubr.bf16.mxu0 0
      %3901 = vmatmul.mubr.bf16.gmra.mrb[0].mxu0 %v3863
      %v3902 = vpop.f32.mrb[0].mxu0
      %v3903 = vadd.f32 0.0, %v3902
      %v3904 = vpop.f32.mrb[0].mxu0
      %v3905 = vpop.f32.mrb[0].mxu0
      %v3906 = vadd.f32 0.0, %v3905
      %v3907 = vpop.f32.mrb[0].mxu0
      %3908 = vdwg.mxu0
      %v3910 = vsel %vm2733, %v2694, 0
      %v3913 = vsel %vm2733, %v2710, 0
      %3915 = vmatprep.subr.bf16.mxu0 0
      %3916 = vmatpush1.bf16.xpose.msra.mxu0 %v3913
      %3917 = vmatprep.subr.bf16.mxu0 0
      %3918 = vmatpush1.bf16.xpose.msra.mxu0 0
      %3919 = vmatprep.subr.bf16.mxu0 0
      %3920 = vmatpush1.bf16.xpose.msra.mxu0 0
      %3921 = vmatprep.subr.bf16.mxu0 0
      %3922 = vmatpush1.bf16.xpose.msra.mxu0 0
      %3923 = vmatprep.subr.bf16.mxu0 0
      %3924 = vmatpush1.bf16.xpose.msra.mxu0 0
      %3925 = vmatprep.subr.bf16.mxu0 0
      %3926 = vmatpush1.bf16.xpose.msra.mxu0 0
      %3927 = vmatprep.subr.bf16.mxu0 0
      %3928 = vmatpush1.bf16.xpose.msra.mxu0 0
      %3929 = vmatprep.subr.bf16.mxu0 0
      %3930 = vmatpush1.bf16.xpose.msra.mxu0 0
      %3931 = vmatprep.subr.bf16.mxu0 0
      %3932 = vmatpush1.bf16.xpose.msra.mxu0 0
      %3933 = vmatprep.subr.bf16.mxu0 0
      %3934 = vmatpush1.bf16.xpose.msra.mxu0 0
      %3935 = vmatprep.subr.bf16.mxu0 0
      %3936 = vmatpush1.bf16.xpose.msra.mxu0 0
      %3937 = vmatprep.subr.bf16.mxu0 0
      %3938 = vmatpush1.bf16.xpose.msra.mxu0 0
      %3939 = vmatprep.subr.bf16.mxu0 0
      %3940 = vmatpush1.bf16.xpose.msra.mxu0 0
      %3941 = vmatprep.subr.bf16.mxu0 0
      %3942 = vmatpush1.bf16.xpose.msra.mxu0 0
      %3943 = vmatprep.subr.bf16.mxu0 0
      %3944 = vmatpush1.bf16.xpose.msra.mxu0 0
      %3945 = vmatprep.subr.bf16.mxu0 0
      %3946 = vmatpush1.bf16.xpose.msra.mxu0 0
      %3947 = vmatprep.mubr.bf16.mxu0 0
      %3948 = vmatmul.mubr.bf16.gmra.mrb[0].mxu0 %v3910
      %v3949 = vpop.f32.mrb[0].mxu0
      %v3950 = vadd.f32 0.0, %v3949
      %v3951 = vpop.f32.mrb[0].mxu0
      %v3952 = vpop.f32.mrb[0].mxu0
      %v3953 = vadd.f32 0.0, %v3952
      %v3954 = vpop.f32.mrb[0].mxu0
      %3955 = vdwg.mxu0
      %v3957 = vsel %vm2733, %v2695, 0
      %v3960 = vsel %vm2733, %v2711, 0
      %3962 = vmatprep.subr.bf16.mxu0 0
      %3963 = vmatpush1.bf16.xpose.msra.mxu0 %v3960
      %3964 = vmatprep.subr.bf16.mxu0 0
      %3965 = vmatpush1.bf16.xpose.msra.mxu0 0
      %3966 = vmatprep.subr.bf16.mxu0 0
      %3967 = vmatpush1.bf16.xpose.msra.mxu0 0
      %3968 = vmatprep.subr.bf16.mxu0 0
      %3969 = vmatpush1.bf16.xpose.msra.mxu0 0
      %3970 = vmatprep.subr.bf16.mxu0 0
      %3971 = vmatpush1.bf16.xpose.msra.mxu0 0
      %3972 = vmatprep.subr.bf16.mxu0 0
      %3973 = vmatpush1.bf16.xpose.msra.mxu0 0
      %3974 = vmatprep.subr.bf16.mxu0 0
      %3975 = vmatpush1.bf16.xpose.msra.mxu0 0
      %3976 = vmatprep.subr.bf16.mxu0 0
      %3977 = vmatpush1.bf16.xpose.msra.mxu0 0
      %3978 = vmatprep.subr.bf16.mxu0 0
      %3979 = vmatpush1.bf16.xpose.msra.mxu0 0
      %3980 = vmatprep.subr.bf16.mxu0 0
      %3981 = vmatpush1.bf16.xpose.msra.mxu0 0
      %3982 = vmatprep.subr.bf16.mxu0 0
      %3983 = vmatpush1.bf16.xpose.msra.mxu0 0
      %3984 = vmatprep.subr.bf16.mxu0 0
      %3985 = vmatpush1.bf16.xpose.msra.mxu0 0
      %3986 = vmatprep.subr.bf16.mxu0 0
      %3987 = vmatpush1.bf16.xpose.msra.mxu0 0
      %3988 = vmatprep.subr.bf16.mxu0 0
      %3989 = vmatpush1.bf16.xpose.msra.mxu0 0
      %3990 = vmatprep.subr.bf16.mxu0 0
      %3991 = vmatpush1.bf16.xpose.msra.mxu0 0
      %3992 = vmatprep.subr.bf16.mxu0 0
      %3993 = vmatpush1.bf16.xpose.msra.mxu0 0
      %3994 = vmatprep.mubr.bf16.mxu0 0
      %3995 = vmatmul.mubr.bf16.gmra.mrb[0].mxu0 %v3957
      %v3996 = vpop.f32.mrb[0].mxu0
      %v3997 = vadd.f32 0.0, %v3996
      %v3998 = vpop.f32.mrb[0].mxu0
      %v3999 = vpop.f32.mrb[0].mxu0
      %v4000 = vadd.f32 0.0, %v3999
      %v4001 = vpop.f32.mrb[0].mxu0
      %4002 = vdwg.mxu0
      %v4004 = vsel %vm2733, %v2696, 0
      %v4007 = vsel %vm2733, %v2712, 0
      %4009 = vmatprep.subr.bf16.mxu0 0
      %4010 = vmatpush1.bf16.xpose.msra.mxu0 %v4007
      %4011 = vmatprep.subr.bf16.mxu0 0
      %4012 = vmatpush1.bf16.xpose.msra.mxu0 0
      %4013 = vmatprep.subr.bf16.mxu0 0
      %4014 = vmatpush1.bf16.xpose.msra.mxu0 0
      %4015 = vmatprep.subr.bf16.mxu0 0
      %4016 = vmatpush1.bf16.xpose.msra.mxu0 0
      %4017 = vmatprep.subr.bf16.mxu0 0
      %4018 = vmatpush1.bf16.xpose.msra.mxu0 0
      %4019 = vmatprep.subr.bf16.mxu0 0
      %4020 = vmatpush1.bf16.xpose.msra.mxu0 0
      %4021 = vmatprep.subr.bf16.mxu0 0
      %4022 = vmatpush1.bf16.xpose.msra.mxu0 0
      %4023 = vmatprep.subr.bf16.mxu0 0
      %4024 = vmatpush1.bf16.xpose.msra.mxu0 0
      %4025 = vmatprep.subr.bf16.mxu0 0
      %4026 = vmatpush1.bf16.xpose.msra.mxu0 0
      %4027 = vmatprep.subr.bf16.mxu0 0
      %4028 = vmatpush1.bf16.xpose.msra.mxu0 0
      %4029 = vmatprep.subr.bf16.mxu0 0
      %4030 = vmatpush1.bf16.xpose.msra.mxu0 0
      %4031 = vmatprep.subr.bf16.mxu0 0
      %4032 = vmatpush1.bf16.xpose.msra.mxu0 0
      %4033 = vmatprep.subr.bf16.mxu0 0
      %4034 = vmatpush1.bf16.xpose.msra.mxu0 0
      %4035 = vmatprep.subr.bf16.mxu0 0
      %4036 = vmatpush1.bf16.xpose.msra.mxu0 0
      %4037 = vmatprep.subr.bf16.mxu0 0
      %4038 = vmatpush1.bf16.xpose.msra.mxu0 0
      %4039 = vmatprep.subr.bf16.mxu0 0
      %4040 = vmatpush1.bf16.xpose.msra.mxu0 0
      %4041 = vmatprep.mubr.bf16.mxu0 0
      %4042 = vmatmul.mubr.bf16.gmra.mrb[0].mxu0 %v4004
      %v4043 = vpop.f32.mrb[0].mxu0
      %v4044 = vadd.f32 0.0, %v4043
      %v4045 = vpop.f32.mrb[0].mxu0
      %v4046 = vpop.f32.mrb[0].mxu0
      %v4047 = vadd.f32 0.0, %v4046
      %v4048 = vpop.f32.mrb[0].mxu0
      %4049 = vdwg.mxu0
      %v4051 = vsel %vm2733, %v2697, 0
      %v4054 = vsel %vm2733, %v2713, 0
      %4056 = vmatprep.subr.bf16.mxu0 0
      %4057 = vmatpush1.bf16.xpose.msra.mxu0 %v4054
      %4058 = vmatprep.subr.bf16.mxu0 0
      %4059 = vmatpush1.bf16.xpose.msra.mxu0 0
      %4060 = vmatprep.subr.bf16.mxu0 0
      %4061 = vmatpush1.bf16.xpose.msra.mxu0 0
      %4062 = vmatprep.subr.bf16.mxu0 0
      %4063 = vmatpush1.bf16.xpose.msra.mxu0 0
      %4064 = vmatprep.subr.bf16.mxu0 0
      %4065 = vmatpush1.bf16.xpose.msra.mxu0 0
      %4066 = vmatprep.subr.bf16.mxu0 0
      %4067 = vmatpush1.bf16.xpose.msra.mxu0 0
      %4068 = vmatprep.subr.bf16.mxu0 0
      %4069 = vmatpush1.bf16.xpose.msra.mxu0 0
      %4070 = vmatprep.subr.bf16.mxu0 0
      %4071 = vmatpush1.bf16.xpose.msra.mxu0 0
      %4072 = vmatprep.subr.bf16.mxu0 0
      %4073 = vmatpush1.bf16.xpose.msra.mxu0 0
      %4074 = vmatprep.subr.bf16.mxu0 0
      %4075 = vmatpush1.bf16.xpose.msra.mxu0 0
      %4076 = vmatprep.subr.bf16.mxu0 0
      %4077 = vmatpush1.bf16.xpose.msra.mxu0 0
      %4078 = vmatprep.subr.bf16.mxu0 0
      %4079 = vmatpush1.bf16.xpose.msra.mxu0 0
      %4080 = vmatprep.subr.bf16.mxu0 0
      %4081 = vmatpush1.bf16.xpose.msra.mxu0 0
      %4082 = vmatprep.subr.bf16.mxu0 0
      %4083 = vmatpush1.bf16.xpose.msra.mxu0 0
      %4084 = vmatprep.subr.bf16.mxu0 0
      %4085 = vmatpush1.bf16.xpose.msra.mxu0 0
      %4086 = vmatprep.subr.bf16.mxu0 0
      %4087 = vmatpush1.bf16.xpose.msra.mxu0 0
      %4088 = vmatprep.mubr.bf16.mxu0 0
      %4089 = vmatmul.mubr.bf16.gmra.mrb[0].mxu0 %v4051
      %v4090 = vpop.f32.mrb[0].mxu0
      %v4091 = vadd.f32 0.0, %v4090
      %v4092 = vpop.f32.mrb[0].mxu0
      %v4093 = vpop.f32.mrb[0].mxu0
      %v4094 = vadd.f32 0.0, %v4093
      %v4095 = vpop.f32.mrb[0].mxu0
      %4096 = vdwg.mxu0
      %v4098 = vsel %vm2733, %v2698, 0
      %v4101 = vsel %vm2733, %v2714, 0
      %4103 = vmatprep.subr.bf16.mxu0 0
      %4104 = vmatpush1.bf16.xpose.msra.mxu0 %v4101
      %4105 = vmatprep.subr.bf16.mxu0 0
      %4106 = vmatpush1.bf16.xpose.msra.mxu0 0
      %4107 = vmatprep.subr.bf16.mxu0 0
      %4108 = vmatpush1.bf16.xpose.msra.mxu0 0
      %4109 = vmatprep.subr.bf16.mxu0 0
      %4110 = vmatpush1.bf16.xpose.msra.mxu0 0
      %4111 = vmatprep.subr.bf16.mxu0 0
      %4112 = vmatpush1.bf16.xpose.msra.mxu0 0
      %4113 = vmatprep.subr.bf16.mxu0 0
      %4114 = vmatpush1.bf16.xpose.msra.mxu0 0
      %4115 = vmatprep.subr.bf16.mxu0 0
      %4116 = vmatpush1.bf16.xpose.msra.mxu0 0
      %4117 = vmatprep.subr.bf16.mxu0 0
      %4118 = vmatpush1.bf16.xpose.msra.mxu0 0
      %4119 = vmatprep.subr.bf16.mxu0 0
      %4120 = vmatpush1.bf16.xpose.msra.mxu0 0
      %4121 = vmatprep.subr.bf16.mxu0 0
      %4122 = vmatpush1.bf16.xpose.msra.mxu0 0
      %4123 = vmatprep.subr.bf16.mxu0 0
      %4124 = vmatpush1.bf16.xpose.msra.mxu0 0
      %4125 = vmatprep.subr.bf16.mxu0 0
      %4126 = vmatpush1.bf16.xpose.msra.mxu0 0
      %4127 = vmatprep.subr.bf16.mxu0 0
      %4128 = vmatpush1.bf16.xpose.msra.mxu0 0
      %4129 = vmatprep.subr.bf16.mxu0 0
      %4130 = vmatpush1.bf16.xpose.msra.mxu0 0
      %4131 = vmatprep.subr.bf16.mxu0 0
      %4132 = vmatpush1.bf16.xpose.msra.mxu0 0
      %4133 = vmatprep.subr.bf16.mxu0 0
      %4134 = vmatpush1.bf16.xpose.msra.mxu0 0
      %4135 = vmatprep.mubr.bf16.mxu0 0
      %4136 = vmatmul.mubr.bf16.gmra.mrb[0].mxu0 %v4098
      %v4137 = vpop.f32.mrb[0].mxu0
      %v4138 = vadd.f32 0.0, %v4137
      %v4139 = vpop.f32.mrb[0].mxu0
      %v4140 = vpop.f32.mrb[0].mxu0
      %v4141 = vadd.f32 0.0, %v4140
      %v4142 = vpop.f32.mrb[0].mxu0
      %4143 = vdwg.mxu0
      %v4145 = vsel %vm2733, %v2699, 0
      %v4148 = vsel %vm2733, %v2715, 0
      %4150 = vmatprep.subr.bf16.mxu0 0
      %4151 = vmatpush1.bf16.xpose.msra.mxu0 %v4148
      %4152 = vmatprep.subr.bf16.mxu0 0
      %4153 = vmatpush1.bf16.xpose.msra.mxu0 0
      %4154 = vmatprep.subr.bf16.mxu0 0
      %4155 = vmatpush1.bf16.xpose.msra.mxu0 0
      %4156 = vmatprep.subr.bf16.mxu0 0
      %4157 = vmatpush1.bf16.xpose.msra.mxu0 0
      %4158 = vmatprep.subr.bf16.mxu0 0
      %4159 = vmatpush1.bf16.xpose.msra.mxu0 0
      %4160 = vmatprep.subr.bf16.mxu0 0
      %4161 = vmatpush1.bf16.xpose.msra.mxu0 0
      %4162 = vmatprep.subr.bf16.mxu0 0
      %4163 = vmatpush1.bf16.xpose.msra.mxu0 0
      %4164 = vmatprep.subr.bf16.mxu0 0
      %4165 = vmatpush1.bf16.xpose.msra.mxu0 0
      %4166 = vmatprep.subr.bf16.mxu0 0
      %4167 = vmatpush1.bf16.xpose.msra.mxu0 0
      %4168 = vmatprep.subr.bf16.mxu0 0
      %4169 = vmatpush1.bf16.xpose.msra.mxu0 0
      %4170 = vmatprep.subr.bf16.mxu0 0
      %4171 = vmatpush1.bf16.xpose.msra.mxu0 0
      %4172 = vmatprep.subr.bf16.mxu0 0
      %4173 = vmatpush1.bf16.xpose.msra.mxu0 0
      %4174 = vmatprep.subr.bf16.mxu0 0
      %4175 = vmatpush1.bf16.xpose.msra.mxu0 0
      %4176 = vmatprep.subr.bf16.mxu0 0
      %4177 = vmatpush1.bf16.xpose.msra.mxu0 0
      %4178 = vmatprep.subr.bf16.mxu0 0
      %4179 = vmatpush1.bf16.xpose.msra.mxu0 0
      %4180 = vmatprep.subr.bf16.mxu0 0
      %4181 = vmatpush1.bf16.xpose.msra.mxu0 0
      %4182 = vmatprep.mubr.bf16.mxu0 0
      %4183 = vmatmul.mubr.bf16.gmra.mrb[0].mxu0 %v4145
      %v4184 = vpop.f32.mrb[0].mxu0
      %v4185 = vadd.f32 0.0, %v4184
      %v4186 = vpop.f32.mrb[0].mxu0
      %v4187 = vpop.f32.mrb[0].mxu0
      %v4188 = vadd.f32 0.0, %v4187
      %v4189 = vpop.f32.mrb[0].mxu0
      %4190 = vdwg.mxu0
      %v4192 = vsel %vm2733, %v2700, 0
      %v4195 = vsel %vm2733, %v2716, 0
      %4197 = vmatprep.subr.bf16.mxu0 0
      %4198 = vmatpush1.bf16.xpose.msra.mxu0 %v4195
      %4199 = vmatprep.subr.bf16.mxu0 0
      %4200 = vmatpush1.bf16.xpose.msra.mxu0 0
      %4201 = vmatprep.subr.bf16.mxu0 0
      %4202 = vmatpush1.bf16.xpose.msra.mxu0 0
      %4203 = vmatprep.subr.bf16.mxu0 0
      %4204 = vmatpush1.bf16.xpose.msra.mxu0 0
      %4205 = vmatprep.subr.bf16.mxu0 0
      %4206 = vmatpush1.bf16.xpose.msra.mxu0 0
      %4207 = vmatprep.subr.bf16.mxu0 0
      %4208 = vmatpush1.bf16.xpose.msra.mxu0 0
      %4209 = vmatprep.subr.bf16.mxu0 0
      %4210 = vmatpush1.bf16.xpose.msra.mxu0 0
      %4211 = vmatprep.subr.bf16.mxu0 0
      %4212 = vmatpush1.bf16.xpose.msra.mxu0 0
      %4213 = vmatprep.subr.bf16.mxu0 0
      %4214 = vmatpush1.bf16.xpose.msra.mxu0 0
      %4215 = vmatprep.subr.bf16.mxu0 0
      %4216 = vmatpush1.bf16.xpose.msra.mxu0 0
      %4217 = vmatprep.subr.bf16.mxu0 0
      %4218 = vmatpush1.bf16.xpose.msra.mxu0 0
      %4219 = vmatprep.subr.bf16.mxu0 0
      %4220 = vmatpush1.bf16.xpose.msra.mxu0 0
      %4221 = vmatprep.subr.bf16.mxu0 0
      %4222 = vmatpush1.bf16.xpose.msra.mxu0 0
      %4223 = vmatprep.subr.bf16.mxu0 0
      %4224 = vmatpush1.bf16.xpose.msra.mxu0 0
      %4225 = vmatprep.subr.bf16.mxu0 0
      %4226 = vmatpush1.bf16.xpose.msra.mxu0 0
      %4227 = vmatprep.subr.bf16.mxu0 0
      %4228 = vmatpush1.bf16.xpose.msra.mxu0 0
      %4229 = vmatprep.mubr.bf16.mxu0 0
      %4230 = vmatmul.mubr.bf16.gmra.mrb[0].mxu0 %v4192
      %v4231 = vpop.f32.mrb[0].mxu0
      %v4232 = vadd.f32 0.0, %v4231
      %v4233 = vpop.f32.mrb[0].mxu0
      %v4234 = vpop.f32.mrb[0].mxu0
      %v4235 = vadd.f32 0.0, %v4234
      %v4236 = vpop.f32.mrb[0].mxu0
      %4237 = vdwg.mxu0
      %v4238 = vlaneseq
      %v4239 = vshrl.u32 %v4238, 7
      %v4240 = vadd.s32 %v4239, 8
      %v4241 = vlaneseq
      %v4242 = vand.u32 %v4241, 127
      %vm4243 = vcmp.eq.s32.totalorder %v4239, %v4242
      %vm4244 = vcmp.eq.s32.totalorder %v4240, %v4242
      %v4245 = vsel %vm4243, 1, 0
      %v4246 = vsel %vm4244, 1, 0
      %vm4247 = vcmp.eq.s32.totalorder %v4245, 1
      %vm4248 = vcmp.eq.s32.totalorder %v4246, 1
      %v4249 = vsel %vm4247, -1e+30, %v3527
      %v4250 = vsel %vm4248, -1e+30, %v3530
      %v4251 = vsel %vm4247, -1e+30, %v3574
      %v4252 = vsel %vm4248, -1e+30, %v3577
      %v4253 = vsel %vm4247, -1e+30, %v3621
      %v4254 = vsel %vm4248, -1e+30, %v3624
      %v4255 = vsel %vm4247, -1e+30, %v3668
      %v4256 = vsel %vm4248, -1e+30, %v3671
      %v4257 = vsel %vm4247, -1e+30, %v3715
      %v4258 = vsel %vm4248, -1e+30, %v3718
      %v4259 = vsel %vm4247, -1e+30, %v3762
      %v4260 = vsel %vm4248, -1e+30, %v3765
      %v4261 = vsel %vm4247, -1e+30, %v3809
      %v4262 = vsel %vm4248, -1e+30, %v3812
      %v4263 = vsel %vm4247, -1e+30, %v3856
      %v4264 = vsel %vm4248, -1e+30, %v3859
      %v4265 = vsel %vm4247, -1e+30, %v3903
      %v4266 = vsel %vm4248, -1e+30, %v3906
      %v4267 = vsel %vm4247, -1e+30, %v3950
      %v4268 = vsel %vm4248, -1e+30, %v3953
      %v4269 = vsel %vm4247, -1e+30, %v3997
      %v4270 = vsel %vm4248, -1e+30, %v4000
      %v4271 = vsel %vm4247, -1e+30, %v4044
      %v4272 = vsel %vm4248, -1e+30, %v4047
      %v4273 = vsel %vm4247, -1e+30, %v4091
      %v4274 = vsel %vm4248, -1e+30, %v4094
      %v4275 = vsel %vm4247, -1e+30, %v4138
      %v4276 = vsel %vm4248, -1e+30, %v4141
      %v4277 = vsel %vm4247, -1e+30, %v4185
      %v4278 = vsel %vm4248, -1e+30, %v4188
      %v4279 = vsel %vm4247, -1e+30, %v4232
      %v4280 = vsel %vm4248, -1e+30, %v4235
      %vm4281 = vcmask 130048
      %v4282 = vsel %vm4281, %v2775, -inf
      %4283 = vmax.xlane.f32.xlu0 %v4282
      %v4284 = vpop.xlane.xlu0 %4283
      %v4285 = vsel %vm4281, %v2778, -inf
      %4286 = vmax.xlane.f32.xlu0 %v4285
      %v4287 = vpop.xlane.xlu0 %4286
      %v4288 = vsel %vm4281, %v2822, -inf
      %4289 = vmax.xlane.f32.xlu0 %v4288
      %v4290 = vpop.xlane.xlu0 %4289
      %v4291 = vsel %vm4281, %v2825, -inf
      %4292 = vmax.xlane.f32.xlu0 %v4291
      %v4293 = vpop.xlane.xlu0 %4292
      %v4294 = vsel %vm4281, %v2869, -inf
      %4295 = vmax.xlane.f32.xlu0 %v4294
      %v4296 = vpop.xlane.xlu0 %4295
      %v4297 = vsel %vm4281, %v2872, -inf
      %4298 = vmax.xlane.f32.xlu0 %v4297
      %v4299 = vpop.xlane.xlu0 %4298
      %v4300 = vsel %vm4281, %v2916, -inf
      %4301 = vmax.xlane.f32.xlu0 %v4300
      %v4302 = vpop.xlane.xlu0 %4301
      %v4303 = vsel %vm4281, %v2919, -inf
      %4304 = vmax.xlane.f32.xlu0 %v4303
      %v4305 = vpop.xlane.xlu0 %4304
      %v4306 = vsel %vm4281, %v2963, -inf
      %4307 = vmax.xlane.f32.xlu0 %v4306
      %v4308 = vpop.xlane.xlu0 %4307
      %v4309 = vsel %vm4281, %v2966, -inf
      %4310 = vmax.xlane.f32.xlu0 %v4309
      %v4311 = vpop.xlane.xlu0 %4310
      %v4312 = vsel %vm4281, %v3010, -inf
      %4313 = vmax.xlane.f32.xlu0 %v4312
      %v4314 = vpop.xlane.xlu0 %4313
      %v4315 = vsel %vm4281, %v3013, -inf
      %4316 = vmax.xlane.f32.xlu0 %v4315
      %v4317 = vpop.xlane.xlu0 %4316
      %v4318 = vsel %vm4281, %v3057, -inf
      %4319 = vmax.xlane.f32.xlu0 %v4318
      %v4320 = vpop.xlane.xlu0 %4319
      %v4321 = vsel %vm4281, %v3060, -inf
      %4322 = vmax.xlane.f32.xlu0 %v4321
      %v4323 = vpop.xlane.xlu0 %4322
      %v4324 = vsel %vm4281, %v3104, -inf
      %4325 = vmax.xlane.f32.xlu0 %v4324
      %v4326 = vpop.xlane.xlu0 %4325
      %v4327 = vsel %vm4281, %v3107, -inf
      %4328 = vmax.xlane.f32.xlu0 %v4327
      %v4329 = vpop.xlane.xlu0 %4328
      %v4330 = vsel %vm4281, %v3151, -inf
      %4331 = vmax.xlane.f32.xlu0 %v4330
      %v4332 = vpop.xlane.xlu0 %4331
      %v4333 = vsel %vm4281, %v3154, -inf
      %4334 = vmax.xlane.f32.xlu0 %v4333
      %v4335 = vpop.xlane.xlu0 %4334
      %v4336 = vsel %vm4281, %v3198, -inf
      %4337 = vmax.xlane.f32.xlu0 %v4336
      %v4338 = vpop.xlane.xlu0 %4337
      %v4339 = vsel %vm4281, %v3201, -inf
      %4340 = vmax.xlane.f32.xlu0 %v4339
      %v4341 = vpop.xlane.xlu0 %4340
      %v4342 = vsel %vm4281, %v3245, -inf
      %4343 = vmax.xlane.f32.xlu0 %v4342
      %v4344 = vpop.xlane.xlu0 %4343
      %v4345 = vsel %vm4281, %v3248, -inf
      %4346 = vmax.xlane.f32.xlu0 %v4345
      %v4347 = vpop.xlane.xlu0 %4346
      %v4348 = vsel %vm4281, %v3292, -inf
      %4349 = vmax.xlane.f32.xlu0 %v4348
      %v4350 = vpop.xlane.xlu0 %4349
      %v4351 = vsel %vm4281, %v3295, -inf
      %4352 = vmax.xlane.f32.xlu0 %v4351
      %v4353 = vpop.xlane.xlu0 %4352
      %v4354 = vsel %vm4281, %v3339, -inf
      %4355 = vmax.xlane.f32.xlu0 %v4354
      %v4356 = vpop.xlane.xlu0 %4355
      %v4357 = vsel %vm4281, %v3342, -inf
      %4358 = vmax.xlane.f32.xlu0 %v4357
      %v4359 = vpop.xlane.xlu0 %4358
      %v4360 = vsel %vm4281, %v3386, -inf
      %4361 = vmax.xlane.f32.xlu0 %v4360
      %v4362 = vpop.xlane.xlu0 %4361
      %v4363 = vsel %vm4281, %v3389, -inf
      %4364 = vmax.xlane.f32.xlu0 %v4363
      %v4365 = vpop.xlane.xlu0 %4364
      %v4366 = vsel %vm4281, %v3433, -inf
      %4367 = vmax.xlane.f32.xlu0 %v4366
      %v4368 = vpop.xlane.xlu0 %4367
      %v4369 = vsel %vm4281, %v3436, -inf
      %4370 = vmax.xlane.f32.xlu0 %v4369
      %v4371 = vpop.xlane.xlu0 %4370
      %v4372 = vsel %vm4281, %v3480, -inf
      %4373 = vmax.xlane.f32.xlu0 %v4372
      %v4374 = vpop.xlane.xlu0 %4373
      %v4375 = vsel %vm4281, %v3483, -inf
      %4376 = vmax.xlane.f32.xlu0 %v4375
      %v4377 = vpop.xlane.xlu0 %4376
      %v4378 = vsel %vm4281, %v4249, -inf
      %4379 = vmax.xlane.f32.xlu0 %v4378
      %v4380 = vpop.xlane.xlu0 %4379
      %v4381 = vsel %vm4281, %v4250, -inf
      %4382 = vmax.xlane.f32.xlu0 %v4381
      %v4383 = vpop.xlane.xlu0 %4382
      %v4384 = vsel %vm4281, %v4251, -inf
      %4385 = vmax.xlane.f32.xlu0 %v4384
      %v4386 = vpop.xlane.xlu0 %4385
      %v4387 = vsel %vm4281, %v4252, -inf
      %4388 = vmax.xlane.f32.xlu0 %v4387
      %v4389 = vpop.xlane.xlu0 %4388
      %v4390 = vsel %vm4281, %v4253, -inf
      %4391 = vmax.xlane.f32.xlu0 %v4390
      %v4392 = vpop.xlane.xlu0 %4391
      %v4393 = vsel %vm4281, %v4254, -inf
      %4394 = vmax.xlane.f32.xlu0 %v4393
      %v4395 = vpop.xlane.xlu0 %4394
      %v4396 = vsel %vm4281, %v4255, -inf
      %4397 = vmax.xlane.f32.xlu0 %v4396
      %v4398 = vpop.xlane.xlu0 %4397
      %v4399 = vsel %vm4281, %v4256, -inf
      %4400 = vmax.xlane.f32.xlu0 %v4399
      %v4401 = vpop.xlane.xlu0 %4400
      %v4402 = vsel %vm4281, %v4257, -inf
      %4403 = vmax.xlane.f32.xlu0 %v4402
      %v4404 = vpop.xlane.xlu0 %4403
      %v4405 = vsel %vm4281, %v4258, -inf
      %4406 = vmax.xlane.f32.xlu0 %v4405
      %v4407 = vpop.xlane.xlu0 %4406
      %v4408 = vsel %vm4281, %v4259, -inf
      %4409 = vmax.xlane.f32.xlu0 %v4408
      %v4410 = vpop.xlane.xlu0 %4409
      %v4411 = vsel %vm4281, %v4260, -inf
      %4412 = vmax.xlane.f32.xlu0 %v4411
      %v4413 = vpop.xlane.xlu0 %4412
      %v4414 = vsel %vm4281, %v4261, -inf
      %4415 = vmax.xlane.f32.xlu0 %v4414
      %v4416 = vpop.xlane.xlu0 %4415
      %v4417 = vsel %vm4281, %v4262, -inf
      %4418 = vmax.xlane.f32.xlu0 %v4417
      %v4419 = vpop.xlane.xlu0 %4418
      %v4420 = vsel %vm4281, %v4263, -inf
      %4421 = vmax.xlane.f32.xlu0 %v4420
      %v4422 = vpop.xlane.xlu0 %4421
      %v4423 = vsel %vm4281, %v4264, -inf
      %4424 = vmax.xlane.f32.xlu0 %v4423
      %v4425 = vpop.xlane.xlu0 %4424
      %v4426 = vsel %vm4281, %v4265, -inf
      %4427 = vmax.xlane.f32.xlu0 %v4426
      %v4428 = vpop.xlane.xlu0 %4427
      %v4429 = vsel %vm4281, %v4266, -inf
      %4430 = vmax.xlane.f32.xlu0 %v4429
      %v4431 = vpop.xlane.xlu0 %4430
      %v4432 = vsel %vm4281, %v4267, -inf
      %4433 = vmax.xlane.f32.xlu0 %v4432
      %v4434 = vpop.xlane.xlu0 %4433
      %v4435 = vsel %vm4281, %v4268, -inf
      %4436 = vmax.xlane.f32.xlu0 %v4435
      %v4437 = vpop.xlane.xlu0 %4436
      %v4438 = vsel %vm4281, %v4269, -inf
      %4439 = vmax.xlane.f32.xlu0 %v4438
      %v4440 = vpop.xlane.xlu0 %4439
      %v4441 = vsel %vm4281, %v4270, -inf
      %4442 = vmax.xlane.f32.xlu0 %v4441
      %v4443 = vpop.xlane.xlu0 %4442
      %v4444 = vsel %vm4281, %v4271, -inf
      %4445 = vmax.xlane.f32.xlu0 %v4444
      %v4446 = vpop.xlane.xlu0 %4445
      %v4447 = vsel %vm4281, %v4272, -inf
      %4448 = vmax.xlane.f32.xlu0 %v4447
      %v4449 = vpop.xlane.xlu0 %4448
      %v4450 = vsel %vm4281, %v4273, -inf
      %4451 = vmax.xlane.f32.xlu0 %v4450
      %v4452 = vpop.xlane.xlu0 %4451
      %v4453 = vsel %vm4281, %v4274, -inf
      %4454 = vmax.xlane.f32.xlu0 %v4453
      %v4455 = vpop.xlane.xlu0 %4454
      %v4456 = vsel %vm4281, %v4275, -inf
      %4457 = vmax.xlane.f32.xlu0 %v4456
      %v4458 = vpop.xlane.xlu0 %4457
      %v4459 = vsel %vm4281, %v4276, -inf
      %4460 = vmax.xlane.f32.xlu0 %v4459
      %v4461 = vpop.xlane.xlu0 %4460
      %v4462 = vsel %vm4281, %v4277, -inf
      %4463 = vmax.xlane.f32.xlu0 %v4462
      %v4464 = vpop.xlane.xlu0 %4463
      %v4465 = vsel %vm4281, %v4278, -inf
      %4466 = vmax.xlane.f32.xlu0 %v4465
      %v4467 = vpop.xlane.xlu0 %4466
      %v4468 = vsel %vm4281, %v4279, -inf
      %4469 = vmax.xlane.f32.xlu0 %v4468
      %v4470 = vpop.xlane.xlu0 %4469
      %v4471 = vsel %vm4281, %v4280, -inf
      %4472 = vmax.xlane.f32.xlu0 %v4471
      %v4473 = vpop.xlane.xlu0 %4472
      %v4506 = vlaneseq
      %v4507 = vshrl.u32 %v4506, 7
      %v4508 = vsub.s32 %v4242, %v4507
      %v4509 = vrot.slane %v4380, %v4508
      %v4510 = vadd.s32 %v4242, 4294967288
      %v4511 = vlaneseq
      %v4512 = vshrl.u32 %v4511, 7
      %v4513 = vsub.s32 %v4510, %v4512
      %v4514 = vrot.slane %v4383, %v4513
      %vm4515 = vcmask 130112
      %v4516 = vsel %vm4515, %v4514, %v4509
      %v4517 = vlaneseq
      %v4518 = vshrl.u32 %v4517, 7
      %v4519 = vsub.s32 %v4242, %v4518
      %v4520 = vrot.slane %v4386, %v4519
      %v4521 = vlaneseq
      %v4522 = vshrl.u32 %v4521, 7
      %v4523 = vsub.s32 %v4510, %v4522
      %v4524 = vrot.slane %v4389, %v4523
      %v4525 = vsel %vm4515, %v4524, %v4520
      %v4526 = vlaneseq
      %v4527 = vshrl.u32 %v4526, 7
      %v4528 = vsub.s32 %v4242, %v4527
      %v4529 = vrot.slane %v4392, %v4528
      %v4530 = vlaneseq
      %v4531 = vshrl.u32 %v4530, 7
      %v4532 = vsub.s32 %v4510, %v4531
      %v4533 = vrot.slane %v4395, %v4532
      %v4534 = vsel %vm4515, %v4533, %v4529
      %v4535 = vlaneseq
      %v4536 = vshrl.u32 %v4535, 7
      %v4537 = vsub.s32 %v4242, %v4536
      %v4538 = vrot.slane %v4398, %v4537
      %v4539 = vlaneseq
      %v4540 = vshrl.u32 %v4539, 7
      %v4541 = vsub.s32 %v4510, %v4540
      %v4542 = vrot.slane %v4401, %v4541
      %v4543 = vsel %vm4515, %v4542, %v4538
      %v4544 = vlaneseq
      %v4545 = vshrl.u32 %v4544, 7
      %v4546 = vsub.s32 %v4242, %v4545
      %v4547 = vrot.slane %v4404, %v4546
      %v4548 = vlaneseq
      %v4549 = vshrl.u32 %v4548, 7
      %v4550 = vsub.s32 %v4510, %v4549
      %v4551 = vrot.slane %v4407, %v4550
      %v4552 = vsel %vm4515, %v4551, %v4547
      %v4553 = vlaneseq
      %v4554 = vshrl.u32 %v4553, 7
      %v4555 = vsub.s32 %v4242, %v4554
      %v4556 = vrot.slane %v4410, %v4555
      %v4557 = vlaneseq
      %v4558 = vshrl.u32 %v4557, 7
      %v4559 = vsub.s32 %v4510, %v4558
      %v4560 = vrot.slane %v4413, %v4559
      %v4561 = vsel %vm4515, %v4560, %v4556
      %v4562 = vlaneseq
      %v4563 = vshrl.u32 %v4562, 7
      %v4564 = vsub.s32 %v4242, %v4563
      %v4565 = vrot.slane %v4416, %v4564
      %v4566 = vlaneseq
      %v4567 = vshrl.u32 %v4566, 7
      %v4568 = vsub.s32 %v4510, %v4567
      %v4569 = vrot.slane %v4419, %v4568
      %v4570 = vsel %vm4515, %v4569, %v4565
      %v4571 = vlaneseq
      %v4572 = vshrl.u32 %v4571, 7
      %v4573 = vsub.s32 %v4242, %v4572
      %v4574 = vrot.slane %v4422, %v4573
      %v4575 = vlaneseq
      %v4576 = vshrl.u32 %v4575, 7
      %v4577 = vsub.s32 %v4510, %v4576
      %v4578 = vrot.slane %v4425, %v4577
      %v4579 = vsel %vm4515, %v4578, %v4574
      %v4580 = vlaneseq
      %v4581 = vshrl.u32 %v4580, 7
      %v4582 = vsub.s32 %v4242, %v4581
      %v4583 = vrot.slane %v4428, %v4582
      %v4584 = vlaneseq
      %v4585 = vshrl.u32 %v4584, 7
      %v4586 = vsub.s32 %v4510, %v4585
      %v4587 = vrot.slane %v4431, %v4586
      %v4588 = vsel %vm4515, %v4587, %v4583
      %v4589 = vlaneseq
      %v4590 = vshrl.u32 %v4589, 7
      %v4591 = vsub.s32 %v4242, %v4590
      %v4592 = vrot.slane %v4434, %v4591
      %v4593 = vlaneseq
      %v4594 = vshrl.u32 %v4593, 7
      %v4595 = vsub.s32 %v4510, %v4594
      %v4596 = vrot.slane %v4437, %v4595
      %v4597 = vsel %vm4515, %v4596, %v4592
      %v4598 = vlaneseq
      %v4599 = vshrl.u32 %v4598, 7
      %v4600 = vsub.s32 %v4242, %v4599
      %v4601 = vrot.slane %v4440, %v4600
      %v4602 = vlaneseq
      %v4603 = vshrl.u32 %v4602, 7
      %v4604 = vsub.s32 %v4510, %v4603
      %v4605 = vrot.slane %v4443, %v4604
      %v4606 = vsel %vm4515, %v4605, %v4601
      %v4607 = vlaneseq
      %v4608 = vshrl.u32 %v4607, 7
      %v4609 = vsub.s32 %v4242, %v4608
      %v4610 = vrot.slane %v4446, %v4609
      %v4611 = vlaneseq
      %v4612 = vshrl.u32 %v4611, 7
      %v4613 = vsub.s32 %v4510, %v4612
      %v4614 = vrot.slane %v4449, %v4613
      %v4615 = vsel %vm4515, %v4614, %v4610
      %v4616 = vlaneseq
      %v4617 = vshrl.u32 %v4616, 7
      %v4618 = vsub.s32 %v4242, %v4617
      %v4619 = vrot.slane %v4452, %v4618
      %v4620 = vlaneseq
      %v4621 = vshrl.u32 %v4620, 7
      %v4622 = vsub.s32 %v4510, %v4621
      %v4623 = vrot.slane %v4455, %v4622
      %v4624 = vsel %vm4515, %v4623, %v4619
      %v4625 = vlaneseq
      %v4626 = vshrl.u32 %v4625, 7
      %v4627 = vsub.s32 %v4242, %v4626
      %v4628 = vrot.slane %v4458, %v4627
      %v4629 = vlaneseq
      %v4630 = vshrl.u32 %v4629, 7
      %v4631 = vsub.s32 %v4510, %v4630
      %v4632 = vrot.slane %v4461, %v4631
      %v4633 = vsel %vm4515, %v4632, %v4628
      %v4634 = vlaneseq
      %v4635 = vshrl.u32 %v4634, 7
      %v4636 = vsub.s32 %v4242, %v4635
      %v4637 = vrot.slane %v4464, %v4636
      %v4638 = vlaneseq
      %v4639 = vshrl.u32 %v4638, 7
      %v4640 = vsub.s32 %v4510, %v4639
      %v4641 = vrot.slane %v4467, %v4640
      %v4642 = vsel %vm4515, %v4641, %v4637
      %v4643 = vlaneseq
      %v4644 = vshrl.u32 %v4643, 7
      %v4645 = vsub.s32 %v4242, %v4644
      %v4646 = vrot.slane %v4470, %v4645
      %v4647 = vlaneseq
      %v4648 = vshrl.u32 %v4647, 7
      %v4649 = vsub.s32 %v4510, %v4648
      %v4650 = vrot.slane %v4473, %v4649
      %v4651 = vsel %vm4515, %v4650, %v4646
      %vm4652 = vcmask 1041409
      %v4653 = vsel %vm4652, %v4525, %v4516
      %vm4654 = vcmask 1042434
      %v4655 = vsel %vm4654, %v4534, %v4653
      %vm4656 = vcmask 1043459
      %v4657 = vsel %vm4656, %v4543, %v4655
      %vm4658 = vcmask 1044484
      %v4659 = vsel %vm4658, %v4552, %v4657
      %vm4660 = vcmask 1045509
      %v4661 = vsel %vm4660, %v4561, %v4659
      %vm4662 = vcmask 1046534
      %v4663 = vsel %vm4662, %v4570, %v4661
      %vm4664 = vcmask 1047559
      %v4665 = vsel %vm4664, %v4579, %v4663
      %v4666 = vsel %vm4652, %v4597, %v4588
      %v4667 = vsel %vm4654, %v4606, %v4666
      %v4668 = vsel %vm4656, %v4615, %v4667
      %v4669 = vsel %vm4658, %v4624, %v4668
      %v4670 = vsel %vm4660, %v4633, %v4669
      %v4671 = vsel %vm4662, %v4642, %v4670
      %v4672 = vsel %vm4664, %v4651, %v4671
      %4675 = vxpose.xlu0.b32.start [1/16] %v4665, 128
      %4676 = vxpose.xlu0.b32.cont [2/16] %v4672, 128
      %4677 = vxpose.xlu0.b32.cont [3/16] 0.0, 128
      %4678 = vxpose.xlu0.b32.cont [4/16] 0.0, 128
      %4679 = vxpose.xlu0.b32.cont [5/16] 0.0, 128
      %4680 = vxpose.xlu0.b32.cont [6/16] 0.0, 128
      %4681 = vxpose.xlu0.b32.cont [7/16] 0.0, 128
      %4682 = vxpose.xlu0.b32.cont [8/16] 0.0, 128
      %4683 = vxpose.xlu0.b32.cont [9/16] 0.0, 128
      %4684 = vxpose.xlu0.b32.cont [10/16] 0.0, 128
      %4685 = vxpose.xlu0.b32.cont [11/16] 0.0, 128
      %4686 = vxpose.xlu0.b32.cont [12/16] 0.0, 128
      %4687 = vxpose.xlu0.b32.cont [13/16] 0.0, 128
      %4688 = vxpose.xlu0.b32.cont [14/16] 0.0, 128
      %4689 = vxpose.xlu0.b32.cont [15/16] 0.0, 128
      %4690 = vxpose.xlu0.b32.end [16/16] 0.0, 128
      %v4691 = vpop.trf.xlu0
      %v4692 = vpop.trf.xlu0
      %v4693 = vpop.trf.xlu0
      %v4694 = vpop.trf.xlu0
      %v4695 = vpop.trf.xlu0
      %v4696 = vpop.trf.xlu0
      %v4697 = vpop.trf.xlu0
      %v4698 = vpop.trf.xlu0
      %v4699 = vpop.trf.xlu0
      %v4700 = vpop.trf.xlu0
      %v4701 = vpop.trf.xlu0
      %v4702 = vpop.trf.xlu0
      %v4703 = vpop.trf.xlu0
      %v4704 = vpop.trf.xlu0
      %v4705 = vpop.trf.xlu0
      %v4706 = vpop.trf.xlu0
      %v4709 = vlaneseq
      %v4710 = vshrl.u32 %v4709, 7
      %v4711 = vsub.s32 0, %v4710
      %v4712 = vrot.slane %v4691, %v4711
      %4714 = vbcast.lane.b32.xlu0 %v4712, 256
      %v4715 = vpop.permute.xlu0 %4714
      %s4717 = sor.u32 256, 8
      %4718 = vbcast.lane.b32.xlu0 %v4712, %s4717
      %v4719 = vpop.permute.xlu0 %4718
      %v4720 = vlaneseq
      %v4721 = vshrl.u32 %v4720, 7
      %v4722 = vsub.s32 1, %v4721
      %v4723 = vrot.slane %v4691, %v4722
      %4725 = vbcast.lane.b32.xlu0 %v4723, 256
      %v4726 = vpop.permute.xlu0 %4725
      %s4728 = sor.u32 256, 8
      %4729 = vbcast.lane.b32.xlu0 %v4723, %s4728
      %v4730 = vpop.permute.xlu0 %4729
      %v4731 = vlaneseq
      %v4732 = vshrl.u32 %v4731, 7
      %v4733 = vsub.s32 2, %v4732
      %v4734 = vrot.slane %v4691, %v4733
      %4736 = vbcast.lane.b32.xlu0 %v4734, 256
      %v4737 = vpop.permute.xlu0 %4736
      %s4739 = sor.u32 256, 8
      %4740 = vbcast.lane.b32.xlu0 %v4734, %s4739
      %v4741 = vpop.permute.xlu0 %4740
      %v4742 = vlaneseq
      %v4743 = vshrl.u32 %v4742, 7
      %v4744 = vsub.s32 3, %v4743
      %v4745 = vrot.slane %v4691, %v4744
      %4747 = vbcast.lane.b32.xlu0 %v4745, 256
      %v4748 = vpop.permute.xlu0 %4747
      %s4750 = sor.u32 256, 8
      %4751 = vbcast.lane.b32.xlu0 %v4745, %s4750
      %v4752 = vpop.permute.xlu0 %4751
      %v4753 = vlaneseq
      %v4754 = vshrl.u32 %v4753, 7
      %v4755 = vsub.s32 4, %v4754
      %v4756 = vrot.slane %v4691, %v4755
      %4758 = vbcast.lane.b32.xlu0 %v4756, 256
      %v4759 = vpop.permute.xlu0 %4758
      %s4761 = sor.u32 256, 8
      %4762 = vbcast.lane.b32.xlu0 %v4756, %s4761
      %v4763 = vpop.permute.xlu0 %4762
      %v4764 = vlaneseq
      %v4765 = vshrl.u32 %v4764, 7
      %v4766 = vsub.s32 5, %v4765
      %v4767 = vrot.slane %v4691, %v4766
      %4769 = vbcast.lane.b32.xlu0 %v4767, 256
      %v4770 = vpop.permute.xlu0 %4769
      %s4772 = sor.u32 256, 8
      %4773 = vbcast.lane.b32.xlu0 %v4767, %s4772
      %v4774 = vpop.permute.xlu0 %4773
      %v4775 = vlaneseq
      %v4776 = vshrl.u32 %v4775, 7
      %v4777 = vsub.s32 6, %v4776
      %v4778 = vrot.slane %v4691, %v4777
      %4780 = vbcast.lane.b32.xlu0 %v4778, 256
      %v4781 = vpop.permute.xlu0 %4780
      %s4783 = sor.u32 256, 8
      %4784 = vbcast.lane.b32.xlu0 %v4778, %s4783
      %v4785 = vpop.permute.xlu0 %4784
      %v4786 = vlaneseq
      %v4787 = vshrl.u32 %v4786, 7
      %v4788 = vsub.s32 7, %v4787
      %v4789 = vrot.slane %v4691, %v4788
      %4791 = vbcast.lane.b32.xlu0 %v4789, 256
      %v4792 = vpop.permute.xlu0 %4791
      %s4794 = sor.u32 256, 8
      %4795 = vbcast.lane.b32.xlu0 %v4789, %s4794
      %v4796 = vpop.permute.xlu0 %4795
      %v4797 = vlaneseq
      %v4798 = vshrl.u32 %v4797, 7
      %v4799 = vsub.s32 0, %v4798
      %v4800 = vrot.slane %v4692, %v4799
      %4802 = vbcast.lane.b32.xlu0 %v4800, 256
      %v4803 = vpop.permute.xlu0 %4802
      %s4805 = sor.u32 256, 8
      %4806 = vbcast.lane.b32.xlu0 %v4800, %s4805
      %v4807 = vpop.permute.xlu0 %4806
      %v4808 = vlaneseq
      %v4809 = vshrl.u32 %v4808, 7
      %v4810 = vsub.s32 1, %v4809
      %v4811 = vrot.slane %v4692, %v4810
      %4813 = vbcast.lane.b32.xlu0 %v4811, 256
      %v4814 = vpop.permute.xlu0 %4813
      %s4816 = sor.u32 256, 8
      %4817 = vbcast.lane.b32.xlu0 %v4811, %s4816
      %v4818 = vpop.permute.xlu0 %4817
      %v4819 = vlaneseq
      %v4820 = vshrl.u32 %v4819, 7
      %v4821 = vsub.s32 2, %v4820
      %v4822 = vrot.slane %v4692, %v4821
      %4824 = vbcast.lane.b32.xlu0 %v4822, 256
      %v4825 = vpop.permute.xlu0 %4824
      %s4827 = sor.u32 256, 8
      %4828 = vbcast.lane.b32.xlu0 %v4822, %s4827
      %v4829 = vpop.permute.xlu0 %4828
      %v4830 = vlaneseq
      %v4831 = vshrl.u32 %v4830, 7
      %v4832 = vsub.s32 3, %v4831
      %v4833 = vrot.slane %v4692, %v4832
      %4835 = vbcast.lane.b32.xlu0 %v4833, 256
      %v4836 = vpop.permute.xlu0 %4835
      %s4838 = sor.u32 256, 8
      %4839 = vbcast.lane.b32.xlu0 %v4833, %s4838
      %v4840 = vpop.permute.xlu0 %4839
      %v4841 = vlaneseq
      %v4842 = vshrl.u32 %v4841, 7
      %v4843 = vsub.s32 4, %v4842
      %v4844 = vrot.slane %v4692, %v4843
      %4846 = vbcast.lane.b32.xlu0 %v4844, 256
      %v4847 = vpop.permute.xlu0 %4846
      %s4849 = sor.u32 256, 8
      %4850 = vbcast.lane.b32.xlu0 %v4844, %s4849
      %v4851 = vpop.permute.xlu0 %4850
      %v4852 = vlaneseq
      %v4853 = vshrl.u32 %v4852, 7
      %v4854 = vsub.s32 5, %v4853
      %v4855 = vrot.slane %v4692, %v4854
      %4857 = vbcast.lane.b32.xlu0 %v4855, 256
      %v4858 = vpop.permute.xlu0 %4857
      %s4860 = sor.u32 256, 8
      %4861 = vbcast.lane.b32.xlu0 %v4855, %s4860
      %v4862 = vpop.permute.xlu0 %4861
      %v4863 = vlaneseq
      %v4864 = vshrl.u32 %v4863, 7
      %v4865 = vsub.s32 6, %v4864
      %v4866 = vrot.slane %v4692, %v4865
      %4868 = vbcast.lane.b32.xlu0 %v4866, 256
      %v4869 = vpop.permute.xlu0 %4868
      %s4871 = sor.u32 256, 8
      %4872 = vbcast.lane.b32.xlu0 %v4866, %s4871
      %v4873 = vpop.permute.xlu0 %4872
      %v4874 = vlaneseq
      %v4875 = vshrl.u32 %v4874, 7
      %v4876 = vsub.s32 7, %v4875
      %v4877 = vrot.slane %v4692, %v4876
      %4879 = vbcast.lane.b32.xlu0 %v4877, 256
      %v4880 = vpop.permute.xlu0 %4879
      %s4882 = sor.u32 256, 8
      %4883 = vbcast.lane.b32.xlu0 %v4877, %s4882
      %v4884 = vpop.permute.xlu0 %4883
      %v4917 = vmax.f32 %v4284, %v4715
      %v4918 = vmax.f32 %v4287, %v4719
      %v4919 = vmax.f32 %v4290, %v4726
      %v4920 = vmax.f32 %v4293, %v4730
      %v4921 = vmax.f32 %v4296, %v4737
      %v4922 = vmax.f32 %v4299, %v4741
      %v4923 = vmax.f32 %v4302, %v4748
      %v4924 = vmax.f32 %v4305, %v4752
      %v4925 = vmax.f32 %v4308, %v4759
      %v4926 = vmax.f32 %v4311, %v4763
      %v4927 = vmax.f32 %v4314, %v4770
      %v4928 = vmax.f32 %v4317, %v4774
      %v4929 = vmax.f32 %v4320, %v4781
      %v4930 = vmax.f32 %v4323, %v4785
      %v4931 = vmax.f32 %v4326, %v4792
      %v4932 = vmax.f32 %v4329, %v4796
      %v4933 = vmax.f32 %v4332, %v4803
      %v4934 = vmax.f32 %v4335, %v4807
      %v4935 = vmax.f32 %v4338, %v4814
      %v4936 = vmax.f32 %v4341, %v4818
      %v4937 = vmax.f32 %v4344, %v4825
      %v4938 = vmax.f32 %v4347, %v4829
      %v4939 = vmax.f32 %v4350, %v4836
      %v4940 = vmax.f32 %v4353, %v4840
      %v4941 = vmax.f32 %v4356, %v4847
      %v4942 = vmax.f32 %v4359, %v4851
      %v4943 = vmax.f32 %v4362, %v4858
      %v4944 = vmax.f32 %v4365, %v4862
      %v4945 = vmax.f32 %v4368, %v4869
      %v4946 = vmax.f32 %v4371, %v4873
      %v4947 = vmax.f32 %v4374, %v4880
      %v4948 = vmax.f32 %v4377, %v4884
      %4950 = vset.pattern.permute.xlu0 0
      %4951 = vperm.xlu0 %4950, %v4917
      %v4952 = vpop.permute.xlu0 %4951
      %4955 = vset.pattern.permute.xlu0 0
      %4956 = vperm.xlu0 %4955, %v4918
      %v4957 = vpop.permute.xlu0 %4956
      %4960 = vset.pattern.permute.xlu0 0
      %4961 = vperm.xlu0 %4960, %v4919
      %v4962 = vpop.permute.xlu0 %4961
      %4965 = vset.pattern.permute.xlu0 0
      %4966 = vperm.xlu0 %4965, %v4920
      %v4967 = vpop.permute.xlu0 %4966
      %4970 = vset.pattern.permute.xlu0 0
      %4971 = vperm.xlu0 %4970, %v4921
      %v4972 = vpop.permute.xlu0 %4971
      %4975 = vset.pattern.permute.xlu0 0
      %4976 = vperm.xlu0 %4975, %v4922
      %v4977 = vpop.permute.xlu0 %4976
      %4980 = vset.pattern.permute.xlu0 0
      %4981 = vperm.xlu0 %4980, %v4923
      %v4982 = vpop.permute.xlu0 %4981
      %4985 = vset.pattern.permute.xlu0 0
      %4986 = vperm.xlu0 %4985, %v4924
      %v4987 = vpop.permute.xlu0 %4986
      %4990 = vset.pattern.permute.xlu0 0
      %4991 = vperm.xlu0 %4990, %v4925
      %v4992 = vpop.permute.xlu0 %4991
      %4995 = vset.pattern.permute.xlu0 0
      %4996 = vperm.xlu0 %4995, %v4926
      %v4997 = vpop.permute.xlu0 %4996
      %5000 = vset.pattern.permute.xlu0 0
      %5001 = vperm.xlu0 %5000, %v4927
      %v5002 = vpop.permute.xlu0 %5001
      %5005 = vset.pattern.permute.xlu0 0
      %5006 = vperm.xlu0 %5005, %v4928
      %v5007 = vpop.permute.xlu0 %5006
      %5010 = vset.pattern.permute.xlu0 0
      %5011 = vperm.xlu0 %5010, %v4929
      %v5012 = vpop.permute.xlu0 %5011
      %5015 = vset.pattern.permute.xlu0 0
      %5016 = vperm.xlu0 %5015, %v4930
      %v5017 = vpop.permute.xlu0 %5016
      %5020 = vset.pattern.permute.xlu0 0
      %5021 = vperm.xlu0 %5020, %v4931
      %v5022 = vpop.permute.xlu0 %5021
      %5025 = vset.pattern.permute.xlu0 0
      %5026 = vperm.xlu0 %5025, %v4932
      %v5027 = vpop.permute.xlu0 %5026
      %5030 = vset.pattern.permute.xlu0 0
      %5031 = vperm.xlu0 %5030, %v4933
      %v5032 = vpop.permute.xlu0 %5031
      %5035 = vset.pattern.permute.xlu0 0
      %5036 = vperm.xlu0 %5035, %v4934
      %v5037 = vpop.permute.xlu0 %5036
      %5040 = vset.pattern.permute.xlu0 0
      %5041 = vperm.xlu0 %5040, %v4935
      %v5042 = vpop.permute.xlu0 %5041
      %5045 = vset.pattern.permute.xlu0 0
      %5046 = vperm.xlu0 %5045, %v4936
      %v5047 = vpop.permute.xlu0 %5046
      %5050 = vset.pattern.permute.xlu0 0
      %5051 = vperm.xlu0 %5050, %v4937
      %v5052 = vpop.permute.xlu0 %5051
      %5055 = vset.pattern.permute.xlu0 0
      %5056 = vperm.xlu0 %5055, %v4938
      %v5057 = vpop.permute.xlu0 %5056
      %5060 = vset.pattern.permute.xlu0 0
      %5061 = vperm.xlu0 %5060, %v4939
      %v5062 = vpop.permute.xlu0 %5061
      %5065 = vset.pattern.permute.xlu0 0
      %5066 = vperm.xlu0 %5065, %v4940
      %v5067 = vpop.permute.xlu0 %5066
      %5070 = vset.pattern.permute.xlu0 0
      %5071 = vperm.xlu0 %5070, %v4941
      %v5072 = vpop.permute.xlu0 %5071
      %5075 = vset.pattern.permute.xlu0 0
      %5076 = vperm.xlu0 %5075, %v4942
      %v5077 = vpop.permute.xlu0 %5076
      %5080 = vset.pattern.permute.xlu0 0
      %5081 = vperm.xlu0 %5080, %v4943
      %v5082 = vpop.permute.xlu0 %5081
      %5085 = vset.pattern.permute.xlu0 0
      %5086 = vperm.xlu0 %5085, %v4944
      %v5087 = vpop.permute.xlu0 %5086
      %5090 = vset.pattern.permute.xlu0 0
      %5091 = vperm.xlu0 %5090, %v4945
      %v5092 = vpop.permute.xlu0 %5091
      %5095 = vset.pattern.permute.xlu0 0
      %5096 = vperm.xlu0 %5095, %v4946
      %v5097 = vpop.permute.xlu0 %5096
      %5100 = vset.pattern.permute.xlu0 0
      %5101 = vperm.xlu0 %5100, %v4947
      %v5102 = vpop.permute.xlu0 %5101
      %5105 = vset.pattern.permute.xlu0 0
      %5106 = vperm.xlu0 %5105, %v4948
      %v5107 = vpop.permute.xlu0 %5106
      %v5109 = vsub.f32 %v2775, %v4952
      %v5110 = vsub.f32 %v2778, %v4957
      %v5111 = vsub.f32 %v2822, %v4962
      %v5112 = vsub.f32 %v2825, %v4967
      %v5113 = vsub.f32 %v2869, %v4972
      %v5114 = vsub.f32 %v2872, %v4977
      %v5115 = vsub.f32 %v2916, %v4982
      %v5116 = vsub.f32 %v2919, %v4987
      %v5117 = vsub.f32 %v2963, %v4992
      %v5118 = vsub.f32 %v2966, %v4997
      %v5119 = vsub.f32 %v3010, %v5002
      %v5120 = vsub.f32 %v3013, %v5007
      %v5121 = vsub.f32 %v3057, %v5012
      %v5122 = vsub.f32 %v3060, %v5017
      %v5123 = vsub.f32 %v3104, %v5022
      %v5124 = vsub.f32 %v3107, %v5027
      %v5125 = vsub.f32 %v3151, %v5032
      %v5126 = vsub.f32 %v3154, %v5037
      %v5127 = vsub.f32 %v3198, %v5042
      %v5128 = vsub.f32 %v3201, %v5047
      %v5129 = vsub.f32 %v3245, %v5052
      %v5130 = vsub.f32 %v3248, %v5057
      %v5131 = vsub.f32 %v3292, %v5062
      %v5132 = vsub.f32 %v3295, %v5067
      %v5133 = vsub.f32 %v3339, %v5072
      %v5134 = vsub.f32 %v3342, %v5077
      %v5135 = vsub.f32 %v3386, %v5082
      %v5136 = vsub.f32 %v3389, %v5087
      %v5137 = vsub.f32 %v3433, %v5092
      %v5138 = vsub.f32 %v3436, %v5097
      %v5139 = vsub.f32 %v3480, %v5102
      %v5140 = vsub.f32 %v3483, %v5107
      %v5141 = vmul.f32 %v5109, 1.442695
      %v5142 = vpow.pop %v5141
      %v5143 = vmul.f32 %v5110, 1.442695
      %v5144 = vpow.pop %v5143
      %v5145 = vmul.f32 %v5111, 1.442695
      %v5146 = vpow.pop %v5145
      %v5147 = vmul.f32 %v5112, 1.442695
      %v5148 = vpow.pop %v5147
      %v5149 = vmul.f32 %v5113, 1.442695
      %v5150 = vpow.pop %v5149
      %v5151 = vmul.f32 %v5114, 1.442695
      %v5152 = vpow.pop %v5151
      %v5153 = vmul.f32 %v5115, 1.442695
      %v5154 = vpow.pop %v5153
      %v5155 = vmul.f32 %v5116, 1.442695
      %v5156 = vpow.pop %v5155
      %v5157 = vmul.f32 %v5117, 1.442695
      %v5158 = vpow.pop %v5157
      %v5159 = vmul.f32 %v5118, 1.442695
      %v5160 = vpow.pop %v5159
      %v5161 = vmul.f32 %v5119, 1.442695
      %v5162 = vpow.pop %v5161
      %v5163 = vmul.f32 %v5120, 1.442695
      %v5164 = vpow.pop %v5163
      %v5165 = vmul.f32 %v5121, 1.442695
      %v5166 = vpow.pop %v5165
      %v5167 = vmul.f32 %v5122, 1.442695
      %v5168 = vpow.pop %v5167
      %v5169 = vmul.f32 %v5123, 1.442695
      %v5170 = vpow.pop %v5169
      %v5171 = vmul.f32 %v5124, 1.442695
      %v5172 = vpow.pop %v5171
      %v5173 = vmul.f32 %v5125, 1.442695
      %v5174 = vpow.pop %v5173
      %v5175 = vmul.f32 %v5126, 1.442695
      %v5176 = vpow.pop %v5175
      %v5177 = vmul.f32 %v5127, 1.442695
      %v5178 = vpow.pop %v5177
      %v5179 = vmul.f32 %v5128, 1.442695
      %v5180 = vpow.pop %v5179
      %v5181 = vmul.f32 %v5129, 1.442695
      %v5182 = vpow.pop %v5181
      %v5183 = vmul.f32 %v5130, 1.442695
      %v5184 = vpow.pop %v5183
      %v5185 = vmul.f32 %v5131, 1.442695
      %v5186 = vpow.pop %v5185
      %v5187 = vmul.f32 %v5132, 1.442695
      %v5188 = vpow.pop %v5187
      %v5189 = vmul.f32 %v5133, 1.442695
      %v5190 = vpow.pop %v5189
      %v5191 = vmul.f32 %v5134, 1.442695
      %v5192 = vpow.pop %v5191
      %v5193 = vmul.f32 %v5135, 1.442695
      %v5194 = vpow.pop %v5193
      %v5195 = vmul.f32 %v5136, 1.442695
      %v5196 = vpow.pop %v5195
      %v5197 = vmul.f32 %v5137, 1.442695
      %v5198 = vpow.pop %v5197
      %v5199 = vmul.f32 %v5138, 1.442695
      %v5200 = vpow.pop %v5199
      %v5201 = vmul.f32 %v5139, 1.442695
      %v5202 = vpow.pop %v5201
      %v5203 = vmul.f32 %v5140, 1.442695
      %v5204 = vpow.pop %v5203
      %v5205 = vlaneseq
      %v5206 = vshrl.u32 %v5205, 7
      %v5207 = vsub.s32 %v4242, %v5206
      %v5208 = vrot.slane %v4952, %v5207
      %v5209 = vlaneseq
      %v5210 = vshrl.u32 %v5209, 7
      %v5211 = vsub.s32 %v4510, %v5210
      %v5212 = vrot.slane %v4957, %v5211
      %v5213 = vsel %vm4515, %v5212, %v5208
      %v5214 = vlaneseq
      %v5215 = vshrl.u32 %v5214, 7
      %v5216 = vsub.s32 %v4242, %v5215
      %v5217 = vrot.slane %v4962, %v5216
      %v5218 = vlaneseq
      %v5219 = vshrl.u32 %v5218, 7
      %v5220 = vsub.s32 %v4510, %v5219
      %v5221 = vrot.slane %v4967, %v5220
      %v5222 = vsel %vm4515, %v5221, %v5217
      %v5223 = vlaneseq
      %v5224 = vshrl.u32 %v5223, 7
      %v5225 = vsub.s32 %v4242, %v5224
      %v5226 = vrot.slane %v4972, %v5225
      %v5227 = vlaneseq
      %v5228 = vshrl.u32 %v5227, 7
      %v5229 = vsub.s32 %v4510, %v5228
      %v5230 = vrot.slane %v4977, %v5229
      %v5231 = vsel %vm4515, %v5230, %v5226
      %v5232 = vlaneseq
      %v5233 = vshrl.u32 %v5232, 7
      %v5234 = vsub.s32 %v4242, %v5233
      %v5235 = vrot.slane %v4982, %v5234
      %v5236 = vlaneseq
      %v5237 = vshrl.u32 %v5236, 7
      %v5238 = vsub.s32 %v4510, %v5237
      %v5239 = vrot.slane %v4987, %v5238
      %v5240 = vsel %vm4515, %v5239, %v5235
      %v5241 = vlaneseq
      %v5242 = vshrl.u32 %v5241, 7
      %v5243 = vsub.s32 %v4242, %v5242
      %v5244 = vrot.slane %v4992, %v5243
      %v5245 = vlaneseq
      %v5246 = vshrl.u32 %v5245, 7
      %v5247 = vsub.s32 %v4510, %v5246
      %v5248 = vrot.slane %v4997, %v5247
      %v5249 = vsel %vm4515, %v5248, %v5244
      %v5250 = vlaneseq
      %v5251 = vshrl.u32 %v5250, 7
      %v5252 = vsub.s32 %v4242, %v5251
      %v5253 = vrot.slane %v5002, %v5252
      %v5254 = vlaneseq
      %v5255 = vshrl.u32 %v5254, 7
      %v5256 = vsub.s32 %v4510, %v5255
      %v5257 = vrot.slane %v5007, %v5256
      %v5258 = vsel %vm4515, %v5257, %v5253
      %v5259 = vlaneseq
      %v5260 = vshrl.u32 %v5259, 7
      %v5261 = vsub.s32 %v4242, %v5260
      %v5262 = vrot.slane %v5012, %v5261
      %v5263 = vlaneseq
      %v5264 = vshrl.u32 %v5263, 7
      %v5265 = vsub.s32 %v4510, %v5264
      %v5266 = vrot.slane %v5017, %v5265
      %v5267 = vsel %vm4515, %v5266, %v5262
      %v5268 = vlaneseq
      %v5269 = vshrl.u32 %v5268, 7
      %v5270 = vsub.s32 %v4242, %v5269
      %v5271 = vrot.slane %v5022, %v5270
      %v5272 = vlaneseq
      %v5273 = vshrl.u32 %v5272, 7
      %v5274 = vsub.s32 %v4510, %v5273
      %v5275 = vrot.slane %v5027, %v5274
      %v5276 = vsel %vm4515, %v5275, %v5271
      %v5277 = vlaneseq
      %v5278 = vshrl.u32 %v5277, 7
      %v5279 = vsub.s32 %v4242, %v5278
      %v5280 = vrot.slane %v5032, %v5279
      %v5281 = vlaneseq
      %v5282 = vshrl.u32 %v5281, 7
      %v5283 = vsub.s32 %v4510, %v5282
      %v5284 = vrot.slane %v5037, %v5283
      %v5285 = vsel %vm4515, %v5284, %v5280
      %v5286 = vlaneseq
      %v5287 = vshrl.u32 %v5286, 7
      %v5288 = vsub.s32 %v4242, %v5287
      %v5289 = vrot.slane %v5042, %v5288
      %v5290 = vlaneseq
      %v5291 = vshrl.u32 %v5290, 7
      %v5292 = vsub.s32 %v4510, %v5291
      %v5293 = vrot.slane %v5047, %v5292
      %v5294 = vsel %vm4515, %v5293, %v5289
      %v5295 = vlaneseq
      %v5296 = vshrl.u32 %v5295, 7
      %v5297 = vsub.s32 %v4242, %v5296
      %v5298 = vrot.slane %v5052, %v5297
      %v5299 = vlaneseq
      %v5300 = vshrl.u32 %v5299, 7
      %v5301 = vsub.s32 %v4510, %v5300
      %v5302 = vrot.slane %v5057, %v5301
      %v5303 = vsel %vm4515, %v5302, %v5298
      %v5304 = vlaneseq
      %v5305 = vshrl.u32 %v5304, 7
      %v5306 = vsub.s32 %v4242, %v5305
      %v5307 = vrot.slane %v5062, %v5306
      %v5308 = vlaneseq
      %v5309 = vshrl.u32 %v5308, 7
      %v5310 = vsub.s32 %v4510, %v5309
      %v5311 = vrot.slane %v5067, %v5310
      %v5312 = vsel %vm4515, %v5311, %v5307
      %v5313 = vlaneseq
      %v5314 = vshrl.u32 %v5313, 7
      %v5315 = vsub.s32 %v4242, %v5314
      %v5316 = vrot.slane %v5072, %v5315
      %v5317 = vlaneseq
      %v5318 = vshrl.u32 %v5317, 7
      %v5319 = vsub.s32 %v4510, %v5318
      %v5320 = vrot.slane %v5077, %v5319
      %v5321 = vsel %vm4515, %v5320, %v5316
      %v5322 = vlaneseq
      %v5323 = vshrl.u32 %v5322, 7
      %v5324 = vsub.s32 %v4242, %v5323
      %v5325 = vrot.slane %v5082, %v5324
      %v5326 = vlaneseq
      %v5327 = vshrl.u32 %v5326, 7
      %v5328 = vsub.s32 %v4510, %v5327
      %v5329 = vrot.slane %v5087, %v5328
      %v5330 = vsel %vm4515, %v5329, %v5325
      %v5331 = vlaneseq
      %v5332 = vshrl.u32 %v5331, 7
      %v5333 = vsub.s32 %v4242, %v5332
      %v5334 = vrot.slane %v5092, %v5333
      %v5335 = vlaneseq
      %v5336 = vshrl.u32 %v5335, 7
      %v5337 = vsub.s32 %v4510, %v5336
      %v5338 = vrot.slane %v5097, %v5337
      %v5339 = vsel %vm4515, %v5338, %v5334
      %v5340 = vlaneseq
      %v5341 = vshrl.u32 %v5340, 7
      %v5342 = vsub.s32 %v4242, %v5341
      %v5343 = vrot.slane %v5102, %v5342
      %v5344 = vlaneseq
      %v5345 = vshrl.u32 %v5344, 7
      %v5346 = vsub.s32 %v4510, %v5345
      %v5347 = vrot.slane %v5107, %v5346
      %v5348 = vsel %vm4515, %v5347, %v5343
      %v5349 = vsel %vm4652, %v5222, %v5213
      %v5350 = vsel %vm4654, %v5231, %v5349
      %v5351 = vsel %vm4656, %v5240, %v5350
      %v5352 = vsel %vm4658, %v5249, %v5351
      %v5353 = vsel %vm4660, %v5258, %v5352
      %v5354 = vsel %vm4662, %v5267, %v5353
      %v5355 = vsel %vm4664, %v5276, %v5354
      %v5356 = vsel %vm4652, %v5294, %v5285
      %v5357 = vsel %vm4654, %v5303, %v5356
      %v5358 = vsel %vm4656, %v5312, %v5357
      %v5359 = vsel %vm4658, %v5321, %v5358
      %v5360 = vsel %vm4660, %v5330, %v5359
      %v5361 = vsel %vm4662, %v5339, %v5360
      %v5362 = vsel %vm4664, %v5348, %v5361
      %5365 = vxpose.xlu0.b32.start [1/16] %v5355, 128
      %5366 = vxpose.xlu0.b32.cont [2/16] %v5362, 128
      %5367 = vxpose.xlu0.b32.cont [3/16] 0.0, 128
      %5368 = vxpose.xlu0.b32.cont [4/16] 0.0, 128
      %5369 = vxpose.xlu0.b32.cont [5/16] 0.0, 128
      %5370 = vxpose.xlu0.b32.cont [6/16] 0.0, 128
      %5371 = vxpose.xlu0.b32.cont [7/16] 0.0, 128
      %5372 = vxpose.xlu0.b32.cont [8/16] 0.0, 128
      %5373 = vxpose.xlu0.b32.cont [9/16] 0.0, 128
      %5374 = vxpose.xlu0.b32.cont [10/16] 0.0, 128
      %5375 = vxpose.xlu0.b32.cont [11/16] 0.0, 128
      %5376 = vxpose.xlu0.b32.cont [12/16] 0.0, 128
      %5377 = vxpose.xlu0.b32.cont [13/16] 0.0, 128
      %5378 = vxpose.xlu0.b32.cont [14/16] 0.0, 128
      %5379 = vxpose.xlu0.b32.cont [15/16] 0.0, 128
      %5380 = vxpose.xlu0.b32.end [16/16] 0.0, 128
      %v5381 = vpop.trf.xlu0
      %v5382 = vpop.trf.xlu0
      %v5383 = vpop.trf.xlu0
      %v5384 = vpop.trf.xlu0
      %v5385 = vpop.trf.xlu0
      %v5386 = vpop.trf.xlu0
      %v5387 = vpop.trf.xlu0
      %v5388 = vpop.trf.xlu0
      %v5389 = vpop.trf.xlu0
      %v5390 = vpop.trf.xlu0
      %v5391 = vpop.trf.xlu0
      %v5392 = vpop.trf.xlu0
      %v5393 = vpop.trf.xlu0
      %v5394 = vpop.trf.xlu0
      %v5395 = vpop.trf.xlu0
      %v5396 = vpop.trf.xlu0
      %v5397 = vlaneseq
      %v5398 = vshrl.u32 %v5397, 7
      %v5399 = vsub.s32 0, %v5398
      %v5400 = vrot.slane %v5381, %v5399
      %5402 = vbcast.lane.b32.xlu0 %v5400, 256
      %v5403 = vpop.permute.xlu0 %5402
      %s5405 = sor.u32 256, 8
      %5406 = vbcast.lane.b32.xlu0 %v5400, %s5405
      %v5407 = vpop.permute.xlu0 %5406
      %v5408 = vlaneseq
      %v5409 = vshrl.u32 %v5408, 7
      %v5410 = vsub.s32 1, %v5409
      %v5411 = vrot.slane %v5381, %v5410
      %5413 = vbcast.lane.b32.xlu0 %v5411, 256
      %v5414 = vpop.permute.xlu0 %5413
      %s5416 = sor.u32 256, 8
      %5417 = vbcast.lane.b32.xlu0 %v5411, %s5416
      %v5418 = vpop.permute.xlu0 %5417
      %v5419 = vlaneseq
      %v5420 = vshrl.u32 %v5419, 7
      %v5421 = vsub.s32 2, %v5420
      %v5422 = vrot.slane %v5381, %v5421
      %5424 = vbcast.lane.b32.xlu0 %v5422, 256
      %v5425 = vpop.permute.xlu0 %5424
      %s5427 = sor.u32 256, 8
      %5428 = vbcast.lane.b32.xlu0 %v5422, %s5427
      %v5429 = vpop.permute.xlu0 %5428
      %v5430 = vlaneseq
      %v5431 = vshrl.u32 %v5430, 7
      %v5432 = vsub.s32 3, %v5431
      %v5433 = vrot.slane %v5381, %v5432
      %5435 = vbcast.lane.b32.xlu0 %v5433, 256
      %v5436 = vpop.permute.xlu0 %5435
      %s5438 = sor.u32 256, 8
      %5439 = vbcast.lane.b32.xlu0 %v5433, %s5438
      %v5440 = vpop.permute.xlu0 %5439
      %v5441 = vlaneseq
      %v5442 = vshrl.u32 %v5441, 7
      %v5443 = vsub.s32 4, %v5442
      %v5444 = vrot.slane %v5381, %v5443
      %5446 = vbcast.lane.b32.xlu0 %v5444, 256
      %v5447 = vpop.permute.xlu0 %5446
      %s5449 = sor.u32 256, 8
      %5450 = vbcast.lane.b32.xlu0 %v5444, %s5449
      %v5451 = vpop.permute.xlu0 %5450
      %v5452 = vlaneseq
      %v5453 = vshrl.u32 %v5452, 7
      %v5454 = vsub.s32 5, %v5453
      %v5455 = vrot.slane %v5381, %v5454
      %5457 = vbcast.lane.b32.xlu0 %v5455, 256
      %v5458 = vpop.permute.xlu0 %5457
      %s5460 = sor.u32 256, 8
      %5461 = vbcast.lane.b32.xlu0 %v5455, %s5460
      %v5462 = vpop.permute.xlu0 %5461
      %v5463 = vlaneseq
      %v5464 = vshrl.u32 %v5463, 7
      %v5465 = vsub.s32 6, %v5464
      %v5466 = vrot.slane %v5381, %v5465
      %5468 = vbcast.lane.b32.xlu0 %v5466, 256
      %v5469 = vpop.permute.xlu0 %5468
      %s5471 = sor.u32 256, 8
      %5472 = vbcast.lane.b32.xlu0 %v5466, %s5471
      %v5473 = vpop.permute.xlu0 %5472
      %v5474 = vlaneseq
      %v5475 = vshrl.u32 %v5474, 7
      %v5476 = vsub.s32 7, %v5475
      %v5477 = vrot.slane %v5381, %v5476
      %5479 = vbcast.lane.b32.xlu0 %v5477, 256
      %v5480 = vpop.permute.xlu0 %5479
      %s5482 = sor.u32 256, 8
      %5483 = vbcast.lane.b32.xlu0 %v5477, %s5482
      %v5484 = vpop.permute.xlu0 %5483
      %v5485 = vlaneseq
      %v5486 = vshrl.u32 %v5485, 7
      %v5487 = vsub.s32 0, %v5486
      %v5488 = vrot.slane %v5382, %v5487
      %5490 = vbcast.lane.b32.xlu0 %v5488, 256
      %v5491 = vpop.permute.xlu0 %5490
      %s5493 = sor.u32 256, 8
      %5494 = vbcast.lane.b32.xlu0 %v5488, %s5493
      %v5495 = vpop.permute.xlu0 %5494
      %v5496 = vlaneseq
      %v5497 = vshrl.u32 %v5496, 7
      %v5498 = vsub.s32 1, %v5497
      %v5499 = vrot.slane %v5382, %v5498
      %5501 = vbcast.lane.b32.xlu0 %v5499, 256
      %v5502 = vpop.permute.xlu0 %5501
      %s5504 = sor.u32 256, 8
      %5505 = vbcast.lane.b32.xlu0 %v5499, %s5504
      %v5506 = vpop.permute.xlu0 %5505
      %v5507 = vlaneseq
      %v5508 = vshrl.u32 %v5507, 7
      %v5509 = vsub.s32 2, %v5508
      %v5510 = vrot.slane %v5382, %v5509
      %5512 = vbcast.lane.b32.xlu0 %v5510, 256
      %v5513 = vpop.permute.xlu0 %5512
      %s5515 = sor.u32 256, 8
      %5516 = vbcast.lane.b32.xlu0 %v5510, %s5515
      %v5517 = vpop.permute.xlu0 %5516
      %v5518 = vlaneseq
      %v5519 = vshrl.u32 %v5518, 7
      %v5520 = vsub.s32 3, %v5519
      %v5521 = vrot.slane %v5382, %v5520
      %5523 = vbcast.lane.b32.xlu0 %v5521, 256
      %v5524 = vpop.permute.xlu0 %5523
      %s5526 = sor.u32 256, 8
      %5527 = vbcast.lane.b32.xlu0 %v5521, %s5526
      %v5528 = vpop.permute.xlu0 %5527
      %v5529 = vlaneseq
      %v5530 = vshrl.u32 %v5529, 7
      %v5531 = vsub.s32 4, %v5530
      %v5532 = vrot.slane %v5382, %v5531
      %5534 = vbcast.lane.b32.xlu0 %v5532, 256
      %v5535 = vpop.permute.xlu0 %5534
      %s5537 = sor.u32 256, 8
      %5538 = vbcast.lane.b32.xlu0 %v5532, %s5537
      %v5539 = vpop.permute.xlu0 %5538
      %v5540 = vlaneseq
      %v5541 = vshrl.u32 %v5540, 7
      %v5542 = vsub.s32 5, %v5541
      %v5543 = vrot.slane %v5382, %v5542
      %5545 = vbcast.lane.b32.xlu0 %v5543, 256
      %v5546 = vpop.permute.xlu0 %5545
      %s5548 = sor.u32 256, 8
      %5549 = vbcast.lane.b32.xlu0 %v5543, %s5548
      %v5550 = vpop.permute.xlu0 %5549
      %v5551 = vlaneseq
      %v5552 = vshrl.u32 %v5551, 7
      %v5553 = vsub.s32 6, %v5552
      %v5554 = vrot.slane %v5382, %v5553
      %5556 = vbcast.lane.b32.xlu0 %v5554, 256
      %v5557 = vpop.permute.xlu0 %5556
      %s5559 = sor.u32 256, 8
      %5560 = vbcast.lane.b32.xlu0 %v5554, %s5559
      %v5561 = vpop.permute.xlu0 %5560
      %v5562 = vlaneseq
      %v5563 = vshrl.u32 %v5562, 7
      %v5564 = vsub.s32 7, %v5563
      %v5565 = vrot.slane %v5382, %v5564
      %5567 = vbcast.lane.b32.xlu0 %v5565, 256
      %v5568 = vpop.permute.xlu0 %5567
      %s5570 = sor.u32 256, 8
      %5571 = vbcast.lane.b32.xlu0 %v5565, %s5570
      %v5572 = vpop.permute.xlu0 %5571
      %v5573 = vsub.f32 %v4249, %v5403
      %v5574 = vsub.f32 %v4250, %v5407
      %v5575 = vsub.f32 %v4251, %v5414
      %v5576 = vsub.f32 %v4252, %v5418
      %v5577 = vsub.f32 %v4253, %v5425
      %v5578 = vsub.f32 %v4254, %v5429
      %v5579 = vsub.f32 %v4255, %v5436
      %v5580 = vsub.f32 %v4256, %v5440
      %v5581 = vsub.f32 %v4257, %v5447
      %v5582 = vsub.f32 %v4258, %v5451
      %v5583 = vsub.f32 %v4259, %v5458
      %v5584 = vsub.f32 %v4260, %v5462
      %v5585 = vsub.f32 %v4261, %v5469
      %v5586 = vsub.f32 %v4262, %v5473
      %v5587 = vsub.f32 %v4263, %v5480
      %v5588 = vsub.f32 %v4264, %v5484
      %v5589 = vsub.f32 %v4265, %v5491
      %v5590 = vsub.f32 %v4266, %v5495
      %v5591 = vsub.f32 %v4267, %v5502
      %v5592 = vsub.f32 %v4268, %v5506
      %v5593 = vsub.f32 %v4269, %v5513
      %v5594 = vsub.f32 %v4270, %v5517
      %v5595 = vsub.f32 %v4271, %v5524
      %v5596 = vsub.f32 %v4272, %v5528
      %v5597 = vsub.f32 %v4273, %v5535
      %v5598 = vsub.f32 %v4274, %v5539
      %v5599 = vsub.f32 %v4275, %v5546
      %v5600 = vsub.f32 %v4276, %v5550
      %v5601 = vsub.f32 %v4277, %v5557
      %v5602 = vsub.f32 %v4278, %v5561
      %v5603 = vsub.f32 %v4279, %v5568
      %v5604 = vsub.f32 %v4280, %v5572
      %v5605 = vmul.f32 %v5573, 1.442695
      %v5606 = vpow.pop %v5605
      %v5607 = vmul.f32 %v5574, 1.442695
      %v5608 = vpow.pop %v5607
      %v5609 = vmul.f32 %v5575, 1.442695
      %v5610 = vpow.pop %v5609
      %v5611 = vmul.f32 %v5576, 1.442695
      %v5612 = vpow.pop %v5611
      %v5613 = vmul.f32 %v5577, 1.442695
      %v5614 = vpow.pop %v5613
      %v5615 = vmul.f32 %v5578, 1.442695
      %v5616 = vpow.pop %v5615
      %v5617 = vmul.f32 %v5579, 1.442695
      %v5618 = vpow.pop %v5617
      %v5619 = vmul.f32 %v5580, 1.442695
      %v5620 = vpow.pop %v5619
      %v5621 = vmul.f32 %v5581, 1.442695
      %v5622 = vpow.pop %v5621
      %v5623 = vmul.f32 %v5582, 1.442695
      %v5624 = vpow.pop %v5623
      %v5625 = vmul.f32 %v5583, 1.442695
      %v5626 = vpow.pop %v5625
      %v5627 = vmul.f32 %v5584, 1.442695
      %v5628 = vpow.pop %v5627
      %v5629 = vmul.f32 %v5585, 1.442695
      %v5630 = vpow.pop %v5629
      %v5631 = vmul.f32 %v5586, 1.442695
      %v5632 = vpow.pop %v5631
      %v5633 = vmul.f32 %v5587, 1.442695
      %v5634 = vpow.pop %v5633
      %v5635 = vmul.f32 %v5588, 1.442695
      %v5636 = vpow.pop %v5635
      %v5637 = vmul.f32 %v5589, 1.442695
      %v5638 = vpow.pop %v5637
      %v5639 = vmul.f32 %v5590, 1.442695
      %v5640 = vpow.pop %v5639
      %v5641 = vmul.f32 %v5591, 1.442695
      %v5642 = vpow.pop %v5641
      %v5643 = vmul.f32 %v5592, 1.442695
      %v5644 = vpow.pop %v5643
      %v5645 = vmul.f32 %v5593, 1.442695
      %v5646 = vpow.pop %v5645
      %v5647 = vmul.f32 %v5594, 1.442695
      %v5648 = vpow.pop %v5647
      %v5649 = vmul.f32 %v5595, 1.442695
      %v5650 = vpow.pop %v5649
      %v5651 = vmul.f32 %v5596, 1.442695
      %v5652 = vpow.pop %v5651
      %v5653 = vmul.f32 %v5597, 1.442695
      %v5654 = vpow.pop %v5653
      %v5655 = vmul.f32 %v5598, 1.442695
      %v5656 = vpow.pop %v5655
      %v5657 = vmul.f32 %v5599, 1.442695
      %v5658 = vpow.pop %v5657
      %v5659 = vmul.f32 %v5600, 1.442695
      %v5660 = vpow.pop %v5659
      %v5661 = vmul.f32 %v5601, 1.442695
      %v5662 = vpow.pop %v5661
      %v5663 = vmul.f32 %v5602, 1.442695
      %v5664 = vpow.pop %v5663
      %v5665 = vmul.f32 %v5603, 1.442695
      %v5666 = vpow.pop %v5665
      %v5667 = vmul.f32 %v5604, 1.442695
      %v5668 = vpow.pop %v5667
      %v5669 = vsel %vm4281, %v5142, 0.0
      %5670 = vadd.xlane.f32.xlu0 %v5669
      %v5671 = vpop.xlane.xlu0 %5670
      %v5672 = vsel %vm4281, %v5144, 0.0
      %5673 = vadd.xlane.f32.xlu0 %v5672
      %v5674 = vpop.xlane.xlu0 %5673
      %v5675 = vsel %vm4281, %v5146, 0.0
      %5676 = vadd.xlane.f32.xlu0 %v5675
      %v5677 = vpop.xlane.xlu0 %5676
      %v5678 = vsel %vm4281, %v5148, 0.0
      %5679 = vadd.xlane.f32.xlu0 %v5678
      %v5680 = vpop.xlane.xlu0 %5679
      %v5681 = vsel %vm4281, %v5150, 0.0
      %5682 = vadd.xlane.f32.xlu0 %v5681
      %v5683 = vpop.xlane.xlu0 %5682
      %v5684 = vsel %vm4281, %v5152, 0.0
      %5685 = vadd.xlane.f32.xlu0 %v5684
      %v5686 = vpop.xlane.xlu0 %5685
      %v5687 = vsel %vm4281, %v5154, 0.0
      %5688 = vadd.xlane.f32.xlu0 %v5687
      %v5689 = vpop.xlane.xlu0 %5688
      %v5690 = vsel %vm4281, %v5156, 0.0
      %5691 = vadd.xlane.f32.xlu0 %v5690
      %v5692 = vpop.xlane.xlu0 %5691
      %v5693 = vsel %vm4281, %v5158, 0.0
      %5694 = vadd.xlane.f32.xlu0 %v5693
      %v5695 = vpop.xlane.xlu0 %5694
      %v5696 = vsel %vm4281, %v5160, 0.0
      %5697 = vadd.xlane.f32.xlu0 %v5696
      %v5698 = vpop.xlane.xlu0 %5697
      %v5699 = vsel %vm4281, %v5162, 0.0
      %5700 = vadd.xlane.f32.xlu0 %v5699
      %v5701 = vpop.xlane.xlu0 %5700
      %v5702 = vsel %vm4281, %v5164, 0.0
      %5703 = vadd.xlane.f32.xlu0 %v5702
      %v5704 = vpop.xlane.xlu0 %5703
      %v5705 = vsel %vm4281, %v5166, 0.0
      %5706 = vadd.xlane.f32.xlu0 %v5705
      %v5707 = vpop.xlane.xlu0 %5706
      %v5708 = vsel %vm4281, %v5168, 0.0
      %5709 = vadd.xlane.f32.xlu0 %v5708
      %v5710 = vpop.xlane.xlu0 %5709
      %v5711 = vsel %vm4281, %v5170, 0.0
      %5712 = vadd.xlane.f32.xlu0 %v5711
      %v5713 = vpop.xlane.xlu0 %5712
      %v5714 = vsel %vm4281, %v5172, 0.0
      %5715 = vadd.xlane.f32.xlu0 %v5714
      %v5716 = vpop.xlane.xlu0 %5715
      %v5717 = vsel %vm4281, %v5174, 0.0
      %5718 = vadd.xlane.f32.xlu0 %v5717
      %v5719 = vpop.xlane.xlu0 %5718
      %v5720 = vsel %vm4281, %v5176, 0.0
      %5721 = vadd.xlane.f32.xlu0 %v5720
      %v5722 = vpop.xlane.xlu0 %5721
      %v5723 = vsel %vm4281, %v5178, 0.0
      %5724 = vadd.xlane.f32.xlu0 %v5723
      %v5725 = vpop.xlane.xlu0 %5724
      %v5726 = vsel %vm4281, %v5180, 0.0
      %5727 = vadd.xlane.f32.xlu0 %v5726
      %v5728 = vpop.xlane.xlu0 %5727
      %v5729 = vsel %vm4281, %v5182, 0.0
      %5730 = vadd.xlane.f32.xlu0 %v5729
      %v5731 = vpop.xlane.xlu0 %5730
      %v5732 = vsel %vm4281, %v5184, 0.0
      %5733 = vadd.xlane.f32.xlu0 %v5732
      %v5734 = vpop.xlane.xlu0 %5733
      %v5735 = vsel %vm4281, %v5186, 0.0
      %5736 = vadd.xlane.f32.xlu0 %v5735
      %v5737 = vpop.xlane.xlu0 %5736
      %v5738 = vsel %vm4281, %v5188, 0.0
      %5739 = vadd.xlane.f32.xlu0 %v5738
      %v5740 = vpop.xlane.xlu0 %5739
      %v5741 = vsel %vm4281, %v5190, 0.0
      %5742 = vadd.xlane.f32.xlu0 %v5741
      %v5743 = vpop.xlane.xlu0 %5742
      %v5744 = vsel %vm4281, %v5192, 0.0
      %5745 = vadd.xlane.f32.xlu0 %v5744
      %v5746 = vpop.xlane.xlu0 %5745
      %v5747 = vsel %vm4281, %v5194, 0.0
      %5748 = vadd.xlane.f32.xlu0 %v5747
      %v5749 = vpop.xlane.xlu0 %5748
      %v5750 = vsel %vm4281, %v5196, 0.0
      %5751 = vadd.xlane.f32.xlu0 %v5750
      %v5752 = vpop.xlane.xlu0 %5751
      %v5753 = vsel %vm4281, %v5198, 0.0
      %5754 = vadd.xlane.f32.xlu0 %v5753
      %v5755 = vpop.xlane.xlu0 %5754
      %v5756 = vsel %vm4281, %v5200, 0.0
      %5757 = vadd.xlane.f32.xlu0 %v5756
      %v5758 = vpop.xlane.xlu0 %5757
      %v5759 = vsel %vm4281, %v5202, 0.0
      %5760 = vadd.xlane.f32.xlu0 %v5759
      %v5761 = vpop.xlane.xlu0 %5760
      %v5762 = vsel %vm4281, %v5204, 0.0
      %5763 = vadd.xlane.f32.xlu0 %v5762
      %v5764 = vpop.xlane.xlu0 %5763
      %v5765 = vsel %vm4281, %v5606, 0.0
      %5766 = vadd.xlane.f32.xlu0 %v5765
      %v5767 = vpop.xlane.xlu0 %5766
      %v5768 = vsel %vm4281, %v5608, 0.0
      %5769 = vadd.xlane.f32.xlu0 %v5768
      %v5770 = vpop.xlane.xlu0 %5769
      %v5771 = vsel %vm4281, %v5610, 0.0
      %5772 = vadd.xlane.f32.xlu0 %v5771
      %v5773 = vpop.xlane.xlu0 %5772
      %v5774 = vsel %vm4281, %v5612, 0.0
      %5775 = vadd.xlane.f32.xlu0 %v5774
      %v5776 = vpop.xlane.xlu0 %5775
      %v5777 = vsel %vm4281, %v5614, 0.0
      %5778 = vadd.xlane.f32.xlu0 %v5777
      %v5779 = vpop.xlane.xlu0 %5778
      %v5780 = vsel %vm4281, %v5616, 0.0
      %5781 = vadd.xlane.f32.xlu0 %v5780
      %v5782 = vpop.xlane.xlu0 %5781
      %v5783 = vsel %vm4281, %v5618, 0.0
      %5784 = vadd.xlane.f32.xlu0 %v5783
      %v5785 = vpop.xlane.xlu0 %5784
      %v5786 = vsel %vm4281, %v5620, 0.0
      %5787 = vadd.xlane.f32.xlu0 %v5786
      %v5788 = vpop.xlane.xlu0 %5787
      %v5789 = vsel %vm4281, %v5622, 0.0
      %5790 = vadd.xlane.f32.xlu0 %v5789
      %v5791 = vpop.xlane.xlu0 %5790
      %v5792 = vsel %vm4281, %v5624, 0.0
      %5793 = vadd.xlane.f32.xlu0 %v5792
      %v5794 = vpop.xlane.xlu0 %5793
      %v5795 = vsel %vm4281, %v5626, 0.0
      %5796 = vadd.xlane.f32.xlu0 %v5795
      %v5797 = vpop.xlane.xlu0 %5796
      %v5798 = vsel %vm4281, %v5628, 0.0
      %5799 = vadd.xlane.f32.xlu0 %v5798
      %v5800 = vpop.xlane.xlu0 %5799
      %v5801 = vsel %vm4281, %v5630, 0.0
      %5802 = vadd.xlane.f32.xlu0 %v5801
      %v5803 = vpop.xlane.xlu0 %5802
      %v5804 = vsel %vm4281, %v5632, 0.0
      %5805 = vadd.xlane.f32.xlu0 %v5804
      %v5806 = vpop.xlane.xlu0 %5805
      %v5807 = vsel %vm4281, %v5634, 0.0
      %5808 = vadd.xlane.f32.xlu0 %v5807
      %v5809 = vpop.xlane.xlu0 %5808
      %v5810 = vsel %vm4281, %v5636, 0.0
      %5811 = vadd.xlane.f32.xlu0 %v5810
      %v5812 = vpop.xlane.xlu0 %5811
      %v5813 = vsel %vm4281, %v5638, 0.0
      %5814 = vadd.xlane.f32.xlu0 %v5813
      %v5815 = vpop.xlane.xlu0 %5814
      %v5816 = vsel %vm4281, %v5640, 0.0
      %5817 = vadd.xlane.f32.xlu0 %v5816
      %v5818 = vpop.xlane.xlu0 %5817
      %v5819 = vsel %vm4281, %v5642, 0.0
      %5820 = vadd.xlane.f32.xlu0 %v5819
      %v5821 = vpop.xlane.xlu0 %5820
      %v5822 = vsel %vm4281, %v5644, 0.0
      %5823 = vadd.xlane.f32.xlu0 %v5822
      %v5824 = vpop.xlane.xlu0 %5823
      %v5825 = vsel %vm4281, %v5646, 0.0
      %5826 = vadd.xlane.f32.xlu0 %v5825
      %v5827 = vpop.xlane.xlu0 %5826
      %v5828 = vsel %vm4281, %v5648, 0.0
      %5829 = vadd.xlane.f32.xlu0 %v5828
      %v5830 = vpop.xlane.xlu0 %5829
      %v5831 = vsel %vm4281, %v5650, 0.0
      %5832 = vadd.xlane.f32.xlu0 %v5831
      %v5833 = vpop.xlane.xlu0 %5832
      %v5834 = vsel %vm4281, %v5652, 0.0
      %5835 = vadd.xlane.f32.xlu0 %v5834
      %v5836 = vpop.xlane.xlu0 %5835
      %v5837 = vsel %vm4281, %v5654, 0.0
      %5838 = vadd.xlane.f32.xlu0 %v5837
      %v5839 = vpop.xlane.xlu0 %5838
      %v5840 = vsel %vm4281, %v5656, 0.0
      %5841 = vadd.xlane.f32.xlu0 %v5840
      %v5842 = vpop.xlane.xlu0 %5841
      %v5843 = vsel %vm4281, %v5658, 0.0
      %5844 = vadd.xlane.f32.xlu0 %v5843
      %v5845 = vpop.xlane.xlu0 %5844
      %v5846 = vsel %vm4281, %v5660, 0.0
      %5847 = vadd.xlane.f32.xlu0 %v5846
      %v5848 = vpop.xlane.xlu0 %5847
      %v5849 = vsel %vm4281, %v5662, 0.0
      %5850 = vadd.xlane.f32.xlu0 %v5849
      %v5851 = vpop.xlane.xlu0 %5850
      %v5852 = vsel %vm4281, %v5664, 0.0
      %5853 = vadd.xlane.f32.xlu0 %v5852
      %v5854 = vpop.xlane.xlu0 %5853
      %v5855 = vsel %vm4281, %v5666, 0.0
      %5856 = vadd.xlane.f32.xlu0 %v5855
      %v5857 = vpop.xlane.xlu0 %5856
      %v5858 = vsel %vm4281, %v5668, 0.0
      %5859 = vadd.xlane.f32.xlu0 %v5858
      %v5860 = vpop.xlane.xlu0 %5859
      %v5893 = vlaneseq
      %v5894 = vshrl.u32 %v5893, 7
      %v5895 = vsub.s32 %v4242, %v5894
      %v5896 = vrot.slane %v5767, %v5895
      %v5897 = vlaneseq
      %v5898 = vshrl.u32 %v5897, 7
      %v5899 = vsub.s32 %v4510, %v5898
      %v5900 = vrot.slane %v5770, %v5899
      %v5901 = vsel %vm4515, %v5900, %v5896
      %v5902 = vlaneseq
      %v5903 = vshrl.u32 %v5902, 7
      %v5904 = vsub.s32 %v4242, %v5903
      %v5905 = vrot.slane %v5773, %v5904
      %v5906 = vlaneseq
      %v5907 = vshrl.u32 %v5906, 7
      %v5908 = vsub.s32 %v4510, %v5907
      %v5909 = vrot.slane %v5776, %v5908
      %v5910 = vsel %vm4515, %v5909, %v5905
      %v5911 = vlaneseq
      %v5912 = vshrl.u32 %v5911, 7
      %v5913 = vsub.s32 %v4242, %v5912
      %v5914 = vrot.slane %v5779, %v5913
      %v5915 = vlaneseq
      %v5916 = vshrl.u32 %v5915, 7
      %v5917 = vsub.s32 %v4510, %v5916
      %v5918 = vrot.slane %v5782, %v5917
      %v5919 = vsel %vm4515, %v5918, %v5914
      %v5920 = vlaneseq
      %v5921 = vshrl.u32 %v5920, 7
      %v5922 = vsub.s32 %v4242, %v5921
      %v5923 = vrot.slane %v5785, %v5922
      %v5924 = vlaneseq
      %v5925 = vshrl.u32 %v5924, 7
      %v5926 = vsub.s32 %v4510, %v5925
      %v5927 = vrot.slane %v5788, %v5926
      %v5928 = vsel %vm4515, %v5927, %v5923
      %v5929 = vlaneseq
      %v5930 = vshrl.u32 %v5929, 7
      %v5931 = vsub.s32 %v4242, %v5930
      %v5932 = vrot.slane %v5791, %v5931
      %v5933 = vlaneseq
      %v5934 = vshrl.u32 %v5933, 7
      %v5935 = vsub.s32 %v4510, %v5934
      %v5936 = vrot.slane %v5794, %v5935
      %v5937 = vsel %vm4515, %v5936, %v5932
      %v5938 = vlaneseq
      %v5939 = vshrl.u32 %v5938, 7
      %v5940 = vsub.s32 %v4242, %v5939
      %v5941 = vrot.slane %v5797, %v5940
      %v5942 = vlaneseq
      %v5943 = vshrl.u32 %v5942, 7
      %v5944 = vsub.s32 %v4510, %v5943
      %v5945 = vrot.slane %v5800, %v5944
      %v5946 = vsel %vm4515, %v5945, %v5941
      %v5947 = vlaneseq
      %v5948 = vshrl.u32 %v5947, 7
      %v5949 = vsub.s32 %v4242, %v5948
      %v5950 = vrot.slane %v5803, %v5949
      %v5951 = vlaneseq
      %v5952 = vshrl.u32 %v5951, 7
      %v5953 = vsub.s32 %v4510, %v5952
      %v5954 = vrot.slane %v5806, %v5953
      %v5955 = vsel %vm4515, %v5954, %v5950
      %v5956 = vlaneseq
      %v5957 = vshrl.u32 %v5956, 7
      %v5958 = vsub.s32 %v4242, %v5957
      %v5959 = vrot.slane %v5809, %v5958
      %v5960 = vlaneseq
      %v5961 = vshrl.u32 %v5960, 7
      %v5962 = vsub.s32 %v4510, %v5961
      %v5963 = vrot.slane %v5812, %v5962
      %v5964 = vsel %vm4515, %v5963, %v5959
      %v5965 = vlaneseq
      %v5966 = vshrl.u32 %v5965, 7
      %v5967 = vsub.s32 %v4242, %v5966
      %v5968 = vrot.slane %v5815, %v5967
      %v5969 = vlaneseq
      %v5970 = vshrl.u32 %v5969, 7
      %v5971 = vsub.s32 %v4510, %v5970
      %v5972 = vrot.slane %v5818, %v5971
      %v5973 = vsel %vm4515, %v5972, %v5968
      %v5974 = vlaneseq
      %v5975 = vshrl.u32 %v5974, 7
      %v5976 = vsub.s32 %v4242, %v5975
      %v5977 = vrot.slane %v5821, %v5976
      %v5978 = vlaneseq
      %v5979 = vshrl.u32 %v5978, 7
      %v5980 = vsub.s32 %v4510, %v5979
      %v5981 = vrot.slane %v5824, %v5980
      %v5982 = vsel %vm4515, %v5981, %v5977
      %v5983 = vlaneseq
      %v5984 = vshrl.u32 %v5983, 7
      %v5985 = vsub.s32 %v4242, %v5984
      %v5986 = vrot.slane %v5827, %v5985
      %v5987 = vlaneseq
      %v5988 = vshrl.u32 %v5987, 7
      %v5989 = vsub.s32 %v4510, %v5988
      %v5990 = vrot.slane %v5830, %v5989
      %v5991 = vsel %vm4515, %v5990, %v5986
      %v5992 = vlaneseq
      %v5993 = vshrl.u32 %v5992, 7
      %v5994 = vsub.s32 %v4242, %v5993
      %v5995 = vrot.slane %v5833, %v5994
      %v5996 = vlaneseq
      %v5997 = vshrl.u32 %v5996, 7
      %v5998 = vsub.s32 %v4510, %v5997
      %v5999 = vrot.slane %v5836, %v5998
      %v6000 = vsel %vm4515, %v5999, %v5995
      %v6001 = vlaneseq
      %v6002 = vshrl.u32 %v6001, 7
      %v6003 = vsub.s32 %v4242, %v6002
      %v6004 = vrot.slane %v5839, %v6003
      %v6005 = vlaneseq
      %v6006 = vshrl.u32 %v6005, 7
      %v6007 = vsub.s32 %v4510, %v6006
      %v6008 = vrot.slane %v5842, %v6007
      %v6009 = vsel %vm4515, %v6008, %v6004
      %v6010 = vlaneseq
      %v6011 = vshrl.u32 %v6010, 7
      %v6012 = vsub.s32 %v4242, %v6011
      %v6013 = vrot.slane %v5845, %v6012
      %v6014 = vlaneseq
      %v6015 = vshrl.u32 %v6014, 7
      %v6016 = vsub.s32 %v4510, %v6015
      %v6017 = vrot.slane %v5848, %v6016
      %v6018 = vsel %vm4515, %v6017, %v6013
      %v6019 = vlaneseq
      %v6020 = vshrl.u32 %v6019, 7
      %v6021 = vsub.s32 %v4242, %v6020
      %v6022 = vrot.slane %v5851, %v6021
      %v6023 = vlaneseq
      %v6024 = vshrl.u32 %v6023, 7
      %v6025 = vsub.s32 %v4510, %v6024
      %v6026 = vrot.slane %v5854, %v6025
      %v6027 = vsel %vm4515, %v6026, %v6022
      %v6028 = vlaneseq
      %v6029 = vshrl.u32 %v6028, 7
      %v6030 = vsub.s32 %v4242, %v6029
      %v6031 = vrot.slane %v5857, %v6030
      %v6032 = vlaneseq
      %v6033 = vshrl.u32 %v6032, 7
      %v6034 = vsub.s32 %v4510, %v6033
      %v6035 = vrot.slane %v5860, %v6034
      %v6036 = vsel %vm4515, %v6035, %v6031
      %v6037 = vsel %vm4652, %v5910, %v5901
      %v6038 = vsel %vm4654, %v5919, %v6037
      %v6039 = vsel %vm4656, %v5928, %v6038
      %v6040 = vsel %vm4658, %v5937, %v6039
      %v6041 = vsel %vm4660, %v5946, %v6040
      %v6042 = vsel %vm4662, %v5955, %v6041
      %v6043 = vsel %vm4664, %v5964, %v6042
      %v6044 = vsel %vm4652, %v5982, %v5973
      %v6045 = vsel %vm4654, %v5991, %v6044
      %v6046 = vsel %vm4656, %v6000, %v6045
      %v6047 = vsel %vm4658, %v6009, %v6046
      %v6048 = vsel %vm4660, %v6018, %v6047
      %v6049 = vsel %vm4662, %v6027, %v6048
      %v6050 = vsel %vm4664, %v6036, %v6049
      %6053 = vxpose.xlu0.b32.start [1/16] %v6043, 128
      %6054 = vxpose.xlu0.b32.cont [2/16] %v6050, 128
      %6055 = vxpose.xlu0.b32.cont [3/16] 0.0, 128
      %6056 = vxpose.xlu0.b32.cont [4/16] 0.0, 128
      %6057 = vxpose.xlu0.b32.cont [5/16] 0.0, 128
      %6058 = vxpose.xlu0.b32.cont [6/16] 0.0, 128
      %6059 = vxpose.xlu0.b32.cont [7/16] 0.0, 128
      %6060 = vxpose.xlu0.b32.cont [8/16] 0.0, 128
      %6061 = vxpose.xlu0.b32.cont [9/16] 0.0, 128
      %6062 = vxpose.xlu0.b32.cont [10/16] 0.0, 128
      %6063 = vxpose.xlu0.b32.cont [11/16] 0.0, 128
      %6064 = vxpose.xlu0.b32.cont [12/16] 0.0, 128
      %6065 = vxpose.xlu0.b32.cont [13/16] 0.0, 128
      %6066 = vxpose.xlu0.b32.cont [14/16] 0.0, 128
      %6067 = vxpose.xlu0.b32.cont [15/16] 0.0, 128
      %6068 = vxpose.xlu0.b32.end [16/16] 0.0, 128
      %v6069 = vpop.trf.xlu0
      %v6070 = vpop.trf.xlu0
      %v6071 = vpop.trf.xlu0
      %v6072 = vpop.trf.xlu0
      %v6073 = vpop.trf.xlu0
      %v6074 = vpop.trf.xlu0
      %v6075 = vpop.trf.xlu0
      %v6076 = vpop.trf.xlu0
      %v6077 = vpop.trf.xlu0
      %v6078 = vpop.trf.xlu0
      %v6079 = vpop.trf.xlu0
      %v6080 = vpop.trf.xlu0
      %v6081 = vpop.trf.xlu0
      %v6082 = vpop.trf.xlu0
      %v6083 = vpop.trf.xlu0
      %v6084 = vpop.trf.xlu0
      %v6087 = vlaneseq
      %v6088 = vshrl.u32 %v6087, 7
      %v6089 = vsub.s32 0, %v6088
      %v6090 = vrot.slane %v6069, %v6089
      %6092 = vbcast.lane.b32.xlu0 %v6090, 256
      %v6093 = vpop.permute.xlu0 %6092
      %s6095 = sor.u32 256, 8
      %6096 = vbcast.lane.b32.xlu0 %v6090, %s6095
      %v6097 = vpop.permute.xlu0 %6096
      %v6098 = vlaneseq
      %v6099 = vshrl.u32 %v6098, 7
      %v6100 = vsub.s32 1, %v6099
      %v6101 = vrot.slane %v6069, %v6100
      %6103 = vbcast.lane.b32.xlu0 %v6101, 256
      %v6104 = vpop.permute.xlu0 %6103
      %s6106 = sor.u32 256, 8
      %6107 = vbcast.lane.b32.xlu0 %v6101, %s6106
      %v6108 = vpop.permute.xlu0 %6107
      %v6109 = vlaneseq
      %v6110 = vshrl.u32 %v6109, 7
      %v6111 = vsub.s32 2, %v6110
      %v6112 = vrot.slane %v6069, %v6111
      %6114 = vbcast.lane.b32.xlu0 %v6112, 256
      %v6115 = vpop.permute.xlu0 %6114
      %s6117 = sor.u32 256, 8
      %6118 = vbcast.lane.b32.xlu0 %v6112, %s6117
      %v6119 = vpop.permute.xlu0 %6118
      %v6120 = vlaneseq
      %v6121 = vshrl.u32 %v6120, 7
      %v6122 = vsub.s32 3, %v6121
      %v6123 = vrot.slane %v6069, %v6122
      %6125 = vbcast.lane.b32.xlu0 %v6123, 256
      %v6126 = vpop.permute.xlu0 %6125
      %s6128 = sor.u32 256, 8
      %6129 = vbcast.lane.b32.xlu0 %v6123, %s6128
      %v6130 = vpop.permute.xlu0 %6129
      %v6131 = vlaneseq
      %v6132 = vshrl.u32 %v6131, 7
      %v6133 = vsub.s32 4, %v6132
      %v6134 = vrot.slane %v6069, %v6133
      %6136 = vbcast.lane.b32.xlu0 %v6134, 256
      %v6137 = vpop.permute.xlu0 %6136
      %s6139 = sor.u32 256, 8
      %6140 = vbcast.lane.b32.xlu0 %v6134, %s6139
      %v6141 = vpop.permute.xlu0 %6140
      %v6142 = vlaneseq
      %v6143 = vshrl.u32 %v6142, 7
      %v6144 = vsub.s32 5, %v6143
      %v6145 = vrot.slane %v6069, %v6144
      %6147 = vbcast.lane.b32.xlu0 %v6145, 256
      %v6148 = vpop.permute.xlu0 %6147
      %s6150 = sor.u32 256, 8
      %6151 = vbcast.lane.b32.xlu0 %v6145, %s6150
      %v6152 = vpop.permute.xlu0 %6151
      %v6153 = vlaneseq
      %v6154 = vshrl.u32 %v6153, 7
      %v6155 = vsub.s32 6, %v6154
      %v6156 = vrot.slane %v6069, %v6155
      %6158 = vbcast.lane.b32.xlu0 %v6156, 256
      %v6159 = vpop.permute.xlu0 %6158
      %s6161 = sor.u32 256, 8
      %6162 = vbcast.lane.b32.xlu0 %v6156, %s6161
      %v6163 = vpop.permute.xlu0 %6162
      %v6164 = vlaneseq
      %v6165 = vshrl.u32 %v6164, 7
      %v6166 = vsub.s32 7, %v6165
      %v6167 = vrot.slane %v6069, %v6166
      %6169 = vbcast.lane.b32.xlu0 %v6167, 256
      %v6170 = vpop.permute.xlu0 %6169
      %s6172 = sor.u32 256, 8
      %6173 = vbcast.lane.b32.xlu0 %v6167, %s6172
      %v6174 = vpop.permute.xlu0 %6173
      %v6175 = vlaneseq
      %v6176 = vshrl.u32 %v6175, 7
      %v6177 = vsub.s32 0, %v6176
      %v6178 = vrot.slane %v6070, %v6177
      %6180 = vbcast.lane.b32.xlu0 %v6178, 256
      %v6181 = vpop.permute.xlu0 %6180
      %s6183 = sor.u32 256, 8
      %6184 = vbcast.lane.b32.xlu0 %v6178, %s6183
      %v6185 = vpop.permute.xlu0 %6184
      %v6186 = vlaneseq
      %v6187 = vshrl.u32 %v6186, 7
      %v6188 = vsub.s32 1, %v6187
      %v6189 = vrot.slane %v6070, %v6188
      %6191 = vbcast.lane.b32.xlu0 %v6189, 256
      %v6192 = vpop.permute.xlu0 %6191
      %s6194 = sor.u32 256, 8
      %6195 = vbcast.lane.b32.xlu0 %v6189, %s6194
      %v6196 = vpop.permute.xlu0 %6195
      %v6197 = vlaneseq
      %v6198 = vshrl.u32 %v6197, 7
      %v6199 = vsub.s32 2, %v6198
      %v6200 = vrot.slane %v6070, %v6199
      %6202 = vbcast.lane.b32.xlu0 %v6200, 256
      %v6203 = vpop.permute.xlu0 %6202
      %s6205 = sor.u32 256, 8
      %6206 = vbcast.lane.b32.xlu0 %v6200, %s6205
      %v6207 = vpop.permute.xlu0 %6206
      %v6208 = vlaneseq
      %v6209 = vshrl.u32 %v6208, 7
      %v6210 = vsub.s32 3, %v6209
      %v6211 = vrot.slane %v6070, %v6210
      %6213 = vbcast.lane.b32.xlu0 %v6211, 256
      %v6214 = vpop.permute.xlu0 %6213
      %s6216 = sor.u32 256, 8
      %6217 = vbcast.lane.b32.xlu0 %v6211, %s6216
      %v6218 = vpop.permute.xlu0 %6217
      %v6219 = vlaneseq
      %v6220 = vshrl.u32 %v6219, 7
      %v6221 = vsub.s32 4, %v6220
      %v6222 = vrot.slane %v6070, %v6221
      %6224 = vbcast.lane.b32.xlu0 %v6222, 256
      %v6225 = vpop.permute.xlu0 %6224
      %s6227 = sor.u32 256, 8
      %6228 = vbcast.lane.b32.xlu0 %v6222, %s6227
      %v6229 = vpop.permute.xlu0 %6228
      %v6230 = vlaneseq
      %v6231 = vshrl.u32 %v6230, 7
      %v6232 = vsub.s32 5, %v6231
      %v6233 = vrot.slane %v6070, %v6232
      %6235 = vbcast.lane.b32.xlu0 %v6233, 256
      %v6236 = vpop.permute.xlu0 %6235
      %s6238 = sor.u32 256, 8
      %6239 = vbcast.lane.b32.xlu0 %v6233, %s6238
      %v6240 = vpop.permute.xlu0 %6239
      %v6241 = vlaneseq
      %v6242 = vshrl.u32 %v6241, 7
      %v6243 = vsub.s32 6, %v6242
      %v6244 = vrot.slane %v6070, %v6243
      %6246 = vbcast.lane.b32.xlu0 %v6244, 256
      %v6247 = vpop.permute.xlu0 %6246
      %s6249 = sor.u32 256, 8
      %6250 = vbcast.lane.b32.xlu0 %v6244, %s6249
      %v6251 = vpop.permute.xlu0 %6250
      %v6252 = vlaneseq
      %v6253 = vshrl.u32 %v6252, 7
      %v6254 = vsub.s32 7, %v6253
      %v6255 = vrot.slane %v6070, %v6254
      %6257 = vbcast.lane.b32.xlu0 %v6255, 256
      %v6258 = vpop.permute.xlu0 %6257
      %s6260 = sor.u32 256, 8
      %6261 = vbcast.lane.b32.xlu0 %v6255, %s6260
      %v6262 = vpop.permute.xlu0 %6261
      %v6295 = vadd.f32 %v5671, %v6093
      %v6296 = vadd.f32 %v5674, %v6097
      %v6297 = vadd.f32 %v5677, %v6104
      %v6298 = vadd.f32 %v5680, %v6108
      %v6299 = vadd.f32 %v5683, %v6115
      %v6300 = vadd.f32 %v5686, %v6119
      %v6301 = vadd.f32 %v5689, %v6126
      %v6302 = vadd.f32 %v5692, %v6130
      %v6303 = vadd.f32 %v5695, %v6137
      %v6304 = vadd.f32 %v5698, %v6141
      %v6305 = vadd.f32 %v5701, %v6148
      %v6306 = vadd.f32 %v5704, %v6152
      %v6307 = vadd.f32 %v5707, %v6159
      %v6308 = vadd.f32 %v5710, %v6163
      %v6309 = vadd.f32 %v5713, %v6170
      %v6310 = vadd.f32 %v5716, %v6174
      %v6311 = vadd.f32 %v5719, %v6181
      %v6312 = vadd.f32 %v5722, %v6185
      %v6313 = vadd.f32 %v5725, %v6192
      %v6314 = vadd.f32 %v5728, %v6196
      %v6315 = vadd.f32 %v5731, %v6203
      %v6316 = vadd.f32 %v5734, %v6207
      %v6317 = vadd.f32 %v5737, %v6214
      %v6318 = vadd.f32 %v5740, %v6218
      %v6319 = vadd.f32 %v5743, %v6225
      %v6320 = vadd.f32 %v5746, %v6229
      %v6321 = vadd.f32 %v5749, %v6236
      %v6322 = vadd.f32 %v5752, %v6240
      %v6323 = vadd.f32 %v5755, %v6247
      %v6324 = vadd.f32 %v5758, %v6251
      %v6325 = vadd.f32 %v5761, %v6258
      %v6326 = vadd.f32 %v5764, %v6262
      %v6327 = vpack.c.bf16 %v5144, %v5142
      %v6328 = vpack.c.bf16 %v5148, %v5146
      %v6329 = vpack.c.bf16 %v5152, %v5150
      %v6330 = vpack.c.bf16 %v5156, %v5154
      %v6331 = vpack.c.bf16 %v5160, %v5158
      %v6332 = vpack.c.bf16 %v5164, %v5162
      %v6333 = vpack.c.bf16 %v5168, %v5166
      %v6334 = vpack.c.bf16 %v5172, %v5170
      %v6335 = vpack.c.bf16 %v5176, %v5174
      %v6336 = vpack.c.bf16 %v5180, %v5178
      %v6337 = vpack.c.bf16 %v5184, %v5182
      %v6338 = vpack.c.bf16 %v5188, %v5186
      %v6339 = vpack.c.bf16 %v5192, %v5190
      %v6340 = vpack.c.bf16 %v5196, %v5194
      %v6341 = vpack.c.bf16 %v5200, %v5198
      %v6342 = vpack.c.bf16 %v5204, %v5202
      %v6343 = vpack.c.bf16 %v5608, %v5606
      %v6344 = vpack.c.bf16 %v5612, %v5610
      %v6345 = vpack.c.bf16 %v5616, %v5614
      %v6346 = vpack.c.bf16 %v5620, %v5618
      %v6347 = vpack.c.bf16 %v5624, %v5622
      %v6348 = vpack.c.bf16 %v5628, %v5626
      %v6349 = vpack.c.bf16 %v5632, %v5630
      %v6350 = vpack.c.bf16 %v5636, %v5634
      %v6351 = vpack.c.bf16 %v5640, %v5638
      %v6352 = vpack.c.bf16 %v5644, %v5642
      %v6353 = vpack.c.bf16 %v5648, %v5646
      %v6354 = vpack.c.bf16 %v5652, %v5650
      %v6355 = vpack.c.bf16 %v5656, %v5654
      %v6356 = vpack.c.bf16 %v5660, %v5658
      %v6357 = vpack.c.bf16 %v5664, %v5662
      %v6358 = vpack.c.bf16 %v5668, %v5666
      %v6360 = vsel %vm4281, %v6343, 0
      %6362 = vmatprep.subr.bf16.mxu0 0
      %6363 = vmatpush1.bf16.msra.mxu0 %v2717
      %6364 = vmatprep.subr.bf16.mxu0 0
      %6365 = vmatpush1.bf16.msra.mxu0 0
      %6366 = vmatprep.subr.bf16.mxu0 0
      %6367 = vmatpush1.bf16.msra.mxu0 0
      %6368 = vmatprep.subr.bf16.mxu0 0
      %6369 = vmatpush1.bf16.msra.mxu0 0
      %6370 = vmatprep.subr.bf16.mxu0 0
      %6371 = vmatpush1.bf16.msra.mxu0 0
      %6372 = vmatprep.subr.bf16.mxu0 0
      %6373 = vmatpush1.bf16.msra.mxu0 0
      %6374 = vmatprep.subr.bf16.mxu0 0
      %6375 = vmatpush1.bf16.msra.mxu0 0
      %6376 = vmatprep.subr.bf16.mxu0 0
      %6377 = vmatpush1.bf16.msra.mxu0 0
      %6378 = vmatprep.subr.bf16.mxu0 0
      %6379 = vmatpush1.bf16.msra.mxu0 0
      %6380 = vmatprep.subr.bf16.mxu0 0
      %6381 = vmatpush1.bf16.msra.mxu0 0
      %6382 = vmatprep.subr.bf16.mxu0 0
      %6383 = vmatpush1.bf16.msra.mxu0 0
      %6384 = vmatprep.subr.bf16.mxu0 0
      %6385 = vmatpush1.bf16.msra.mxu0 0
      %6386 = vmatprep.subr.bf16.mxu0 0
      %6387 = vmatpush1.bf16.msra.mxu0 0
      %6388 = vmatprep.subr.bf16.mxu0 0
      %6389 = vmatpush1.bf16.msra.mxu0 0
      %6390 = vmatprep.subr.bf16.mxu0 0
      %6391 = vmatpush1.bf16.msra.mxu0 0
      %6392 = vmatprep.subr.bf16.mxu0 0
      %6393 = vmatpush1.bf16.msra.mxu0 0
      %6394 = vmatprep.mubr.bf16.mxu0 0
      %6395 = vmatmul.mubr.bf16.gmra.mrb[0].mxu0 %v6360
      %v6396 = vpop.f32.mrb[0].mxu0
      %v6397 = vadd.f32 0.0, %v6396
      %v6398 = vpop.f32.mrb[0].mxu0
      %v6399 = vpop.f32.mrb[0].mxu0
      %v6400 = vadd.f32 0.0, %v6399
      %v6401 = vpop.f32.mrb[0].mxu0
      %6402 = vdwg.mxu0
      %v6404 = vsel %vm4281, %v6344, 0
      %6406 = vmatprep.subr.bf16.mxu0 0
      %6407 = vmatpush1.bf16.msra.mxu0 %v2718
      %6408 = vmatprep.subr.bf16.mxu0 0
      %6409 = vmatpush1.bf16.msra.mxu0 0
      %6410 = vmatprep.subr.bf16.mxu0 0
      %6411 = vmatpush1.bf16.msra.mxu0 0
      %6412 = vmatprep.subr.bf16.mxu0 0
      %6413 = vmatpush1.bf16.msra.mxu0 0
      %6414 = vmatprep.subr.bf16.mxu0 0
      %6415 = vmatpush1.bf16.msra.mxu0 0
      %6416 = vmatprep.subr.bf16.mxu0 0
      %6417 = vmatpush1.bf16.msra.mxu0 0
      %6418 = vmatprep.subr.bf16.mxu0 0
      %6419 = vmatpush1.bf16.msra.mxu0 0
      %6420 = vmatprep.subr.bf16.mxu0 0
      %6421 = vmatpush1.bf16.msra.mxu0 0
      %6422 = vmatprep.subr.bf16.mxu0 0
      %6423 = vmatpush1.bf16.msra.mxu0 0
      %6424 = vmatprep.subr.bf16.mxu0 0
      %6425 = vmatpush1.bf16.msra.mxu0 0
      %6426 = vmatprep.subr.bf16.mxu0 0
      %6427 = vmatpush1.bf16.msra.mxu0 0
      %6428 = vmatprep.subr.bf16.mxu0 0
      %6429 = vmatpush1.bf16.msra.mxu0 0
      %6430 = vmatprep.subr.bf16.mxu0 0
      %6431 = vmatpush1.bf16.msra.mxu0 0
      %6432 = vmatprep.subr.bf16.mxu0 0
      %6433 = vmatpush1.bf16.msra.mxu0 0
      %6434 = vmatprep.subr.bf16.mxu0 0
      %6435 = vmatpush1.bf16.msra.mxu0 0
      %6436 = vmatprep.subr.bf16.mxu0 0
      %6437 = vmatpush1.bf16.msra.mxu0 0
      %6438 = vmatprep.mubr.bf16.mxu0 0
      %6439 = vmatmul.mubr.bf16.gmra.mrb[0].mxu0 %v6404
      %v6440 = vpop.f32.mrb[0].mxu0
      %v6441 = vadd.f32 0.0, %v6440
      %v6442 = vpop.f32.mrb[0].mxu0
      %v6443 = vpop.f32.mrb[0].mxu0
      %v6444 = vadd.f32 0.0, %v6443
      %v6445 = vpop.f32.mrb[0].mxu0
      %6446 = vdwg.mxu0
      %v6448 = vsel %vm4281, %v6345, 0
      %6450 = vmatprep.subr.bf16.mxu0 0
      %6451 = vmatpush1.bf16.msra.mxu0 %v2719
      %6452 = vmatprep.subr.bf16.mxu0 0
      %6453 = vmatpush1.bf16.msra.mxu0 0
      %6454 = vmatprep.subr.bf16.mxu0 0
      %6455 = vmatpush1.bf16.msra.mxu0 0
      %6456 = vmatprep.subr.bf16.mxu0 0
      %6457 = vmatpush1.bf16.msra.mxu0 0
      %6458 = vmatprep.subr.bf16.mxu0 0
      %6459 = vmatpush1.bf16.msra.mxu0 0
      %6460 = vmatprep.subr.bf16.mxu0 0
      %6461 = vmatpush1.bf16.msra.mxu0 0
      %6462 = vmatprep.subr.bf16.mxu0 0
      %6463 = vmatpush1.bf16.msra.mxu0 0
      %6464 = vmatprep.subr.bf16.mxu0 0
      %6465 = vmatpush1.bf16.msra.mxu0 0
      %6466 = vmatprep.subr.bf16.mxu0 0
      %6467 = vmatpush1.bf16.msra.mxu0 0
      %6468 = vmatprep.subr.bf16.mxu0 0
      %6469 = vmatpush1.bf16.msra.mxu0 0
      %6470 = vmatprep.subr.bf16.mxu0 0
      %6471 = vmatpush1.bf16.msra.mxu0 0
      %6472 = vmatprep.subr.bf16.mxu0 0
      %6473 = vmatpush1.bf16.msra.mxu0 0
      %6474 = vmatprep.subr.bf16.mxu0 0
      %6475 = vmatpush1.bf16.msra.mxu0 0
      %6476 = vmatprep.subr.bf16.mxu0 0
      %6477 = vmatpush1.bf16.msra.mxu0 0
      %6478 = vmatprep.subr.bf16.mxu0 0
      %6479 = vmatpush1.bf16.msra.mxu0 0
      %6480 = vmatprep.subr.bf16.mxu0 0
      %6481 = vmatpush1.bf16.msra.mxu0 0
      %6482 = vmatprep.mubr.bf16.mxu0 0
      %6483 = vmatmul.mubr.bf16.gmra.mrb[0].mxu0 %v6448
      %v6484 = vpop.f32.mrb[0].mxu0
      %v6485 = vadd.f32 0.0, %v6484
      %v6486 = vpop.f32.mrb[0].mxu0
      %v6487 = vpop.f32.mrb[0].mxu0
      %v6488 = vadd.f32 0.0, %v6487
      %v6489 = vpop.f32.mrb[0].mxu0
      %6490 = vdwg.mxu0
      %v6492 = vsel %vm4281, %v6346, 0
      %6494 = vmatprep.subr.bf16.mxu0 0
      %6495 = vmatpush1.bf16.msra.mxu0 %v2720
      %6496 = vmatprep.subr.bf16.mxu0 0
      %6497 = vmatpush1.bf16.msra.mxu0 0
      %6498 = vmatprep.subr.bf16.mxu0 0
      %6499 = vmatpush1.bf16.msra.mxu0 0
      %6500 = vmatprep.subr.bf16.mxu0 0
      %6501 = vmatpush1.bf16.msra.mxu0 0
      %6502 = vmatprep.subr.bf16.mxu0 0
      %6503 = vmatpush1.bf16.msra.mxu0 0
      %6504 = vmatprep.subr.bf16.mxu0 0
      %6505 = vmatpush1.bf16.msra.mxu0 0
      %6506 = vmatprep.subr.bf16.mxu0 0
      %6507 = vmatpush1.bf16.msra.mxu0 0
      %6508 = vmatprep.subr.bf16.mxu0 0
      %6509 = vmatpush1.bf16.msra.mxu0 0
      %6510 = vmatprep.subr.bf16.mxu0 0
      %6511 = vmatpush1.bf16.msra.mxu0 0
      %6512 = vmatprep.subr.bf16.mxu0 0
      %6513 = vmatpush1.bf16.msra.mxu0 0
      %6514 = vmatprep.subr.bf16.mxu0 0
      %6515 = vmatpush1.bf16.msra.mxu0 0
      %6516 = vmatprep.subr.bf16.mxu0 0
      %6517 = vmatpush1.bf16.msra.mxu0 0
      %6518 = vmatprep.subr.bf16.mxu0 0
      %6519 = vmatpush1.bf16.msra.mxu0 0
      %6520 = vmatprep.subr.bf16.mxu0 0
      %6521 = vmatpush1.bf16.msra.mxu0 0
      %6522 = vmatprep.subr.bf16.mxu0 0
      %6523 = vmatpush1.bf16.msra.mxu0 0
      %6524 = vmatprep.subr.bf16.mxu0 0
      %6525 = vmatpush1.bf16.msra.mxu0 0
      %6526 = vmatprep.mubr.bf16.mxu0 0
      %6527 = vmatmul.mubr.bf16.gmra.mrb[0].mxu0 %v6492
      %v6528 = vpop.f32.mrb[0].mxu0
      %v6529 = vadd.f32 0.0, %v6528
      %v6530 = vpop.f32.mrb[0].mxu0
      %v6531 = vpop.f32.mrb[0].mxu0
      %v6532 = vadd.f32 0.0, %v6531
      %v6533 = vpop.f32.mrb[0].mxu0
      %6534 = vdwg.mxu0
      %v6536 = vsel %vm4281, %v6347, 0
      %6538 = vmatprep.subr.bf16.mxu0 0
      %6539 = vmatpush1.bf16.msra.mxu0 %v2721
      %6540 = vmatprep.subr.bf16.mxu0 0
      %6541 = vmatpush1.bf16.msra.mxu0 0
      %6542 = vmatprep.subr.bf16.mxu0 0
      %6543 = vmatpush1.bf16.msra.mxu0 0
      %6544 = vmatprep.subr.bf16.mxu0 0
      %6545 = vmatpush1.bf16.msra.mxu0 0
      %6546 = vmatprep.subr.bf16.mxu0 0
      %6547 = vmatpush1.bf16.msra.mxu0 0
      %6548 = vmatprep.subr.bf16.mxu0 0
      %6549 = vmatpush1.bf16.msra.mxu0 0
      %6550 = vmatprep.subr.bf16.mxu0 0
      %6551 = vmatpush1.bf16.msra.mxu0 0
      %6552 = vmatprep.subr.bf16.mxu0 0
      %6553 = vmatpush1.bf16.msra.mxu0 0
      %6554 = vmatprep.subr.bf16.mxu0 0
      %6555 = vmatpush1.bf16.msra.mxu0 0
      %6556 = vmatprep.subr.bf16.mxu0 0
      %6557 = vmatpush1.bf16.msra.mxu0 0
      %6558 = vmatprep.subr.bf16.mxu0 0
      %6559 = vmatpush1.bf16.msra.mxu0 0
      %6560 = vmatprep.subr.bf16.mxu0 0
      %6561 = vmatpush1.bf16.msra.mxu0 0
      %6562 = vmatprep.subr.bf16.mxu0 0
      %6563 = vmatpush1.bf16.msra.mxu0 0
      %6564 = vmatprep.subr.bf16.mxu0 0
      %6565 = vmatpush1.bf16.msra.mxu0 0
      %6566 = vmatprep.subr.bf16.mxu0 0
      %6567 = vmatpush1.bf16.msra.mxu0 0
      %6568 = vmatprep.subr.bf16.mxu0 0
      %6569 = vmatpush1.bf16.msra.mxu0 0
      %6570 = vmatprep.mubr.bf16.mxu0 0
      %6571 = vmatmul.mubr.bf16.gmra.mrb[0].mxu0 %v6536
      %v6572 = vpop.f32.mrb[0].mxu0
      %v6573 = vadd.f32 0.0, %v6572
      %v6574 = vpop.f32.mrb[0].mxu0
      %v6575 = vpop.f32.mrb[0].mxu0
      %v6576 = vadd.f32 0.0, %v6575
      %v6577 = vpop.f32.mrb[0].mxu0
      %6578 = vdwg.mxu0
      %v6580 = vsel %vm4281, %v6348, 0
      %6582 = vmatprep.subr.bf16.mxu0 0
      %6583 = vmatpush1.bf16.msra.mxu0 %v2722
      %6584 = vmatprep.subr.bf16.mxu0 0
      %6585 = vmatpush1.bf16.msra.mxu0 0
      %6586 = vmatprep.subr.bf16.mxu0 0
      %6587 = vmatpush1.bf16.msra.mxu0 0
      %6588 = vmatprep.subr.bf16.mxu0 0
      %6589 = vmatpush1.bf16.msra.mxu0 0
      %6590 = vmatprep.subr.bf16.mxu0 0
      %6591 = vmatpush1.bf16.msra.mxu0 0
      %6592 = vmatprep.subr.bf16.mxu0 0
      %6593 = vmatpush1.bf16.msra.mxu0 0
      %6594 = vmatprep.subr.bf16.mxu0 0
      %6595 = vmatpush1.bf16.msra.mxu0 0
      %6596 = vmatprep.subr.bf16.mxu0 0
      %6597 = vmatpush1.bf16.msra.mxu0 0
      %6598 = vmatprep.subr.bf16.mxu0 0
      %6599 = vmatpush1.bf16.msra.mxu0 0
      %6600 = vmatprep.subr.bf16.mxu0 0
      %6601 = vmatpush1.bf16.msra.mxu0 0
      %6602 = vmatprep.subr.bf16.mxu0 0
      %6603 = vmatpush1.bf16.msra.mxu0 0
      %6604 = vmatprep.subr.bf16.mxu0 0
      %6605 = vmatpush1.bf16.msra.mxu0 0
      %6606 = vmatprep.subr.bf16.mxu0 0
      %6607 = vmatpush1.bf16.msra.mxu0 0
      %6608 = vmatprep.subr.bf16.mxu0 0
      %6609 = vmatpush1.bf16.msra.mxu0 0
      %6610 = vmatprep.subr.bf16.mxu0 0
      %6611 = vmatpush1.bf16.msra.mxu0 0
      %6612 = vmatprep.subr.bf16.mxu0 0
      %6613 = vmatpush1.bf16.msra.mxu0 0
      %6614 = vmatprep.mubr.bf16.mxu0 0
      %6615 = vmatmul.mubr.bf16.gmra.mrb[0].mxu0 %v6580
      %v6616 = vpop.f32.mrb[0].mxu0
      %v6617 = vadd.f32 0.0, %v6616
      %v6618 = vpop.f32.mrb[0].mxu0
      %v6619 = vpop.f32.mrb[0].mxu0
      %v6620 = vadd.f32 0.0, %v6619
      %v6621 = vpop.f32.mrb[0].mxu0
      %6622 = vdwg.mxu0
      %v6624 = vsel %vm4281, %v6349, 0
      %6626 = vmatprep.subr.bf16.mxu0 0
      %6627 = vmatpush1.bf16.msra.mxu0 %v2723
      %6628 = vmatprep.subr.bf16.mxu0 0
      %6629 = vmatpush1.bf16.msra.mxu0 0
      %6630 = vmatprep.subr.bf16.mxu0 0
      %6631 = vmatpush1.bf16.msra.mxu0 0
      %6632 = vmatprep.subr.bf16.mxu0 0
      %6633 = vmatpush1.bf16.msra.mxu0 0
      %6634 = vmatprep.subr.bf16.mxu0 0
      %6635 = vmatpush1.bf16.msra.mxu0 0
      %6636 = vmatprep.subr.bf16.mxu0 0
      %6637 = vmatpush1.bf16.msra.mxu0 0
      %6638 = vmatprep.subr.bf16.mxu0 0
      %6639 = vmatpush1.bf16.msra.mxu0 0
      %6640 = vmatprep.subr.bf16.mxu0 0
      %6641 = vmatpush1.bf16.msra.mxu0 0
      %6642 = vmatprep.subr.bf16.mxu0 0
      %6643 = vmatpush1.bf16.msra.mxu0 0
      %6644 = vmatprep.subr.bf16.mxu0 0
      %6645 = vmatpush1.bf16.msra.mxu0 0
      %6646 = vmatprep.subr.bf16.mxu0 0
      %6647 = vmatpush1.bf16.msra.mxu0 0
      %6648 = vmatprep.subr.bf16.mxu0 0
      %6649 = vmatpush1.bf16.msra.mxu0 0
      %6650 = vmatprep.subr.bf16.mxu0 0
      %6651 = vmatpush1.bf16.msra.mxu0 0
      %6652 = vmatprep.subr.bf16.mxu0 0
      %6653 = vmatpush1.bf16.msra.mxu0 0
      %6654 = vmatprep.subr.bf16.mxu0 0
      %6655 = vmatpush1.bf16.msra.mxu0 0
      %6656 = vmatprep.subr.bf16.mxu0 0
      %6657 = vmatpush1.bf16.msra.mxu0 0
      %6658 = vmatprep.mubr.bf16.mxu0 0
      %6659 = vmatmul.mubr.bf16.gmra.mrb[0].mxu0 %v6624
      %v6660 = vpop.f32.mrb[0].mxu0
      %v6661 = vadd.f32 0.0, %v6660
      %v6662 = vpop.f32.mrb[0].mxu0
      %v6663 = vpop.f32.mrb[0].mxu0
      %v6664 = vadd.f32 0.0, %v6663
      %v6665 = vpop.f32.mrb[0].mxu0
      %6666 = vdwg.mxu0
      %v6668 = vsel %vm4281, %v6350, 0
      %6670 = vmatprep.subr.bf16.mxu0 0
      %6671 = vmatpush1.bf16.msra.mxu0 %v2724
      %6672 = vmatprep.subr.bf16.mxu0 0
      %6673 = vmatpush1.bf16.msra.mxu0 0
      %6674 = vmatprep.subr.bf16.mxu0 0
      %6675 = vmatpush1.bf16.msra.mxu0 0
      %6676 = vmatprep.subr.bf16.mxu0 0
      %6677 = vmatpush1.bf16.msra.mxu0 0
      %6678 = vmatprep.subr.bf16.mxu0 0
      %6679 = vmatpush1.bf16.msra.mxu0 0
      %6680 = vmatprep.subr.bf16.mxu0 0
      %6681 = vmatpush1.bf16.msra.mxu0 0
      %6682 = vmatprep.subr.bf16.mxu0 0
      %6683 = vmatpush1.bf16.msra.mxu0 0
      %6684 = vmatprep.subr.bf16.mxu0 0
      %6685 = vmatpush1.bf16.msra.mxu0 0
      %6686 = vmatprep.subr.bf16.mxu0 0
      %6687 = vmatpush1.bf16.msra.mxu0 0
      %6688 = vmatprep.subr.bf16.mxu0 0
      %6689 = vmatpush1.bf16.msra.mxu0 0
      %6690 = vmatprep.subr.bf16.mxu0 0
      %6691 = vmatpush1.bf16.msra.mxu0 0
      %6692 = vmatprep.subr.bf16.mxu0 0
      %6693 = vmatpush1.bf16.msra.mxu0 0
      %6694 = vmatprep.subr.bf16.mxu0 0
      %6695 = vmatpush1.bf16.msra.mxu0 0
      %6696 = vmatprep.subr.bf16.mxu0 0
      %6697 = vmatpush1.bf16.msra.mxu0 0
      %6698 = vmatprep.subr.bf16.mxu0 0
      %6699 = vmatpush1.bf16.msra.mxu0 0
      %6700 = vmatprep.subr.bf16.mxu0 0
      %6701 = vmatpush1.bf16.msra.mxu0 0
      %6702 = vmatprep.mubr.bf16.mxu0 0
      %6703 = vmatmul.mubr.bf16.gmra.mrb[0].mxu0 %v6668
      %v6704 = vpop.f32.mrb[0].mxu0
      %v6705 = vadd.f32 0.0, %v6704
      %v6706 = vpop.f32.mrb[0].mxu0
      %v6707 = vpop.f32.mrb[0].mxu0
      %v6708 = vadd.f32 0.0, %v6707
      %v6709 = vpop.f32.mrb[0].mxu0
      %6710 = vdwg.mxu0
      %v6712 = vsel %vm4281, %v6351, 0
      %6714 = vmatprep.subr.bf16.mxu0 0
      %6715 = vmatpush1.bf16.msra.mxu0 %v2725
      %6716 = vmatprep.subr.bf16.mxu0 0
      %6717 = vmatpush1.bf16.msra.mxu0 0
      %6718 = vmatprep.subr.bf16.mxu0 0
      %6719 = vmatpush1.bf16.msra.mxu0 0
      %6720 = vmatprep.subr.bf16.mxu0 0
      %6721 = vmatpush1.bf16.msra.mxu0 0
      %6722 = vmatprep.subr.bf16.mxu0 0
      %6723 = vmatpush1.bf16.msra.mxu0 0
      %6724 = vmatprep.subr.bf16.mxu0 0
      %6725 = vmatpush1.bf16.msra.mxu0 0
      %6726 = vmatprep.subr.bf16.mxu0 0
      %6727 = vmatpush1.bf16.msra.mxu0 0
      %6728 = vmatprep.subr.bf16.mxu0 0
      %6729 = vmatpush1.bf16.msra.mxu0 0
      %6730 = vmatprep.subr.bf16.mxu0 0
      %6731 = vmatpush1.bf16.msra.mxu0 0
      %6732 = vmatprep.subr.bf16.mxu0 0
      %6733 = vmatpush1.bf16.msra.mxu0 0
      %6734 = vmatprep.subr.bf16.mxu0 0
      %6735 = vmatpush1.bf16.msra.mxu0 0
      %6736 = vmatprep.subr.bf16.mxu0 0
      %6737 = vmatpush1.bf16.msra.mxu0 0
      %6738 = vmatprep.subr.bf16.mxu0 0
      %6739 = vmatpush1.bf16.msra.mxu0 0
      %6740 = vmatprep.subr.bf16.mxu0 0
      %6741 = vmatpush1.bf16.msra.mxu0 0
      %6742 = vmatprep.subr.bf16.mxu0 0
      %6743 = vmatpush1.bf16.msra.mxu0 0
      %6744 = vmatprep.subr.bf16.mxu0 0
      %6745 = vmatpush1.bf16.msra.mxu0 0
      %6746 = vmatprep.mubr.bf16.mxu0 0
      %6747 = vmatmul.mubr.bf16.gmra.mrb[0].mxu0 %v6712
      %v6748 = vpop.f32.mrb[0].mxu0
      %v6749 = vadd.f32 0.0, %v6748
      %v6750 = vpop.f32.mrb[0].mxu0
      %v6751 = vpop.f32.mrb[0].mxu0
      %v6752 = vadd.f32 0.0, %v6751
      %v6753 = vpop.f32.mrb[0].mxu0
      %6754 = vdwg.mxu0
      %v6756 = vsel %vm4281, %v6352, 0
      %6758 = vmatprep.subr.bf16.mxu0 0
      %6759 = vmatpush1.bf16.msra.mxu0 %v2726
      %6760 = vmatprep.subr.bf16.mxu0 0
      %6761 = vmatpush1.bf16.msra.mxu0 0
      %6762 = vmatprep.subr.bf16.mxu0 0
      %6763 = vmatpush1.bf16.msra.mxu0 0
      %6764 = vmatprep.subr.bf16.mxu0 0
      %6765 = vmatpush1.bf16.msra.mxu0 0
      %6766 = vmatprep.subr.bf16.mxu0 0
      %6767 = vmatpush1.bf16.msra.mxu0 0
      %6768 = vmatprep.subr.bf16.mxu0 0
      %6769 = vmatpush1.bf16.msra.mxu0 0
      %6770 = vmatprep.subr.bf16.mxu0 0
      %6771 = vmatpush1.bf16.msra.mxu0 0
      %6772 = vmatprep.subr.bf16.mxu0 0
      %6773 = vmatpush1.bf16.msra.mxu0 0
      %6774 = vmatprep.subr.bf16.mxu0 0
      %6775 = vmatpush1.bf16.msra.mxu0 0
      %6776 = vmatprep.subr.bf16.mxu0 0
      %6777 = vmatpush1.bf16.msra.mxu0 0
      %6778 = vmatprep.subr.bf16.mxu0 0
      %6779 = vmatpush1.bf16.msra.mxu0 0
      %6780 = vmatprep.subr.bf16.mxu0 0
      %6781 = vmatpush1.bf16.msra.mxu0 0
      %6782 = vmatprep.subr.bf16.mxu0 0
      %6783 = vmatpush1.bf16.msra.mxu0 0
      %6784 = vmatprep.subr.bf16.mxu0 0
      %6785 = vmatpush1.bf16.msra.mxu0 0
      %6786 = vmatprep.subr.bf16.mxu0 0
      %6787 = vmatpush1.bf16.msra.mxu0 0
      %6788 = vmatprep.subr.bf16.mxu0 0
      %6789 = vmatpush1.bf16.msra.mxu0 0
      %6790 = vmatprep.mubr.bf16.mxu0 0
      %6791 = vmatmul.mubr.bf16.gmra.mrb[0].mxu0 %v6756
      %v6792 = vpop.f32.mrb[0].mxu0
      %v6793 = vadd.f32 0.0, %v6792
      %v6794 = vpop.f32.mrb[0].mxu0
      %v6795 = vpop.f32.mrb[0].mxu0
      %v6796 = vadd.f32 0.0, %v6795
      %v6797 = vpop.f32.mrb[0].mxu0
      %6798 = vdwg.mxu0
      %v6800 = vsel %vm4281, %v6353, 0
      %6802 = vmatprep.subr.bf16.mxu0 0
      %6803 = vmatpush1.bf16.msra.mxu0 %v2727
      %6804 = vmatprep.subr.bf16.mxu0 0
      %6805 = vmatpush1.bf16.msra.mxu0 0
      %6806 = vmatprep.subr.bf16.mxu0 0
      %6807 = vmatpush1.bf16.msra.mxu0 0
      %6808 = vmatprep.subr.bf16.mxu0 0
      %6809 = vmatpush1.bf16.msra.mxu0 0
      %6810 = vmatprep.subr.bf16.mxu0 0
      %6811 = vmatpush1.bf16.msra.mxu0 0
      %6812 = vmatprep.subr.bf16.mxu0 0
      %6813 = vmatpush1.bf16.msra.mxu0 0
      %6814 = vmatprep.subr.bf16.mxu0 0
      %6815 = vmatpush1.bf16.msra.mxu0 0
      %6816 = vmatprep.subr.bf16.mxu0 0
      %6817 = vmatpush1.bf16.msra.mxu0 0
      %6818 = vmatprep.subr.bf16.mxu0 0
      %6819 = vmatpush1.bf16.msra.mxu0 0
      %6820 = vmatprep.subr.bf16.mxu0 0
      %6821 = vmatpush1.bf16.msra.mxu0 0
      %6822 = vmatprep.subr.bf16.mxu0 0
      %6823 = vmatpush1.bf16.msra.mxu0 0
      %6824 = vmatprep.subr.bf16.mxu0 0
      %6825 = vmatpush1.bf16.msra.mxu0 0
      %6826 = vmatprep.subr.bf16.mxu0 0
      %6827 = vmatpush1.bf16.msra.mxu0 0
      %6828 = vmatprep.subr.bf16.mxu0 0
      %6829 = vmatpush1.bf16.msra.mxu0 0
      %6830 = vmatprep.subr.bf16.mxu0 0
      %6831 = vmatpush1.bf16.msra.mxu0 0
      %6832 = vmatprep.subr.bf16.mxu0 0
      %6833 = vmatpush1.bf16.msra.mxu0 0
      %6834 = vmatprep.mubr.bf16.mxu0 0
      %6835 = vmatmul.mubr.bf16.gmra.mrb[0].mxu0 %v6800
      %v6836 = vpop.f32.mrb[0].mxu0
      %v6837 = vadd.f32 0.0, %v6836
      %v6838 = vpop.f32.mrb[0].mxu0
      %v6839 = vpop.f32.mrb[0].mxu0
      %v6840 = vadd.f32 0.0, %v6839
      %v6841 = vpop.f32.mrb[0].mxu0
      %6842 = vdwg.mxu0
      %v6844 = vsel %vm4281, %v6354, 0
      %6846 = vmatprep.subr.bf16.mxu0 0
      %6847 = vmatpush1.bf16.msra.mxu0 %v2728
      %6848 = vmatprep.subr.bf16.mxu0 0
      %6849 = vmatpush1.bf16.msra.mxu0 0
      %6850 = vmatprep.subr.bf16.mxu0 0
      %6851 = vmatpush1.bf16.msra.mxu0 0
      %6852 = vmatprep.subr.bf16.mxu0 0
      %6853 = vmatpush1.bf16.msra.mxu0 0
      %6854 = vmatprep.subr.bf16.mxu0 0
      %6855 = vmatpush1.bf16.msra.mxu0 0
      %6856 = vmatprep.subr.bf16.mxu0 0
      %6857 = vmatpush1.bf16.msra.mxu0 0
      %6858 = vmatprep.subr.bf16.mxu0 0
      %6859 = vmatpush1.bf16.msra.mxu0 0
      %6860 = vmatprep.subr.bf16.mxu0 0
      %6861 = vmatpush1.bf16.msra.mxu0 0
      %6862 = vmatprep.subr.bf16.mxu0 0
      %6863 = vmatpush1.bf16.msra.mxu0 0
      %6864 = vmatprep.subr.bf16.mxu0 0
      %6865 = vmatpush1.bf16.msra.mxu0 0
      %6866 = vmatprep.subr.bf16.mxu0 0
      %6867 = vmatpush1.bf16.msra.mxu0 0
      %6868 = vmatprep.subr.bf16.mxu0 0
      %6869 = vmatpush1.bf16.msra.mxu0 0
      %6870 = vmatprep.subr.bf16.mxu0 0
      %6871 = vmatpush1.bf16.msra.mxu0 0
      %6872 = vmatprep.subr.bf16.mxu0 0
      %6873 = vmatpush1.bf16.msra.mxu0 0
      %6874 = vmatprep.subr.bf16.mxu0 0
      %6875 = vmatpush1.bf16.msra.mxu0 0
      %6876 = vmatprep.subr.bf16.mxu0 0
      %6877 = vmatpush1.bf16.msra.mxu0 0
      %6878 = vmatprep.mubr.bf16.mxu0 0
      %6879 = vmatmul.mubr.bf16.gmra.mrb[0].mxu0 %v6844
      %v6880 = vpop.f32.mrb[0].mxu0
      %v6881 = vadd.f32 0.0, %v6880
      %v6882 = vpop.f32.mrb[0].mxu0
      %v6883 = vpop.f32.mrb[0].mxu0
      %v6884 = vadd.f32 0.0, %v6883
      %v6885 = vpop.f32.mrb[0].mxu0
      %6886 = vdwg.mxu0
      %v6888 = vsel %vm4281, %v6355, 0
      %6890 = vmatprep.subr.bf16.mxu0 0
      %6891 = vmatpush1.bf16.msra.mxu0 %v2729
      %6892 = vmatprep.subr.bf16.mxu0 0
      %6893 = vmatpush1.bf16.msra.mxu0 0
      %6894 = vmatprep.subr.bf16.mxu0 0
      %6895 = vmatpush1.bf16.msra.mxu0 0
      %6896 = vmatprep.subr.bf16.mxu0 0
      %6897 = vmatpush1.bf16.msra.mxu0 0
      %6898 = vmatprep.subr.bf16.mxu0 0
      %6899 = vmatpush1.bf16.msra.mxu0 0
      %6900 = vmatprep.subr.bf16.mxu0 0
      %6901 = vmatpush1.bf16.msra.mxu0 0
      %6902 = vmatprep.subr.bf16.mxu0 0
      %6903 = vmatpush1.bf16.msra.mxu0 0
      %6904 = vmatprep.subr.bf16.mxu0 0
      %6905 = vmatpush1.bf16.msra.mxu0 0
      %6906 = vmatprep.subr.bf16.mxu0 0
      %6907 = vmatpush1.bf16.msra.mxu0 0
      %6908 = vmatprep.subr.bf16.mxu0 0
      %6909 = vmatpush1.bf16.msra.mxu0 0
      %6910 = vmatprep.subr.bf16.mxu0 0
      %6911 = vmatpush1.bf16.msra.mxu0 0
      %6912 = vmatprep.subr.bf16.mxu0 0
      %6913 = vmatpush1.bf16.msra.mxu0 0
      %6914 = vmatprep.subr.bf16.mxu0 0
      %6915 = vmatpush1.bf16.msra.mxu0 0
      %6916 = vmatprep.subr.bf16.mxu0 0
      %6917 = vmatpush1.bf16.msra.mxu0 0
      %6918 = vmatprep.subr.bf16.mxu0 0
      %6919 = vmatpush1.bf16.msra.mxu0 0
      %6920 = vmatprep.subr.bf16.mxu0 0
      %6921 = vmatpush1.bf16.msra.mxu0 0
      %6922 = vmatprep.mubr.bf16.mxu0 0
      %6923 = vmatmul.mubr.bf16.gmra.mrb[0].mxu0 %v6888
      %v6924 = vpop.f32.mrb[0].mxu0
      %v6925 = vadd.f32 0.0, %v6924
      %v6926 = vpop.f32.mrb[0].mxu0
      %v6927 = vpop.f32.mrb[0].mxu0
      %v6928 = vadd.f32 0.0, %v6927
      %v6929 = vpop.f32.mrb[0].mxu0
      %6930 = vdwg.mxu0
      %v6932 = vsel %vm4281, %v6356, 0
      %6934 = vmatprep.subr.bf16.mxu0 0
      %6935 = vmatpush1.bf16.msra.mxu0 %v2730
      %6936 = vmatprep.subr.bf16.mxu0 0
      %6937 = vmatpush1.bf16.msra.mxu0 0
      %6938 = vmatprep.subr.bf16.mxu0 0
      %6939 = vmatpush1.bf16.msra.mxu0 0
      %6940 = vmatprep.subr.bf16.mxu0 0
      %6941 = vmatpush1.bf16.msra.mxu0 0
      %6942 = vmatprep.subr.bf16.mxu0 0
      %6943 = vmatpush1.bf16.msra.mxu0 0
      %6944 = vmatprep.subr.bf16.mxu0 0
      %6945 = vmatpush1.bf16.msra.mxu0 0
      %6946 = vmatprep.subr.bf16.mxu0 0
      %6947 = vmatpush1.bf16.msra.mxu0 0
      %6948 = vmatprep.subr.bf16.mxu0 0
      %6949 = vmatpush1.bf16.msra.mxu0 0
      %6950 = vmatprep.subr.bf16.mxu0 0
      %6951 = vmatpush1.bf16.msra.mxu0 0
      %6952 = vmatprep.subr.bf16.mxu0 0
      %6953 = vmatpush1.bf16.msra.mxu0 0
      %6954 = vmatprep.subr.bf16.mxu0 0
      %6955 = vmatpush1.bf16.msra.mxu0 0
      %6956 = vmatprep.subr.bf16.mxu0 0
      %6957 = vmatpush1.bf16.msra.mxu0 0
      %6958 = vmatprep.subr.bf16.mxu0 0
      %6959 = vmatpush1.bf16.msra.mxu0 0
      %6960 = vmatprep.subr.bf16.mxu0 0
      %6961 = vmatpush1.bf16.msra.mxu0 0
      %6962 = vmatprep.subr.bf16.mxu0 0
      %6963 = vmatpush1.bf16.msra.mxu0 0
      %6964 = vmatprep.subr.bf16.mxu0 0
      %6965 = vmatpush1.bf16.msra.mxu0 0
      %6966 = vmatprep.mubr.bf16.mxu0 0
      %6967 = vmatmul.mubr.bf16.gmra.mrb[0].mxu0 %v6932
      %v6968 = vpop.f32.mrb[0].mxu0
      %v6969 = vadd.f32 0.0, %v6968
      %v6970 = vpop.f32.mrb[0].mxu0
      %v6971 = vpop.f32.mrb[0].mxu0
      %v6972 = vadd.f32 0.0, %v6971
      %v6973 = vpop.f32.mrb[0].mxu0
      %6974 = vdwg.mxu0
      %v6976 = vsel %vm4281, %v6357, 0
      %6978 = vmatprep.subr.bf16.mxu0 0
      %6979 = vmatpush1.bf16.msra.mxu0 %v2731
      %6980 = vmatprep.subr.bf16.mxu0 0
      %6981 = vmatpush1.bf16.msra.mxu0 0
      %6982 = vmatprep.subr.bf16.mxu0 0
      %6983 = vmatpush1.bf16.msra.mxu0 0
      %6984 = vmatprep.subr.bf16.mxu0 0
      %6985 = vmatpush1.bf16.msra.mxu0 0
      %6986 = vmatprep.subr.bf16.mxu0 0
      %6987 = vmatpush1.bf16.msra.mxu0 0
      %6988 = vmatprep.subr.bf16.mxu0 0
      %6989 = vmatpush1.bf16.msra.mxu0 0
      %6990 = vmatprep.subr.bf16.mxu0 0
      %6991 = vmatpush1.bf16.msra.mxu0 0
      %6992 = vmatprep.subr.bf16.mxu0 0
      %6993 = vmatpush1.bf16.msra.mxu0 0
      %6994 = vmatprep.subr.bf16.mxu0 0
      %6995 = vmatpush1.bf16.msra.mxu0 0
      %6996 = vmatprep.subr.bf16.mxu0 0
      %6997 = vmatpush1.bf16.msra.mxu0 0
      %6998 = vmatprep.subr.bf16.mxu0 0
      %6999 = vmatpush1.bf16.msra.mxu0 0
      %7000 = vmatprep.subr.bf16.mxu0 0
      %7001 = vmatpush1.bf16.msra.mxu0 0
      %7002 = vmatprep.subr.bf16.mxu0 0
      %7003 = vmatpush1.bf16.msra.mxu0 0
      %7004 = vmatprep.subr.bf16.mxu0 0
      %7005 = vmatpush1.bf16.msra.mxu0 0
      %7006 = vmatprep.subr.bf16.mxu0 0
      %7007 = vmatpush1.bf16.msra.mxu0 0
      %7008 = vmatprep.subr.bf16.mxu0 0
      %7009 = vmatpush1.bf16.msra.mxu0 0
      %7010 = vmatprep.mubr.bf16.mxu0 0
      %7011 = vmatmul.mubr.bf16.gmra.mrb[0].mxu0 %v6976
      %v7012 = vpop.f32.mrb[0].mxu0
      %v7013 = vadd.f32 0.0, %v7012
      %v7014 = vpop.f32.mrb[0].mxu0
      %v7015 = vpop.f32.mrb[0].mxu0
      %v7016 = vadd.f32 0.0, %v7015
      %v7017 = vpop.f32.mrb[0].mxu0
      %7018 = vdwg.mxu0
      %v7020 = vsel %vm4281, %v6358, 0
      %7022 = vmatprep.subr.bf16.mxu0 0
      %7023 = vmatpush1.bf16.msra.mxu0 %v2732
      %7024 = vmatprep.subr.bf16.mxu0 0
      %7025 = vmatpush1.bf16.msra.mxu0 0
      %7026 = vmatprep.subr.bf16.mxu0 0
      %7027 = vmatpush1.bf16.msra.mxu0 0
      %7028 = vmatprep.subr.bf16.mxu0 0
      %7029 = vmatpush1.bf16.msra.mxu0 0
      %7030 = vmatprep.subr.bf16.mxu0 0
      %7031 = vmatpush1.bf16.msra.mxu0 0
      %7032 = vmatprep.subr.bf16.mxu0 0
      %7033 = vmatpush1.bf16.msra.mxu0 0
      %7034 = vmatprep.subr.bf16.mxu0 0
      %7035 = vmatpush1.bf16.msra.mxu0 0
      %7036 = vmatprep.subr.bf16.mxu0 0
      %7037 = vmatpush1.bf16.msra.mxu0 0
      %7038 = vmatprep.subr.bf16.mxu0 0
      %7039 = vmatpush1.bf16.msra.mxu0 0
      %7040 = vmatprep.subr.bf16.mxu0 0
      %7041 = vmatpush1.bf16.msra.mxu0 0
      %7042 = vmatprep.subr.bf16.mxu0 0
      %7043 = vmatpush1.bf16.msra.mxu0 0
      %7044 = vmatprep.subr.bf16.mxu0 0
      %7045 = vmatpush1.bf16.msra.mxu0 0
      %7046 = vmatprep.subr.bf16.mxu0 0
      %7047 = vmatpush1.bf16.msra.mxu0 0
      %7048 = vmatprep.subr.bf16.mxu0 0
      %7049 = vmatpush1.bf16.msra.mxu0 0
      %7050 = vmatprep.subr.bf16.mxu0 0
      %7051 = vmatpush1.bf16.msra.mxu0 0
      %7052 = vmatprep.subr.bf16.mxu0 0
      %7053 = vmatpush1.bf16.msra.mxu0 0
      %7054 = vmatprep.mubr.bf16.mxu0 0
      %7055 = vmatmul.mubr.bf16.gmra.mrb[0].mxu0 %v7020
      %v7056 = vpop.f32.mrb[0].mxu0
      %v7057 = vadd.f32 0.0, %v7056
      %v7058 = vpop.f32.mrb[0].mxu0
      %v7059 = vpop.f32.mrb[0].mxu0
      %v7060 = vadd.f32 0.0, %v7059
      %v7061 = vpop.f32.mrb[0].mxu0
      %7062 = vdwg.mxu0
      %v7063 = vcombine.low %v6397, %v6485
      %v7064 = vcombine.high %v6397, %v6485
      %v7066 = vunpack.c.l.s4 1983009808
      %v7067 = vunpack.c.0.s8 %v7066
      %v7068 = vlaneseq
      %v7069 = vshrl.u32 %v7068, 7
      %v7070 = vsub.s32 %v7067, %v7069
      %v7071 = vrot.slane %v7063, %v7070
      %v7073 = vunpack.c.l.s4 1983009808
      %v7074 = vunpack.c.0.s8 %v7073
      %v7075 = vlaneseq
      %v7076 = vshrl.u32 %v7075, 7
      %v7077 = vsub.s32 %v7074, %v7076
      %v7078 = vrot.slane %v7064, %v7077
      %v7079 = vcombine.low %v6441, %v6529
      %v7080 = vcombine.high %v6441, %v6529
      %v7082 = vunpack.c.l.s4 1983009808
      %v7083 = vunpack.c.0.s8 %v7082
      %v7084 = vlaneseq
      %v7085 = vshrl.u32 %v7084, 7
      %v7086 = vsub.s32 %v7083, %v7085
      %v7087 = vrot.slane %v7079, %v7086
      %v7089 = vunpack.c.l.s4 1983009808
      %v7090 = vunpack.c.0.s8 %v7089
      %v7091 = vlaneseq
      %v7092 = vshrl.u32 %v7091, 7
      %v7093 = vsub.s32 %v7090, %v7092
      %v7094 = vrot.slane %v7080, %v7093
      %v7095 = vcombine.low %v6573, %v6661
      %v7096 = vcombine.high %v6573, %v6661
      %v7098 = vunpack.c.l.s4 1983009808
      %v7099 = vunpack.c.0.s8 %v7098
      %v7100 = vlaneseq
      %v7101 = vshrl.u32 %v7100, 7
      %v7102 = vsub.s32 %v7099, %v7101
      %v7103 = vrot.slane %v7095, %v7102
      %v7105 = vunpack.c.l.s4 1983009808
      %v7106 = vunpack.c.0.s8 %v7105
      %v7107 = vlaneseq
      %v7108 = vshrl.u32 %v7107, 7
      %v7109 = vsub.s32 %v7106, %v7108
      %v7110 = vrot.slane %v7096, %v7109
      %v7111 = vcombine.low %v6617, %v6705
      %v7112 = vcombine.high %v6617, %v6705
      %v7114 = vunpack.c.l.s4 1983009808
      %v7115 = vunpack.c.0.s8 %v7114
      %v7116 = vlaneseq
      %v7117 = vshrl.u32 %v7116, 7
      %v7118 = vsub.s32 %v7115, %v7117
      %v7119 = vrot.slane %v7111, %v7118
      %v7121 = vunpack.c.l.s4 1983009808
      %v7122 = vunpack.c.0.s8 %v7121
      %v7123 = vlaneseq
      %v7124 = vshrl.u32 %v7123, 7
      %v7125 = vsub.s32 %v7122, %v7124
      %v7126 = vrot.slane %v7112, %v7125
      %v7127 = vcombine.low %v7071, %v7087
      %v7128 = vcombine.high %v7071, %v7087
      %v7130 = vunpack.c.l.s4 1934713408
      %v7131 = vunpack.c.0.s8 %v7130
      %v7132 = vlaneseq
      %v7133 = vshrl.u32 %v7132, 7
      %v7134 = vsub.s32 %v7131, %v7133
      %v7135 = vrot.slane %v7127, %v7134
      %v7137 = vunpack.c.l.s4 1934713408
      %v7138 = vunpack.c.0.s8 %v7137
      %v7139 = vlaneseq
      %v7140 = vshrl.u32 %v7139, 7
      %v7141 = vsub.s32 %v7138, %v7140
      %v7142 = vrot.slane %v7128, %v7141
      %v7143 = vcombine.low %v7078, %v7094
      %v7144 = vcombine.high %v7078, %v7094
      %v7146 = vunpack.c.l.s4 1934713408
      %v7147 = vunpack.c.0.s8 %v7146
      %v7148 = vlaneseq
      %v7149 = vshrl.u32 %v7148, 7
      %v7150 = vsub.s32 %v7147, %v7149
      %v7151 = vrot.slane %v7143, %v7150
      %v7153 = vunpack.c.l.s4 1934713408
      %v7154 = vunpack.c.0.s8 %v7153
      %v7155 = vlaneseq
      %v7156 = vshrl.u32 %v7155, 7
      %v7157 = vsub.s32 %v7154, %v7156
      %v7158 = vrot.slane %v7144, %v7157
      %v7159 = vcombine.low %v7103, %v7119
      %v7160 = vcombine.high %v7103, %v7119
      %v7162 = vunpack.c.l.s4 1934713408
      %v7163 = vunpack.c.0.s8 %v7162
      %v7164 = vlaneseq
      %v7165 = vshrl.u32 %v7164, 7
      %v7166 = vsub.s32 %v7163, %v7165
      %v7167 = vrot.slane %v7159, %v7166
      %v7169 = vunpack.c.l.s4 1934713408
      %v7170 = vunpack.c.0.s8 %v7169
      %v7171 = vlaneseq
      %v7172 = vshrl.u32 %v7171, 7
      %v7173 = vsub.s32 %v7170, %v7172
      %v7174 = vrot.slane %v7160, %v7173
      %v7175 = vcombine.low %v7110, %v7126
      %v7176 = vcombine.high %v7110, %v7126
      %v7178 = vunpack.c.l.s4 1934713408
      %v7179 = vunpack.c.0.s8 %v7178
      %v7180 = vlaneseq
      %v7181 = vshrl.u32 %v7180, 7
      %v7182 = vsub.s32 %v7179, %v7181
      %v7183 = vrot.slane %v7175, %v7182
      %v7185 = vunpack.c.l.s4 1934713408
      %v7186 = vunpack.c.0.s8 %v7185
      %v7187 = vlaneseq
      %v7188 = vshrl.u32 %v7187, 7
      %v7189 = vsub.s32 %v7186, %v7188
      %v7190 = vrot.slane %v7176, %v7189
      %v7191 = vcombine.low %v7135, %v7167
      %v7192 = vcombine.high %v7135, %v7167
      %v7193 = vcombine.low %v7142, %v7174
      %v7194 = vcombine.high %v7142, %v7174
      %v7195 = vcombine.low %v7151, %v7183
      %v7196 = vcombine.high %v7151, %v7183
      %v7197 = vcombine.low %v7158, %v7190
      %v7198 = vcombine.high %v7158, %v7190
      %v7199 = vcombine.low %v6749, %v6837
      %v7200 = vcombine.high %v6749, %v6837
      %v7202 = vunpack.c.l.s4 1983009808
      %v7203 = vunpack.c.0.s8 %v7202
      %v7204 = vlaneseq
      %v7205 = vshrl.u32 %v7204, 7
      %v7206 = vsub.s32 %v7203, %v7205
      %v7207 = vrot.slane %v7199, %v7206
      %v7209 = vunpack.c.l.s4 1983009808
      %v7210 = vunpack.c.0.s8 %v7209
      %v7211 = vlaneseq
      %v7212 = vshrl.u32 %v7211, 7
      %v7213 = vsub.s32 %v7210, %v7212
      %v7214 = vrot.slane %v7200, %v7213
      %v7215 = vcombine.low %v6793, %v6881
      %v7216 = vcombine.high %v6793, %v6881
      %v7218 = vunpack.c.l.s4 1983009808
      %v7219 = vunpack.c.0.s8 %v7218
      %v7220 = vlaneseq
      %v7221 = vshrl.u32 %v7220, 7
      %v7222 = vsub.s32 %v7219, %v7221
      %v7223 = vrot.slane %v7215, %v7222
      %v7225 = vunpack.c.l.s4 1983009808
      %v7226 = vunpack.c.0.s8 %v7225
      %v7227 = vlaneseq
      %v7228 = vshrl.u32 %v7227, 7
      %v7229 = vsub.s32 %v7226, %v7228
      %v7230 = vrot.slane %v7216, %v7229
      %v7231 = vcombine.low %v6925, %v7013
      %v7232 = vcombine.high %v6925, %v7013
      %v7234 = vunpack.c.l.s4 1983009808
      %v7235 = vunpack.c.0.s8 %v7234
      %v7236 = vlaneseq
      %v7237 = vshrl.u32 %v7236, 7
      %v7238 = vsub.s32 %v7235, %v7237
      %v7239 = vrot.slane %v7231, %v7238
      %v7241 = vunpack.c.l.s4 1983009808
      %v7242 = vunpack.c.0.s8 %v7241
      %v7243 = vlaneseq
      %v7244 = vshrl.u32 %v7243, 7
      %v7245 = vsub.s32 %v7242, %v7244
      %v7246 = vrot.slane %v7232, %v7245
      %v7247 = vcombine.low %v6969, %v7057
      %v7248 = vcombine.high %v6969, %v7057
      %v7250 = vunpack.c.l.s4 1983009808
      %v7251 = vunpack.c.0.s8 %v7250
      %v7252 = vlaneseq
      %v7253 = vshrl.u32 %v7252, 7
      %v7254 = vsub.s32 %v7251, %v7253
      %v7255 = vrot.slane %v7247, %v7254
      %v7257 = vunpack.c.l.s4 1983009808
      %v7258 = vunpack.c.0.s8 %v7257
      %v7259 = vlaneseq
      %v7260 = vshrl.u32 %v7259, 7
      %v7261 = vsub.s32 %v7258, %v7260
      %v7262 = vrot.slane %v7248, %v7261
      %v7263 = vcombine.low %v7207, %v7223
      %v7264 = vcombine.high %v7207, %v7223
      %v7266 = vunpack.c.l.s4 1934713408
      %v7267 = vunpack.c.0.s8 %v7266
      %v7268 = vlaneseq
      %v7269 = vshrl.u32 %v7268, 7
      %v7270 = vsub.s32 %v7267, %v7269
      %v7271 = vrot.slane %v7263, %v7270
      %v7273 = vunpack.c.l.s4 1934713408
      %v7274 = vunpack.c.0.s8 %v7273
      %v7275 = vlaneseq
      %v7276 = vshrl.u32 %v7275, 7
      %v7277 = vsub.s32 %v7274, %v7276
      %v7278 = vrot.slane %v7264, %v7277
      %v7279 = vcombine.low %v7214, %v7230
      %v7280 = vcombine.high %v7214, %v7230
      %v7282 = vunpack.c.l.s4 1934713408
      %v7283 = vunpack.c.0.s8 %v7282
      %v7284 = vlaneseq
      %v7285 = vshrl.u32 %v7284, 7
      %v7286 = vsub.s32 %v7283, %v7285
      %v7287 = vrot.slane %v7279, %v7286
      %v7289 = vunpack.c.l.s4 1934713408
      %v7290 = vunpack.c.0.s8 %v7289
      %v7291 = vlaneseq
      %v7292 = vshrl.u32 %v7291, 7
      %v7293 = vsub.s32 %v7290, %v7292
      %v7294 = vrot.slane %v7280, %v7293
      %v7295 = vcombine.low %v7239, %v7255
      %v7296 = vcombine.high %v7239, %v7255
      %v7298 = vunpack.c.l.s4 1934713408
      %v7299 = vunpack.c.0.s8 %v7298
      %v7300 = vlaneseq
      %v7301 = vshrl.u32 %v7300, 7
      %v7302 = vsub.s32 %v7299, %v7301
      %v7303 = vrot.slane %v7295, %v7302
      %v7305 = vunpack.c.l.s4 1934713408
      %v7306 = vunpack.c.0.s8 %v7305
      %v7307 = vlaneseq
      %v7308 = vshrl.u32 %v7307, 7
      %v7309 = vsub.s32 %v7306, %v7308
      %v7310 = vrot.slane %v7296, %v7309
      %v7311 = vcombine.low %v7246, %v7262
      %v7312 = vcombine.high %v7246, %v7262
      %v7314 = vunpack.c.l.s4 1934713408
      %v7315 = vunpack.c.0.s8 %v7314
      %v7316 = vlaneseq
      %v7317 = vshrl.u32 %v7316, 7
      %v7318 = vsub.s32 %v7315, %v7317
      %v7319 = vrot.slane %v7311, %v7318
      %v7321 = vunpack.c.l.s4 1934713408
      %v7322 = vunpack.c.0.s8 %v7321
      %v7323 = vlaneseq
      %v7324 = vshrl.u32 %v7323, 7
      %v7325 = vsub.s32 %v7322, %v7324
      %v7326 = vrot.slane %v7312, %v7325
      %v7327 = vcombine.low %v7271, %v7303
      %v7328 = vcombine.high %v7271, %v7303
      %v7329 = vcombine.low %v7278, %v7310
      %v7330 = vcombine.high %v7278, %v7310
      %v7331 = vcombine.low %v7287, %v7319
      %v7332 = vcombine.high %v7287, %v7319
      %v7333 = vcombine.low %v7294, %v7326
      %v7334 = vcombine.high %v7294, %v7326
      %v7335 = vcombine.low %v6400, %v6488
      %v7336 = vcombine.high %v6400, %v6488
      %v7338 = vunpack.c.l.s4 1983009808
      %v7339 = vunpack.c.0.s8 %v7338
      %v7340 = vlaneseq
      %v7341 = vshrl.u32 %v7340, 7
      %v7342 = vsub.s32 %v7339, %v7341
      %v7343 = vrot.slane %v7335, %v7342
      %v7345 = vunpack.c.l.s4 1983009808
      %v7346 = vunpack.c.0.s8 %v7345
      %v7347 = vlaneseq
      %v7348 = vshrl.u32 %v7347, 7
      %v7349 = vsub.s32 %v7346, %v7348
      %v7350 = vrot.slane %v7336, %v7349
      %v7351 = vcombine.low %v6444, %v6532
      %v7352 = vcombine.high %v6444, %v6532
      %v7354 = vunpack.c.l.s4 1983009808
      %v7355 = vunpack.c.0.s8 %v7354
      %v7356 = vlaneseq
      %v7357 = vshrl.u32 %v7356, 7
      %v7358 = vsub.s32 %v7355, %v7357
      %v7359 = vrot.slane %v7351, %v7358
      %v7361 = vunpack.c.l.s4 1983009808
      %v7362 = vunpack.c.0.s8 %v7361
      %v7363 = vlaneseq
      %v7364 = vshrl.u32 %v7363, 7
      %v7365 = vsub.s32 %v7362, %v7364
      %v7366 = vrot.slane %v7352, %v7365
      %v7367 = vcombine.low %v6576, %v6664
      %v7368 = vcombine.high %v6576, %v6664
      %v7370 = vunpack.c.l.s4 1983009808
      %v7371 = vunpack.c.0.s8 %v7370
      %v7372 = vlaneseq
      %v7373 = vshrl.u32 %v7372, 7
      %v7374 = vsub.s32 %v7371, %v7373
      %v7375 = vrot.slane %v7367, %v7374
      %v7377 = vunpack.c.l.s4 1983009808
      %v7378 = vunpack.c.0.s8 %v7377
      %v7379 = vlaneseq
      %v7380 = vshrl.u32 %v7379, 7
      %v7381 = vsub.s32 %v7378, %v7380
      %v7382 = vrot.slane %v7368, %v7381
      %v7383 = vcombine.low %v6620, %v6708
      %v7384 = vcombine.high %v6620, %v6708
      %v7386 = vunpack.c.l.s4 1983009808
      %v7387 = vunpack.c.0.s8 %v7386
      %v7388 = vlaneseq
      %v7389 = vshrl.u32 %v7388, 7
      %v7390 = vsub.s32 %v7387, %v7389
      %v7391 = vrot.slane %v7383, %v7390
      %v7393 = vunpack.c.l.s4 1983009808
      %v7394 = vunpack.c.0.s8 %v7393
      %v7395 = vlaneseq
      %v7396 = vshrl.u32 %v7395, 7
      %v7397 = vsub.s32 %v7394, %v7396
      %v7398 = vrot.slane %v7384, %v7397
      %v7399 = vcombine.low %v7343, %v7359
      %v7400 = vcombine.high %v7343, %v7359
      %v7402 = vunpack.c.l.s4 1934713408
      %v7403 = vunpack.c.0.s8 %v7402
      %v7404 = vlaneseq
      %v7405 = vshrl.u32 %v7404, 7
      %v7406 = vsub.s32 %v7403, %v7405
      %v7407 = vrot.slane %v7399, %v7406
      %v7409 = vunpack.c.l.s4 1934713408
      %v7410 = vunpack.c.0.s8 %v7409
      %v7411 = vlaneseq
      %v7412 = vshrl.u32 %v7411, 7
      %v7413 = vsub.s32 %v7410, %v7412
      %v7414 = vrot.slane %v7400, %v7413
      %v7415 = vcombine.low %v7350, %v7366
      %v7416 = vcombine.high %v7350, %v7366
      %v7418 = vunpack.c.l.s4 1934713408
      %v7419 = vunpack.c.0.s8 %v7418
      %v7420 = vlaneseq
      %v7421 = vshrl.u32 %v7420, 7
      %v7422 = vsub.s32 %v7419, %v7421
      %v7423 = vrot.slane %v7415, %v7422
      %v7425 = vunpack.c.l.s4 1934713408
      %v7426 = vunpack.c.0.s8 %v7425
      %v7427 = vlaneseq
      %v7428 = vshrl.u32 %v7427, 7
      %v7429 = vsub.s32 %v7426, %v7428
      %v7430 = vrot.slane %v7416, %v7429
      %v7431 = vcombine.low %v7375, %v7391
      %v7432 = vcombine.high %v7375, %v7391
      %v7434 = vunpack.c.l.s4 1934713408
      %v7435 = vunpack.c.0.s8 %v7434
      %v7436 = vlaneseq
      %v7437 = vshrl.u32 %v7436, 7
      %v7438 = vsub.s32 %v7435, %v7437
      %v7439 = vrot.slane %v7431, %v7438
      %v7441 = vunpack.c.l.s4 1934713408
      %v7442 = vunpack.c.0.s8 %v7441
      %v7443 = vlaneseq
      %v7444 = vshrl.u32 %v7443, 7
      %v7445 = vsub.s32 %v7442, %v7444
      %v7446 = vrot.slane %v7432, %v7445
      %v7447 = vcombine.low %v7382, %v7398
      %v7448 = vcombine.high %v7382, %v7398
      %v7450 = vunpack.c.l.s4 1934713408
      %v7451 = vunpack.c.0.s8 %v7450
      %v7452 = vlaneseq
      %v7453 = vshrl.u32 %v7452, 7
      %v7454 = vsub.s32 %v7451, %v7453
      %v7455 = vrot.slane %v7447, %v7454
      %v7457 = vunpack.c.l.s4 1934713408
      %v7458 = vunpack.c.0.s8 %v7457
      %v7459 = vlaneseq
      %v7460 = vshrl.u32 %v7459, 7
      %v7461 = vsub.s32 %v7458, %v7460
      %v7462 = vrot.slane %v7448, %v7461
      %v7463 = vcombine.low %v7407, %v7439
      %v7464 = vcombine.high %v7407, %v7439
      %v7465 = vcombine.low %v7414, %v7446
      %v7466 = vcombine.high %v7414, %v7446
      %v7467 = vcombine.low %v7423, %v7455
      %v7468 = vcombine.high %v7423, %v7455
      %v7469 = vcombine.low %v7430, %v7462
      %v7470 = vcombine.high %v7430, %v7462
      %v7471 = vcombine.low %v6752, %v6840
      %v7472 = vcombine.high %v6752, %v6840
      %v7474 = vunpack.c.l.s4 1983009808
      %v7475 = vunpack.c.0.s8 %v7474
      %v7476 = vlaneseq
      %v7477 = vshrl.u32 %v7476, 7
      %v7478 = vsub.s32 %v7475, %v7477
      %v7479 = vrot.slane %v7471, %v7478
      %v7481 = vunpack.c.l.s4 1983009808
      %v7482 = vunpack.c.0.s8 %v7481
      %v7483 = vlaneseq
      %v7484 = vshrl.u32 %v7483, 7
      %v7485 = vsub.s32 %v7482, %v7484
      %v7486 = vrot.slane %v7472, %v7485
      %v7487 = vcombine.low %v6796, %v6884
      %v7488 = vcombine.high %v6796, %v6884
      %v7490 = vunpack.c.l.s4 1983009808
      %v7491 = vunpack.c.0.s8 %v7490
      %v7492 = vlaneseq
      %v7493 = vshrl.u32 %v7492, 7
      %v7494 = vsub.s32 %v7491, %v7493
      %v7495 = vrot.slane %v7487, %v7494
      %v7497 = vunpack.c.l.s4 1983009808
      %v7498 = vunpack.c.0.s8 %v7497
      %v7499 = vlaneseq
      %v7500 = vshrl.u32 %v7499, 7
      %v7501 = vsub.s32 %v7498, %v7500
      %v7502 = vrot.slane %v7488, %v7501
      %v7503 = vcombine.low %v6928, %v7016
      %v7504 = vcombine.high %v6928, %v7016
      %v7506 = vunpack.c.l.s4 1983009808
      %v7507 = vunpack.c.0.s8 %v7506
      %v7508 = vlaneseq
      %v7509 = vshrl.u32 %v7508, 7
      %v7510 = vsub.s32 %v7507, %v7509
      %v7511 = vrot.slane %v7503, %v7510
      %v7513 = vunpack.c.l.s4 1983009808
      %v7514 = vunpack.c.0.s8 %v7513
      %v7515 = vlaneseq
      %v7516 = vshrl.u32 %v7515, 7
      %v7517 = vsub.s32 %v7514, %v7516
      %v7518 = vrot.slane %v7504, %v7517
      %v7519 = vcombine.low %v6972, %v7060
      %v7520 = vcombine.high %v6972, %v7060
      %v7522 = vunpack.c.l.s4 1983009808
      %v7523 = vunpack.c.0.s8 %v7522
      %v7524 = vlaneseq
      %v7525 = vshrl.u32 %v7524, 7
      %v7526 = vsub.s32 %v7523, %v7525
      %v7527 = vrot.slane %v7519, %v7526
      %v7529 = vunpack.c.l.s4 1983009808
      %v7530 = vunpack.c.0.s8 %v7529
      %v7531 = vlaneseq
      %v7532 = vshrl.u32 %v7531, 7
      %v7533 = vsub.s32 %v7530, %v7532
      %v7534 = vrot.slane %v7520, %v7533
      %v7535 = vcombine.low %v7479, %v7495
      %v7536 = vcombine.high %v7479, %v7495
      %v7538 = vunpack.c.l.s4 1934713408
      %v7539 = vunpack.c.0.s8 %v7538
      %v7540 = vlaneseq
      %v7541 = vshrl.u32 %v7540, 7
      %v7542 = vsub.s32 %v7539, %v7541
      %v7543 = vrot.slane %v7535, %v7542
      %v7545 = vunpack.c.l.s4 1934713408
      %v7546 = vunpack.c.0.s8 %v7545
      %v7547 = vlaneseq
      %v7548 = vshrl.u32 %v7547, 7
      %v7549 = vsub.s32 %v7546, %v7548
      %v7550 = vrot.slane %v7536, %v7549
      %v7551 = vcombine.low %v7486, %v7502
      %v7552 = vcombine.high %v7486, %v7502
      %v7554 = vunpack.c.l.s4 1934713408
      %v7555 = vunpack.c.0.s8 %v7554
      %v7556 = vlaneseq
      %v7557 = vshrl.u32 %v7556, 7
      %v7558 = vsub.s32 %v7555, %v7557
      %v7559 = vrot.slane %v7551, %v7558
      %v7561 = vunpack.c.l.s4 1934713408
      %v7562 = vunpack.c.0.s8 %v7561
      %v7563 = vlaneseq
      %v7564 = vshrl.u32 %v7563, 7
      %v7565 = vsub.s32 %v7562, %v7564
      %v7566 = vrot.slane %v7552, %v7565
      %v7567 = vcombine.low %v7511, %v7527
      %v7568 = vcombine.high %v7511, %v7527
      %v7570 = vunpack.c.l.s4 1934713408
      %v7571 = vunpack.c.0.s8 %v7570
      %v7572 = vlaneseq
      %v7573 = vshrl.u32 %v7572, 7
      %v7574 = vsub.s32 %v7571, %v7573
      %v7575 = vrot.slane %v7567, %v7574
      %v7577 = vunpack.c.l.s4 1934713408
      %v7578 = vunpack.c.0.s8 %v7577
      %v7579 = vlaneseq
      %v7580 = vshrl.u32 %v7579, 7
      %v7581 = vsub.s32 %v7578, %v7580
      %v7582 = vrot.slane %v7568, %v7581
      %v7583 = vcombine.low %v7518, %v7534
      %v7584 = vcombine.high %v7518, %v7534
      %v7586 = vunpack.c.l.s4 1934713408
      %v7587 = vunpack.c.0.s8 %v7586
      %v7588 = vlaneseq
      %v7589 = vshrl.u32 %v7588, 7
      %v7590 = vsub.s32 %v7587, %v7589
      %v7591 = vrot.slane %v7583, %v7590
      %v7593 = vunpack.c.l.s4 1934713408
      %v7594 = vunpack.c.0.s8 %v7593
      %v7595 = vlaneseq
      %v7596 = vshrl.u32 %v7595, 7
      %v7597 = vsub.s32 %v7594, %v7596
      %v7598 = vrot.slane %v7584, %v7597
      %v7599 = vcombine.low %v7543, %v7575
      %v7600 = vcombine.high %v7543, %v7575
      %v7601 = vcombine.low %v7550, %v7582
      %v7602 = vcombine.high %v7550, %v7582
      %v7603 = vcombine.low %v7559, %v7591
      %v7604 = vcombine.high %v7559, %v7591
      %v7605 = vcombine.low %v7566, %v7598
      %v7606 = vcombine.high %v7566, %v7598
      %v7608 = vsel %vm4281, %v6327, 0
      %7610 = vmatprep.subr.bf16.mxu0 0
      %7611 = vmatpush1.bf16.msra.mxu0 %v2669
      %7612 = vmatprep.subr.bf16.mxu0 0
      %7613 = vmatpush1.bf16.msra.mxu0 0
      %7614 = vmatprep.subr.bf16.mxu0 0
      %7615 = vmatpush1.bf16.msra.mxu0 0
      %7616 = vmatprep.subr.bf16.mxu0 0
      %7617 = vmatpush1.bf16.msra.mxu0 0
      %7618 = vmatprep.subr.bf16.mxu0 0
      %7619 = vmatpush1.bf16.msra.mxu0 0
      %7620 = vmatprep.subr.bf16.mxu0 0
      %7621 = vmatpush1.bf16.msra.mxu0 0
      %7622 = vmatprep.subr.bf16.mxu0 0
      %7623 = vmatpush1.bf16.msra.mxu0 0
      %7624 = vmatprep.subr.bf16.mxu0 0
      %7625 = vmatpush1.bf16.msra.mxu0 0
      %7626 = vmatprep.subr.bf16.mxu0 0
      %7627 = vmatpush1.bf16.msra.mxu0 0
      %7628 = vmatprep.subr.bf16.mxu0 0
      %7629 = vmatpush1.bf16.msra.mxu0 0
      %7630 = vmatprep.subr.bf16.mxu0 0
      %7631 = vmatpush1.bf16.msra.mxu0 0
      %7632 = vmatprep.subr.bf16.mxu0 0
      %7633 = vmatpush1.bf16.msra.mxu0 0
      %7634 = vmatprep.subr.bf16.mxu0 0
      %7635 = vmatpush1.bf16.msra.mxu0 0
      %7636 = vmatprep.subr.bf16.mxu0 0
      %7637 = vmatpush1.bf16.msra.mxu0 0
      %7638 = vmatprep.subr.bf16.mxu0 0
      %7639 = vmatpush1.bf16.msra.mxu0 0
      %7640 = vmatprep.subr.bf16.mxu0 0
      %7641 = vmatpush1.bf16.msra.mxu0 0
      %7642 = vmatprep.mubr.bf16.mxu0 0
      %7643 = vmatmul.mubr.bf16.gmra.mrb[0].mxu0 %v7608
      %v7644 = vpop.f32.mrb[0].mxu0
      %v7645 = vadd.f32 %v7191, %v7644
      %v7646 = vpop.f32.mrb[0].mxu0
      %v7647 = vpop.f32.mrb[0].mxu0
      %v7648 = vadd.f32 %v7327, %v7647
      %v7649 = vpop.f32.mrb[0].mxu0
      %7650 = vdwg.mxu0
      %v7652 = vsel %vm4281, %v6328, 0
      %7654 = vmatprep.subr.bf16.mxu0 0
      %7655 = vmatpush1.bf16.msra.mxu0 %v2670
      %7656 = vmatprep.subr.bf16.mxu0 0
      %7657 = vmatpush1.bf16.msra.mxu0 0
      %7658 = vmatprep.subr.bf16.mxu0 0
      %7659 = vmatpush1.bf16.msra.mxu0 0
      %7660 = vmatprep.subr.bf16.mxu0 0
      %7661 = vmatpush1.bf16.msra.mxu0 0
      %7662 = vmatprep.subr.bf16.mxu0 0
      %7663 = vmatpush1.bf16.msra.mxu0 0
      %7664 = vmatprep.subr.bf16.mxu0 0
      %7665 = vmatpush1.bf16.msra.mxu0 0
      %7666 = vmatprep.subr.bf16.mxu0 0
      %7667 = vmatpush1.bf16.msra.mxu0 0
      %7668 = vmatprep.subr.bf16.mxu0 0
      %7669 = vmatpush1.bf16.msra.mxu0 0
      %7670 = vmatprep.subr.bf16.mxu0 0
      %7671 = vmatpush1.bf16.msra.mxu0 0
      %7672 = vmatprep.subr.bf16.mxu0 0
      %7673 = vmatpush1.bf16.msra.mxu0 0
      %7674 = vmatprep.subr.bf16.mxu0 0
      %7675 = vmatpush1.bf16.msra.mxu0 0
      %7676 = vmatprep.subr.bf16.mxu0 0
      %7677 = vmatpush1.bf16.msra.mxu0 0
      %7678 = vmatprep.subr.bf16.mxu0 0
      %7679 = vmatpush1.bf16.msra.mxu0 0
      %7680 = vmatprep.subr.bf16.mxu0 0
      %7681 = vmatpush1.bf16.msra.mxu0 0
      %7682 = vmatprep.subr.bf16.mxu0 0
      %7683 = vmatpush1.bf16.msra.mxu0 0
      %7684 = vmatprep.subr.bf16.mxu0 0
      %7685 = vmatpush1.bf16.msra.mxu0 0
      %7686 = vmatprep.mubr.bf16.mxu0 0
      %7687 = vmatmul.mubr.bf16.gmra.mrb[0].mxu0 %v7652
      %v7688 = vpop.f32.mrb[0].mxu0
      %v7689 = vadd.f32 %v7192, %v7688
      %v7690 = vpop.f32.mrb[0].mxu0
      %v7691 = vpop.f32.mrb[0].mxu0
      %v7692 = vadd.f32 %v7328, %v7691
      %v7693 = vpop.f32.mrb[0].mxu0
      %7694 = vdwg.mxu0
      %v7696 = vsel %vm4281, %v6329, 0
      %7698 = vmatprep.subr.bf16.mxu0 0
      %7699 = vmatpush1.bf16.msra.mxu0 %v2671
      %7700 = vmatprep.subr.bf16.mxu0 0
      %7701 = vmatpush1.bf16.msra.mxu0 0
      %7702 = vmatprep.subr.bf16.mxu0 0
      %7703 = vmatpush1.bf16.msra.mxu0 0
      %7704 = vmatprep.subr.bf16.mxu0 0
      %7705 = vmatpush1.bf16.msra.mxu0 0
      %7706 = vmatprep.subr.bf16.mxu0 0
      %7707 = vmatpush1.bf16.msra.mxu0 0
      %7708 = vmatprep.subr.bf16.mxu0 0
      %7709 = vmatpush1.bf16.msra.mxu0 0
      %7710 = vmatprep.subr.bf16.mxu0 0
      %7711 = vmatpush1.bf16.msra.mxu0 0
      %7712 = vmatprep.subr.bf16.mxu0 0
      %7713 = vmatpush1.bf16.msra.mxu0 0
      %7714 = vmatprep.subr.bf16.mxu0 0
      %7715 = vmatpush1.bf16.msra.mxu0 0
      %7716 = vmatprep.subr.bf16.mxu0 0
      %7717 = vmatpush1.bf16.msra.mxu0 0
      %7718 = vmatprep.subr.bf16.mxu0 0
      %7719 = vmatpush1.bf16.msra.mxu0 0
      %7720 = vmatprep.subr.bf16.mxu0 0
      %7721 = vmatpush1.bf16.msra.mxu0 0
      %7722 = vmatprep.subr.bf16.mxu0 0
      %7723 = vmatpush1.bf16.msra.mxu0 0
      %7724 = vmatprep.subr.bf16.mxu0 0
      %7725 = vmatpush1.bf16.msra.mxu0 0
      %7726 = vmatprep.subr.bf16.mxu0 0
      %7727 = vmatpush1.bf16.msra.mxu0 0
      %7728 = vmatprep.subr.bf16.mxu0 0
      %7729 = vmatpush1.bf16.msra.mxu0 0
      %7730 = vmatprep.mubr.bf16.mxu0 0
      %7731 = vmatmul.mubr.bf16.gmra.mrb[0].mxu0 %v7696
      %v7732 = vpop.f32.mrb[0].mxu0
      %v7733 = vadd.f32 %v7193, %v7732
      %v7734 = vpop.f32.mrb[0].mxu0
      %v7735 = vpop.f32.mrb[0].mxu0
      %v7736 = vadd.f32 %v7329, %v7735
      %v7737 = vpop.f32.mrb[0].mxu0
      %7738 = vdwg.mxu0
      %v7740 = vsel %vm4281, %v6330, 0
      %7742 = vmatprep.subr.bf16.mxu0 0
      %7743 = vmatpush1.bf16.msra.mxu0 %v2672
      %7744 = vmatprep.subr.bf16.mxu0 0
      %7745 = vmatpush1.bf16.msra.mxu0 0
      %7746 = vmatprep.subr.bf16.mxu0 0
      %7747 = vmatpush1.bf16.msra.mxu0 0
      %7748 = vmatprep.subr.bf16.mxu0 0
      %7749 = vmatpush1.bf16.msra.mxu0 0
      %7750 = vmatprep.subr.bf16.mxu0 0
      %7751 = vmatpush1.bf16.msra.mxu0 0
      %7752 = vmatprep.subr.bf16.mxu0 0
      %7753 = vmatpush1.bf16.msra.mxu0 0
      %7754 = vmatprep.subr.bf16.mxu0 0
      %7755 = vmatpush1.bf16.msra.mxu0 0
      %7756 = vmatprep.subr.bf16.mxu0 0
      %7757 = vmatpush1.bf16.msra.mxu0 0
      %7758 = vmatprep.subr.bf16.mxu0 0
      %7759 = vmatpush1.bf16.msra.mxu0 0
      %7760 = vmatprep.subr.bf16.mxu0 0
      %7761 = vmatpush1.bf16.msra.mxu0 0
      %7762 = vmatprep.subr.bf16.mxu0 0
      %7763 = vmatpush1.bf16.msra.mxu0 0
      %7764 = vmatprep.subr.bf16.mxu0 0
      %7765 = vmatpush1.bf16.msra.mxu0 0
      %7766 = vmatprep.subr.bf16.mxu0 0
      %7767 = vmatpush1.bf16.msra.mxu0 0
      %7768 = vmatprep.subr.bf16.mxu0 0
      %7769 = vmatpush1.bf16.msra.mxu0 0
      %7770 = vmatprep.subr.bf16.mxu0 0
      %7771 = vmatpush1.bf16.msra.mxu0 0
      %7772 = vmatprep.subr.bf16.mxu0 0
      %7773 = vmatpush1.bf16.msra.mxu0 0
      %7774 = vmatprep.mubr.bf16.mxu0 0
      %7775 = vmatmul.mubr.bf16.gmra.mrb[0].mxu0 %v7740
      %v7776 = vpop.f32.mrb[0].mxu0
      %v7777 = vadd.f32 %v7194, %v7776
      %v7778 = vpop.f32.mrb[0].mxu0
      %v7779 = vpop.f32.mrb[0].mxu0
      %v7780 = vadd.f32 %v7330, %v7779
      %v7781 = vpop.f32.mrb[0].mxu0
      %7782 = vdwg.mxu0
      %v7784 = vsel %vm4281, %v6331, 0
      %7786 = vmatprep.subr.bf16.mxu0 0
      %7787 = vmatpush1.bf16.msra.mxu0 %v2673
      %7788 = vmatprep.subr.bf16.mxu0 0
      %7789 = vmatpush1.bf16.msra.mxu0 0
      %7790 = vmatprep.subr.bf16.mxu0 0
      %7791 = vmatpush1.bf16.msra.mxu0 0
      %7792 = vmatprep.subr.bf16.mxu0 0
      %7793 = vmatpush1.bf16.msra.mxu0 0
      %7794 = vmatprep.subr.bf16.mxu0 0
      %7795 = vmatpush1.bf16.msra.mxu0 0
      %7796 = vmatprep.subr.bf16.mxu0 0
      %7797 = vmatpush1.bf16.msra.mxu0 0
      %7798 = vmatprep.subr.bf16.mxu0 0
      %7799 = vmatpush1.bf16.msra.mxu0 0
      %7800 = vmatprep.subr.bf16.mxu0 0
      %7801 = vmatpush1.bf16.msra.mxu0 0
      %7802 = vmatprep.subr.bf16.mxu0 0
      %7803 = vmatpush1.bf16.msra.mxu0 0
      %7804 = vmatprep.subr.bf16.mxu0 0
      %7805 = vmatpush1.bf16.msra.mxu0 0
      %7806 = vmatprep.subr.bf16.mxu0 0
      %7807 = vmatpush1.bf16.msra.mxu0 0
      %7808 = vmatprep.subr.bf16.mxu0 0
      %7809 = vmatpush1.bf16.msra.mxu0 0
      %7810 = vmatprep.subr.bf16.mxu0 0
      %7811 = vmatpush1.bf16.msra.mxu0 0
      %7812 = vmatprep.subr.bf16.mxu0 0
      %7813 = vmatpush1.bf16.msra.mxu0 0
      %7814 = vmatprep.subr.bf16.mxu0 0
      %7815 = vmatpush1.bf16.msra.mxu0 0
      %7816 = vmatprep.subr.bf16.mxu0 0
      %7817 = vmatpush1.bf16.msra.mxu0 0
      %7818 = vmatprep.mubr.bf16.mxu0 0
      %7819 = vmatmul.mubr.bf16.gmra.mrb[0].mxu0 %v7784
      %v7820 = vpop.f32.mrb[0].mxu0
      %v7821 = vadd.f32 %v7195, %v7820
      %v7822 = vpop.f32.mrb[0].mxu0
      %v7823 = vpop.f32.mrb[0].mxu0
      %v7824 = vadd.f32 %v7331, %v7823
      %v7825 = vpop.f32.mrb[0].mxu0
      %7826 = vdwg.mxu0
      %v7828 = vsel %vm4281, %v6332, 0
      %7830 = vmatprep.subr.bf16.mxu0 0
      %7831 = vmatpush1.bf16.msra.mxu0 %v2674
      %7832 = vmatprep.subr.bf16.mxu0 0
      %7833 = vmatpush1.bf16.msra.mxu0 0
      %7834 = vmatprep.subr.bf16.mxu0 0
      %7835 = vmatpush1.bf16.msra.mxu0 0
      %7836 = vmatprep.subr.bf16.mxu0 0
      %7837 = vmatpush1.bf16.msra.mxu0 0
      %7838 = vmatprep.subr.bf16.mxu0 0
      %7839 = vmatpush1.bf16.msra.mxu0 0
      %7840 = vmatprep.subr.bf16.mxu0 0
      %7841 = vmatpush1.bf16.msra.mxu0 0
      %7842 = vmatprep.subr.bf16.mxu0 0
      %7843 = vmatpush1.bf16.msra.mxu0 0
      %7844 = vmatprep.subr.bf16.mxu0 0
      %7845 = vmatpush1.bf16.msra.mxu0 0
      %7846 = vmatprep.subr.bf16.mxu0 0
      %7847 = vmatpush1.bf16.msra.mxu0 0
      %7848 = vmatprep.subr.bf16.mxu0 0
      %7849 = vmatpush1.bf16.msra.mxu0 0
      %7850 = vmatprep.subr.bf16.mxu0 0
      %7851 = vmatpush1.bf16.msra.mxu0 0
      %7852 = vmatprep.subr.bf16.mxu0 0
      %7853 = vmatpush1.bf16.msra.mxu0 0
      %7854 = vmatprep.subr.bf16.mxu0 0
      %7855 = vmatpush1.bf16.msra.mxu0 0
      %7856 = vmatprep.subr.bf16.mxu0 0
      %7857 = vmatpush1.bf16.msra.mxu0 0
      %7858 = vmatprep.subr.bf16.mxu0 0
      %7859 = vmatpush1.bf16.msra.mxu0 0
      %7860 = vmatprep.subr.bf16.mxu0 0
      %7861 = vmatpush1.bf16.msra.mxu0 0
      %7862 = vmatprep.mubr.bf16.mxu0 0
      %7863 = vmatmul.mubr.bf16.gmra.mrb[0].mxu0 %v7828
      %v7864 = vpop.f32.mrb[0].mxu0
      %v7865 = vadd.f32 %v7196, %v7864
      %v7866 = vpop.f32.mrb[0].mxu0
      %v7867 = vpop.f32.mrb[0].mxu0
      %v7868 = vadd.f32 %v7332, %v7867
      %v7869 = vpop.f32.mrb[0].mxu0
      %7870 = vdwg.mxu0
      %v7872 = vsel %vm4281, %v6333, 0
      %7874 = vmatprep.subr.bf16.mxu0 0
      %7875 = vmatpush1.bf16.msra.mxu0 %v2675
      %7876 = vmatprep.subr.bf16.mxu0 0
      %7877 = vmatpush1.bf16.msra.mxu0 0
      %7878 = vmatprep.subr.bf16.mxu0 0
      %7879 = vmatpush1.bf16.msra.mxu0 0
      %7880 = vmatprep.subr.bf16.mxu0 0
      %7881 = vmatpush1.bf16.msra.mxu0 0
      %7882 = vmatprep.subr.bf16.mxu0 0
      %7883 = vmatpush1.bf16.msra.mxu0 0
      %7884 = vmatprep.subr.bf16.mxu0 0
      %7885 = vmatpush1.bf16.msra.mxu0 0
      %7886 = vmatprep.subr.bf16.mxu0 0
      %7887 = vmatpush1.bf16.msra.mxu0 0
      %7888 = vmatprep.subr.bf16.mxu0 0
      %7889 = vmatpush1.bf16.msra.mxu0 0
      %7890 = vmatprep.subr.bf16.mxu0 0
      %7891 = vmatpush1.bf16.msra.mxu0 0
      %7892 = vmatprep.subr.bf16.mxu0 0
      %7893 = vmatpush1.bf16.msra.mxu0 0
      %7894 = vmatprep.subr.bf16.mxu0 0
      %7895 = vmatpush1.bf16.msra.mxu0 0
      %7896 = vmatprep.subr.bf16.mxu0 0
      %7897 = vmatpush1.bf16.msra.mxu0 0
      %7898 = vmatprep.subr.bf16.mxu0 0
      %7899 = vmatpush1.bf16.msra.mxu0 0
      %7900 = vmatprep.subr.bf16.mxu0 0
      %7901 = vmatpush1.bf16.msra.mxu0 0
      %7902 = vmatprep.subr.bf16.mxu0 0
      %7903 = vmatpush1.bf16.msra.mxu0 0
      %7904 = vmatprep.subr.bf16.mxu0 0
      %7905 = vmatpush1.bf16.msra.mxu0 0
      %7906 = vmatprep.mubr.bf16.mxu0 0
      %7907 = vmatmul.mubr.bf16.gmra.mrb[0].mxu0 %v7872
      %v7908 = vpop.f32.mrb[0].mxu0
      %v7909 = vadd.f32 %v7197, %v7908
      %v7910 = vpop.f32.mrb[0].mxu0
      %v7911 = vpop.f32.mrb[0].mxu0
      %v7912 = vadd.f32 %v7333, %v7911
      %v7913 = vpop.f32.mrb[0].mxu0
      %7914 = vdwg.mxu0
      %v7916 = vsel %vm4281, %v6334, 0
      %7918 = vmatprep.subr.bf16.mxu0 0
      %7919 = vmatpush1.bf16.msra.mxu0 %v2676
      %7920 = vmatprep.subr.bf16.mxu0 0
      %7921 = vmatpush1.bf16.msra.mxu0 0
      %7922 = vmatprep.subr.bf16.mxu0 0
      %7923 = vmatpush1.bf16.msra.mxu0 0
      %7924 = vmatprep.subr.bf16.mxu0 0
      %7925 = vmatpush1.bf16.msra.mxu0 0
      %7926 = vmatprep.subr.bf16.mxu0 0
      %7927 = vmatpush1.bf16.msra.mxu0 0
      %7928 = vmatprep.subr.bf16.mxu0 0
      %7929 = vmatpush1.bf16.msra.mxu0 0
      %7930 = vmatprep.subr.bf16.mxu0 0
      %7931 = vmatpush1.bf16.msra.mxu0 0
      %7932 = vmatprep.subr.bf16.mxu0 0
      %7933 = vmatpush1.bf16.msra.mxu0 0
      %7934 = vmatprep.subr.bf16.mxu0 0
      %7935 = vmatpush1.bf16.msra.mxu0 0
      %7936 = vmatprep.subr.bf16.mxu0 0
      %7937 = vmatpush1.bf16.msra.mxu0 0
      %7938 = vmatprep.subr.bf16.mxu0 0
      %7939 = vmatpush1.bf16.msra.mxu0 0
      %7940 = vmatprep.subr.bf16.mxu0 0
      %7941 = vmatpush1.bf16.msra.mxu0 0
      %7942 = vmatprep.subr.bf16.mxu0 0
      %7943 = vmatpush1.bf16.msra.mxu0 0
      %7944 = vmatprep.subr.bf16.mxu0 0
      %7945 = vmatpush1.bf16.msra.mxu0 0
      %7946 = vmatprep.subr.bf16.mxu0 0
      %7947 = vmatpush1.bf16.msra.mxu0 0
      %7948 = vmatprep.subr.bf16.mxu0 0
      %7949 = vmatpush1.bf16.msra.mxu0 0
      %7950 = vmatprep.mubr.bf16.mxu0 0
      %7951 = vmatmul.mubr.bf16.gmra.mrb[0].mxu0 %v7916
      %v7952 = vpop.f32.mrb[0].mxu0
      %v7953 = vadd.f32 %v7198, %v7952
      %v7954 = vpop.f32.mrb[0].mxu0
      %v7955 = vpop.f32.mrb[0].mxu0
      %v7956 = vadd.f32 %v7334, %v7955
      %v7957 = vpop.f32.mrb[0].mxu0
      %7958 = vdwg.mxu0
      %v7960 = vsel %vm4281, %v6335, 0
      %7962 = vmatprep.subr.bf16.mxu0 0
      %7963 = vmatpush1.bf16.msra.mxu0 %v2677
      %7964 = vmatprep.subr.bf16.mxu0 0
      %7965 = vmatpush1.bf16.msra.mxu0 0
      %7966 = vmatprep.subr.bf16.mxu0 0
      %7967 = vmatpush1.bf16.msra.mxu0 0
      %7968 = vmatprep.subr.bf16.mxu0 0
      %7969 = vmatpush1.bf16.msra.mxu0 0
      %7970 = vmatprep.subr.bf16.mxu0 0
      %7971 = vmatpush1.bf16.msra.mxu0 0
      %7972 = vmatprep.subr.bf16.mxu0 0
      %7973 = vmatpush1.bf16.msra.mxu0 0
      %7974 = vmatprep.subr.bf16.mxu0 0
      %7975 = vmatpush1.bf16.msra.mxu0 0
      %7976 = vmatprep.subr.bf16.mxu0 0
      %7977 = vmatpush1.bf16.msra.mxu0 0
      %7978 = vmatprep.subr.bf16.mxu0 0
      %7979 = vmatpush1.bf16.msra.mxu0 0
      %7980 = vmatprep.subr.bf16.mxu0 0
      %7981 = vmatpush1.bf16.msra.mxu0 0
      %7982 = vmatprep.subr.bf16.mxu0 0
      %7983 = vmatpush1.bf16.msra.mxu0 0
      %7984 = vmatprep.subr.bf16.mxu0 0
      %7985 = vmatpush1.bf16.msra.mxu0 0
      %7986 = vmatprep.subr.bf16.mxu0 0
      %7987 = vmatpush1.bf16.msra.mxu0 0
      %7988 = vmatprep.subr.bf16.mxu0 0
      %7989 = vmatpush1.bf16.msra.mxu0 0
      %7990 = vmatprep.subr.bf16.mxu0 0
      %7991 = vmatpush1.bf16.msra.mxu0 0
      %7992 = vmatprep.subr.bf16.mxu0 0
      %7993 = vmatpush1.bf16.msra.mxu0 0
      %7994 = vmatprep.mubr.bf16.mxu0 0
      %7995 = vmatmul.mubr.bf16.gmra.mrb[0].mxu0 %v7960
      %v7996 = vpop.f32.mrb[0].mxu0
      %v7997 = vadd.f32 %v7463, %v7996
      %v7998 = vpop.f32.mrb[0].mxu0
      %v7999 = vpop.f32.mrb[0].mxu0
      %v8000 = vadd.f32 %v7599, %v7999
      %v8001 = vpop.f32.mrb[0].mxu0
      %8002 = vdwg.mxu0
      %v8004 = vsel %vm4281, %v6336, 0
      %8006 = vmatprep.subr.bf16.mxu0 0
      %8007 = vmatpush1.bf16.msra.mxu0 %v2678
      %8008 = vmatprep.subr.bf16.mxu0 0
      %8009 = vmatpush1.bf16.msra.mxu0 0
      %8010 = vmatprep.subr.bf16.mxu0 0
      %8011 = vmatpush1.bf16.msra.mxu0 0
      %8012 = vmatprep.subr.bf16.mxu0 0
      %8013 = vmatpush1.bf16.msra.mxu0 0
      %8014 = vmatprep.subr.bf16.mxu0 0
      %8015 = vmatpush1.bf16.msra.mxu0 0
      %8016 = vmatprep.subr.bf16.mxu0 0
      %8017 = vmatpush1.bf16.msra.mxu0 0
      %8018 = vmatprep.subr.bf16.mxu0 0
      %8019 = vmatpush1.bf16.msra.mxu0 0
      %8020 = vmatprep.subr.bf16.mxu0 0
      %8021 = vmatpush1.bf16.msra.mxu0 0
      %8022 = vmatprep.subr.bf16.mxu0 0
      %8023 = vmatpush1.bf16.msra.mxu0 0
      %8024 = vmatprep.subr.bf16.mxu0 0
      %8025 = vmatpush1.bf16.msra.mxu0 0
      %8026 = vmatprep.subr.bf16.mxu0 0
      %8027 = vmatpush1.bf16.msra.mxu0 0
      %8028 = vmatprep.subr.bf16.mxu0 0
      %8029 = vmatpush1.bf16.msra.mxu0 0
      %8030 = vmatprep.subr.bf16.mxu0 0
      %8031 = vmatpush1.bf16.msra.mxu0 0
      %8032 = vmatprep.subr.bf16.mxu0 0
      %8033 = vmatpush1.bf16.msra.mxu0 0
      %8034 = vmatprep.subr.bf16.mxu0 0
      %8035 = vmatpush1.bf16.msra.mxu0 0
      %8036 = vmatprep.subr.bf16.mxu0 0
      %8037 = vmatpush1.bf16.msra.mxu0 0
      %8038 = vmatprep.mubr.bf16.mxu0 0
      %8039 = vmatmul.mubr.bf16.gmra.mrb[0].mxu0 %v8004
      %v8040 = vpop.f32.mrb[0].mxu0
      %v8041 = vadd.f32 %v7464, %v8040
      %v8042 = vpop.f32.mrb[0].mxu0
      %v8043 = vpop.f32.mrb[0].mxu0
      %v8044 = vadd.f32 %v7600, %v8043
      %v8045 = vpop.f32.mrb[0].mxu0
      %8046 = vdwg.mxu0
      %v8048 = vsel %vm4281, %v6337, 0
      %8050 = vmatprep.subr.bf16.mxu0 0
      %8051 = vmatpush1.bf16.msra.mxu0 %v2679
      %8052 = vmatprep.subr.bf16.mxu0 0
      %8053 = vmatpush1.bf16.msra.mxu0 0
      %8054 = vmatprep.subr.bf16.mxu0 0
      %8055 = vmatpush1.bf16.msra.mxu0 0
      %8056 = vmatprep.subr.bf16.mxu0 0
      %8057 = vmatpush1.bf16.msra.mxu0 0
      %8058 = vmatprep.subr.bf16.mxu0 0
      %8059 = vmatpush1.bf16.msra.mxu0 0
      %8060 = vmatprep.subr.bf16.mxu0 0
      %8061 = vmatpush1.bf16.msra.mxu0 0
      %8062 = vmatprep.subr.bf16.mxu0 0
      %8063 = vmatpush1.bf16.msra.mxu0 0
      %8064 = vmatprep.subr.bf16.mxu0 0
      %8065 = vmatpush1.bf16.msra.mxu0 0
      %8066 = vmatprep.subr.bf16.mxu0 0
      %8067 = vmatpush1.bf16.msra.mxu0 0
      %8068 = vmatprep.subr.bf16.mxu0 0
      %8069 = vmatpush1.bf16.msra.mxu0 0
      %8070 = vmatprep.subr.bf16.mxu0 0
      %8071 = vmatpush1.bf16.msra.mxu0 0
      %8072 = vmatprep.subr.bf16.mxu0 0
      %8073 = vmatpush1.bf16.msra.mxu0 0
      %8074 = vmatprep.subr.bf16.mxu0 0
      %8075 = vmatpush1.bf16.msra.mxu0 0
      %8076 = vmatprep.subr.bf16.mxu0 0
      %8077 = vmatpush1.bf16.msra.mxu0 0
      %8078 = vmatprep.subr.bf16.mxu0 0
      %8079 = vmatpush1.bf16.msra.mxu0 0
      %8080 = vmatprep.subr.bf16.mxu0 0
      %8081 = vmatpush1.bf16.msra.mxu0 0
      %8082 = vmatprep.mubr.bf16.mxu0 0
      %8083 = vmatmul.mubr.bf16.gmra.mrb[0].mxu0 %v8048
      %v8084 = vpop.f32.mrb[0].mxu0
      %v8085 = vadd.f32 %v7465, %v8084
      %v8086 = vpop.f32.mrb[0].mxu0
      %v8087 = vpop.f32.mrb[0].mxu0
      %v8088 = vadd.f32 %v7601, %v8087
      %v8089 = vpop.f32.mrb[0].mxu0
      %8090 = vdwg.mxu0
      %v8092 = vsel %vm4281, %v6338, 0
      %8094 = vmatprep.subr.bf16.mxu0 0
      %8095 = vmatpush1.bf16.msra.mxu0 %v2680
      %8096 = vmatprep.subr.bf16.mxu0 0
      %8097 = vmatpush1.bf16.msra.mxu0 0
      %8098 = vmatprep.subr.bf16.mxu0 0
      %8099 = vmatpush1.bf16.msra.mxu0 0
      %8100 = vmatprep.subr.bf16.mxu0 0
      %8101 = vmatpush1.bf16.msra.mxu0 0
      %8102 = vmatprep.subr.bf16.mxu0 0
      %8103 = vmatpush1.bf16.msra.mxu0 0
      %8104 = vmatprep.subr.bf16.mxu0 0
      %8105 = vmatpush1.bf16.msra.mxu0 0
      %8106 = vmatprep.subr.bf16.mxu0 0
      %8107 = vmatpush1.bf16.msra.mxu0 0
      %8108 = vmatprep.subr.bf16.mxu0 0
      %8109 = vmatpush1.bf16.msra.mxu0 0
      %8110 = vmatprep.subr.bf16.mxu0 0
      %8111 = vmatpush1.bf16.msra.mxu0 0
      %8112 = vmatprep.subr.bf16.mxu0 0
      %8113 = vmatpush1.bf16.msra.mxu0 0
      %8114 = vmatprep.subr.bf16.mxu0 0
      %8115 = vmatpush1.bf16.msra.mxu0 0
      %8116 = vmatprep.subr.bf16.mxu0 0
      %8117 = vmatpush1.bf16.msra.mxu0 0
      %8118 = vmatprep.subr.bf16.mxu0 0
      %8119 = vmatpush1.bf16.msra.mxu0 0
      %8120 = vmatprep.subr.bf16.mxu0 0
      %8121 = vmatpush1.bf16.msra.mxu0 0
      %8122 = vmatprep.subr.bf16.mxu0 0
      %8123 = vmatpush1.bf16.msra.mxu0 0
      %8124 = vmatprep.subr.bf16.mxu0 0
      %8125 = vmatpush1.bf16.msra.mxu0 0
      %8126 = vmatprep.mubr.bf16.mxu0 0
      %8127 = vmatmul.mubr.bf16.gmra.mrb[0].mxu0 %v8092
      %v8128 = vpop.f32.mrb[0].mxu0
      %v8129 = vadd.f32 %v7466, %v8128
      %v8130 = vpop.f32.mrb[0].mxu0
      %v8131 = vpop.f32.mrb[0].mxu0
      %v8132 = vadd.f32 %v7602, %v8131
      %v8133 = vpop.f32.mrb[0].mxu0
      %8134 = vdwg.mxu0
      %v8136 = vsel %vm4281, %v6339, 0
      %8138 = vmatprep.subr.bf16.mxu0 0
      %8139 = vmatpush1.bf16.msra.mxu0 %v2681
      %8140 = vmatprep.subr.bf16.mxu0 0
      %8141 = vmatpush1.bf16.msra.mxu0 0
      %8142 = vmatprep.subr.bf16.mxu0 0
      %8143 = vmatpush1.bf16.msra.mxu0 0
      %8144 = vmatprep.subr.bf16.mxu0 0
      %8145 = vmatpush1.bf16.msra.mxu0 0
      %8146 = vmatprep.subr.bf16.mxu0 0
      %8147 = vmatpush1.bf16.msra.mxu0 0
      %8148 = vmatprep.subr.bf16.mxu0 0
      %8149 = vmatpush1.bf16.msra.mxu0 0
      %8150 = vmatprep.subr.bf16.mxu0 0
      %8151 = vmatpush1.bf16.msra.mxu0 0
      %8152 = vmatprep.subr.bf16.mxu0 0
      %8153 = vmatpush1.bf16.msra.mxu0 0
      %8154 = vmatprep.subr.bf16.mxu0 0
      %8155 = vmatpush1.bf16.msra.mxu0 0
      %8156 = vmatprep.subr.bf16.mxu0 0
      %8157 = vmatpush1.bf16.msra.mxu0 0
      %8158 = vmatprep.subr.bf16.mxu0 0
      %8159 = vmatpush1.bf16.msra.mxu0 0
      %8160 = vmatprep.subr.bf16.mxu0 0
      %8161 = vmatpush1.bf16.msra.mxu0 0
      %8162 = vmatprep.subr.bf16.mxu0 0
      %8163 = vmatpush1.bf16.msra.mxu0 0
      %8164 = vmatprep.subr.bf16.mxu0 0
      %8165 = vmatpush1.bf16.msra.mxu0 0
      %8166 = vmatprep.subr.bf16.mxu0 0
      %8167 = vmatpush1.bf16.msra.mxu0 0
      %8168 = vmatprep.subr.bf16.mxu0 0
      %8169 = vmatpush1.bf16.msra.mxu0 0
      %8170 = vmatprep.mubr.bf16.mxu0 0
      %8171 = vmatmul.mubr.bf16.gmra.mrb[0].mxu0 %v8136
      %v8172 = vpop.f32.mrb[0].mxu0
      %v8173 = vadd.f32 %v7467, %v8172
      %v8174 = vpop.f32.mrb[0].mxu0
      %v8175 = vpop.f32.mrb[0].mxu0
      %v8176 = vadd.f32 %v7603, %v8175
      %v8177 = vpop.f32.mrb[0].mxu0
      %8178 = vdwg.mxu0
      %v8180 = vsel %vm4281, %v6340, 0
      %8182 = vmatprep.subr.bf16.mxu0 0
      %8183 = vmatpush1.bf16.msra.mxu0 %v2682
      %8184 = vmatprep.subr.bf16.mxu0 0
      %8185 = vmatpush1.bf16.msra.mxu0 0
      %8186 = vmatprep.subr.bf16.mxu0 0
      %8187 = vmatpush1.bf16.msra.mxu0 0
      %8188 = vmatprep.subr.bf16.mxu0 0
      %8189 = vmatpush1.bf16.msra.mxu0 0
      %8190 = vmatprep.subr.bf16.mxu0 0
      %8191 = vmatpush1.bf16.msra.mxu0 0
      %8192 = vmatprep.subr.bf16.mxu0 0
      %8193 = vmatpush1.bf16.msra.mxu0 0
      %8194 = vmatprep.subr.bf16.mxu0 0
      %8195 = vmatpush1.bf16.msra.mxu0 0
      %8196 = vmatprep.subr.bf16.mxu0 0
      %8197 = vmatpush1.bf16.msra.mxu0 0
      %8198 = vmatprep.subr.bf16.mxu0 0
      %8199 = vmatpush1.bf16.msra.mxu0 0
      %8200 = vmatprep.subr.bf16.mxu0 0
      %8201 = vmatpush1.bf16.msra.mxu0 0
      %8202 = vmatprep.subr.bf16.mxu0 0
      %8203 = vmatpush1.bf16.msra.mxu0 0
      %8204 = vmatprep.subr.bf16.mxu0 0
      %8205 = vmatpush1.bf16.msra.mxu0 0
      %8206 = vmatprep.subr.bf16.mxu0 0
      %8207 = vmatpush1.bf16.msra.mxu0 0
      %8208 = vmatprep.subr.bf16.mxu0 0
      %8209 = vmatpush1.bf16.msra.mxu0 0
      %8210 = vmatprep.subr.bf16.mxu0 0
      %8211 = vmatpush1.bf16.msra.mxu0 0
      %8212 = vmatprep.subr.bf16.mxu0 0
      %8213 = vmatpush1.bf16.msra.mxu0 0
      %8214 = vmatprep.mubr.bf16.mxu0 0
      %8215 = vmatmul.mubr.bf16.gmra.mrb[0].mxu0 %v8180
      %v8216 = vpop.f32.mrb[0].mxu0
      %v8217 = vadd.f32 %v7468, %v8216
      %v8218 = vpop.f32.mrb[0].mxu0
      %v8219 = vpop.f32.mrb[0].mxu0
      %v8220 = vadd.f32 %v7604, %v8219
      %v8221 = vpop.f32.mrb[0].mxu0
      %8222 = vdwg.mxu0
      %v8224 = vsel %vm4281, %v6341, 0
      %8226 = vmatprep.subr.bf16.mxu0 0
      %8227 = vmatpush1.bf16.msra.mxu0 %v2683
      %8228 = vmatprep.subr.bf16.mxu0 0
      %8229 = vmatpush1.bf16.msra.mxu0 0
      %8230 = vmatprep.subr.bf16.mxu0 0
      %8231 = vmatpush1.bf16.msra.mxu0 0
      %8232 = vmatprep.subr.bf16.mxu0 0
      %8233 = vmatpush1.bf16.msra.mxu0 0
      %8234 = vmatprep.subr.bf16.mxu0 0
      %8235 = vmatpush1.bf16.msra.mxu0 0
      %8236 = vmatprep.subr.bf16.mxu0 0
      %8237 = vmatpush1.bf16.msra.mxu0 0
      %8238 = vmatprep.subr.bf16.mxu0 0
      %8239 = vmatpush1.bf16.msra.mxu0 0
      %8240 = vmatprep.subr.bf16.mxu0 0
      %8241 = vmatpush1.bf16.msra.mxu0 0
      %8242 = vmatprep.subr.bf16.mxu0 0
      %8243 = vmatpush1.bf16.msra.mxu0 0
      %8244 = vmatprep.subr.bf16.mxu0 0
      %8245 = vmatpush1.bf16.msra.mxu0 0
      %8246 = vmatprep.subr.bf16.mxu0 0
      %8247 = vmatpush1.bf16.msra.mxu0 0
      %8248 = vmatprep.subr.bf16.mxu0 0
      %8249 = vmatpush1.bf16.msra.mxu0 0
      %8250 = vmatprep.subr.bf16.mxu0 0
      %8251 = vmatpush1.bf16.msra.mxu0 0
      %8252 = vmatprep.subr.bf16.mxu0 0
      %8253 = vmatpush1.bf16.msra.mxu0 0
      %8254 = vmatprep.subr.bf16.mxu0 0
      %8255 = vmatpush1.bf16.msra.mxu0 0
      %8256 = vmatprep.subr.bf16.mxu0 0
      %8257 = vmatpush1.bf16.msra.mxu0 0
      %8258 = vmatprep.mubr.bf16.mxu0 0
      %8259 = vmatmul.mubr.bf16.gmra.mrb[0].mxu0 %v8224
      %v8260 = vpop.f32.mrb[0].mxu0
      %v8261 = vadd.f32 %v7469, %v8260
      %v8262 = vpop.f32.mrb[0].mxu0
      %v8263 = vpop.f32.mrb[0].mxu0
      %v8264 = vadd.f32 %v7605, %v8263
      %v8265 = vpop.f32.mrb[0].mxu0
      %8266 = vdwg.mxu0
      %v8268 = vsel %vm4281, %v6342, 0
      %8270 = vmatprep.subr.bf16.mxu0 0
      %8271 = vmatpush1.bf16.msra.mxu0 %v2684
      %8272 = vmatprep.subr.bf16.mxu0 0
      %8273 = vmatpush1.bf16.msra.mxu0 0
      %8274 = vmatprep.subr.bf16.mxu0 0
      %8275 = vmatpush1.bf16.msra.mxu0 0
      %8276 = vmatprep.subr.bf16.mxu0 0
      %8277 = vmatpush1.bf16.msra.mxu0 0
      %8278 = vmatprep.subr.bf16.mxu0 0
      %8279 = vmatpush1.bf16.msra.mxu0 0
      %8280 = vmatprep.subr.bf16.mxu0 0
      %8281 = vmatpush1.bf16.msra.mxu0 0
      %8282 = vmatprep.subr.bf16.mxu0 0
      %8283 = vmatpush1.bf16.msra.mxu0 0
      %8284 = vmatprep.subr.bf16.mxu0 0
      %8285 = vmatpush1.bf16.msra.mxu0 0
      %8286 = vmatprep.subr.bf16.mxu0 0
      %8287 = vmatpush1.bf16.msra.mxu0 0
      %8288 = vmatprep.subr.bf16.mxu0 0
      %8289 = vmatpush1.bf16.msra.mxu0 0
      %8290 = vmatprep.subr.bf16.mxu0 0
      %8291 = vmatpush1.bf16.msra.mxu0 0
      %8292 = vmatprep.subr.bf16.mxu0 0
      %8293 = vmatpush1.bf16.msra.mxu0 0
      %8294 = vmatprep.subr.bf16.mxu0 0
      %8295 = vmatpush1.bf16.msra.mxu0 0
      %8296 = vmatprep.subr.bf16.mxu0 0
      %8297 = vmatpush1.bf16.msra.mxu0 0
      %8298 = vmatprep.subr.bf16.mxu0 0
      %8299 = vmatpush1.bf16.msra.mxu0 0
      %8300 = vmatprep.subr.bf16.mxu0 0
      %8301 = vmatpush1.bf16.msra.mxu0 0
      %8302 = vmatprep.mubr.bf16.mxu0 0
      %8303 = vmatmul.mubr.bf16.gmra.mrb[0].mxu0 %v8268
      %v8304 = vpop.f32.mrb[0].mxu0
      %v8305 = vadd.f32 %v7470, %v8304
      %v8306 = vpop.f32.mrb[0].mxu0
      %v8307 = vpop.f32.mrb[0].mxu0
      %v8308 = vadd.f32 %v7606, %v8307
      %v8309 = vpop.f32.mrb[0].mxu0
      %8310 = vdwg.mxu0
      %v8311 = vrcp.pop %v6295
      %v8312 = vrcp.pop %v6296
      %v8313 = vrcp.pop %v6297
      %v8314 = vrcp.pop %v6298
      %v8315 = vrcp.pop %v6299
      %v8316 = vrcp.pop %v6300
      %v8317 = vrcp.pop %v6301
      %v8318 = vrcp.pop %v6302
      %v8319 = vrcp.pop %v6303
      %v8320 = vrcp.pop %v6304
      %v8321 = vrcp.pop %v6305
      %v8322 = vrcp.pop %v6306
      %v8323 = vrcp.pop %v6307
      %v8324 = vrcp.pop %v6308
      %v8325 = vrcp.pop %v6309
      %v8326 = vrcp.pop %v6310
      %v8327 = vrcp.pop %v6311
      %v8328 = vrcp.pop %v6312
      %v8329 = vrcp.pop %v6313
      %v8330 = vrcp.pop %v6314
      %v8331 = vrcp.pop %v6315
      %v8332 = vrcp.pop %v6316
      %v8333 = vrcp.pop %v6317
      %v8334 = vrcp.pop %v6318
      %v8335 = vrcp.pop %v6319
      %v8336 = vrcp.pop %v6320
      %v8337 = vrcp.pop %v6321
      %v8338 = vrcp.pop %v6322
      %v8339 = vrcp.pop %v6323
      %v8340 = vrcp.pop %v6324
      %v8341 = vrcp.pop %v6325
      %v8342 = vrcp.pop %v6326
      %8344 = vset.pattern.permute.xlu0 0
      %8345 = vperm.xlu0 %8344, %v8311
      %v8346 = vpop.permute.xlu0 %8345
      %8349 = vset.pattern.permute.xlu0 0
      %8350 = vperm.xlu0 %8349, %v8312
      %v8351 = vpop.permute.xlu0 %8350
      %8354 = vset.pattern.permute.xlu0 0
      %8355 = vperm.xlu0 %8354, %v8313
      %v8356 = vpop.permute.xlu0 %8355
      %8359 = vset.pattern.permute.xlu0 0
      %8360 = vperm.xlu0 %8359, %v8314
      %v8361 = vpop.permute.xlu0 %8360
      %8364 = vset.pattern.permute.xlu0 0
      %8365 = vperm.xlu0 %8364, %v8315
      %v8366 = vpop.permute.xlu0 %8365
      %8369 = vset.pattern.permute.xlu0 0
      %8370 = vperm.xlu0 %8369, %v8316
      %v8371 = vpop.permute.xlu0 %8370
      %8374 = vset.pattern.permute.xlu0 0
      %8375 = vperm.xlu0 %8374, %v8317
      %v8376 = vpop.permute.xlu0 %8375
      %8379 = vset.pattern.permute.xlu0 0
      %8380 = vperm.xlu0 %8379, %v8318
      %v8381 = vpop.permute.xlu0 %8380
      %8384 = vset.pattern.permute.xlu0 0
      %8385 = vperm.xlu0 %8384, %v8319
      %v8386 = vpop.permute.xlu0 %8385
      %8389 = vset.pattern.permute.xlu0 0
      %8390 = vperm.xlu0 %8389, %v8320
      %v8391 = vpop.permute.xlu0 %8390
      %8394 = vset.pattern.permute.xlu0 0
      %8395 = vperm.xlu0 %8394, %v8321
      %v8396 = vpop.permute.xlu0 %8395
      %8399 = vset.pattern.permute.xlu0 0
      %8400 = vperm.xlu0 %8399, %v8322
      %v8401 = vpop.permute.xlu0 %8400
      %8404 = vset.pattern.permute.xlu0 0
      %8405 = vperm.xlu0 %8404, %v8323
      %v8406 = vpop.permute.xlu0 %8405
      %8409 = vset.pattern.permute.xlu0 0
      %8410 = vperm.xlu0 %8409, %v8324
      %v8411 = vpop.permute.xlu0 %8410
      %8414 = vset.pattern.permute.xlu0 0
      %8415 = vperm.xlu0 %8414, %v8325
      %v8416 = vpop.permute.xlu0 %8415
      %8419 = vset.pattern.permute.xlu0 0
      %8420 = vperm.xlu0 %8419, %v8326
      %v8421 = vpop.permute.xlu0 %8420
      %8424 = vset.pattern.permute.xlu0 0
      %8425 = vperm.xlu0 %8424, %v8327
      %v8426 = vpop.permute.xlu0 %8425
      %8429 = vset.pattern.permute.xlu0 0
      %8430 = vperm.xlu0 %8429, %v8328
      %v8431 = vpop.permute.xlu0 %8430
      %8434 = vset.pattern.permute.xlu0 0
      %8435 = vperm.xlu0 %8434, %v8329
      %v8436 = vpop.permute.xlu0 %8435
      %8439 = vset.pattern.permute.xlu0 0
      %8440 = vperm.xlu0 %8439, %v8330
      %v8441 = vpop.permute.xlu0 %8440
      %8444 = vset.pattern.permute.xlu0 0
      %8445 = vperm.xlu0 %8444, %v8331
      %v8446 = vpop.permute.xlu0 %8445
      %8449 = vset.pattern.permute.xlu0 0
      %8450 = vperm.xlu0 %8449, %v8332
      %v8451 = vpop.permute.xlu0 %8450
      %8454 = vset.pattern.permute.xlu0 0
      %8455 = vperm.xlu0 %8454, %v8333
      %v8456 = vpop.permute.xlu0 %8455
      %8459 = vset.pattern.permute.xlu0 0
      %8460 = vperm.xlu0 %8459, %v8334
      %v8461 = vpop.permute.xlu0 %8460
      %8464 = vset.pattern.permute.xlu0 0
      %8465 = vperm.xlu0 %8464, %v8335
      %v8466 = vpop.permute.xlu0 %8465
      %8469 = vset.pattern.permute.xlu0 0
      %8470 = vperm.xlu0 %8469, %v8336
      %v8471 = vpop.permute.xlu0 %8470
      %8474 = vset.pattern.permute.xlu0 0
      %8475 = vperm.xlu0 %8474, %v8337
      %v8476 = vpop.permute.xlu0 %8475
      %8479 = vset.pattern.permute.xlu0 0
      %8480 = vperm.xlu0 %8479, %v8338
      %v8481 = vpop.permute.xlu0 %8480
      %8484 = vset.pattern.permute.xlu0 0
      %8485 = vperm.xlu0 %8484, %v8339
      %v8486 = vpop.permute.xlu0 %8485
      %8489 = vset.pattern.permute.xlu0 0
      %8490 = vperm.xlu0 %8489, %v8340
      %v8491 = vpop.permute.xlu0 %8490
      %8494 = vset.pattern.permute.xlu0 0
      %8495 = vperm.xlu0 %8494, %v8341
      %v8496 = vpop.permute.xlu0 %8495
      %8499 = vset.pattern.permute.xlu0 0
      %8500 = vperm.xlu0 %8499, %v8342
      %v8501 = vpop.permute.xlu0 %8500
      %v8503 = vmul.f32 %v7645, %v8346
      %v8504 = vmul.f32 %v7648, %v8351
      %v8505 = vmul.f32 %v7689, %v8356
      %v8506 = vmul.f32 %v7692, %v8361
      %v8507 = vmul.f32 %v7733, %v8366
      %v8508 = vmul.f32 %v7736, %v8371
      %v8509 = vmul.f32 %v7777, %v8376
      %v8510 = vmul.f32 %v7780, %v8381
      %v8511 = vmul.f32 %v7821, %v8386
      %v8512 = vmul.f32 %v7824, %v8391
      %v8513 = vmul.f32 %v7865, %v8396
      %v8514 = vmul.f32 %v7868, %v8401
      %v8515 = vmul.f32 %v7909, %v8406
      %v8516 = vmul.f32 %v7912, %v8411
      %v8517 = vmul.f32 %v7953, %v8416
      %v8518 = vmul.f32 %v7956, %v8421
      %v8519 = vmul.f32 %v7997, %v8426
      %v8520 = vmul.f32 %v8000, %v8431
      %v8521 = vmul.f32 %v8041, %v8436
      %v8522 = vmul.f32 %v8044, %v8441
      %v8523 = vmul.f32 %v8085, %v8446
      %v8524 = vmul.f32 %v8088, %v8451
      %v8525 = vmul.f32 %v8129, %v8456
      %v8526 = vmul.f32 %v8132, %v8461
      %v8527 = vmul.f32 %v8173, %v8466
      %v8528 = vmul.f32 %v8176, %v8471
      %v8529 = vmul.f32 %v8217, %v8476
      %v8530 = vmul.f32 %v8220, %v8481
      %v8531 = vmul.f32 %v8261, %v8486
      %v8532 = vmul.f32 %v8264, %v8491
      %v8533 = vmul.f32 %v8305, %v8496
      %v8534 = vmul.f32 %v8308, %v8501
      %s8535 = sld [smem:[#allocation2]]
      %v8536 = vstv %s8535
      %v8537 = vmul.f32 %v8536, %v8503
      %v8538 = vmul.f32 %v8536, %v8504
      %v8539 = vmul.f32 %v8536, %v8505
      %v8540 = vmul.f32 %v8536, %v8506
      %v8541 = vmul.f32 %v8536, %v8507
      %v8542 = vmul.f32 %v8536, %v8508
      %v8543 = vmul.f32 %v8536, %v8509
      %v8544 = vmul.f32 %v8536, %v8510
      %v8545 = vmul.f32 %v8536, %v8511
      %v8546 = vmul.f32 %v8536, %v8512
      %v8547 = vmul.f32 %v8536, %v8513
      %v8548 = vmul.f32 %v8536, %v8514
      %v8549 = vmul.f32 %v8536, %v8515
      %v8550 = vmul.f32 %v8536, %v8516
      %v8551 = vmul.f32 %v8536, %v8517
      %v8552 = vmul.f32 %v8536, %v8518
      %v8553 = vmul.f32 %v8536, %v8519
      %v8554 = vmul.f32 %v8536, %v8520
      %v8555 = vmul.f32 %v8536, %v8521
      %v8556 = vmul.f32 %v8536, %v8522
      %v8557 = vmul.f32 %v8536, %v8523
      %v8558 = vmul.f32 %v8536, %v8524
      %v8559 = vmul.f32 %v8536, %v8525
      %v8560 = vmul.f32 %v8536, %v8526
      %v8561 = vmul.f32 %v8536, %v8527
      %v8562 = vmul.f32 %v8536, %v8528
      %v8563 = vmul.f32 %v8536, %v8529
      %v8564 = vmul.f32 %v8536, %v8530
      %v8565 = vmul.f32 %v8536, %v8531
      %v8566 = vmul.f32 %v8536, %v8532
      %v8567 = vmul.f32 %v8536, %v8533
      %v8568 = vmul.f32 %v8536, %v8534
      %v8569 = vadd.f32 %v8537, %v308
      %v8570 = vadd.f32 %v8538, %v309
      %v8571 = vadd.f32 %v8539, %v310
      %v8572 = vadd.f32 %v8540, %v311
      %v8573 = vadd.f32 %v8541, %v312
      %v8574 = vadd.f32 %v8542, %v313
      %v8575 = vadd.f32 %v8543, %v314
      %v8576 = vadd.f32 %v8544, %v315
      %v8577 = vadd.f32 %v8545, %v316
      %v8578 = vadd.f32 %v8546, %v317
      %v8579 = vadd.f32 %v8547, %v318
      %v8580 = vadd.f32 %v8548, %v319
      %v8581 = vadd.f32 %v8549, %v320
      %v8582 = vadd.f32 %v8550, %v321
      %v8583 = vadd.f32 %v8551, %v322
      %v8584 = vadd.f32 %v8552, %v323
      %v8585 = vadd.f32 %v8553, %v324
      %v8586 = vadd.f32 %v8554, %v325
      %v8587 = vadd.f32 %v8555, %v326
      %v8588 = vadd.f32 %v8556, %v327
      %v8589 = vadd.f32 %v8557, %v328
      %v8590 = vadd.f32 %v8558, %v329
      %v8591 = vadd.f32 %v8559, %v330
      %v8592 = vadd.f32 %v8560, %v331
      %v8593 = vadd.f32 %v8561, %v332
      %v8594 = vadd.f32 %v8562, %v333
      %v8595 = vadd.f32 %v8563, %v334
      %v8596 = vadd.f32 %v8564, %v335
      %v8597 = vadd.f32 %v8565, %v336
      %v8598 = vadd.f32 %v8566, %v337
      %v8599 = vadd.f32 %v8567, %v338
      %v8600 = vadd.f32 %v8568, %v339
      %8601 = vst.msk [vmem:[%s306] sm:$0xff] %vm395, %v8569
      %8602 = vst.msk [vmem:[%s306 + $0x8] sm:$0xff] %vm395, %v8570
      %8603 = vst.msk [vmem:[%s306 + $0x10] sm:$0xff] %vm395, %v8571
      %8604 = vst.msk [vmem:[%s306 + $0x18] sm:$0xff] %vm395, %v8572
      %8605 = vst.msk [vmem:[%s306 + $0x20] sm:$0xff] %vm395, %v8573
      %8606 = vst.msk [vmem:[%s306 + $0x28] sm:$0xff] %vm395, %v8574
      %8607 = vst.msk [vmem:[%s306 + $0x30] sm:$0xff] %vm395, %v8575
      %8608 = vst.msk [vmem:[%s306 + $0x38] sm:$0xff] %vm395, %v8576
      %8609 = vst.msk [vmem:[%s306 + $0x40] sm:$0xff] %vm395, %v8577
      %8610 = vst.msk [vmem:[%s306 + $0x48] sm:$0xff] %vm395, %v8578
      %8611 = vst.msk [vmem:[%s306 + $0x50] sm:$0xff] %vm395, %v8579
      %8612 = vst.msk [vmem:[%s306 + $0x58] sm:$0xff] %vm395, %v8580
      %8613 = vst.msk [vmem:[%s306 + $0x60] sm:$0xff] %vm395, %v8581
      %8614 = vst.msk [vmem:[%s306 + $0x68] sm:$0xff] %vm395, %v8582
      %8615 = vst.msk [vmem:[%s306 + $0x70] sm:$0xff] %vm395, %v8583
      %8616 = vst.msk [vmem:[%s306 + $0x78] sm:$0xff] %vm395, %v8584
      %8617 = vst.msk [vmem:[%s306 + $0x80] sm:$0xff] %vm395, %v8585
      %8618 = vst.msk [vmem:[%s306 + $0x88] sm:$0xff] %vm395, %v8586
      %8619 = vst.msk [vmem:[%s306 + $0x90] sm:$0xff] %vm395, %v8587
      %8620 = vst.msk [vmem:[%s306 + $0x98] sm:$0xff] %vm395, %v8588
      %8621 = vst.msk [vmem:[%s306 + $0xa0] sm:$0xff] %vm395, %v8589
      %8622 = vst.msk [vmem:[%s306 + $0xa8] sm:$0xff] %vm395, %v8590
      %8623 = vst.msk [vmem:[%s306 + $0xb0] sm:$0xff] %vm395, %v8591
      %8624 = vst.msk [vmem:[%s306 + $0xb8] sm:$0xff] %vm395, %v8592
      %8625 = vst.msk [vmem:[%s306 + $0xc0] sm:$0xff] %vm395, %v8593
      %8626 = vst.msk [vmem:[%s306 + $0xc8] sm:$0xff] %vm395, %v8594
      %8627 = vst.msk [vmem:[%s306 + $0xd0] sm:$0xff] %vm395, %v8595
      %8628 = vst.msk [vmem:[%s306 + $0xd8] sm:$0xff] %vm395, %v8596
      %8629 = vst.msk [vmem:[%s306 + $0xe0] sm:$0xff] %vm395, %v8597
      %8630 = vst.msk [vmem:[%s306 + $0xe8] sm:$0xff] %vm395, %v8598
      %8631 = vst.msk [vmem:[%s306 + $0xf0] sm:$0xff] %vm395, %v8599
      %8632 = vst.msk [vmem:[%s306 + $0xf8] sm:$0xff] %vm395, %v8600
      %p8633 = scmp.lt.s32.totalorder %s20, 1
      %s8634 = scalar_select %p8633, %s20, 1
      %s8635 = smul.addr %s8634, 32
      %s8636 = smul.addr %s8635, 8
      %s8637 = scalar_lea.vmem %s8, %s8636
      // Predicated region
      $region53: #{tpu_custom_call.1} parent=51 // pred_check
        %p8638 = pneg %p211
      $region54: #{tpu_custom_call.1} parent=51 // pred_check_branch
        %8640 = sbr.rel (%p8638) target = $region56
      $region55: #{tpu_custom_call.1} parent=51 // pred_region
        _
      $region56: #{tpu_custom_call.1} parent=51 // pred_fallthru
        _
    $region52: #{tpu_custom_call.1} parent=5 // pred_fallthru
      _
    %p8641 = scmp.le.s32.totalorder 2, %s15
    // Predicated region
    $region57: #{tpu_custom_call.1} parent=5 // pred_check
      %p8642 = pneg %p8641
    $region58: #{tpu_custom_call.1} parent=5 // pred_check_branch
      %8644 = sbr.rel (%p8642) target = $region60
    $region59: #{tpu_custom_call.1} parent=5 // pred_region
      %s8645 = ssub.s32 %s15, 2
      // Predicated region
      $region61: #{tpu_custom_call.1} parent=59 // pred_check
        %p8646 = pneg %p217
      $region62: #{tpu_custom_call.1} parent=59 // pred_check_branch
        %8648 = sbr.rel (%p8646) target = $region64
      $region63: #{tpu_custom_call.1} parent=59 // pred_region
        %p8649 = scmp.lt.s32.totalorder %s21, 1
        %s8650 = scalar_select %p8649, %s21, 1
        %s8651 = smul.addr %s8650, 32
        %s8652 = smul.addr %s8651, 8
        %s8653 = scalar_lea.vmem %s8, %s8652
      $region64: #{tpu_custom_call.1} parent=59 // pred_fallthru
        _
    $region60: #{tpu_custom_call.1} parent=5 // pred_fallthru
      _
  $region6: #{tpu_custom_call.1} parent=0 // loop_footer
    %s19 = sadd.s32 1, %s15
  $region7: #{tpu_custom_call.1} parent=0 // loop_footer_branch
    %14 = sbr.rel target = $region3
  $region8: #{tpu_custom_call.1} parent=0 // loop_exit
    _

</llo_original>
